<compile_context>
chip_gen: v7x
topology: tpu7x:2x2x1
jax: 0.10.0
libtpu: 0.0.40
codegen_flags: <defaults>
</compile_context>

<pallas_src>
import numpy as np
import jax
import jax.numpy as jnp
from jax import lax
from jax.experimental import pallas as pl
from jax.experimental.pallas import tpu as pltpu


# --------------------------------------------------------------------------------------
# Fused decoder kernel: attention + gating + LSTMCell + fc, TB decode steps per grid step.
# --------------------------------------------------------------------------------------
def _decoder_kernel(bst_ref,                                   # scalar prefetch: (T_pad,) int32 in SMEM
                    enc_ref,                                   # (B, P, E) bf16, resident
                    emb_gates_ref,                             # (TB, B, 4D) f32 — emb@W_ih_e + b_lstm
                    w_init_h_ref, b_init_h_ref,
                    w_init_c_ref, b_init_c_ref,
                    w_ea_ref, b_ea_ref,
                    w_h_all_ref, b_h_all_ref,                  # fused [w_da | w_beta | w_hh]
                    w_fa_ref,                                  # (1, A)
                    b_fa_ref,                                  # (1,) f32 in SMEM
                    w_ih_a_ref,                                # (E, 4D)
                    w_fc_ref, b_fc_ref,                        # (D, V), (1, V)
                    pred_ref,                                  # out block: (TB, B, V)
                    alpha_ref,                                 # out block: (T_pad, B, P) resident
                    h_st, c_st, att1_st):                      # scratch
    tb = pl.program_id(0)
    B, P, E = enc_ref.shape
    D = h_st.shape[1]
    A = att1_st.shape[2]
    TB = emb_gates_ref.shape[0]

    enc = enc_ref[...]                                                               # (B, P, E) bf16

    # -------- first grid step: init_hidden_state + hoisted (time-invariant) encoder-att proj ----
    @pl.when(tb == 0)
    def _init():
        mean_enc = (jnp.sum(enc.astype(jnp.float32), axis=1) * (1.0 / P)).astype(jnp.bfloat16)
        h_st[...] = (jnp.dot(mean_enc, w_init_h_ref[...], preferred_element_type=jnp.float32)
                     + b_init_h_ref[...])
        c_st[...] = (jnp.dot(mean_enc, w_init_c_ref[...], preferred_element_type=jnp.float32)
                     + b_init_c_ref[...])
        att1 = (jnp.dot(enc.reshape(B * P, E), w_ea_ref[...], preferred_element_type=jnp.float32)
                + b_ea_ref[...])                                                      # (B*P, A)
        att1_st[...] = att1.reshape(B, P, A)

    # hoisted out of the unrolled sub-step loop (JAX does not CSE broadcast_in_dim)
    enc_f32 = enc.astype(jnp.float32)
    att1 = att1_st[...]                                                               # (B, P, A)
    w_fa_b = w_fa_ref[...][None, :, :]                                                # (1, 1, A)
    b_fa = b_fa_ref[0]                                                                # scalar (SMEM)
    row = lax.broadcasted_iota(jnp.int32, (B, 1), 0)

    for sub in range(TB):                       # static unroll over the TB decode sub-steps
        t = tb * TB + sub
        h = h_st[...]                                                                 # (B, D) f32
        c = c_st[...]
        h_bf = h.astype(jnp.bfloat16)

        # ---- ONE fused h-dependent matmul: [decoder_att | f_beta | LSTM hh] ----
        h_all = (jnp.dot(h_bf, w_h_all_ref[...], preferred_element_type=jnp.float32)
                 + b_h_all_ref[...])                                                  # (B, A+E+4D)
        att2 = h_all[:, :A]
        gate_pre = h_all[:, A:A + E]
        hh_gates = h_all[:, A + E:]

        # ---- Attention (att1 reused from scratch) ----
        att = jnp.maximum(att1 + att2[:, None, :], 0.0)                               # ReLU, (B, P, A)
        # TODO(synk): at realistic A/P sizes move this lane-reduce to the MXU ((B*P,A)@(A,1)) per review.
        score = jnp.sum(att * w_fa_b, axis=2) + b_fa                                  # (B, P)
        score = score - jnp.max(score, axis=1, keepdims=True)                         # softmax(dim=1)
        ex = jnp.exp(score)
        alpha = ex / jnp.sum(ex, axis=1, keepdims=True)                               # exact: sums to 1
        # attention-weighted encoding: VPU multiply + sublane reduce over P (no M=1 batched matmuls)
        awe = jnp.sum(enc_f32 * alpha[:, :, None], axis=1)                            # (B, E) f32

        # ---- Gating (f_beta + sigmoid) ----
        gate = jax.nn.sigmoid(gate_pre)
        awe = gate * awe

        # ---- LSTMCell: embedding (+bias) contribution was precomputed on host ----
        gates = (emb_gates_ref[sub]
                 + jnp.dot(awe.astype(jnp.bfloat16), w_ih_a_ref[...],
                           preferred_element_type=jnp.float32)
                 + hh_gates)                                                          # (B, 4D) i,f,g,o
        i_g = jax.nn.sigmoid(gates[:, 0:D])
        f_g = jax.nn.sigmoid(gates[:, D:2 * D])
        g_g = jnp.tanh(gates[:, 2 * D:3 * D])
        o_g = jax.nn.sigmoid(gates[:, 3 * D:4 * D])
        c_new = f_g * c + i_g * g_g
        h_new = o_g * jnp.tanh(c_new)

        # ---- Output projection ----
        # TODO(synk): nn.Dropout treated as identity (eval mode); training would use pltpu PRNG masking.
        preds = (jnp.dot(h_new.astype(jnp.bfloat16), w_fc_ref[...],
                         preferred_element_type=jnp.float32) + b_fc_ref[...])         # (B, V)

        # ---- Mask rows that finished decoding (row >= batch_size_t; padded steps have bst=0) ----
        bst = bst_ref[t]
        active = row < bst
        h_st[...] = jnp.where(active, h_new, h)
        c_st[...] = jnp.where(active, c_new, c)
        pred_ref[sub] = jnp.where(active, preds, jnp.zeros_like(preds))
        alpha_ref[t] = jnp.where(active, alpha, jnp.zeros_like(alpha))


# --------------------------------------------------------------------------------------
# Parameter construction (deterministic, synthetic). Weights bf16, biases f32.
# Linear weights stored transposed as (in_features, out_features).
# --------------------------------------------------------------------------------------
def make_params(key, *, vocab_size, embed_dim, decoder_dim, encoder_dim, attention_dim):
    ks = list(jax.random.split(key, 20))
    wf = lambda k, shape: jax.random.uniform(k, shape, jnp.float32, -0.1, 0.1)
    wb = lambda k, shape: wf(k, shape).astype(jnp.bfloat16)
    p = {}
    p['embedding'] = wb(ks[0], (vocab_size, embed_dim))
    # Attention
    p['w_ea'] = wb(ks[1], (encoder_dim, attention_dim));  p['b_ea'] = wf(ks[2], (1, attention_dim))
    p['w_da'] = wb(ks[3], (decoder_dim, attention_dim));  p['b_da'] = wf(ks[4], (1, attention_dim))
    p['w_fa'] = wf(ks[5], (1, attention_dim));            p['b_fa'] = wf(ks[6], (1, 1))
    # init_h / init_c
    p['w_init_h'] = wb(ks[7], (encoder_dim, decoder_dim)); p['b_init_h'] = wf(ks[8], (1, decoder_dim))
    p['w_init_c'] = wb(ks[9], (encoder_dim, decoder_dim)); p['b_init_c'] = wf(ks[10], (1, decoder_dim))
    # f_beta
    p['w_beta'] = wb(ks[11], (decoder_dim, encoder_dim)); p['b_beta'] = wf(ks[12], (1, encoder_dim))
    # LSTMCell (weight_ih split into embedding part and attention part, stored transposed)
    p['w_ih_e'] = wb(ks[13], (embed_dim, 4 * decoder_dim))
    p['w_ih_a'] = wb(ks[14], (encoder_dim, 4 * decoder_dim))
    p['w_hh'] = wb(ks[15], (decoder_dim, 4 * decoder_dim))
    p['b_lstm'] = wf(ks[16], (1, 4 * decoder_dim))         # b_ih + b_hh combined
    # fc (init_weights: weight uniform(-0.1,0.1), bias 0)
    p['w_fc'] = wb(ks[17], (decoder_dim, vocab_size))
    p['b_fc'] = jnp.zeros((1, vocab_size), jnp.float32)
    return p


# --------------------------------------------------------------------------------------
# Forward wrapper (mirrors DecoderWithAttention.forward)
# --------------------------------------------------------------------------------------
def decoder_forward(params, encoder_out, encoded_captions, caption_lengths, time_block=4):
    B = encoder_out.shape[0]
    E = encoder_out.shape[-1]
    enc = encoder_out.reshape(B, -1, E)                  # (B, num_pixels, encoder_dim)
    P = enc.shape[1]
    D = params['w_hh'].shape[0]
    A = params['w_ea'].shape[1]
    V = params['w_fc'].shape[1]
    Emb = params['embedding'].shape[1]

    # sort by caption length, descending (stable) — host-side, like the PyTorch reference
    cap_len = np.asarray(caption_lengths).reshape(B)
    sort_ind = np.argsort(-cap_len, kind='stable')
    cap_len = cap_len[sort_ind]
    enc = enc[jnp.asarray(sort_ind)]
    caps = encoded_captions[jnp.asarray(sort_ind)]

    # embedding lookup (gather — glue in plain JAX)
    embeddings = params['embedding'][caps]               # (B, L, embed_dim) bf16

    decode_lengths = [int(l) - 1 for l in cap_len]
    max_dec = max(decode_lengths)

    # ---- time blocking: TB decode steps per grid iteration, padded with bst=0 steps ----
    TB = int(time_block)
    n_blocks = -(-max_dec // TB)
    T_pad = n_blocks * TB

    bst_np = np.zeros((T_pad,), np.int32)
    for t in range(max_dec):
        bst_np[t] = sum(l > t for l in decode_lengths)
    bst = jnp.asarray(bst_np)

    enc_bf = enc.astype(jnp.bfloat16)                                   # (B, P, E)

    # time-major embeddings, padded to T_pad, then the embedding (+bias) contribution to the LSTM
    # gates is precomputed as ONE big MXU matmul in XLA (lane-dense 4D slices fed to the kernel).
    emb_t = jnp.transpose(embeddings[:, :max_dec, :], (1, 0, 2)).astype(jnp.bfloat16)  # (T, B, Emb)
    emb_t = jnp.pad(emb_t, ((0, T_pad - max_dec), (0, 0), (0, 0)))
    emb_gates = (jnp.dot(emb_t.reshape(T_pad * B, Emb), params['w_ih_e'],
                         preferred_element_type=jnp.float32).reshape(T_pad, B, 4 * D)
                 + params['b_lstm'])                                                    # (T_pad, B, 4D) f32

    # fused h-dependent weight / bias: [decoder_att | f_beta | LSTM w_hh]
    w_h_all = jnp.concatenate([params['w_da'], params['w_beta'], params['w_hh']], axis=1)  # (D, A+E+4D) bf16
    b_h_all = jnp.concatenate([params['b_da'], params['b_beta'],
                               jnp.zeros((1, 4 * D), jnp.float32)], axis=1)                # (1, A+E+4D) f32
    b_fa = params['b_fa'].reshape(1)                                                       # scalar → SMEM

    const2 = lambda tb, bst_r: (0, 0)
    const3 = lambda tb, bst_r: (0, 0, 0)
    time3 = lambda tb, bst_r: (tb, 0, 0)
    F = A + E + 4 * D

    grid_spec = pltpu.PrefetchScalarGridSpec(
        num_scalar_prefetch=1,
        grid=(n_blocks,),
        in_specs=[
            pl.BlockSpec((B, P, E), const3),                              # enc (resident)
            pl.BlockSpec((TB, B, 4 * D), time3),                          # precomputed emb gate slices
            pl.BlockSpec((E, D), const2), pl.BlockSpec((1, D), const2),   # init_h
            pl.BlockSpec((E, D), const2), pl.BlockSpec((1, D), const2),   # init_c
            pl.BlockSpec((E, A), const2), pl.BlockSpec((1, A), const2),   # encoder_att
            pl.BlockSpec((D, F), const2), pl.BlockSpec((1, F), const2),   # fused h matmul
            pl.BlockSpec((1, A), const2),                                 # full_att weight
            pl.BlockSpec(memory_space=pltpu.MemorySpace.SMEM),            # full_att bias (scalar)
            pl.BlockSpec((E, 4 * D), const2),                             # LSTM w_ih (attention part)
            pl.BlockSpec((D, V), const2), pl.BlockSpec((1, V), const2),   # fc
        ],
        out_specs=(
            pl.BlockSpec((TB, B, V), time3),                              # predictions, time-major
            pl.BlockSpec((T_pad, B, P), const3),                          # alphas: VMEM-resident, 1 writeback
        ),
        scratch_shapes=[
            pltpu.VMEM((B, D), jnp.float32),                              # h state (persists over grid)
            pltpu.VMEM((B, D), jnp.float32),                              # c state
            pltpu.VMEM((B, P, A), jnp.float32),                           # hoisted att1 = enc @ W_ea + b_ea
        ],
    )

    call = pl.pallas_call(
        _decoder_kernel,
        out_shape=(jax.ShapeDtypeStruct((T_pad, B, V), jnp.float32),
                   jax.ShapeDtypeStruct((T_pad, B, P), jnp.float32)),
        grid_spec=grid_spec,
        # time carries h/c state through scratch -> sequential grid.
        # TODO(synk): on v7x, add a "parallel" batch grid axis (2 TCs) and set vmem_limit_bytes /
        # pipeline_mode=pl.Buffered(1) on resident weights at realistic (E=2048, V=10k) sizes.
        compiler_params=pltpu.CompilerParams(dimension_semantics=("arbitrary",)),
    )

    preds_t, alphas_t = call(
        bst, enc_bf, emb_gates,
        params['w_init_h'], params['b_init_h'], params['w_init_c'], params['b_init_c'],
        params['w_ea'], params['b_ea'],
        w_h_all, b_h_all,
        params['w_fa'], b_fa,
        params['w_ih_a'],
        params['w_fc'], params['b_fc'])

    predictions = jnp.transpose(preds_t[:max_dec], (1, 0, 2))    # (B, max_dec, vocab_size)
    alphas = jnp.transpose(alphas_t[:max_dec], (1, 0, 2))        # (B, max_dec, num_pixels)
    return predictions, caps, decode_lengths, alphas, jnp.asarray(sort_ind)


# --------------------------------------------------------------------------------------
# Main
# --------------------------------------------------------------------------------------
if __name__ == "__main__":
    B = 4
    enc_image_size = 4           # num_pixels = 16
    encoder_dim = 128
    attention_dim = 128
    embed_dim = 32
    decoder_dim = 128
    vocab_size = 256
    max_cap_len = 8

    key = jax.random.PRNGKey(0)
    k_params, k_enc, k_cap = jax.random.split(key, 3)

    params = make_params(k_params, vocab_size=vocab_size, embed_dim=embed_dim,
                         decoder_dim=decoder_dim, encoder_dim=encoder_dim,
                         attention_dim=attention_dim)

    encoder_out = jax.random.normal(k_enc, (B, enc_image_size, enc_image_size, encoder_dim),
                                    jnp.float32)
    encoded_captions = jax.random.randint(k_cap, (B, max_cap_len), 0, vocab_size, dtype=jnp.int32)
    caption_lengths = np.array([[5], [8], [3], [6]], dtype=np.int32)

    preds, caps, dec_lens, alphas, sort_ind = decoder_forward(
        params, encoder_out, encoded_captions, caption_lengths)
    jax.block_until_ready((preds, alphas, caps, sort_ind))

    num_pixels = enc_image_size * enc_image_size
    assert preds.shape == (B, max(dec_lens), vocab_size)
    assert alphas.shape == (B, max(dec_lens), num_pixels)
    assert bool(jnp.all(jnp.isfinite(preds))) and bool(jnp.all(jnp.isfinite(alphas)))
    print("KERNEL_OK")
</pallas_src>

<mosaic_0001>
module attributes {stable_mosaic.version = 11 : i64} {
  func.func @_decoder_kernel(%arg0: i32, %arg1: memref<8xi32, #tpu.memory_space<smem>>, %arg2: memref<4x16x128xbf16, #tpu.memory_space<vmem>>, %arg3: memref<4x4x512xf32, #tpu.memory_space<vmem>>, %arg4: memref<128x128xbf16, #tpu.memory_space<vmem>>, %arg5: memref<1x128xf32, #tpu.memory_space<vmem>>, %arg6: memref<128x128xbf16, #tpu.memory_space<vmem>>, %arg7: memref<1x128xf32, #tpu.memory_space<vmem>>, %arg8: memref<128x128xbf16, #tpu.memory_space<vmem>>, %arg9: memref<1x128xf32, #tpu.memory_space<vmem>>, %arg10: memref<128x768xbf16, #tpu.memory_space<vmem>>, %arg11: memref<1x768xf32, #tpu.memory_space<vmem>>, %arg12: memref<1x128xf32, #tpu.memory_space<vmem>>, %arg13: memref<1xf32, #tpu.memory_space<smem>>, %arg14: memref<128x512xbf16, #tpu.memory_space<vmem>>, %arg15: memref<128x256xbf16, #tpu.memory_space<vmem>>, %arg16: memref<1x256xf32, #tpu.memory_space<vmem>>, %arg17: memref<4x4x256xf32, #tpu.memory_space<vmem>>, %arg18: memref<8x4x16xf32, #tpu.memory_space<vmem>>, %arg19: memref<4x128xf32, #tpu.memory_space<vmem>>, %arg20: memref<4x128xf32, #tpu.memory_space<vmem>>, %arg21: memref<4x16x128xf32, #tpu.memory_space<vmem>>) attributes {dimension_semantics = [#tpu.dimension_semantics<arbitrary>], iteration_bounds = array<i64: 2>, scalar_prefetch = 1 : i64, scratch_operands = 3 : i64, tpu.core_type = #tpu.core_type<tc>, window_params = [{pipeline_mode = #tpu.pipeline_mode<synchronous>, transform_indices = @transform_0, window_bounds = array<i64: 4, 16, 128>}, {transform_indices = @transform_1, window_bounds = array<i64: 4, 4, 512>}, {pipeline_mode = #tpu.pipeline_mode<synchronous>, transform_indices = @transform_2, window_bounds = array<i64: 128, 128>}, {pipeline_mode = #tpu.pipeline_mode<synchronous>, transform_indices = @transform_3, window_bounds = array<i64: 1, 128>}, {pipeline_mode = #tpu.pipeline_mode<synchronous>, transform_indices = @transform_4, window_bounds = array<i64: 128, 128>}, {pipeline_mode = #tpu.pipeline_mode<synchronous>, transform_indices = @transform_5, window_bounds = array<i64: 1, 128>}, {pipeline_mode = #tpu.pipeline_mode<synchronous>, transform_indices = @transform_6, window_bounds = array<i64: 128, 128>}, {pipeline_mode = #tpu.pipeline_mode<synchronous>, transform_indices = @transform_7, window_bounds = array<i64: 1, 128>}, {pipeline_mode = #tpu.pipeline_mode<synchronous>, transform_indices = @transform_8, window_bounds = array<i64: 128, 768>}, {pipeline_mode = #tpu.pipeline_mode<synchronous>, transform_indices = @transform_9, window_bounds = array<i64: 1, 768>}, {pipeline_mode = #tpu.pipeline_mode<synchronous>, transform_indices = @transform_10, window_bounds = array<i64: 1, 128>}, {transform_indices = @transform_11, window_bounds = array<i64: 1>}, {pipeline_mode = #tpu.pipeline_mode<synchronous>, transform_indices = @transform_12, window_bounds = array<i64: 128, 512>}, {pipeline_mode = #tpu.pipeline_mode<synchronous>, transform_indices = @transform_13, window_bounds = array<i64: 128, 256>}, {pipeline_mode = #tpu.pipeline_mode<synchronous>, transform_indices = @transform_14, window_bounds = array<i64: 1, 256>}, {transform_indices = @transform_15, window_bounds = array<i64: 4, 4, 256>}, {pipeline_mode = #tpu.pipeline_mode<synchronous>, transform_indices = @transform_16, window_bounds = array<i64: 8, 4, 16>}]} {
    %c0 = arith.constant 0 : index
    %c0_0 = arith.constant 0 : index
    %c0_1 = arith.constant 0 : index
    %0 = vector.load %arg2[%c0, %c0_0, %c0_1] : memref<4x16x128xbf16, #tpu.memory_space<vmem>>, vector<4x16x128xbf16>
    %c0_i32 = arith.constant 0 : i32
    %1 = arith.cmpi eq, %arg0, %c0_i32 : i32
    %2 = arith.extui %1 : i1 to i32
    %c0_i32_2 = arith.constant 0 : i32
    %3 = arith.cmpi ne, %2, %c0_i32_2 : i32
    scf.if %3 {
      %438 = arith.extf %0 : vector<4x16x128xbf16> to vector<4x16x128xf32>
      %cst_169 = arith.constant dense<0.000000e+00> : vector<4x128xf32>
      %439 = vector.multi_reduction <add>, %438, %cst_169 [1] : vector<4x16x128xf32> to vector<4x128xf32>
      %cst_170 = arith.constant 6.250000e-02 : f32
      %440 = vector.broadcast %cst_170 : f32 to vector<4x128xf32>
      %441 = arith.mulf %439, %440 : vector<4x128xf32>
      %442 = arith.truncf %441 : vector<4x128xf32> to vector<4x128xbf16>
      %c0_171 = arith.constant 0 : index
      %c0_172 = arith.constant 0 : index
      %443 = vector.load %arg4[%c0_171, %c0_172] : memref<128x128xbf16, #tpu.memory_space<vmem>>, vector<128x128xbf16>
      %cst_173 = arith.constant dense<0.000000e+00> : vector<4x128xf32>
      %444 = tpu.matmul %442, %443, %cst_173 {dimension_numbers = #tpu.dot_dimension_numbers<[1], [0], [0], [1], [0, 0, 1, 1], [], []>} : vector<4x128xbf16>, vector<128x128xbf16>, vector<4x128xf32> -> vector<4x128xf32>
      %c0_174 = arith.constant 0 : index
      %c0_175 = arith.constant 0 : index
      %445 = vector.load %arg5[%c0_174, %c0_175] : memref<1x128xf32, #tpu.memory_space<vmem>>, vector<1x128xf32>
      %446 = vector.broadcast %445 : vector<1x128xf32> to vector<4x128xf32>
      %447 = arith.addf %444, %446 : vector<4x128xf32>
      %c0_176 = arith.constant 0 : index
      %c0_177 = arith.constant 0 : index
      %448 = vector.load %arg19[%c0_176, %c0_177] : memref<4x128xf32, #tpu.memory_space<vmem>>, vector<4x128xf32>
      tpu.vector_store %arg19[%c0_176, %c0_177], %447 {strides = array<i32>} : memref<4x128xf32, #tpu.memory_space<vmem>>, vector<4x128xf32>,
      %c0_178 = arith.constant 0 : index
      %c0_179 = arith.constant 0 : index
      %449 = vector.load %arg6[%c0_178, %c0_179] : memref<128x128xbf16, #tpu.memory_space<vmem>>, vector<128x128xbf16>
      %cst_180 = arith.constant dense<0.000000e+00> : vector<4x128xf32>
      %450 = tpu.matmul %442, %449, %cst_180 {dimension_numbers = #tpu.dot_dimension_numbers<[1], [0], [0], [1], [0, 0, 1, 1], [], []>} : vector<4x128xbf16>, vector<128x128xbf16>, vector<4x128xf32> -> vector<4x128xf32>
      %c0_181 = arith.constant 0 : index
      %c0_182 = arith.constant 0 : index
      %451 = vector.load %arg7[%c0_181, %c0_182] : memref<1x128xf32, #tpu.memory_space<vmem>>, vector<1x128xf32>
      %452 = vector.broadcast %451 : vector<1x128xf32> to vector<4x128xf32>
      %453 = arith.addf %450, %452 : vector<4x128xf32>
      %c0_183 = arith.constant 0 : index
      %c0_184 = arith.constant 0 : index
      %454 = vector.load %arg20[%c0_183, %c0_184] : memref<4x128xf32, #tpu.memory_space<vmem>>, vector<4x128xf32>
      tpu.vector_store %arg20[%c0_183, %c0_184], %453 {strides = array<i32>} : memref<4x128xf32, #tpu.memory_space<vmem>>, vector<4x128xf32>,
      %455 = vector.shape_cast %0 : vector<4x16x128xbf16> to vector<64x128xbf16>
      %c0_185 = arith.constant 0 : index
      %c0_186 = arith.constant 0 : index
      %456 = vector.load %arg8[%c0_185, %c0_186] : memref<128x128xbf16, #tpu.memory_space<vmem>>, vector<128x128xbf16>
      %cst_187 = arith.constant dense<0.000000e+00> : vector<64x128xf32>
      %457 = tpu.matmul %455, %456, %cst_187 {dimension_numbers = #tpu.dot_dimension_numbers<[1], [0], [0], [1], [0, 0, 1, 1], [], []>} : vector<64x128xbf16>, vector<128x128xbf16>, vector<64x128xf32> -> vector<64x128xf32>
      %c0_188 = arith.constant 0 : index
      %c0_189 = arith.constant 0 : index
      %458 = vector.load %arg9[%c0_188, %c0_189] : memref<1x128xf32, #tpu.memory_space<vmem>>, vector<1x128xf32>
      %459 = vector.broadcast %458 : vector<1x128xf32> to vector<64x128xf32>
      %460 = arith.addf %457, %459 : vector<64x128xf32>
      %461 = vector.shape_cast %460 : vector<64x128xf32> to vector<4x16x128xf32>
      %c0_190 = arith.constant 0 : index
      %c0_191 = arith.constant 0 : index
      %c0_192 = arith.constant 0 : index
      %462 = vector.load %arg21[%c0_190, %c0_191, %c0_192] : memref<4x16x128xf32, #tpu.memory_space<vmem>>, vector<4x16x128xf32>
      tpu.vector_store %arg21[%c0_190, %c0_191, %c0_192], %461 {strides = array<i32>} : memref<4x16x128xf32, #tpu.memory_space<vmem>>, vector<4x16x128xf32>,
    } else {
    }
    %4 = arith.extf %0 : vector<4x16x128xbf16> to vector<4x16x128xf32>
    %c0_3 = arith.constant 0 : index
    %c0_4 = arith.constant 0 : index
    %c0_5 = arith.constant 0 : index
    %5 = vector.load %arg21[%c0_3, %c0_4, %c0_5] : memref<4x16x128xf32, #tpu.memory_space<vmem>>, vector<4x16x128xf32>
    %c0_6 = arith.constant 0 : index
    %c0_7 = arith.constant 0 : index
    %6 = vector.load %arg12[%c0_6, %c0_7] : memref<1x128xf32, #tpu.memory_space<vmem>>, vector<1x128xf32>
    %7 = vector.shape_cast %6 : vector<1x128xf32> to vector<1x1x128xf32>
    %c0_8 = arith.constant 0 : index
    %8 = memref.load %arg13[%c0_8] : memref<1xf32, #tpu.memory_space<smem>>
    %9 = tpu.iota {dimensions = array<i32: 0>} : vector<4x1xi32>
    %c4_i32 = arith.constant 4 : i32
    %10 = arith.muli %arg0, %c4_i32 : i32
    %c0_i32_9 = arith.constant 0 : i32
    %11 = arith.addi %10, %c0_i32_9 : i32
    %c0_10 = arith.constant 0 : index
    %c0_11 = arith.constant 0 : index
    %12 = vector.load %arg19[%c0_10, %c0_11] : memref<4x128xf32, #tpu.memory_space<vmem>>, vector<4x128xf32>
    %c0_12 = arith.constant 0 : index
    %c0_13 = arith.constant 0 : index
    %13 = vector.load %arg20[%c0_12, %c0_13] : memref<4x128xf32, #tpu.memory_space<vmem>>, vector<4x128xf32>
    %14 = arith.truncf %12 : vector<4x128xf32> to vector<4x128xbf16>
    %c0_14 = arith.constant 0 : index
    %c0_15 = arith.constant 0 : index
    %15 = vector.load %arg10[%c0_14, %c0_15] : memref<128x768xbf16, #tpu.memory_space<vmem>>, vector<128x768xbf16>
    %cst = arith.constant dense<0.000000e+00> : vector<4x768xf32>
    %16 = tpu.matmul %14, %15, %cst {dimension_numbers = #tpu.dot_dimension_numbers<[1], [0], [0], [1], [0, 0, 1, 1], [], []>} : vector<4x128xbf16>, vector<128x768xbf16>, vector<4x768xf32> -> vector<4x768xf32>
    %c0_16 = arith.constant 0 : index
    %c0_17 = arith.constant 0 : index
    %17 = vector.load %arg11[%c0_16, %c0_17] : memref<1x768xf32, #tpu.memory_space<vmem>>, vector<1x768xf32>
    %18 = vector.broadcast %17 : vector<1x768xf32> to vector<4x768xf32>
    %19 = arith.addf %16, %18 : vector<4x768xf32>
    %20 = vector.extract_strided_slice %19 {offsets = [0, 0], sizes = [4, 128], strides = [1, 1]} : vector<4x768xf32> to vector<4x128xf32>
    %21 = vector.extract_strided_slice %19 {offsets = [0, 128], sizes = [4, 128], strides = [1, 1]} : vector<4x768xf32> to vector<4x128xf32>
    %22 = vector.extract_strided_slice %19 {offsets = [0, 256], sizes = [4, 512], strides = [1, 1]} : vector<4x768xf32> to vector<4x512xf32>
    %23 = vector.shape_cast %20 : vector<4x128xf32> to vector<4x1x128xf32>
    %24 = vector.broadcast %23 : vector<4x1x128xf32> to vector<4x16x128xf32>
    %25 = arith.addf %5, %24 : vector<4x16x128xf32>
    %cst_18 = arith.constant 0.000000e+00 : f32
    %26 = vector.broadcast %cst_18 : f32 to vector<4x16x128xf32>
    %27 = arith.maximumf %25, %26 : vector<4x16x128xf32>
    %28 = vector.broadcast %7 : vector<1x1x128xf32> to vector<4x16x128xf32>
    %29 = arith.mulf %27, %28 : vector<4x16x128xf32>
    %cst_19 = arith.constant dense<0.000000e+00> : vector<4x16xf32>
    %30 = vector.multi_reduction <add>, %29, %cst_19 [2] : vector<4x16x128xf32> to vector<4x16xf32>
    %31 = vector.broadcast %8 : f32 to vector<4x16xf32>
    %32 = arith.addf %30, %31 : vector<4x16xf32>
    %cst_20 = arith.constant dense<0xFF800000> : vector<4xf32>
    %33 = vector.multi_reduction <maximumf>, %32, %cst_20 [1] : vector<4x16xf32> to vector<4xf32>
    %34 = vector.shape_cast %33 : vector<4xf32> to vector<4x1xf32>
    %35 = vector.broadcast %34 : vector<4x1xf32> to vector<4x16xf32>
    %36 = arith.subf %32, %35 : vector<4x16xf32>
    %37 = math.exp %36 : vector<4x16xf32>
    %cst_21 = arith.constant dense<0.000000e+00> : vector<4xf32>
    %38 = vector.multi_reduction <add>, %37, %cst_21 [1] : vector<4x16xf32> to vector<4xf32>
    %39 = vector.shape_cast %38 : vector<4xf32> to vector<4x1xf32>
    %40 = vector.broadcast %39 : vector<4x1xf32> to vector<4x16xf32>
    %41 = arith.divf %37, %40 : vector<4x16xf32>
    %42 = vector.shape_cast %41 : vector<4x16xf32> to vector<4x16x1xf32>
    %43 = vector.broadcast %42 : vector<4x16x1xf32> to vector<4x16x128xf32>
    %44 = arith.mulf %4, %43 : vector<4x16x128xf32>
    %cst_22 = arith.constant dense<0.000000e+00> : vector<4x128xf32>
    %45 = vector.multi_reduction <add>, %44, %cst_22 [1] : vector<4x16x128xf32> to vector<4x128xf32>
    %46 = arith.negf %21 : vector<4x128xf32>
    %47 = math.exp %46 : vector<4x128xf32>
    %cst_23 = arith.constant 1.000000e+00 : f32
    %48 = vector.broadcast %cst_23 : f32 to vector<4x128xf32>
    %49 = arith.addf %48, %47 : vector<4x128xf32>
    %50 = arith.divf %48, %49 : vector<4x128xf32>
    %51 = arith.mulf %50, %45 : vector<4x128xf32>
    %c0_24 = arith.constant 0 : index
    %c0_25 = arith.constant 0 : index
    %c0_26 = arith.constant 0 : index
    %52 = vector.load %arg3[%c0_24, %c0_25, %c0_26] : memref<4x4x512xf32, #tpu.memory_space<vmem>>, vector<1x4x512xf32>
    %53 = vector.shape_cast %52 : vector<1x4x512xf32> to vector<4x512xf32>
    %54 = arith.truncf %51 : vector<4x128xf32> to vector<4x128xbf16>
    %c0_27 = arith.constant 0 : index
    %c0_28 = arith.constant 0 : index
    %55 = vector.load %arg14[%c0_27, %c0_28] : memref<128x512xbf16, #tpu.memory_space<vmem>>, vector<128x512xbf16>
    %cst_29 = arith.constant dense<0.000000e+00> : vector<4x512xf32>
    %56 = tpu.matmul %54, %55, %cst_29 {dimension_numbers = #tpu.dot_dimension_numbers<[1], [0], [0], [1], [0, 0, 1, 1], [], []>} : vector<4x128xbf16>, vector<128x512xbf16>, vector<4x512xf32> -> vector<4x512xf32>
    %57 = arith.addf %53, %56 : vector<4x512xf32>
    %58 = arith.addf %57, %22 : vector<4x512xf32>
    %59 = vector.extract_strided_slice %58 {offsets = [0, 0], sizes = [4, 128], strides = [1, 1]} : vector<4x512xf32> to vector<4x128xf32>
    %60 = arith.negf %59 : vector<4x128xf32>
    %61 = math.exp %60 : vector<4x128xf32>
    %cst_30 = arith.constant 1.000000e+00 : f32
    %62 = vector.broadcast %cst_30 : f32 to vector<4x128xf32>
    %63 = arith.addf %62, %61 : vector<4x128xf32>
    %64 = arith.divf %62, %63 : vector<4x128xf32>
    %65 = vector.extract_strided_slice %58 {offsets = [0, 128], sizes = [4, 128], strides = [1, 1]} : vector<4x512xf32> to vector<4x128xf32>
    %66 = arith.negf %65 : vector<4x128xf32>
    %67 = math.exp %66 : vector<4x128xf32>
    %cst_31 = arith.constant 1.000000e+00 : f32
    %68 = vector.broadcast %cst_31 : f32 to vector<4x128xf32>
    %69 = arith.addf %68, %67 : vector<4x128xf32>
    %70 = arith.divf %68, %69 : vector<4x128xf32>
    %71 = vector.extract_strided_slice %58 {offsets = [0, 256], sizes = [4, 128], strides = [1, 1]} : vector<4x512xf32> to vector<4x128xf32>
    %72 = math.tanh %71 : vector<4x128xf32>
    %73 = vector.extract_strided_slice %58 {offsets = [0, 384], sizes = [4, 128], strides = [1, 1]} : vector<4x512xf32> to vector<4x128xf32>
    %74 = arith.negf %73 : vector<4x128xf32>
    %75 = math.exp %74 : vector<4x128xf32>
    %cst_32 = arith.constant 1.000000e+00 : f32
    %76 = vector.broadcast %cst_32 : f32 to vector<4x128xf32>
    %77 = arith.addf %76, %75 : vector<4x128xf32>
    %78 = arith.divf %76, %77 : vector<4x128xf32>
    %79 = arith.mulf %70, %13 : vector<4x128xf32>
    %80 = arith.mulf %64, %72 : vector<4x128xf32>
    %81 = arith.addf %79, %80 : vector<4x128xf32>
    %82 = math.tanh %81 : vector<4x128xf32>
    %83 = arith.mulf %78, %82 : vector<4x128xf32>
    %84 = arith.truncf %83 : vector<4x128xf32> to vector<4x128xbf16>
    %c0_33 = arith.constant 0 : index
    %c0_34 = arith.constant 0 : index
    %85 = vector.load %arg15[%c0_33, %c0_34] : memref<128x256xbf16, #tpu.memory_space<vmem>>, vector<128x256xbf16>
    %cst_35 = arith.constant dense<0.000000e+00> : vector<4x256xf32>
    %86 = tpu.matmul %84, %85, %cst_35 {dimension_numbers = #tpu.dot_dimension_numbers<[1], [0], [0], [1], [0, 0, 1, 1], [], []>} : vector<4x128xbf16>, vector<128x256xbf16>, vector<4x256xf32> -> vector<4x256xf32>
    %c0_36 = arith.constant 0 : index
    %c0_37 = arith.constant 0 : index
    %87 = vector.load %arg16[%c0_36, %c0_37] : memref<1x256xf32, #tpu.memory_space<vmem>>, vector<1x256xf32>
    %88 = vector.broadcast %87 : vector<1x256xf32> to vector<4x256xf32>
    %89 = arith.addf %86, %88 : vector<4x256xf32>
    %90 = arith.index_cast %11 : i32 to index
    %91 = memref.load %arg1[%90] : memref<8xi32, #tpu.memory_space<smem>>
    %92 = vector.broadcast %91 : i32 to vector<4x1xi32>
    %93 = arith.cmpi slt, %9, %92 : vector<4x1xi32>
    %94 = vector.shape_cast %93 : vector<4x1xi1> to vector<4x1xi1>
    %95 = vector.broadcast %94 : vector<4x1xi1> to vector<4x128xi1>
    %96 = arith.select %95, %83, %12 : vector<4x128xi1>, vector<4x128xf32>
    %c0_38 = arith.constant 0 : index
    %c0_39 = arith.constant 0 : index
    %97 = vector.load %arg19[%c0_38, %c0_39] : memref<4x128xf32, #tpu.memory_space<vmem>>, vector<4x128xf32>
    tpu.vector_store %arg19[%c0_38, %c0_39], %96 {strides = array<i32>} : memref<4x128xf32, #tpu.memory_space<vmem>>, vector<4x128xf32>,
    %98 = vector.shape_cast %93 : vector<4x1xi1> to vector<4x1xi1>
    %99 = vector.broadcast %98 : vector<4x1xi1> to vector<4x128xi1>
    %100 = arith.select %99, %81, %13 : vector<4x128xi1>, vector<4x128xf32>
    %c0_40 = arith.constant 0 : index
    %c0_41 = arith.constant 0 : index
    %101 = vector.load %arg20[%c0_40, %c0_41] : memref<4x128xf32, #tpu.memory_space<vmem>>, vector<4x128xf32>
    tpu.vector_store %arg20[%c0_40, %c0_41], %100 {strides = array<i32>} : memref<4x128xf32, #tpu.memory_space<vmem>>, vector<4x128xf32>,
    %cst_42 = arith.constant 0.000000e+00 : f32
    %102 = vector.broadcast %cst_42 : f32 to vector<4x256xf32>
    %103 = vector.shape_cast %93 : vector<4x1xi1> to vector<4x1xi1>
    %104 = vector.broadcast %103 : vector<4x1xi1> to vector<4x256xi1>
    %105 = arith.select %104, %89, %102 : vector<4x256xi1>, vector<4x256xf32>
    %c0_43 = arith.constant 0 : index
    %c0_44 = arith.constant 0 : index
    %c0_45 = arith.constant 0 : index
    %106 = vector.load %arg17[%c0_43, %c0_44, %c0_45] : memref<4x4x256xf32, #tpu.memory_space<vmem>>, vector<1x4x256xf32>
    %107 = vector.shape_cast %106 : vector<1x4x256xf32> to vector<4x256xf32>
    %108 = vector.shape_cast %105 : vector<4x256xf32> to vector<1x4x256xf32>
    tpu.vector_store %arg17[%c0_43, %c0_44, %c0_45], %108 {strides = array<i32>} : memref<4x4x256xf32, #tpu.memory_space<vmem>>, vector<1x4x256xf32>,
    %cst_46 = arith.constant 0.000000e+00 : f32
    %109 = vector.broadcast %cst_46 : f32 to vector<4x16xf32>
    %110 = vector.shape_cast %93 : vector<4x1xi1> to vector<4x1xi1>
    %111 = vector.broadcast %110 : vector<4x1xi1> to vector<4x16xi1>
    %112 = arith.select %111, %41, %109 : vector<4x16xi1>, vector<4x16xf32>
    %113 = arith.index_cast %11 : i32 to index
    %c0_47 = arith.constant 0 : index
    %c0_48 = arith.constant 0 : index
    %114 = vector.load %arg18[%113, %c0_47, %c0_48] : memref<8x4x16xf32, #tpu.memory_space<vmem>>, vector<1x4x16xf32>
    %115 = vector.shape_cast %114 : vector<1x4x16xf32> to vector<4x16xf32>
    %116 = vector.shape_cast %112 : vector<4x16xf32> to vector<1x4x16xf32>
    tpu.vector_store %arg18[%113, %c0_47, %c0_48], %116 {strides = array<i32>} : memref<8x4x16xf32, #tpu.memory_space<vmem>>, vector<1x4x16xf32>,
    %c4_i32_49 = arith.constant 4 : i32
    %117 = arith.muli %arg0, %c4_i32_49 : i32
    %c1_i32 = arith.constant 1 : i32
    %118 = arith.addi %117, %c1_i32 : i32
    %c0_50 = arith.constant 0 : index
    %c0_51 = arith.constant 0 : index
    %119 = vector.load %arg19[%c0_50, %c0_51] : memref<4x128xf32, #tpu.memory_space<vmem>>, vector<4x128xf32>
    %c0_52 = arith.constant 0 : index
    %c0_53 = arith.constant 0 : index
    %120 = vector.load %arg20[%c0_52, %c0_53] : memref<4x128xf32, #tpu.memory_space<vmem>>, vector<4x128xf32>
    %121 = arith.truncf %119 : vector<4x128xf32> to vector<4x128xbf16>
    %c0_54 = arith.constant 0 : index
    %c0_55 = arith.constant 0 : index
    %122 = vector.load %arg10[%c0_54, %c0_55] : memref<128x768xbf16, #tpu.memory_space<vmem>>, vector<128x768xbf16>
    %cst_56 = arith.constant dense<0.000000e+00> : vector<4x768xf32>
    %123 = tpu.matmul %121, %122, %cst_56 {dimension_numbers = #tpu.dot_dimension_numbers<[1], [0], [0], [1], [0, 0, 1, 1], [], []>} : vector<4x128xbf16>, vector<128x768xbf16>, vector<4x768xf32> -> vector<4x768xf32>
    %c0_57 = arith.constant 0 : index
    %c0_58 = arith.constant 0 : index
    %124 = vector.load %arg11[%c0_57, %c0_58] : memref<1x768xf32, #tpu.memory_space<vmem>>, vector<1x768xf32>
    %125 = vector.broadcast %124 : vector<1x768xf32> to vector<4x768xf32>
    %126 = arith.addf %123, %125 : vector<4x768xf32>
    %127 = vector.extract_strided_slice %126 {offsets = [0, 0], sizes = [4, 128], strides = [1, 1]} : vector<4x768xf32> to vector<4x128xf32>
    %128 = vector.extract_strided_slice %126 {offsets = [0, 128], sizes = [4, 128], strides = [1, 1]} : vector<4x768xf32> to vector<4x128xf32>
    %129 = vector.extract_strided_slice %126 {offsets = [0, 256], sizes = [4, 512], strides = [1, 1]} : vector<4x768xf32> to vector<4x512xf32>
    %130 = vector.shape_cast %127 : vector<4x128xf32> to vector<4x1x128xf32>
    %131 = vector.broadcast %130 : vector<4x1x128xf32> to vector<4x16x128xf32>
    %132 = arith.addf %5, %131 : vector<4x16x128xf32>
    %cst_59 = arith.constant 0.000000e+00 : f32
    %133 = vector.broadcast %cst_59 : f32 to vector<4x16x128xf32>
    %134 = arith.maximumf %132, %133 : vector<4x16x128xf32>
    %135 = vector.broadcast %7 : vector<1x1x128xf32> to vector<4x16x128xf32>
    %136 = arith.mulf %134, %135 : vector<4x16x128xf32>
    %cst_60 = arith.constant dense<0.000000e+00> : vector<4x16xf32>
    %137 = vector.multi_reduction <add>, %136, %cst_60 [2] : vector<4x16x128xf32> to vector<4x16xf32>
    %138 = vector.broadcast %8 : f32 to vector<4x16xf32>
    %139 = arith.addf %137, %138 : vector<4x16xf32>
    %cst_61 = arith.constant dense<0xFF800000> : vector<4xf32>
    %140 = vector.multi_reduction <maximumf>, %139, %cst_61 [1] : vector<4x16xf32> to vector<4xf32>
    %141 = vector.shape_cast %140 : vector<4xf32> to vector<4x1xf32>
    %142 = vector.broadcast %141 : vector<4x1xf32> to vector<4x16xf32>
    %143 = arith.subf %139, %142 : vector<4x16xf32>
    %144 = math.exp %143 : vector<4x16xf32>
    %cst_62 = arith.constant dense<0.000000e+00> : vector<4xf32>
    %145 = vector.multi_reduction <add>, %144, %cst_62 [1] : vector<4x16xf32> to vector<4xf32>
    %146 = vector.shape_cast %145 : vector<4xf32> to vector<4x1xf32>
    %147 = vector.broadcast %146 : vector<4x1xf32> to vector<4x16xf32>
    %148 = arith.divf %144, %147 : vector<4x16xf32>
    %149 = vector.shape_cast %148 : vector<4x16xf32> to vector<4x16x1xf32>
    %150 = vector.broadcast %149 : vector<4x16x1xf32> to vector<4x16x128xf32>
    %151 = arith.mulf %4, %150 : vector<4x16x128xf32>
    %cst_63 = arith.constant dense<0.000000e+00> : vector<4x128xf32>
    %152 = vector.multi_reduction <add>, %151, %cst_63 [1] : vector<4x16x128xf32> to vector<4x128xf32>
    %153 = arith.negf %128 : vector<4x128xf32>
    %154 = math.exp %153 : vector<4x128xf32>
    %cst_64 = arith.constant 1.000000e+00 : f32
    %155 = vector.broadcast %cst_64 : f32 to vector<4x128xf32>
    %156 = arith.addf %155, %154 : vector<4x128xf32>
    %157 = arith.divf %155, %156 : vector<4x128xf32>
    %158 = arith.mulf %157, %152 : vector<4x128xf32>
    %c1 = arith.constant 1 : index
    %c0_65 = arith.constant 0 : index
    %c0_66 = arith.constant 0 : index
    %159 = vector.load %arg3[%c1, %c0_65, %c0_66] : memref<4x4x512xf32, #tpu.memory_space<vmem>>, vector<1x4x512xf32>
    %160 = vector.shape_cast %159 : vector<1x4x512xf32> to vector<4x512xf32>
    %161 = arith.truncf %158 : vector<4x128xf32> to vector<4x128xbf16>
    %c0_67 = arith.constant 0 : index
    %c0_68 = arith.constant 0 : index
    %162 = vector.load %arg14[%c0_67, %c0_68] : memref<128x512xbf16, #tpu.memory_space<vmem>>, vector<128x512xbf16>
    %cst_69 = arith.constant dense<0.000000e+00> : vector<4x512xf32>
    %163 = tpu.matmul %161, %162, %cst_69 {dimension_numbers = #tpu.dot_dimension_numbers<[1], [0], [0], [1], [0, 0, 1, 1], [], []>} : vector<4x128xbf16>, vector<128x512xbf16>, vector<4x512xf32> -> vector<4x512xf32>
    %164 = arith.addf %160, %163 : vector<4x512xf32>
    %165 = arith.addf %164, %129 : vector<4x512xf32>
    %166 = vector.extract_strided_slice %165 {offsets = [0, 0], sizes = [4, 128], strides = [1, 1]} : vector<4x512xf32> to vector<4x128xf32>
    %167 = arith.negf %166 : vector<4x128xf32>
    %168 = math.exp %167 : vector<4x128xf32>
    %cst_70 = arith.constant 1.000000e+00 : f32
    %169 = vector.broadcast %cst_70 : f32 to vector<4x128xf32>
    %170 = arith.addf %169, %168 : vector<4x128xf32>
    %171 = arith.divf %169, %170 : vector<4x128xf32>
    %172 = vector.extract_strided_slice %165 {offsets = [0, 128], sizes = [4, 128], strides = [1, 1]} : vector<4x512xf32> to vector<4x128xf32>
    %173 = arith.negf %172 : vector<4x128xf32>
    %174 = math.exp %173 : vector<4x128xf32>
    %cst_71 = arith.constant 1.000000e+00 : f32
    %175 = vector.broadcast %cst_71 : f32 to vector<4x128xf32>
    %176 = arith.addf %175, %174 : vector<4x128xf32>
    %177 = arith.divf %175, %176 : vector<4x128xf32>
    %178 = vector.extract_strided_slice %165 {offsets = [0, 256], sizes = [4, 128], strides = [1, 1]} : vector<4x512xf32> to vector<4x128xf32>
    %179 = math.tanh %178 : vector<4x128xf32>
    %180 = vector.extract_strided_slice %165 {offsets = [0, 384], sizes = [4, 128], strides = [1, 1]} : vector<4x512xf32> to vector<4x128xf32>
    %181 = arith.negf %180 : vector<4x128xf32>
    %182 = math.exp %181 : vector<4x128xf32>
    %cst_72 = arith.constant 1.000000e+00 : f32
    %183 = vector.broadcast %cst_72 : f32 to vector<4x128xf32>
    %184 = arith.addf %183, %182 : vector<4x128xf32>
    %185 = arith.divf %183, %184 : vector<4x128xf32>
    %186 = arith.mulf %177, %120 : vector<4x128xf32>
    %187 = arith.mulf %171, %179 : vector<4x128xf32>
    %188 = arith.addf %186, %187 : vector<4x128xf32>
    %189 = math.tanh %188 : vector<4x128xf32>
    %190 = arith.mulf %185, %189 : vector<4x128xf32>
    %191 = arith.truncf %190 : vector<4x128xf32> to vector<4x128xbf16>
    %c0_73 = arith.constant 0 : index
    %c0_74 = arith.constant 0 : index
    %192 = vector.load %arg15[%c0_73, %c0_74] : memref<128x256xbf16, #tpu.memory_space<vmem>>, vector<128x256xbf16>
    %cst_75 = arith.constant dense<0.000000e+00> : vector<4x256xf32>
    %193 = tpu.matmul %191, %192, %cst_75 {dimension_numbers = #tpu.dot_dimension_numbers<[1], [0], [0], [1], [0, 0, 1, 1], [], []>} : vector<4x128xbf16>, vector<128x256xbf16>, vector<4x256xf32> -> vector<4x256xf32>
    %c0_76 = arith.constant 0 : index
    %c0_77 = arith.constant 0 : index
    %194 = vector.load %arg16[%c0_76, %c0_77] : memref<1x256xf32, #tpu.memory_space<vmem>>, vector<1x256xf32>
    %195 = vector.broadcast %194 : vector<1x256xf32> to vector<4x256xf32>
    %196 = arith.addf %193, %195 : vector<4x256xf32>
    %197 = arith.index_cast %118 : i32 to index
    %198 = memref.load %arg1[%197] : memref<8xi32, #tpu.memory_space<smem>>
    %199 = vector.broadcast %198 : i32 to vector<4x1xi32>
    %200 = arith.cmpi slt, %9, %199 : vector<4x1xi32>
    %201 = vector.shape_cast %200 : vector<4x1xi1> to vector<4x1xi1>
    %202 = vector.broadcast %201 : vector<4x1xi1> to vector<4x128xi1>
    %203 = arith.select %202, %190, %119 : vector<4x128xi1>, vector<4x128xf32>
    %c0_78 = arith.constant 0 : index
    %c0_79 = arith.constant 0 : index
    %204 = vector.load %arg19[%c0_78, %c0_79] : memref<4x128xf32, #tpu.memory_space<vmem>>, vector<4x128xf32>
    tpu.vector_store %arg19[%c0_78, %c0_79], %203 {strides = array<i32>} : memref<4x128xf32, #tpu.memory_space<vmem>>, vector<4x128xf32>,
    %205 = vector.shape_cast %200 : vector<4x1xi1> to vector<4x1xi1>
    %206 = vector.broadcast %205 : vector<4x1xi1> to vector<4x128xi1>
    %207 = arith.select %206, %188, %120 : vector<4x128xi1>, vector<4x128xf32>
    %c0_80 = arith.constant 0 : index
    %c0_81 = arith.constant 0 : index
    %208 = vector.load %arg20[%c0_80, %c0_81] : memref<4x128xf32, #tpu.memory_space<vmem>>, vector<4x128xf32>
    tpu.vector_store %arg20[%c0_80, %c0_81], %207 {strides = array<i32>} : memref<4x128xf32, #tpu.memory_space<vmem>>, vector<4x128xf32>,
    %cst_82 = arith.constant 0.000000e+00 : f32
    %209 = vector.broadcast %cst_82 : f32 to vector<4x256xf32>
    %210 = vector.shape_cast %200 : vector<4x1xi1> to vector<4x1xi1>
    %211 = vector.broadcast %210 : vector<4x1xi1> to vector<4x256xi1>
    %212 = arith.select %211, %196, %209 : vector<4x256xi1>, vector<4x256xf32>
    %c1_83 = arith.constant 1 : index
    %c0_84 = arith.constant 0 : index
    %c0_85 = arith.constant 0 : index
    %213 = vector.load %arg17[%c1_83, %c0_84, %c0_85] : memref<4x4x256xf32, #tpu.memory_space<vmem>>, vector<1x4x256xf32>
    %214 = vector.shape_cast %213 : vector<1x4x256xf32> to vector<4x256xf32>
    %215 = vector.shape_cast %212 : vector<4x256xf32> to vector<1x4x256xf32>
    tpu.vector_store %arg17[%c1_83, %c0_84, %c0_85], %215 {strides = array<i32>} : memref<4x4x256xf32, #tpu.memory_space<vmem>>, vector<1x4x256xf32>,
    %cst_86 = arith.constant 0.000000e+00 : f32
    %216 = vector.broadcast %cst_86 : f32 to vector<4x16xf32>
    %217 = vector.shape_cast %200 : vector<4x1xi1> to vector<4x1xi1>
    %218 = vector.broadcast %217 : vector<4x1xi1> to vector<4x16xi1>
    %219 = arith.select %218, %148, %216 : vector<4x16xi1>, vector<4x16xf32>
    %220 = arith.index_cast %118 : i32 to index
    %c0_87 = arith.constant 0 : index
    %c0_88 = arith.constant 0 : index
    %221 = vector.load %arg18[%220, %c0_87, %c0_88] : memref<8x4x16xf32, #tpu.memory_space<vmem>>, vector<1x4x16xf32>
    %222 = vector.shape_cast %221 : vector<1x4x16xf32> to vector<4x16xf32>
    %223 = vector.shape_cast %219 : vector<4x16xf32> to vector<1x4x16xf32>
    tpu.vector_store %arg18[%220, %c0_87, %c0_88], %223 {strides = array<i32>} : memref<8x4x16xf32, #tpu.memory_space<vmem>>, vector<1x4x16xf32>,
    %c4_i32_89 = arith.constant 4 : i32
    %224 = arith.muli %arg0, %c4_i32_89 : i32
    %c2_i32 = arith.constant 2 : i32
    %225 = arith.addi %224, %c2_i32 : i32
    %c0_90 = arith.constant 0 : index
    %c0_91 = arith.constant 0 : index
    %226 = vector.load %arg19[%c0_90, %c0_91] : memref<4x128xf32, #tpu.memory_space<vmem>>, vector<4x128xf32>
    %c0_92 = arith.constant 0 : index
    %c0_93 = arith.constant 0 : index
    %227 = vector.load %arg20[%c0_92, %c0_93] : memref<4x128xf32, #tpu.memory_space<vmem>>, vector<4x128xf32>
    %228 = arith.truncf %226 : vector<4x128xf32> to vector<4x128xbf16>
    %c0_94 = arith.constant 0 : index
    %c0_95 = arith.constant 0 : index
    %229 = vector.load %arg10[%c0_94, %c0_95] : memref<128x768xbf16, #tpu.memory_space<vmem>>, vector<128x768xbf16>
    %cst_96 = arith.constant dense<0.000000e+00> : vector<4x768xf32>
    %230 = tpu.matmul %228, %229, %cst_96 {dimension_numbers = #tpu.dot_dimension_numbers<[1], [0], [0], [1], [0, 0, 1, 1], [], []>} : vector<4x128xbf16>, vector<128x768xbf16>, vector<4x768xf32> -> vector<4x768xf32>
    %c0_97 = arith.constant 0 : index
    %c0_98 = arith.constant 0 : index
    %231 = vector.load %arg11[%c0_97, %c0_98] : memref<1x768xf32, #tpu.memory_space<vmem>>, vector<1x768xf32>
    %232 = vector.broadcast %231 : vector<1x768xf32> to vector<4x768xf32>
    %233 = arith.addf %230, %232 : vector<4x768xf32>
    %234 = vector.extract_strided_slice %233 {offsets = [0, 0], sizes = [4, 128], strides = [1, 1]} : vector<4x768xf32> to vector<4x128xf32>
    %235 = vector.extract_strided_slice %233 {offsets = [0, 128], sizes = [4, 128], strides = [1, 1]} : vector<4x768xf32> to vector<4x128xf32>
    %236 = vector.extract_strided_slice %233 {offsets = [0, 256], sizes = [4, 512], strides = [1, 1]} : vector<4x768xf32> to vector<4x512xf32>
    %237 = vector.shape_cast %234 : vector<4x128xf32> to vector<4x1x128xf32>
    %238 = vector.broadcast %237 : vector<4x1x128xf32> to vector<4x16x128xf32>
    %239 = arith.addf %5, %238 : vector<4x16x128xf32>
    %cst_99 = arith.constant 0.000000e+00 : f32
    %240 = vector.broadcast %cst_99 : f32 to vector<4x16x128xf32>
    %241 = arith.maximumf %239, %240 : vector<4x16x128xf32>
    %242 = vector.broadcast %7 : vector<1x1x128xf32> to vector<4x16x128xf32>
    %243 = arith.mulf %241, %242 : vector<4x16x128xf32>
    %cst_100 = arith.constant dense<0.000000e+00> : vector<4x16xf32>
    %244 = vector.multi_reduction <add>, %243, %cst_100 [2] : vector<4x16x128xf32> to vector<4x16xf32>
    %245 = vector.broadcast %8 : f32 to vector<4x16xf32>
    %246 = arith.addf %244, %245 : vector<4x16xf32>
    %cst_101 = arith.constant dense<0xFF800000> : vector<4xf32>
    %247 = vector.multi_reduction <maximumf>, %246, %cst_101 [1] : vector<4x16xf32> to vector<4xf32>
    %248 = vector.shape_cast %247 : vector<4xf32> to vector<4x1xf32>
    %249 = vector.broadcast %248 : vector<4x1xf32> to vector<4x16xf32>
    %250 = arith.subf %246, %249 : vector<4x16xf32>
    %251 = math.exp %250 : vector<4x16xf32>
    %cst_102 = arith.constant dense<0.000000e+00> : vector<4xf32>
    %252 = vector.multi_reduction <add>, %251, %cst_102 [1] : vector<4x16xf32> to vector<4xf32>
    %253 = vector.shape_cast %252 : vector<4xf32> to vector<4x1xf32>
    %254 = vector.broadcast %253 : vector<4x1xf32> to vector<4x16xf32>
    %255 = arith.divf %251, %254 : vector<4x16xf32>
    %256 = vector.shape_cast %255 : vector<4x16xf32> to vector<4x16x1xf32>
    %257 = vector.broadcast %256 : vector<4x16x1xf32> to vector<4x16x128xf32>
    %258 = arith.mulf %4, %257 : vector<4x16x128xf32>
    %cst_103 = arith.constant dense<0.000000e+00> : vector<4x128xf32>
    %259 = vector.multi_reduction <add>, %258, %cst_103 [1] : vector<4x16x128xf32> to vector<4x128xf32>
    %260 = arith.negf %235 : vector<4x128xf32>
    %261 = math.exp %260 : vector<4x128xf32>
    %cst_104 = arith.constant 1.000000e+00 : f32
    %262 = vector.broadcast %cst_104 : f32 to vector<4x128xf32>
    %263 = arith.addf %262, %261 : vector<4x128xf32>
    %264 = arith.divf %262, %263 : vector<4x128xf32>
    %265 = arith.mulf %264, %259 : vector<4x128xf32>
    %c2 = arith.constant 2 : index
    %c0_105 = arith.constant 0 : index
    %c0_106 = arith.constant 0 : index
    %266 = vector.load %arg3[%c2, %c0_105, %c0_106] : memref<4x4x512xf32, #tpu.memory_space<vmem>>, vector<1x4x512xf32>
    %267 = vector.shape_cast %266 : vector<1x4x512xf32> to vector<4x512xf32>
    %268 = arith.truncf %265 : vector<4x128xf32> to vector<4x128xbf16>
    %c0_107 = arith.constant 0 : index
    %c0_108 = arith.constant 0 : index
    %269 = vector.load %arg14[%c0_107, %c0_108] : memref<128x512xbf16, #tpu.memory_space<vmem>>, vector<128x512xbf16>
    %cst_109 = arith.constant dense<0.000000e+00> : vector<4x512xf32>
    %270 = tpu.matmul %268, %269, %cst_109 {dimension_numbers = #tpu.dot_dimension_numbers<[1], [0], [0], [1], [0, 0, 1, 1], [], []>} : vector<4x128xbf16>, vector<128x512xbf16>, vector<4x512xf32> -> vector<4x512xf32>
    %271 = arith.addf %267, %270 : vector<4x512xf32>
    %272 = arith.addf %271, %236 : vector<4x512xf32>
    %273 = vector.extract_strided_slice %272 {offsets = [0, 0], sizes = [4, 128], strides = [1, 1]} : vector<4x512xf32> to vector<4x128xf32>
    %274 = arith.negf %273 : vector<4x128xf32>
    %275 = math.exp %274 : vector<4x128xf32>
    %cst_110 = arith.constant 1.000000e+00 : f32
    %276 = vector.broadcast %cst_110 : f32 to vector<4x128xf32>
    %277 = arith.addf %276, %275 : vector<4x128xf32>
    %278 = arith.divf %276, %277 : vector<4x128xf32>
    %279 = vector.extract_strided_slice %272 {offsets = [0, 128], sizes = [4, 128], strides = [1, 1]} : vector<4x512xf32> to vector<4x128xf32>
    %280 = arith.negf %279 : vector<4x128xf32>
    %281 = math.exp %280 : vector<4x128xf32>
    %cst_111 = arith.constant 1.000000e+00 : f32
    %282 = vector.broadcast %cst_111 : f32 to vector<4x128xf32>
    %283 = arith.addf %282, %281 : vector<4x128xf32>
    %284 = arith.divf %282, %283 : vector<4x128xf32>
    %285 = vector.extract_strided_slice %272 {offsets = [0, 256], sizes = [4, 128], strides = [1, 1]} : vector<4x512xf32> to vector<4x128xf32>
    %286 = math.tanh %285 : vector<4x128xf32>
    %287 = vector.extract_strided_slice %272 {offsets = [0, 384], sizes = [4, 128], strides = [1, 1]} : vector<4x512xf32> to vector<4x128xf32>
    %288 = arith.negf %287 : vector<4x128xf32>
    %289 = math.exp %288 : vector<4x128xf32>
    %cst_112 = arith.constant 1.000000e+00 : f32
    %290 = vector.broadcast %cst_112 : f32 to vector<4x128xf32>
    %291 = arith.addf %290, %289 : vector<4x128xf32>
    %292 = arith.divf %290, %291 : vector<4x128xf32>
    %293 = arith.mulf %284, %227 : vector<4x128xf32>
    %294 = arith.mulf %278, %286 : vector<4x128xf32>
    %295 = arith.addf %293, %294 : vector<4x128xf32>
    %296 = math.tanh %295 : vector<4x128xf32>
    %297 = arith.mulf %292, %296 : vector<4x128xf32>
    %298 = arith.truncf %297 : vector<4x128xf32> to vector<4x128xbf16>
    %c0_113 = arith.constant 0 : index
    %c0_114 = arith.constant 0 : index
    %299 = vector.load %arg15[%c0_113, %c0_114] : memref<128x256xbf16, #tpu.memory_space<vmem>>, vector<128x256xbf16>
    %cst_115 = arith.constant dense<0.000000e+00> : vector<4x256xf32>
    %300 = tpu.matmul %298, %299, %cst_115 {dimension_numbers = #tpu.dot_dimension_numbers<[1], [0], [0], [1], [0, 0, 1, 1], [], []>} : vector<4x128xbf16>, vector<128x256xbf16>, vector<4x256xf32> -> vector<4x256xf32>
    %c0_116 = arith.constant 0 : index
    %c0_117 = arith.constant 0 : index
    %301 = vector.load %arg16[%c0_116, %c0_117] : memref<1x256xf32, #tpu.memory_space<vmem>>, vector<1x256xf32>
    %302 = vector.broadcast %301 : vector<1x256xf32> to vector<4x256xf32>
    %303 = arith.addf %300, %302 : vector<4x256xf32>
    %304 = arith.index_cast %225 : i32 to index
    %305 = memref.load %arg1[%304] : memref<8xi32, #tpu.memory_space<smem>>
    %306 = vector.broadcast %305 : i32 to vector<4x1xi32>
    %307 = arith.cmpi slt, %9, %306 : vector<4x1xi32>
    %308 = vector.shape_cast %307 : vector<4x1xi1> to vector<4x1xi1>
    %309 = vector.broadcast %308 : vector<4x1xi1> to vector<4x128xi1>
    %310 = arith.select %309, %297, %226 : vector<4x128xi1>, vector<4x128xf32>
    %c0_118 = arith.constant 0 : index
    %c0_119 = arith.constant 0 : index
    %311 = vector.load %arg19[%c0_118, %c0_119] : memref<4x128xf32, #tpu.memory_space<vmem>>, vector<4x128xf32>
    tpu.vector_store %arg19[%c0_118, %c0_119], %310 {strides = array<i32>} : memref<4x128xf32, #tpu.memory_space<vmem>>, vector<4x128xf32>,
    %312 = vector.shape_cast %307 : vector<4x1xi1> to vector<4x1xi1>
    %313 = vector.broadcast %312 : vector<4x1xi1> to vector<4x128xi1>
    %314 = arith.select %313, %295, %227 : vector<4x128xi1>, vector<4x128xf32>
    %c0_120 = arith.constant 0 : index
    %c0_121 = arith.constant 0 : index
    %315 = vector.load %arg20[%c0_120, %c0_121] : memref<4x128xf32, #tpu.memory_space<vmem>>, vector<4x128xf32>
    tpu.vector_store %arg20[%c0_120, %c0_121], %314 {strides = array<i32>} : memref<4x128xf32, #tpu.memory_space<vmem>>, vector<4x128xf32>,
    %cst_122 = arith.constant 0.000000e+00 : f32
    %316 = vector.broadcast %cst_122 : f32 to vector<4x256xf32>
    %317 = vector.shape_cast %307 : vector<4x1xi1> to vector<4x1xi1>
    %318 = vector.broadcast %317 : vector<4x1xi1> to vector<4x256xi1>
    %319 = arith.select %318, %303, %316 : vector<4x256xi1>, vector<4x256xf32>
    %c2_123 = arith.constant 2 : index
    %c0_124 = arith.constant 0 : index
    %c0_125 = arith.constant 0 : index
    %320 = vector.load %arg17[%c2_123, %c0_124, %c0_125] : memref<4x4x256xf32, #tpu.memory_space<vmem>>, vector<1x4x256xf32>
    %321 = vector.shape_cast %320 : vector<1x4x256xf32> to vector<4x256xf32>
    %322 = vector.shape_cast %319 : vector<4x256xf32> to vector<1x4x256xf32>
    tpu.vector_store %arg17[%c2_123, %c0_124, %c0_125], %322 {strides = array<i32>} : memref<4x4x256xf32, #tpu.memory_space<vmem>>, vector<1x4x256xf32>,
    %cst_126 = arith.constant 0.000000e+00 : f32
    %323 = vector.broadcast %cst_126 : f32 to vector<4x16xf32>
    %324 = vector.shape_cast %307 : vector<4x1xi1> to vector<4x1xi1>
    %325 = vector.broadcast %324 : vector<4x1xi1> to vector<4x16xi1>
    %326 = arith.select %325, %255, %323 : vector<4x16xi1>, vector<4x16xf32>
    %327 = arith.index_cast %225 : i32 to index
    %c0_127 = arith.constant 0 : index
    %c0_128 = arith.constant 0 : index
    %328 = vector.load %arg18[%327, %c0_127, %c0_128] : memref<8x4x16xf32, #tpu.memory_space<vmem>>, vector<1x4x16xf32>
    %329 = vector.shape_cast %328 : vector<1x4x16xf32> to vector<4x16xf32>
    %330 = vector.shape_cast %326 : vector<4x16xf32> to vector<1x4x16xf32>
    tpu.vector_store %arg18[%327, %c0_127, %c0_128], %330 {strides = array<i32>} : memref<8x4x16xf32, #tpu.memory_space<vmem>>, vector<1x4x16xf32>,
    %c4_i32_129 = arith.constant 4 : i32
    %331 = arith.muli %arg0, %c4_i32_129 : i32
    %c3_i32 = arith.constant 3 : i32
    %332 = arith.addi %331, %c3_i32 : i32
    %c0_130 = arith.constant 0 : index
    %c0_131 = arith.constant 0 : index
    %333 = vector.load %arg19[%c0_130, %c0_131] : memref<4x128xf32, #tpu.memory_space<vmem>>, vector<4x128xf32>
    %c0_132 = arith.constant 0 : index
    %c0_133 = arith.constant 0 : index
    %334 = vector.load %arg20[%c0_132, %c0_133] : memref<4x128xf32, #tpu.memory_space<vmem>>, vector<4x128xf32>
    %335 = arith.truncf %333 : vector<4x128xf32> to vector<4x128xbf16>
    %c0_134 = arith.constant 0 : index
    %c0_135 = arith.constant 0 : index
    %336 = vector.load %arg10[%c0_134, %c0_135] : memref<128x768xbf16, #tpu.memory_space<vmem>>, vector<128x768xbf16>
    %cst_136 = arith.constant dense<0.000000e+00> : vector<4x768xf32>
    %337 = tpu.matmul %335, %336, %cst_136 {dimension_numbers = #tpu.dot_dimension_numbers<[1], [0], [0], [1], [0, 0, 1, 1], [], []>} : vector<4x128xbf16>, vector<128x768xbf16>, vector<4x768xf32> -> vector<4x768xf32>
    %c0_137 = arith.constant 0 : index
    %c0_138 = arith.constant 0 : index
    %338 = vector.load %arg11[%c0_137, %c0_138] : memref<1x768xf32, #tpu.memory_space<vmem>>, vector<1x768xf32>
    %339 = vector.broadcast %338 : vector<1x768xf32> to vector<4x768xf32>
    %340 = arith.addf %337, %339 : vector<4x768xf32>
    %341 = vector.extract_strided_slice %340 {offsets = [0, 0], sizes = [4, 128], strides = [1, 1]} : vector<4x768xf32> to vector<4x128xf32>
    %342 = vector.extract_strided_slice %340 {offsets = [0, 128], sizes = [4, 128], strides = [1, 1]} : vector<4x768xf32> to vector<4x128xf32>
    %343 = vector.extract_strided_slice %340 {offsets = [0, 256], sizes = [4, 512], strides = [1, 1]} : vector<4x768xf32> to vector<4x512xf32>
    %344 = vector.shape_cast %341 : vector<4x128xf32> to vector<4x1x128xf32>
    %345 = vector.broadcast %344 : vector<4x1x128xf32> to vector<4x16x128xf32>
    %346 = arith.addf %5, %345 : vector<4x16x128xf32>
    %cst_139 = arith.constant 0.000000e+00 : f32
    %347 = vector.broadcast %cst_139 : f32 to vector<4x16x128xf32>
    %348 = arith.maximumf %346, %347 : vector<4x16x128xf32>
    %349 = vector.broadcast %7 : vector<1x1x128xf32> to vector<4x16x128xf32>
    %350 = arith.mulf %348, %349 : vector<4x16x128xf32>
    %cst_140 = arith.constant dense<0.000000e+00> : vector<4x16xf32>
    %351 = vector.multi_reduction <add>, %350, %cst_140 [2] : vector<4x16x128xf32> to vector<4x16xf32>
    %352 = vector.broadcast %8 : f32 to vector<4x16xf32>
    %353 = arith.addf %351, %352 : vector<4x16xf32>
    %cst_141 = arith.constant dense<0xFF800000> : vector<4xf32>
    %354 = vector.multi_reduction <maximumf>, %353, %cst_141 [1] : vector<4x16xf32> to vector<4xf32>
    %355 = vector.shape_cast %354 : vector<4xf32> to vector<4x1xf32>
    %356 = vector.broadcast %355 : vector<4x1xf32> to vector<4x16xf32>
    %357 = arith.subf %353, %356 : vector<4x16xf32>
    %358 = math.exp %357 : vector<4x16xf32>
    %cst_142 = arith.constant dense<0.000000e+00> : vector<4xf32>
    %359 = vector.multi_reduction <add>, %358, %cst_142 [1] : vector<4x16xf32> to vector<4xf32>
    %360 = vector.shape_cast %359 : vector<4xf32> to vector<4x1xf32>
    %361 = vector.broadcast %360 : vector<4x1xf32> to vector<4x16xf32>
    %362 = arith.divf %358, %361 : vector<4x16xf32>
    %363 = vector.shape_cast %362 : vector<4x16xf32> to vector<4x16x1xf32>
    %364 = vector.broadcast %363 : vector<4x16x1xf32> to vector<4x16x128xf32>
    %365 = arith.mulf %4, %364 : vector<4x16x128xf32>
    %cst_143 = arith.constant dense<0.000000e+00> : vector<4x128xf32>
    %366 = vector.multi_reduction <add>, %365, %cst_143 [1] : vector<4x16x128xf32> to vector<4x128xf32>
    %367 = arith.negf %342 : vector<4x128xf32>
    %368 = math.exp %367 : vector<4x128xf32>
    %cst_144 = arith.constant 1.000000e+00 : f32
    %369 = vector.broadcast %cst_144 : f32 to vector<4x128xf32>
    %370 = arith.addf %369, %368 : vector<4x128xf32>
    %371 = arith.divf %369, %370 : vector<4x128xf32>
    %372 = arith.mulf %371, %366 : vector<4x128xf32>
    %c3 = arith.constant 3 : index
    %c0_145 = arith.constant 0 : index
    %c0_146 = arith.constant 0 : index
    %373 = vector.load %arg3[%c3, %c0_145, %c0_146] : memref<4x4x512xf32, #tpu.memory_space<vmem>>, vector<1x4x512xf32>
    %374 = vector.shape_cast %373 : vector<1x4x512xf32> to vector<4x512xf32>
    %375 = arith.truncf %372 : vector<4x128xf32> to vector<4x128xbf16>
    %c0_147 = arith.constant 0 : index
    %c0_148 = arith.constant 0 : index
    %376 = vector.load %arg14[%c0_147, %c0_148] : memref<128x512xbf16, #tpu.memory_space<vmem>>, vector<128x512xbf16>
    %cst_149 = arith.constant dense<0.000000e+00> : vector<4x512xf32>
    %377 = tpu.matmul %375, %376, %cst_149 {dimension_numbers = #tpu.dot_dimension_numbers<[1], [0], [0], [1], [0, 0, 1, 1], [], []>} : vector<4x128xbf16>, vector<128x512xbf16>, vector<4x512xf32> -> vector<4x512xf32>
    %378 = arith.addf %374, %377 : vector<4x512xf32>
    %379 = arith.addf %378, %343 : vector<4x512xf32>
    %380 = vector.extract_strided_slice %379 {offsets = [0, 0], sizes = [4, 128], strides = [1, 1]} : vector<4x512xf32> to vector<4x128xf32>
    %381 = arith.negf %380 : vector<4x128xf32>
    %382 = math.exp %381 : vector<4x128xf32>
    %cst_150 = arith.constant 1.000000e+00 : f32
    %383 = vector.broadcast %cst_150 : f32 to vector<4x128xf32>
    %384 = arith.addf %383, %382 : vector<4x128xf32>
    %385 = arith.divf %383, %384 : vector<4x128xf32>
    %386 = vector.extract_strided_slice %379 {offsets = [0, 128], sizes = [4, 128], strides = [1, 1]} : vector<4x512xf32> to vector<4x128xf32>
    %387 = arith.negf %386 : vector<4x128xf32>
    %388 = math.exp %387 : vector<4x128xf32>
    %cst_151 = arith.constant 1.000000e+00 : f32
    %389 = vector.broadcast %cst_151 : f32 to vector<4x128xf32>
    %390 = arith.addf %389, %388 : vector<4x128xf32>
    %391 = arith.divf %389, %390 : vector<4x128xf32>
    %392 = vector.extract_strided_slice %379 {offsets = [0, 256], sizes = [4, 128], strides = [1, 1]} : vector<4x512xf32> to vector<4x128xf32>
    %393 = math.tanh %392 : vector<4x128xf32>
    %394 = vector.extract_strided_slice %379 {offsets = [0, 384], sizes = [4, 128], strides = [1, 1]} : vector<4x512xf32> to vector<4x128xf32>
    %395 = arith.negf %394 : vector<4x128xf32>
    %396 = math.exp %395 : vector<4x128xf32>
    %cst_152 = arith.constant 1.000000e+00 : f32
    %397 = vector.broadcast %cst_152 : f32 to vector<4x128xf32>
    %398 = arith.addf %397, %396 : vector<4x128xf32>
    %399 = arith.divf %397, %398 : vector<4x128xf32>
    %400 = arith.mulf %391, %334 : vector<4x128xf32>
    %401 = arith.mulf %385, %393 : vector<4x128xf32>
    %402 = arith.addf %400, %401 : vector<4x128xf32>
    %403 = math.tanh %402 : vector<4x128xf32>
    %404 = arith.mulf %399, %403 : vector<4x128xf32>
    %405 = arith.truncf %404 : vector<4x128xf32> to vector<4x128xbf16>
    %c0_153 = arith.constant 0 : index
    %c0_154 = arith.constant 0 : index
    %406 = vector.load %arg15[%c0_153, %c0_154] : memref<128x256xbf16, #tpu.memory_space<vmem>>, vector<128x256xbf16>
    %cst_155 = arith.constant dense<0.000000e+00> : vector<4x256xf32>
    %407 = tpu.matmul %405, %406, %cst_155 {dimension_numbers = #tpu.dot_dimension_numbers<[1], [0], [0], [1], [0, 0, 1, 1], [], []>} : vector<4x128xbf16>, vector<128x256xbf16>, vector<4x256xf32> -> vector<4x256xf32>
    %c0_156 = arith.constant 0 : index
    %c0_157 = arith.constant 0 : index
    %408 = vector.load %arg16[%c0_156, %c0_157] : memref<1x256xf32, #tpu.memory_space<vmem>>, vector<1x256xf32>
    %409 = vector.broadcast %408 : vector<1x256xf32> to vector<4x256xf32>
    %410 = arith.addf %407, %409 : vector<4x256xf32>
    %411 = arith.index_cast %332 : i32 to index
    %412 = memref.load %arg1[%411] : memref<8xi32, #tpu.memory_space<smem>>
    %413 = vector.broadcast %412 : i32 to vector<4x1xi32>
    %414 = arith.cmpi slt, %9, %413 : vector<4x1xi32>
    %415 = vector.shape_cast %414 : vector<4x1xi1> to vector<4x1xi1>
    %416 = vector.broadcast %415 : vector<4x1xi1> to vector<4x128xi1>
    %417 = arith.select %416, %404, %333 : vector<4x128xi1>, vector<4x128xf32>
    %c0_158 = arith.constant 0 : index
    %c0_159 = arith.constant 0 : index
    %418 = vector.load %arg19[%c0_158, %c0_159] : memref<4x128xf32, #tpu.memory_space<vmem>>, vector<4x128xf32>
    tpu.vector_store %arg19[%c0_158, %c0_159], %417 {strides = array<i32>} : memref<4x128xf32, #tpu.memory_space<vmem>>, vector<4x128xf32>,
    %419 = vector.shape_cast %414 : vector<4x1xi1> to vector<4x1xi1>
    %420 = vector.broadcast %419 : vector<4x1xi1> to vector<4x128xi1>
    %421 = arith.select %420, %402, %334 : vector<4x128xi1>, vector<4x128xf32>
    %c0_160 = arith.constant 0 : index
    %c0_161 = arith.constant 0 : index
    %422 = vector.load %arg20[%c0_160, %c0_161] : memref<4x128xf32, #tpu.memory_space<vmem>>, vector<4x128xf32>
    tpu.vector_store %arg20[%c0_160, %c0_161], %421 {strides = array<i32>} : memref<4x128xf32, #tpu.memory_space<vmem>>, vector<4x128xf32>,
    %cst_162 = arith.constant 0.000000e+00 : f32
    %423 = vector.broadcast %cst_162 : f32 to vector<4x256xf32>
    %424 = vector.shape_cast %414 : vector<4x1xi1> to vector<4x1xi1>
    %425 = vector.broadcast %424 : vector<4x1xi1> to vector<4x256xi1>
    %426 = arith.select %425, %410, %423 : vector<4x256xi1>, vector<4x256xf32>
    %c3_163 = arith.constant 3 : index
    %c0_164 = arith.constant 0 : index
    %c0_165 = arith.constant 0 : index
    %427 = vector.load %arg17[%c3_163, %c0_164, %c0_165] : memref<4x4x256xf32, #tpu.memory_space<vmem>>, vector<1x4x256xf32>
    %428 = vector.shape_cast %427 : vector<1x4x256xf32> to vector<4x256xf32>
    %429 = vector.shape_cast %426 : vector<4x256xf32> to vector<1x4x256xf32>
    tpu.vector_store %arg17[%c3_163, %c0_164, %c0_165], %429 {strides = array<i32>} : memref<4x4x256xf32, #tpu.memory_space<vmem>>, vector<1x4x256xf32>,
    %cst_166 = arith.constant 0.000000e+00 : f32
    %430 = vector.broadcast %cst_166 : f32 to vector<4x16xf32>
    %431 = vector.shape_cast %414 : vector<4x1xi1> to vector<4x1xi1>
    %432 = vector.broadcast %431 : vector<4x1xi1> to vector<4x16xi1>
    %433 = arith.select %432, %362, %430 : vector<4x16xi1>, vector<4x16xf32>
    %434 = arith.index_cast %332 : i32 to index
    %c0_167 = arith.constant 0 : index
    %c0_168 = arith.constant 0 : index
    %435 = vector.load %arg18[%434, %c0_167, %c0_168] : memref<8x4x16xf32, #tpu.memory_space<vmem>>, vector<1x4x16xf32>
    %436 = vector.shape_cast %435 : vector<1x4x16xf32> to vector<4x16xf32>
    %437 = vector.shape_cast %433 : vector<4x16xf32> to vector<1x4x16xf32>
    tpu.vector_store %arg18[%434, %c0_167, %c0_168], %437 {strides = array<i32>} : memref<8x4x16xf32, #tpu.memory_space<vmem>>, vector<1x4x16xf32>,
    return
  }
  func.func @transform_0(%arg0: i32, %arg1: memref<8xi32, #tpu.memory_space<smem>>) -> (i32, i32, i32) {
    %c0_i32 = arith.constant 0 : i32
    %c0_i32_0 = arith.constant 0 : i32
    %c0_i32_1 = arith.constant 0 : i32
    %c0_i32_2 = arith.constant 0 : i32
    return %c0_i32, %c0_i32_0, %c0_i32_1 : i32, i32, i32
  }
  func.func @transform_1(%arg0: i32, %arg1: memref<8xi32, #tpu.memory_space<smem>>) -> (i32, i32, i32) {
    %c0_i32 = arith.constant 0 : i32
    %c0_i32_0 = arith.constant 0 : i32
    %c0_i32_1 = arith.constant 0 : i32
    return %arg0, %c0_i32, %c0_i32_0 : i32, i32, i32
  }
  func.func @transform_2(%arg0: i32, %arg1: memref<8xi32, #tpu.memory_space<smem>>) -> (i32, i32) {
    %c0_i32 = arith.constant 0 : i32
    %c0_i32_0 = arith.constant 0 : i32
    %c0_i32_1 = arith.constant 0 : i32
    return %c0_i32, %c0_i32_0 : i32, i32
  }
  func.func @transform_3(%arg0: i32, %arg1: memref<8xi32, #tpu.memory_space<smem>>) -> (i32, i32) {
    %c0_i32 = arith.constant 0 : i32
    %c0_i32_0 = arith.constant 0 : i32
    %c0_i32_1 = arith.constant 0 : i32
    return %c0_i32, %c0_i32_0 : i32, i32
  }
  func.func @transform_4(%arg0: i32, %arg1: memref<8xi32, #tpu.memory_space<smem>>) -> (i32, i32) {
    %c0_i32 = arith.constant 0 : i32
    %c0_i32_0 = arith.constant 0 : i32
    %c0_i32_1 = arith.constant 0 : i32
    return %c0_i32, %c0_i32_0 : i32, i32
  }
  func.func @transform_5(%arg0: i32, %arg1: memref<8xi32, #tpu.memory_space<smem>>) -> (i32, i32) {
    %c0_i32 = arith.constant 0 : i32
    %c0_i32_0 = arith.constant 0 : i32
    %c0_i32_1 = arith.constant 0 : i32
    return %c0_i32, %c0_i32_0 : i32, i32
  }
  func.func @transform_6(%arg0: i32, %arg1: memref<8xi32, #tpu.memory_space<smem>>) -> (i32, i32) {
    %c0_i32 = arith.constant 0 : i32
    %c0_i32_0 = arith.constant 0 : i32
    %c0_i32_1 = arith.constant 0 : i32
    return %c0_i32, %c0_i32_0 : i32, i32
  }
  func.func @transform_7(%arg0: i32, %arg1: memref<8xi32, #tpu.memory_space<smem>>) -> (i32, i32) {
    %c0_i32 = arith.constant 0 : i32
    %c0_i32_0 = arith.constant 0 : i32
    %c0_i32_1 = arith.constant 0 : i32
    return %c0_i32, %c0_i32_0 : i32, i32
  }
  func.func @transform_8(%arg0: i32, %arg1: memref<8xi32, #tpu.memory_space<smem>>) -> (i32, i32) {
    %c0_i32 = arith.constant 0 : i32
    %c0_i32_0 = arith.constant 0 : i32
    %c0_i32_1 = arith.constant 0 : i32
    return %c0_i32, %c0_i32_0 : i32, i32
  }
  func.func @transform_9(%arg0: i32, %arg1: memref<8xi32, #tpu.memory_space<smem>>) -> (i32, i32) {
    %c0_i32 = arith.constant 0 : i32
    %c0_i32_0 = arith.constant 0 : i32
    %c0_i32_1 = arith.constant 0 : i32
    return %c0_i32, %c0_i32_0 : i32, i32
  }
  func.func @transform_10(%arg0: i32, %arg1: memref<8xi32, #tpu.memory_space<smem>>) -> (i32, i32) {
    %c0_i32 = arith.constant 0 : i32
    %c0_i32_0 = arith.constant 0 : i32
    %c0_i32_1 = arith.constant 0 : i32
    return %c0_i32, %c0_i32_0 : i32, i32
  }
  func.func @transform_11(%arg0: i32, %arg1: memref<8xi32, #tpu.memory_space<smem>>) -> i32 {
    %c0_i32 = arith.constant 0 : i32
    %c0_i32_0 = arith.constant 0 : i32
    return %c0_i32 : i32
  }
  func.func @transform_12(%arg0: i32, %arg1: memref<8xi32, #tpu.memory_space<smem>>) -> (i32, i32) {
    %c0_i32 = arith.constant 0 : i32
    %c0_i32_0 = arith.constant 0 : i32
    %c0_i32_1 = arith.constant 0 : i32
    return %c0_i32, %c0_i32_0 : i32, i32
  }
  func.func @transform_13(%arg0: i32, %arg1: memref<8xi32, #tpu.memory_space<smem>>) -> (i32, i32) {
    %c0_i32 = arith.constant 0 : i32
    %c0_i32_0 = arith.constant 0 : i32
    %c0_i32_1 = arith.constant 0 : i32
    return %c0_i32, %c0_i32_0 : i32, i32
  }
  func.func @transform_14(%arg0: i32, %arg1: memref<8xi32, #tpu.memory_space<smem>>) -> (i32, i32) {
    %c0_i32 = arith.constant 0 : i32
    %c0_i32_0 = arith.constant 0 : i32
    %c0_i32_1 = arith.constant 0 : i32
    return %c0_i32, %c0_i32_0 : i32, i32
  }
  func.func @transform_15(%arg0: i32, %arg1: memref<8xi32, #tpu.memory_space<smem>>) -> (i32, i32, i32) {
    %c0_i32 = arith.constant 0 : i32
    %c0_i32_0 = arith.constant 0 : i32
    %c0_i32_1 = arith.constant 0 : i32
    return %arg0, %c0_i32, %c0_i32_0 : i32, i32, i32
  }
  func.func @transform_16(%arg0: i32, %arg1: memref<8xi32, #tpu.memory_space<smem>>) -> (i32, i32, i32) {
    %c0_i32 = arith.constant 0 : i32
    %c0_i32_0 = arith.constant 0 : i32
    %c0_i32_1 = arith.constant 0 : i32
    %c0_i32_2 = arith.constant 0 : i32
    return %c0_i32, %c0_i32_0, %c0_i32_1 : i32, i32, i32
  }
}

</mosaic_0001>

<llo_original>
// kernel: tpu_custom_call.1
$region0: #{tpu_custom_call.1}
  #allocation0 [shape = 'u32[]', space=smem, size = 0x4, offset = 0x4, fixed_abs, tag = 'smem constant byte address 0x4 - core index']
  #allocation1 [shape = 'u32[144,128]{1,0:T(1,128)}', space=vmem, size = 0x12000, scoped, tag = 'internal scratch']
  #allocation2 [shape = 'f32[4,128]{1,0:T(4,128)}', space=vmem, size = 0x800, scoped, tag = 'scratch operand']
  #allocation3 [shape = 'f32[4,128]{1,0:T(4,128)}', space=vmem, size = 0x800, scoped, tag = 'scratch operand']
  #allocation4 [shape = 'f32[4,16,128]{2,1,0:T(8,128)}', space=vmem, size = 0x8000, scoped, tag = 'scratch operand']
  #allocation5 [shape = 's32[1]{0}', space=sflag, size = 0x4, scoped, tag = 'scoped memory for tpu_custom_call.1']
  #allocation6 [shape = 'u8[512]{0}', space=smem, size = 0x200, scoped, tag = 'prefetched SMEM operand 0']
  #allocation7 [shape = 'f32[1]{0:T(128)S(6)}', space=smem, size = 0x200, scoped, tag = 'scoped memory for tpu_custom_call.1']
  %s0 = inlined_call_operand.vmem [shape: s32[8], index: 0, kind: input, shape index: {}]
  %s1 = inlined_call_operand.hbm [shape: bf16[4,16,128], index: 1, kind: input, shape index: {}]
  %s2 = inlined_call_operand.hbm [shape: f32[8,4,512], index: 2, kind: input, shape index: {}]
  %s3 = inlined_call_operand.hbm [shape: bf16[128,128], index: 3, kind: input, shape index: {}]
  %s4 = inlined_call_operand.vmem [shape: f32[1,128], index: 4, kind: input, shape index: {}]
  %s5 = inlined_call_operand.hbm [shape: bf16[128,128], index: 5, kind: input, shape index: {}]
  %s6 = inlined_call_operand.vmem [shape: f32[1,128], index: 6, kind: input, shape index: {}]
  %s7 = inlined_call_operand.hbm [shape: bf16[128,128], index: 7, kind: input, shape index: {}]
  %s8 = inlined_call_operand.vmem [shape: f32[1,128], index: 8, kind: input, shape index: {}]
  %s9 = inlined_call_operand.hbm [shape: bf16[128,768], index: 9, kind: input, shape index: {}]
  %s10 = inlined_call_operand.vmem [shape: f32[1,768], index: 10, kind: input, shape index: {}]
  %s11 = inlined_call_operand.vmem [shape: f32[1,128], index: 11, kind: input, shape index: {}]
  %s12 = inlined_call_operand.<no memory space> [shape: f32[1], index: 12, kind: input, shape index: {}]
  %s13 = inlined_call_operand.hbm [shape: bf16[128,512], index: 13, kind: input, shape index: {}]
  %s14 = inlined_call_operand.hbm [shape: bf16[128,256], index: 14, kind: input, shape index: {}]
  %s15 = inlined_call_operand.vmem [shape: f32[1,256], index: 15, kind: input, shape index: {}]
  %s16 = inlined_call_operand.hbm [shape: f32[8,4,256], index: 16, kind: output, shape index: {0}]
  %s17 = inlined_call_operand.hbm [shape: f32[8,4,16], index: 17, kind: output, shape index: {1}]
  %18 = xla_tuple %s16, %s17
  %s19 = sld [smem:[#allocation0]]
  $region137: #{tpu_custom_call.1} parent=0
    _
  %s21 = ssub.s32 1, %s19
  %s22 = scalar_select 0, %s21, %s19
  %s23 = sshll.u32 %s0, 4
  %s24 = int_to_ptr.vmem [resolvable:$true] %s23
  %26 = dma.vmem_to_smem %s24, 16, [#allocation6], [#allocation5]
  %27 = sst [smem:[#allocation7]] %s12
  %28 = dma.done [#allocation5], 16
  %29 = sfence
  $region1: #{tpu_custom_call.1} parent=0
    #allocation8 [shape = 'u8[16384]{0}', space=vmem, size = 0x4000, scoped, tag = 'input window, operand 1, single buffered']
    #allocation9 [shape = 's32[2]{0}', space=sflag, size = 0x8, scoped, tag = 'scoped memory for tpu_custom_call.1']
    #allocation10 [shape = 's32[2]{0}', space=sflag, size = 0x8, scoped, tag = 'scoped memory for tpu_custom_call.1']
    #allocation11 [shape = 'u8[65536]{0}', space=vmem, size = 0x10000, scoped, tag = 'input window, operand 2']
    #allocation12 [shape = 's32[2]{0}', space=sflag, size = 0x8, scoped, tag = 'scoped memory for tpu_custom_call.1']
    #allocation13 [shape = 'u8[32768]{0}', space=vmem, size = 0x8000, scoped, tag = 'input window, operand 3, single buffered']
    #allocation14 [shape = 'u8[32768]{0}', space=vmem, size = 0x8000, scoped, tag = 'input window, operand 5, single buffered']
    #allocation15 [shape = 's32[1]{0}', space=sflag, size = 0x4, scoped, tag = 'scoped memory for tpu_custom_call.1']
    #allocation16 [shape = 'u8[32768]{0}', space=vmem, size = 0x8000, scoped, tag = 'input window, operand 7, single buffered']
    #allocation17 [shape = 'u8[196608]{0}', space=vmem, size = 0x30000, scoped, tag = 'input window, operand 9, single buffered']
    #allocation18 [shape = 's32[1]{0}', space=sflag, size = 0x4, scoped, tag = 'scoped memory for tpu_custom_call.1']
    #allocation19 [shape = 'u8[131072]{0}', space=vmem, size = 0x20000, scoped, tag = 'input window, operand 13, single buffered']
    #allocation20 [shape = 'u8[65536]{0}', space=vmem, size = 0x10000, scoped, tag = 'input window, operand 14, single buffered']
    #allocation21 [shape = 's32[1]{0}', space=sflag, size = 0x4, scoped, tag = 'scoped memory for tpu_custom_call.1']
    #allocation22 [shape = 'u8[32768]{0}', space=vmem, size = 0x8000, scoped, tag = 'output window, operand 0']
    #allocation23 [shape = 'u8[16384]{0}', space=vmem, size = 0x4000, scoped, tag = 'output window, operand 1, single buffered']
    #allocation24 [shape = 's32[1]{0}', space=sflag, size = 0x4, scoped, tag = 'scoped memory for tpu_custom_call.1']
    %30 = vsyncpa [#allocation9], 0
    %31 = vsyncpa [#allocation12], 0
    %s32 = scalar_lea.sflag [#allocation12], 1
    %33 = vsyncpa %s32, 0
    %34 = vsyncpa [#allocation15], 0
    %35 = vsyncpa [#allocation18], 0
    %36 = vsyncpa [#allocation21], 0
    %37 = vsyncpa [#allocation10], 0
    %s38 = scalar_lea.sflag [#allocation10], 1
    %39 = vsyncpa %s38, 0
    %40 = vsyncpa [#allocation24], 0
    loop: start=0, step=1, limit=4
    $region2: #{tpu_custom_call.1} parent=1 // loop_pre_header
      _
    $region3: #{tpu_custom_call.1} parent=1 // loop_header
      %s42 = sphi 0, %s46
      %p43 = scmp.ge.s32.totalorder %s42, 4
      %s50 = sphi 0, %s50
      %s52 = sphi 0, %s50
      %s53 = sphi 0, %s52
      %s67 = sphi 0, %s53
      %s73 = sphi 0, %s75
      %s76 = sphi 0, %s73
      %s77 = sphi 0, %s76
      %s93 = sphi 0, %s77
      %s97 = sphi 0, %s97
      %s99 = sphi 0, %s97
      %s100 = sphi 0, %s99
      %s114 = sphi 0, %s100
      %s118 = sphi 0, %s118
      %s120 = sphi 0, %s118
      %s121 = sphi 0, %s120
      %s135 = sphi 0, %s121
      %s139 = sphi 0, %s139
      %s141 = sphi 0, %s139
      %s142 = sphi 0, %s141
      %s156 = sphi 0, %s142
      %s160 = sphi 0, %s160
      %s162 = sphi 0, %s160
      %s163 = sphi 0, %s162
      %s177 = sphi 0, %s163
      %s181 = sphi 0, %s181
      %s183 = sphi 0, %s181
      %s184 = sphi 0, %s183
      %s198 = sphi 0, %s184
      %s202 = sphi 0, %s202
      %s204 = sphi 0, %s202
      %s205 = sphi 0, %s204
      %s219 = sphi 0, %s205
      %s223 = sphi 0, %s223
      %s225 = sphi 0, %s223
      %s226 = sphi 0, %s225
      %s240 = sphi 0, %s226
      %s244 = sphi 0, %s244
      %s246 = sphi 0, %s244
      %s247 = sphi 0, %s246
      %s261 = sphi 0, %s247
      %s265 = sphi 0, %s265
      %s267 = sphi 0, %s265
      %s268 = sphi 0, %s267
      %s282 = sphi 0, %s268
      %s286 = sphi 0, %s286
      %s288 = sphi 0, %s286
      %s289 = sphi 0, %s288
      %s303 = sphi 0, %s289
      %s307 = sphi 0, %s307
      %s309 = sphi 0, %s307
      %s310 = sphi 0, %s309
      %s324 = sphi 0, %s310
      %s328 = sphi 0, %s328
      %s330 = sphi 0, %s328
      %s331 = sphi 0, %s330
      %s345 = sphi 0, %s331
      %s349 = sphi 0, %s349
      %s351 = sphi 0, %s349
      %s352 = sphi 0, %s351
      %s366 = sphi 0, %s352
      %s372 = sphi 0, %s374
      %s375 = sphi 0, %s372
      %s376 = sphi 0, %s375
      %s392 = sphi 0, %s376
      %s396 = sphi 0, %s396
      %s398 = sphi 0, %s396
      %s399 = sphi 0, %s398
      %s413 = sphi 0, %s399
    $region4: #{tpu_custom_call.1} parent=1 // loop_header_branch
      %45 = sbr.rel (%p43) target = $region8
    $region5: #{tpu_custom_call.1} parent=1 // loop_body
      %s47 = ssub.s32 %s42, 1
      %s48 = ssub.s32 %s42, 2
      %s49 = sadd.s32 %s42, 1
      %s51 = sadd.s32 %s50, 1
      %p54 = scmp.eq.s32.totalorder %s42, 1
      %p55 = scmp.ne.s32.totalorder %s50, %s52
      %p56 = scmp.eq.s32.totalorder %s42, 0
      %p57 = por %p55, %p56
      %p58 = scmp.ne.s32.totalorder %s50, %s52
      %p59 = scmp.eq.s32.totalorder %s47, 1
      %p60 = por %p58, %p59
      %p61 = scmp.ne.s32.totalorder %s52, %s53
      %p62 = scmp.eq.s32.totalorder %s47, 0
      %p63 = por %p61, %p62
      %p64 = scmp.ne.s32.totalorder %s52, %s53
      %p65 = scmp.eq.s32.totalorder %s48, 1
      %p66 = por %p64, %p65
      %p68 = scmp.ne.s32.totalorder %s53, %s67
      %p69 = scmp.eq.s32.totalorder %s48, 0
      %p70 = por %p68, %p69
      %s71 = ssub.s32 %s42, %s49
      %p72 = scmp.eq.s32.totalorder %s71, 0
      %s74 = sadd.s32 %s73, 1
      %s75 = scalar_select %p72, %s73, %s74
      %p78 = pneg %p72
      %p79 = scmp.eq.s32.totalorder %s42, 1
      %p80 = por %p78, %p79
      %p81 = scmp.ne.s32.totalorder %s73, %s76
      %p82 = scmp.eq.s32.totalorder %s42, 0
      %p83 = por %p81, %p82
      %p84 = scmp.ne.s32.totalorder %s73, %s76
      %p85 = scmp.eq.s32.totalorder %s47, 1
      %p86 = por %p84, %p85
      %p87 = scmp.ne.s32.totalorder %s76, %s77
      %p88 = scmp.eq.s32.totalorder %s47, 0
      %p89 = por %p87, %p88
      %p90 = scmp.ne.s32.totalorder %s76, %s77
      %p91 = scmp.eq.s32.totalorder %s48, 1
      %p92 = por %p90, %p91
      %p94 = scmp.ne.s32.totalorder %s77, %s93
      %p95 = scmp.eq.s32.totalorder %s48, 0
      %p96 = por %p94, %p95
      %s98 = sadd.s32 %s97, 1
      %p101 = scmp.eq.s32.totalorder %s42, 1
      %p102 = scmp.ne.s32.totalorder %s97, %s99
      %p103 = scmp.eq.s32.totalorder %s42, 0
      %p104 = por %p102, %p103
      %p105 = scmp.ne.s32.totalorder %s97, %s99
      %p106 = scmp.eq.s32.totalorder %s47, 1
      %p107 = por %p105, %p106
      %p108 = scmp.ne.s32.totalorder %s99, %s100
      %p109 = scmp.eq.s32.totalorder %s47, 0
      %p110 = por %p108, %p109
      %p111 = scmp.ne.s32.totalorder %s99, %s100
      %p112 = scmp.eq.s32.totalorder %s48, 1
      %p113 = por %p111, %p112
      %p115 = scmp.ne.s32.totalorder %s100, %s114
      %p116 = scmp.eq.s32.totalorder %s48, 0
      %p117 = por %p115, %p116
      %s119 = sadd.s32 %s118, 1
      %p122 = scmp.eq.s32.totalorder %s42, 1
      %p123 = scmp.ne.s32.totalorder %s118, %s120
      %p124 = scmp.eq.s32.totalorder %s42, 0
      %p125 = por %p123, %p124
      %p126 = scmp.ne.s32.totalorder %s118, %s120
      %p127 = scmp.eq.s32.totalorder %s47, 1
      %p128 = por %p126, %p127
      %p129 = scmp.ne.s32.totalorder %s120, %s121
      %p130 = scmp.eq.s32.totalorder %s47, 0
      %p131 = por %p129, %p130
      %p132 = scmp.ne.s32.totalorder %s120, %s121
      %p133 = scmp.eq.s32.totalorder %s48, 1
      %p134 = por %p132, %p133
      %p136 = scmp.ne.s32.totalorder %s121, %s135
      %p137 = scmp.eq.s32.totalorder %s48, 0
      %p138 = por %p136, %p137
      %s140 = sadd.s32 %s139, 1
      %p143 = scmp.eq.s32.totalorder %s42, 1
      %p144 = scmp.ne.s32.totalorder %s139, %s141
      %p145 = scmp.eq.s32.totalorder %s42, 0
      %p146 = por %p144, %p145
      %p147 = scmp.ne.s32.totalorder %s139, %s141
      %p148 = scmp.eq.s32.totalorder %s47, 1
      %p149 = por %p147, %p148
      %p150 = scmp.ne.s32.totalorder %s141, %s142
      %p151 = scmp.eq.s32.totalorder %s47, 0
      %p152 = por %p150, %p151
      %p153 = scmp.ne.s32.totalorder %s141, %s142
      %p154 = scmp.eq.s32.totalorder %s48, 1
      %p155 = por %p153, %p154
      %p157 = scmp.ne.s32.totalorder %s142, %s156
      %p158 = scmp.eq.s32.totalorder %s48, 0
      %p159 = por %p157, %p158
      %s161 = sadd.s32 %s160, 1
      %p164 = scmp.eq.s32.totalorder %s42, 1
      %p165 = scmp.ne.s32.totalorder %s160, %s162
      %p166 = scmp.eq.s32.totalorder %s42, 0
      %p167 = por %p165, %p166
      %p168 = scmp.ne.s32.totalorder %s160, %s162
      %p169 = scmp.eq.s32.totalorder %s47, 1
      %p170 = por %p168, %p169
      %p171 = scmp.ne.s32.totalorder %s162, %s163
      %p172 = scmp.eq.s32.totalorder %s47, 0
      %p173 = por %p171, %p172
      %p174 = scmp.ne.s32.totalorder %s162, %s163
      %p175 = scmp.eq.s32.totalorder %s48, 1
      %p176 = por %p174, %p175
      %p178 = scmp.ne.s32.totalorder %s163, %s177
      %p179 = scmp.eq.s32.totalorder %s48, 0
      %p180 = por %p178, %p179
      %s182 = sadd.s32 %s181, 1
      %p185 = scmp.eq.s32.totalorder %s42, 1
      %p186 = scmp.ne.s32.totalorder %s181, %s183
      %p187 = scmp.eq.s32.totalorder %s42, 0
      %p188 = por %p186, %p187
      %p189 = scmp.ne.s32.totalorder %s181, %s183
      %p190 = scmp.eq.s32.totalorder %s47, 1
      %p191 = por %p189, %p190
      %p192 = scmp.ne.s32.totalorder %s183, %s184
      %p193 = scmp.eq.s32.totalorder %s47, 0
      %p194 = por %p192, %p193
      %p195 = scmp.ne.s32.totalorder %s183, %s184
      %p196 = scmp.eq.s32.totalorder %s48, 1
      %p197 = por %p195, %p196
      %p199 = scmp.ne.s32.totalorder %s184, %s198
      %p200 = scmp.eq.s32.totalorder %s48, 0
      %p201 = por %p199, %p200
      %s203 = sadd.s32 %s202, 1
      %p206 = scmp.eq.s32.totalorder %s42, 1
      %p207 = scmp.ne.s32.totalorder %s202, %s204
      %p208 = scmp.eq.s32.totalorder %s42, 0
      %p209 = por %p207, %p208
      %p210 = scmp.ne.s32.totalorder %s202, %s204
      %p211 = scmp.eq.s32.totalorder %s47, 1
      %p212 = por %p210, %p211
      %p213 = scmp.ne.s32.totalorder %s204, %s205
      %p214 = scmp.eq.s32.totalorder %s47, 0
      %p215 = por %p213, %p214
      %p216 = scmp.ne.s32.totalorder %s204, %s205
      %p217 = scmp.eq.s32.totalorder %s48, 1
      %p218 = por %p216, %p217
      %p220 = scmp.ne.s32.totalorder %s205, %s219
      %p221 = scmp.eq.s32.totalorder %s48, 0
      %p222 = por %p220, %p221
      %s224 = sadd.s32 %s223, 1
      %p227 = scmp.eq.s32.totalorder %s42, 1
      %p228 = scmp.ne.s32.totalorder %s223, %s225
      %p229 = scmp.eq.s32.totalorder %s42, 0
      %p230 = por %p228, %p229
      %p231 = scmp.ne.s32.totalorder %s223, %s225
      %p232 = scmp.eq.s32.totalorder %s47, 1
      %p233 = por %p231, %p232
      %p234 = scmp.ne.s32.totalorder %s225, %s226
      %p235 = scmp.eq.s32.totalorder %s47, 0
      %p236 = por %p234, %p235
      %p237 = scmp.ne.s32.totalorder %s225, %s226
      %p238 = scmp.eq.s32.totalorder %s48, 1
      %p239 = por %p237, %p238
      %p241 = scmp.ne.s32.totalorder %s226, %s240
      %p242 = scmp.eq.s32.totalorder %s48, 0
      %p243 = por %p241, %p242
      %s245 = sadd.s32 %s244, 1
      %p248 = scmp.eq.s32.totalorder %s42, 1
      %p249 = scmp.ne.s32.totalorder %s244, %s246
      %p250 = scmp.eq.s32.totalorder %s42, 0
      %p251 = por %p249, %p250
      %p252 = scmp.ne.s32.totalorder %s244, %s246
      %p253 = scmp.eq.s32.totalorder %s47, 1
      %p254 = por %p252, %p253
      %p255 = scmp.ne.s32.totalorder %s246, %s247
      %p256 = scmp.eq.s32.totalorder %s47, 0
      %p257 = por %p255, %p256
      %p258 = scmp.ne.s32.totalorder %s246, %s247
      %p259 = scmp.eq.s32.totalorder %s48, 1
      %p260 = por %p258, %p259
      %p262 = scmp.ne.s32.totalorder %s247, %s261
      %p263 = scmp.eq.s32.totalorder %s48, 0
      %p264 = por %p262, %p263
      %s266 = sadd.s32 %s265, 1
      %p269 = scmp.eq.s32.totalorder %s42, 1
      %p270 = scmp.ne.s32.totalorder %s265, %s267
      %p271 = scmp.eq.s32.totalorder %s42, 0
      %p272 = por %p270, %p271
      %p273 = scmp.ne.s32.totalorder %s265, %s267
      %p274 = scmp.eq.s32.totalorder %s47, 1
      %p275 = por %p273, %p274
      %p276 = scmp.ne.s32.totalorder %s267, %s268
      %p277 = scmp.eq.s32.totalorder %s47, 0
      %p278 = por %p276, %p277
      %p279 = scmp.ne.s32.totalorder %s267, %s268
      %p280 = scmp.eq.s32.totalorder %s48, 1
      %p281 = por %p279, %p280
      %p283 = scmp.ne.s32.totalorder %s268, %s282
      %p284 = scmp.eq.s32.totalorder %s48, 0
      %p285 = por %p283, %p284
      %s287 = sadd.s32 %s286, 1
      %p290 = scmp.eq.s32.totalorder %s42, 1
      %p291 = scmp.ne.s32.totalorder %s286, %s288
      %p292 = scmp.eq.s32.totalorder %s42, 0
      %p293 = por %p291, %p292
      %p294 = scmp.ne.s32.totalorder %s286, %s288
      %p295 = scmp.eq.s32.totalorder %s47, 1
      %p296 = por %p294, %p295
      %p297 = scmp.ne.s32.totalorder %s288, %s289
      %p298 = scmp.eq.s32.totalorder %s47, 0
      %p299 = por %p297, %p298
      %p300 = scmp.ne.s32.totalorder %s288, %s289
      %p301 = scmp.eq.s32.totalorder %s48, 1
      %p302 = por %p300, %p301
      %p304 = scmp.ne.s32.totalorder %s289, %s303
      %p305 = scmp.eq.s32.totalorder %s48, 0
      %p306 = por %p304, %p305
      %s308 = sadd.s32 %s307, 1
      %p311 = scmp.eq.s32.totalorder %s42, 1
      %p312 = scmp.ne.s32.totalorder %s307, %s309
      %p313 = scmp.eq.s32.totalorder %s42, 0
      %p314 = por %p312, %p313
      %p315 = scmp.ne.s32.totalorder %s307, %s309
      %p316 = scmp.eq.s32.totalorder %s47, 1
      %p317 = por %p315, %p316
      %p318 = scmp.ne.s32.totalorder %s309, %s310
      %p319 = scmp.eq.s32.totalorder %s47, 0
      %p320 = por %p318, %p319
      %p321 = scmp.ne.s32.totalorder %s309, %s310
      %p322 = scmp.eq.s32.totalorder %s48, 1
      %p323 = por %p321, %p322
      %p325 = scmp.ne.s32.totalorder %s310, %s324
      %p326 = scmp.eq.s32.totalorder %s48, 0
      %p327 = por %p325, %p326
      %s329 = sadd.s32 %s328, 1
      %p332 = scmp.eq.s32.totalorder %s42, 1
      %p333 = scmp.ne.s32.totalorder %s328, %s330
      %p334 = scmp.eq.s32.totalorder %s42, 0
      %p335 = por %p333, %p334
      %p336 = scmp.ne.s32.totalorder %s328, %s330
      %p337 = scmp.eq.s32.totalorder %s47, 1
      %p338 = por %p336, %p337
      %p339 = scmp.ne.s32.totalorder %s330, %s331
      %p340 = scmp.eq.s32.totalorder %s47, 0
      %p341 = por %p339, %p340
      %p342 = scmp.ne.s32.totalorder %s330, %s331
      %p343 = scmp.eq.s32.totalorder %s48, 1
      %p344 = por %p342, %p343
      %p346 = scmp.ne.s32.totalorder %s331, %s345
      %p347 = scmp.eq.s32.totalorder %s48, 0
      %p348 = por %p346, %p347
      %s350 = sadd.s32 %s349, 1
      %p353 = scmp.eq.s32.totalorder %s42, 1
      %p354 = scmp.ne.s32.totalorder %s349, %s351
      %p355 = scmp.eq.s32.totalorder %s42, 0
      %p356 = por %p354, %p355
      %p357 = scmp.ne.s32.totalorder %s349, %s351
      %p358 = scmp.eq.s32.totalorder %s47, 1
      %p359 = por %p357, %p358
      %p360 = scmp.ne.s32.totalorder %s351, %s352
      %p361 = scmp.eq.s32.totalorder %s47, 0
      %p362 = por %p360, %p361
      %p363 = scmp.ne.s32.totalorder %s351, %s352
      %p364 = scmp.eq.s32.totalorder %s48, 1
      %p365 = por %p363, %p364
      %p367 = scmp.ne.s32.totalorder %s352, %s366
      %p368 = scmp.eq.s32.totalorder %s48, 0
      %p369 = por %p367, %p368
      %s370 = ssub.s32 %s42, %s49
      %p371 = scmp.eq.s32.totalorder %s370, 0
      %s373 = sadd.s32 %s372, 1
      %s374 = scalar_select %p371, %s372, %s373
      %p377 = pneg %p371
      %p378 = scmp.eq.s32.totalorder %s42, 1
      %p379 = por %p377, %p378
      %p380 = scmp.ne.s32.totalorder %s372, %s375
      %p381 = scmp.eq.s32.totalorder %s42, 0
      %p382 = por %p380, %p381
      %p383 = scmp.ne.s32.totalorder %s372, %s375
      %p384 = scmp.eq.s32.totalorder %s47, 1
      %p385 = por %p383, %p384
      %p386 = scmp.ne.s32.totalorder %s375, %s376
      %p387 = scmp.eq.s32.totalorder %s47, 0
      %p388 = por %p386, %p387
      %p389 = scmp.ne.s32.totalorder %s375, %s376
      %p390 = scmp.eq.s32.totalorder %s48, 1
      %p391 = por %p389, %p390
      %p393 = scmp.ne.s32.totalorder %s376, %s392
      %p394 = scmp.eq.s32.totalorder %s48, 0
      %p395 = por %p393, %p394
      %s397 = sadd.s32 %s396, 1
      %p400 = scmp.eq.s32.totalorder %s42, 1
      %p401 = scmp.ne.s32.totalorder %s396, %s398
      %p402 = scmp.eq.s32.totalorder %s42, 0
      %p403 = por %p401, %p402
      %p404 = scmp.ne.s32.totalorder %s396, %s398
      %p405 = scmp.eq.s32.totalorder %s47, 1
      %p406 = por %p404, %p405
      %p407 = scmp.ne.s32.totalorder %s398, %s399
      %p408 = scmp.eq.s32.totalorder %s47, 0
      %p409 = por %p407, %p408
      %p410 = scmp.ne.s32.totalorder %s398, %s399
      %p411 = scmp.eq.s32.totalorder %s48, 1
      %p412 = por %p410, %p411
      %p414 = scmp.ne.s32.totalorder %s399, %s413
      %p415 = scmp.eq.s32.totalorder %s48, 0
      %p416 = por %p414, %p415
      %p417 = scmp.le.s32.totalorder 1, %s42
      %p418 = scmp.lt.s32.totalorder %s42, 3
      %p419 = pnand %p417, %p418
      %p420 = pneg %p419
      // Predicated region
      $region9: #{tpu_custom_call.1} parent=5 // pred_check
        _
      $region10: #{tpu_custom_call.1} parent=5 // pred_check_branch
        %422 = sbr.rel (%p419) target = $region12
      $region11: #{tpu_custom_call.1} parent=5 // pred_region
        %s423 = ssub.s32 %s42, 1
        // Predicated region
        $region13: #{tpu_custom_call.1} parent=11 // pred_check
          %p424 = pneg %p63
        $region14: #{tpu_custom_call.1} parent=11 // pred_check_branch
          %426 = sbr.rel (%p424) target = $region16
        $region15: #{tpu_custom_call.1} parent=11 // pred_region
          %s428 = ssub.s32 512, 512
          %429 = vsyncadd [#allocation9], %s428
          %s430 = sshll.u32 [#allocation8], 4
          %s431 = int_to_ptr.vmem [resolvable:$true] %s430
          %436 = dma.hbm_to_vmem [thread:$0]  %s1, 512, %s431, [#allocation9], 64, 64, 4
        $region16: #{tpu_custom_call.1} parent=11 // pred_fallthru
          _
        // Predicated region
        $region17: #{tpu_custom_call.1} parent=11 // pred_check
          %p437 = pneg %p110
        $region18: #{tpu_custom_call.1} parent=11 // pred_check_branch
          %439 = sbr.rel (%p437) target = $region20
        $region19: #{tpu_custom_call.1} parent=11 // pred_region
          %s441 = ssub.s32 1024, 1024
          %442 = vsyncadd [#allocation12], %s441
          %s443 = sshll.u32 [#allocation13], 4
          %s444 = int_to_ptr.vmem [resolvable:$true] %s443
          %449 = dma.hbm_to_vmem [thread:$0]  %s3, 1024, %s444, [#allocation12], 64, 64, 4
        $region20: #{tpu_custom_call.1} parent=11 // pred_fallthru
          _
        // Predicated region
        $region21: #{tpu_custom_call.1} parent=11 // pred_check
          %p450 = pneg %p131
        $region22: #{tpu_custom_call.1} parent=11 // pred_check_branch
          %452 = sbr.rel (%p450) target = $region24
        $region23: #{tpu_custom_call.1} parent=11 // pred_region
          _
        $region24: #{tpu_custom_call.1} parent=11 // pred_fallthru
          _
        // Predicated region
        $region25: #{tpu_custom_call.1} parent=11 // pred_check
          %p453 = pneg %p152
        $region26: #{tpu_custom_call.1} parent=11 // pred_check_branch
          %455 = sbr.rel (%p453) target = $region28
        $region27: #{tpu_custom_call.1} parent=11 // pred_region
          %s457 = ssub.s32 1024, 1024
          %458 = vsyncadd [#allocation15], %s457
          %s459 = sshll.u32 [#allocation14], 4
          %s460 = int_to_ptr.vmem [resolvable:$true] %s459
          %465 = dma.hbm_to_vmem [thread:$0]  %s5, 1024, %s460, [#allocation15], 64, 64, 4
        $region28: #{tpu_custom_call.1} parent=11 // pred_fallthru
          _
        // Predicated region
        $region29: #{tpu_custom_call.1} parent=11 // pred_check
          %p466 = pneg %p173
        $region30: #{tpu_custom_call.1} parent=11 // pred_check_branch
          %468 = sbr.rel (%p466) target = $region32
        $region31: #{tpu_custom_call.1} parent=11 // pred_region
          _
        $region32: #{tpu_custom_call.1} parent=11 // pred_fallthru
          _
        // Predicated region
        $region33: #{tpu_custom_call.1} parent=11 // pred_check
          %p469 = pneg %p194
        $region34: #{tpu_custom_call.1} parent=11 // pred_check_branch
          %471 = sbr.rel (%p469) target = $region36
        $region35: #{tpu_custom_call.1} parent=11 // pred_region
          %s473 = ssub.s32 1024, 1024
          %474 = vsyncadd [#allocation15], %s473
          %s475 = sshll.u32 [#allocation16], 4
          %s476 = int_to_ptr.vmem [resolvable:$true] %s475
          %481 = dma.hbm_to_vmem [thread:$0]  %s7, 1024, %s476, [#allocation15], 64, 64, 4
        $region36: #{tpu_custom_call.1} parent=11 // pred_fallthru
          _
        // Predicated region
        $region37: #{tpu_custom_call.1} parent=11 // pred_check
          %p482 = pneg %p215
        $region38: #{tpu_custom_call.1} parent=11 // pred_check_branch
          %484 = sbr.rel (%p482) target = $region40
        $region39: #{tpu_custom_call.1} parent=11 // pred_region
          _
        $region40: #{tpu_custom_call.1} parent=11 // pred_fallthru
          _
        // Predicated region
        $region41: #{tpu_custom_call.1} parent=11 // pred_check
          %p485 = pneg %p236
        $region42: #{tpu_custom_call.1} parent=11 // pred_check_branch
          %487 = sbr.rel (%p485) target = $region44
        $region43: #{tpu_custom_call.1} parent=11 // pred_region
          %s489 = ssub.s32 6144, 6144
          %490 = vsyncadd [#allocation18], %s489
          %s491 = sshll.u32 [#allocation17], 4
          %s492 = int_to_ptr.vmem [resolvable:$true] %s491
          %497 = dma.hbm_to_vmem [thread:$0]  %s9, 6144, %s492, [#allocation18], 384, 384, 24
        $region44: #{tpu_custom_call.1} parent=11 // pred_fallthru
          _
        // Predicated region
        $region45: #{tpu_custom_call.1} parent=11 // pred_check
          %p498 = pneg %p257
        $region46: #{tpu_custom_call.1} parent=11 // pred_check_branch
          %500 = sbr.rel (%p498) target = $region48
        $region47: #{tpu_custom_call.1} parent=11 // pred_region
          _
        $region48: #{tpu_custom_call.1} parent=11 // pred_fallthru
          _
        // Predicated region
        $region49: #{tpu_custom_call.1} parent=11 // pred_check
          %p501 = pneg %p278
        $region50: #{tpu_custom_call.1} parent=11 // pred_check_branch
          %503 = sbr.rel (%p501) target = $region52
        $region51: #{tpu_custom_call.1} parent=11 // pred_region
          _
        $region52: #{tpu_custom_call.1} parent=11 // pred_fallthru
          _
        // Predicated region
        $region53: #{tpu_custom_call.1} parent=11 // pred_check
          %p504 = pneg %p299
        $region54: #{tpu_custom_call.1} parent=11 // pred_check_branch
          %506 = sbr.rel (%p504) target = $region56
        $region55: #{tpu_custom_call.1} parent=11 // pred_region
          _
        $region56: #{tpu_custom_call.1} parent=11 // pred_fallthru
          _
        // Predicated region
        $region57: #{tpu_custom_call.1} parent=11 // pred_check
          %p507 = pneg %p320
        $region58: #{tpu_custom_call.1} parent=11 // pred_check_branch
          %509 = sbr.rel (%p507) target = $region60
        $region59: #{tpu_custom_call.1} parent=11 // pred_region
          %s511 = ssub.s32 4096, 4096
          %512 = vsyncadd [#allocation18], %s511
          %s513 = sshll.u32 [#allocation19], 4
          %s514 = int_to_ptr.vmem [resolvable:$true] %s513
          %519 = dma.hbm_to_vmem [thread:$0]  %s13, 4096, %s514, [#allocation18], 256, 256, 16
        $region60: #{tpu_custom_call.1} parent=11 // pred_fallthru
          _
        // Predicated region
        $region61: #{tpu_custom_call.1} parent=11 // pred_check
          %p520 = pneg %p341
        $region62: #{tpu_custom_call.1} parent=11 // pred_check_branch
          %522 = sbr.rel (%p520) target = $region64
        $region63: #{tpu_custom_call.1} parent=11 // pred_region
          %s524 = ssub.s32 2048, 2048
          %525 = vsyncadd [#allocation21], %s524
          %s526 = sshll.u32 [#allocation20], 4
          %s527 = int_to_ptr.vmem [resolvable:$true] %s526
          %532 = dma.hbm_to_vmem [thread:$0]  %s14, 2048, %s527, [#allocation21], 128, 128, 8
        $region64: #{tpu_custom_call.1} parent=11 // pred_fallthru
          _
        // Predicated region
        $region65: #{tpu_custom_call.1} parent=11 // pred_check
          %p533 = pneg %p362
        $region66: #{tpu_custom_call.1} parent=11 // pred_check_branch
          %535 = sbr.rel (%p533) target = $region68
        $region67: #{tpu_custom_call.1} parent=11 // pred_region
          _
        $region68: #{tpu_custom_call.1} parent=11 // pred_fallthru
          _
      $region12: #{tpu_custom_call.1} parent=5 // pred_fallthru
        _
      %p536 = scmp.lt.s32.totalorder %s42, 2
      // Predicated region
      $region69: #{tpu_custom_call.1} parent=5 // pred_check
        %p537 = pneg %p536
      $region70: #{tpu_custom_call.1} parent=5 // pred_check_branch
        %539 = sbr.rel (%p537) target = $region72
      $region71: #{tpu_custom_call.1} parent=5 // pred_region
        // Predicated region
        $region73: #{tpu_custom_call.1} parent=71 // pred_check
          %p540 = pneg %p83
        $region74: #{tpu_custom_call.1} parent=71 // pred_check_branch
          %542 = sbr.rel (%p540) target = $region76
        $region75: #{tpu_custom_call.1} parent=71 // pred_region
          %s543 = sand.u32 %s42, 1
          %s544 = scalar_lea.sflag [#allocation12], %s543
          %s545 = sand.u32 %s73, 1
          %s546 = smul.addr %s545, 64
          %s547 = scalar_lea.vmem [#allocation11], %s546
          %s548 = smul.u32 4, %s42
          %s550 = ssub.s32 1024, 1024
          %551 = vsyncadd %s544, %s550
          %s552 = smul.addr %s548, 4
          %s553 = smul.addr %s552, 64
          %s554 = scalar_lea.hbm %s2, %s553
          %s555 = sshll.u32 %s547, 4
          %s556 = int_to_ptr.vmem [resolvable:$true] %s555
          %561 = dma.hbm_to_vmem [thread:$0]  %s554, 1024, %s556, %s544, 256, 256, 16
        $region76: #{tpu_custom_call.1} parent=71 // pred_fallthru
          _
      $region72: #{tpu_custom_call.1} parent=5 // pred_fallthru
        _
      %p562 = scmp.le.s32.totalorder 1, %s42
      %p563 = scmp.lt.s32.totalorder %s42, 3
      %p564 = pnand %p562, %p563
      %p565 = pneg %p564
      // Predicated region
      $region77: #{tpu_custom_call.1} parent=5 // pred_check
        _
      $region78: #{tpu_custom_call.1} parent=5 // pred_check_branch
        %567 = sbr.rel (%p564) target = $region80
      $region79: #{tpu_custom_call.1} parent=5 // pred_region
        %s568 = ssub.s32 %s42, 1
        // Predicated region
        $region81: #{tpu_custom_call.1} parent=79 // pred_check
          %p569 = pneg %p63
        $region82: #{tpu_custom_call.1} parent=79 // pred_check_branch
          %571 = sbr.rel (%p569) target = $region84
        $region83: #{tpu_custom_call.1} parent=79 // pred_region
          %572 = dma.done [#allocation9], 512
        $region84: #{tpu_custom_call.1} parent=79 // pred_fallthru
          _
        %s573 = sand.u32 %s47, 1
        %s574 = scalar_lea.sflag [#allocation12], %s573
        %s575 = sand.u32 %s76, 1
        %s576 = smul.addr %s575, 64
        %s577 = scalar_lea.vmem [#allocation11], %s576
        // Predicated region
        $region85: #{tpu_custom_call.1} parent=79 // pred_check
          %p578 = pneg %p89
        $region86: #{tpu_custom_call.1} parent=79 // pred_check_branch
          %580 = sbr.rel (%p578) target = $region88
        $region87: #{tpu_custom_call.1} parent=79 // pred_region
          %581 = dma.done %s574, 1024
        $region88: #{tpu_custom_call.1} parent=79 // pred_fallthru
          _
        // Predicated region
        $region89: #{tpu_custom_call.1} parent=79 // pred_check
          %p582 = pneg %p110
        $region90: #{tpu_custom_call.1} parent=79 // pred_check_branch
          %584 = sbr.rel (%p582) target = $region92
        $region91: #{tpu_custom_call.1} parent=79 // pred_region
          %585 = dma.done [#allocation12], 1024
        $region92: #{tpu_custom_call.1} parent=79 // pred_fallthru
          _
        // Predicated region
        $region93: #{tpu_custom_call.1} parent=79 // pred_check
          %p586 = pneg %p152
        $region94: #{tpu_custom_call.1} parent=79 // pred_check_branch
          %588 = sbr.rel (%p586) target = $region96
        $region95: #{tpu_custom_call.1} parent=79 // pred_region
          %589 = dma.done [#allocation15], 1024
        $region96: #{tpu_custom_call.1} parent=79 // pred_fallthru
          _
        // Predicated region
        $region97: #{tpu_custom_call.1} parent=79 // pred_check
          %p590 = pneg %p194
        $region98: #{tpu_custom_call.1} parent=79 // pred_check_branch
          %592 = sbr.rel (%p590) target = $region100
        $region99: #{tpu_custom_call.1} parent=79 // pred_region
          %593 = dma.done [#allocation15], 1024
        $region100: #{tpu_custom_call.1} parent=79 // pred_fallthru
          _
        // Predicated region
        $region101: #{tpu_custom_call.1} parent=79 // pred_check
          %p594 = pneg %p236
        $region102: #{tpu_custom_call.1} parent=79 // pred_check_branch
          %596 = sbr.rel (%p594) target = $region104
        $region103: #{tpu_custom_call.1} parent=79 // pred_region
          %597 = dma.done [#allocation18], 6144
        $region104: #{tpu_custom_call.1} parent=79 // pred_fallthru
          _
        // Predicated region
        $region105: #{tpu_custom_call.1} parent=79 // pred_check
          %p598 = pneg %p320
        $region106: #{tpu_custom_call.1} parent=79 // pred_check_branch
          %600 = sbr.rel (%p598) target = $region108
        $region107: #{tpu_custom_call.1} parent=79 // pred_region
          %601 = dma.done [#allocation18], 4096
        $region108: #{tpu_custom_call.1} parent=79 // pred_fallthru
          _
        // Predicated region
        $region109: #{tpu_custom_call.1} parent=79 // pred_check
          %p602 = pneg %p341
        $region110: #{tpu_custom_call.1} parent=79 // pred_check_branch
          %604 = sbr.rel (%p602) target = $region112
        $region111: #{tpu_custom_call.1} parent=79 // pred_region
          %605 = dma.done [#allocation21], 2048
        $region112: #{tpu_custom_call.1} parent=79 // pred_fallthru
          _
        %p606 = pneg %p63
        %p607 = pneg %p60
        %s608 = sand.u32 %s47, 1
        %s609 = scalar_lea.sflag [#allocation12], %s608
        %s610 = sand.u32 %s76, 1
        %s611 = smul.addr %s610, 64
        %s612 = scalar_lea.vmem [#allocation11], %s611
        %p613 = pneg %p89
        %p614 = pneg %p86
        %p615 = pneg %p110
        %p616 = pneg %p107
        %p617 = pneg %p131
        %p618 = pneg %p128
        %p619 = pneg %p152
        %p620 = pneg %p149
        %p621 = pneg %p173
        %p622 = pneg %p170
        %p623 = pneg %p194
        %p624 = pneg %p191
        %p625 = pneg %p215
        %p626 = pneg %p212
        %p627 = pneg %p236
        %p628 = pneg %p233
        %p629 = pneg %p257
        %p630 = pneg %p254
        %p631 = pneg %p278
        %p632 = pneg %p275
        %p633 = pneg %p299
        %p634 = pneg %p296
        %p635 = pneg %p320
        %p636 = pneg %p317
        %p637 = pneg %p341
        %p638 = pneg %p338
        %p639 = pneg %p362
        %p640 = pneg %p359
        %p641 = pneg %p388
        %p642 = pneg %p385
        %s643 = sand.u32 %s375, 1
        %s644 = scalar_lea.sflag [#allocation10], %s643
        %s645 = sand.u32 %s375, 1
        %s646 = smul.addr %s645, 32
        %s647 = scalar_lea.vmem [#allocation22], %s646
        %p648 = pneg %p409
        %p649 = pneg %p406
        %s650 = smul.u32 4, %s47
        %s651 = smul.u32 4, %s47
        %v653 = vld [vmem:[#allocation8] sm:$0xf]
        %v654 = vld [vmem:[#allocation8 + $0x4] sm:$0xf]
        %v655 = vld [vmem:[#allocation8 + $0x8] sm:$0xf]
        %v656 = vld [vmem:[#allocation8 + $0xc] sm:$0xf]
        %v657 = vld [vmem:[#allocation8 + $0x10] sm:$0xf]
        %v658 = vld [vmem:[#allocation8 + $0x14] sm:$0xf]
        %v659 = vld [vmem:[#allocation8 + $0x18] sm:$0xf]
        %v660 = vld [vmem:[#allocation8 + $0x1c] sm:$0xf]
        %p661 = scmp.eq.s32.totalorder %s47, 0
        // Predicated region
        $region113: #{tpu_custom_call.1} parent=79 // pred_check
          %p662 = pneg %p661
        $region114: #{tpu_custom_call.1} parent=79 // pred_check_branch
          %664 = sbr.rel (%p662) target = $region116
        $region115: #{tpu_custom_call.1} parent=79 // pred_region
          %v665 = vunpack.c.l.bf16 %v653
          %v666 = vunpack.c.l.bf16 %v654
          %v667 = vunpack.c.l.bf16 %v655
          %v668 = vunpack.c.l.bf16 %v656
          %v669 = vunpack.c.l.bf16 %v657
          %v670 = vunpack.c.l.bf16 %v658
          %v671 = vunpack.c.l.bf16 %v659
          %v672 = vunpack.c.l.bf16 %v660
          %v673 = vadd.f32 %v665, %v666
          %v674 = vrot.slane %v673, 4
          %v675 = vadd.f32 %v673, %v674
          %v676 = vrot.slane %v675, 2
          %v677 = vadd.f32 %v675, %v676
          %v678 = vrot.slane %v677, 1
          %v679 = vadd.f32 %v677, %v678
          %v680 = vadd.f32 %v667, %v668
          %v681 = vrot.slane %v680, 4
          %v682 = vadd.f32 %v680, %v681
          %v683 = vrot.slane %v682, 2
          %v684 = vadd.f32 %v682, %v683
          %v685 = vrot.slane %v684, 1
          %v686 = vadd.f32 %v684, %v685
          %v687 = vadd.f32 %v669, %v670
          %v688 = vrot.slane %v687, 4
          %v689 = vadd.f32 %v687, %v688
          %v690 = vrot.slane %v689, 2
          %v691 = vadd.f32 %v689, %v690
          %v692 = vrot.slane %v691, 1
          %v693 = vadd.f32 %v691, %v692
          %v694 = vadd.f32 %v671, %v672
          %v695 = vrot.slane %v694, 4
          %v696 = vadd.f32 %v694, %v695
          %v697 = vrot.slane %v696, 2
          %v698 = vadd.f32 %v696, %v697
          %v699 = vrot.slane %v698, 1
          %v700 = vadd.f32 %v698, %v699
          %v701 = vmul.f32 %v679, 0.0625
          %v702 = vmul.f32 %v686, 0.0625
          %v703 = vmul.f32 %v693, 0.0625
          %v704 = vmul.f32 %v700, 0.0625
          %v705 = vpack.c.bf16 %v701, %v701
          %v706 = vpack.c.bf16 %v702, %v702
          %v707 = vpack.c.bf16 %v703, %v703
          %v708 = vpack.c.bf16 %v704, %v704
          %v709 = vld [vmem:[#allocation13] sm:$0xf]
          %v710 = vld [vmem:[#allocation13 + $0x4] sm:$0xf]
          %v711 = vld [vmem:[#allocation13 + $0x8] sm:$0xf]
          %v712 = vld [vmem:[#allocation13 + $0xc] sm:$0xf]
          %v713 = vld [vmem:[#allocation13 + $0x10] sm:$0xf]
          %v714 = vld [vmem:[#allocation13 + $0x14] sm:$0xf]
          %v715 = vld [vmem:[#allocation13 + $0x18] sm:$0xf]
          %v716 = vld [vmem:[#allocation13 + $0x1c] sm:$0xf]
          %v717 = vld [vmem:[#allocation13 + $0x20] sm:$0xf]
          %v718 = vld [vmem:[#allocation13 + $0x24] sm:$0xf]
          %v719 = vld [vmem:[#allocation13 + $0x28] sm:$0xf]
          %v720 = vld [vmem:[#allocation13 + $0x2c] sm:$0xf]
          %v721 = vld [vmem:[#allocation13 + $0x30] sm:$0xf]
          %v722 = vld [vmem:[#allocation13 + $0x34] sm:$0xf]
          %v723 = vld [vmem:[#allocation13 + $0x38] sm:$0xf]
          %v724 = vld [vmem:[#allocation13 + $0x3c] sm:$0xf]
          %v725 = vld [vmem:[%s4] sm:$0x1]
          %v727 = vlaneseq
          %v728 = vshrl.u32 %v727, 7
          %v729 = vsub.s32 0, %v728
          %v730 = vrot.slane %v725, %v729
          %v736 = vunpack.c.l.b16 %v705
          %v737 = vunpack.c.l.b16 %v706
          %v738 = vunpack.c.l.b16 %v707
          %v739 = vunpack.c.l.b16 %v708
          %vm740 = vcmask 1041409
          %v741 = vsel %vm740, %v737, %v736
          %vm742 = vcmask 1042434
          %v743 = vsel %vm742, %v738, %v741
          %vm744 = vcmask 1043459
          %v745 = vsel %vm744, %v739, %v743
          %v746 = vpack.c.b16 %v745, %v745
          %v764 = vunpack.c.l.b16 %v709
          %v765 = vunpack.c.l.b16 %v710
          %v766 = vunpack.c.l.b16 %v711
          %v767 = vunpack.c.l.b16 %v712
          %v768 = vunpack.c.l.b16 %v713
          %v769 = vunpack.c.l.b16 %v714
          %v770 = vunpack.c.l.b16 %v715
          %v771 = vunpack.c.l.b16 %v716
          %v772 = vunpack.c.l.b16 %v717
          %v773 = vunpack.c.l.b16 %v718
          %v774 = vunpack.c.l.b16 %v719
          %v775 = vunpack.c.l.b16 %v720
          %v776 = vunpack.c.l.b16 %v721
          %v777 = vunpack.c.l.b16 %v722
          %v778 = vunpack.c.l.b16 %v723
          %v779 = vunpack.c.l.b16 %v724
          %v780 = vpack.c.b16 %v765, %v764
          %v781 = vpack.c.b16 %v767, %v766
          %v782 = vpack.c.b16 %v769, %v768
          %v783 = vpack.c.b16 %v771, %v770
          %v784 = vpack.c.b16 %v773, %v772
          %v785 = vpack.c.b16 %v775, %v774
          %v786 = vpack.c.b16 %v777, %v776
          %v787 = vpack.c.b16 %v779, %v778
          %796 = vmatprep.subr.bf16.mxu0 0
          %797 = vmatpush1.bf16.msra.mxu0 %v780
          %798 = vmatprep.subr.bf16.mxu0 0
          %799 = vmatpush1.bf16.msra.mxu0 %v781
          %800 = vmatprep.subr.bf16.mxu0 0
          %801 = vmatpush1.bf16.msra.mxu0 %v782
          %802 = vmatprep.subr.bf16.mxu0 0
          %803 = vmatpush1.bf16.msra.mxu0 %v783
          %804 = vmatprep.subr.bf16.mxu0 0
          %805 = vmatpush1.bf16.msra.mxu0 %v784
          %806 = vmatprep.subr.bf16.mxu0 0
          %807 = vmatpush1.bf16.msra.mxu0 %v785
          %808 = vmatprep.subr.bf16.mxu0 0
          %809 = vmatpush1.bf16.msra.mxu0 %v786
          %810 = vmatprep.subr.bf16.mxu0 0
          %811 = vmatpush1.bf16.msra.mxu0 %v787
          %812 = vmatprep.subr.bf16.mxu0 0
          %813 = vmatpush1.bf16.msra.mxu0 0
          %814 = vmatprep.subr.bf16.mxu0 0
          %815 = vmatpush1.bf16.msra.mxu0 0
          %816 = vmatprep.subr.bf16.mxu0 0
          %817 = vmatpush1.bf16.msra.mxu0 0
          %818 = vmatprep.subr.bf16.mxu0 0
          %819 = vmatpush1.bf16.msra.mxu0 0
          %820 = vmatprep.subr.bf16.mxu0 0
          %821 = vmatpush1.bf16.msra.mxu0 0
          %822 = vmatprep.subr.bf16.mxu0 0
          %823 = vmatpush1.bf16.msra.mxu0 0
          %824 = vmatprep.subr.bf16.mxu0 0
          %825 = vmatpush1.bf16.msra.mxu0 0
          %826 = vmatprep.subr.bf16.mxu0 0
          %827 = vmatpush1.bf16.msra.mxu0 0
          %828 = vmatprep.mubr.bf16.mxu0 0
          %829 = vmatmul.mubr.bf16.gmra.mrb[0].mxu0 %v746
          %v830 = vpop.f32.mrb[0].mxu0
          %v831 = vadd.f32 %v730, %v830
          %v832 = vpop.f32.mrb[0].mxu0
          %v833 = vpop.f32.mrb[0].mxu0
          %v834 = vpop.f32.mrb[0].mxu0
          %835 = vdwg.mxu0
          %836 = vst [vmem:[#allocation2] sm:$0xf] %v831
          %v837 = vld [vmem:[#allocation14] sm:$0xf]
          %v838 = vld [vmem:[#allocation14 + $0x4] sm:$0xf]
          %v839 = vld [vmem:[#allocation14 + $0x8] sm:$0xf]
          %v840 = vld [vmem:[#allocation14 + $0xc] sm:$0xf]
          %v841 = vld [vmem:[#allocation14 + $0x10] sm:$0xf]
          %v842 = vld [vmem:[#allocation14 + $0x14] sm:$0xf]
          %v843 = vld [vmem:[#allocation14 + $0x18] sm:$0xf]
          %v844 = vld [vmem:[#allocation14 + $0x1c] sm:$0xf]
          %v845 = vld [vmem:[#allocation14 + $0x20] sm:$0xf]
          %v846 = vld [vmem:[#allocation14 + $0x24] sm:$0xf]
          %v847 = vld [vmem:[#allocation14 + $0x28] sm:$0xf]
          %v848 = vld [vmem:[#allocation14 + $0x2c] sm:$0xf]
          %v849 = vld [vmem:[#allocation14 + $0x30] sm:$0xf]
          %v850 = vld [vmem:[#allocation14 + $0x34] sm:$0xf]
          %v851 = vld [vmem:[#allocation14 + $0x38] sm:$0xf]
          %v852 = vld [vmem:[#allocation14 + $0x3c] sm:$0xf]
          %v853 = vld [vmem:[%s6] sm:$0x1]
          %v855 = vlaneseq
          %v856 = vshrl.u32 %v855, 7
          %v857 = vsub.s32 0, %v856
          %v858 = vrot.slane %v853, %v857
          %v876 = vunpack.c.l.b16 %v837
          %v877 = vunpack.c.l.b16 %v838
          %v878 = vunpack.c.l.b16 %v839
          %v879 = vunpack.c.l.b16 %v840
          %v880 = vunpack.c.l.b16 %v841
          %v881 = vunpack.c.l.b16 %v842
          %v882 = vunpack.c.l.b16 %v843
          %v883 = vunpack.c.l.b16 %v844
          %v884 = vunpack.c.l.b16 %v845
          %v885 = vunpack.c.l.b16 %v846
          %v886 = vunpack.c.l.b16 %v847
          %v887 = vunpack.c.l.b16 %v848
          %v888 = vunpack.c.l.b16 %v849
          %v889 = vunpack.c.l.b16 %v850
          %v890 = vunpack.c.l.b16 %v851
          %v891 = vunpack.c.l.b16 %v852
          %v892 = vpack.c.b16 %v877, %v876
          %v893 = vpack.c.b16 %v879, %v878
          %v894 = vpack.c.b16 %v881, %v880
          %v895 = vpack.c.b16 %v883, %v882
          %v896 = vpack.c.b16 %v885, %v884
          %v897 = vpack.c.b16 %v887, %v886
          %v898 = vpack.c.b16 %v889, %v888
          %v899 = vpack.c.b16 %v891, %v890
          %908 = vmatprep.subr.bf16.mxu0 0
          %909 = vmatpush1.bf16.msra.mxu0 %v892
          %910 = vmatprep.subr.bf16.mxu0 0
          %911 = vmatpush1.bf16.msra.mxu0 %v893
          %912 = vmatprep.subr.bf16.mxu0 0
          %913 = vmatpush1.bf16.msra.mxu0 %v894
          %914 = vmatprep.subr.bf16.mxu0 0
          %915 = vmatpush1.bf16.msra.mxu0 %v895
          %916 = vmatprep.subr.bf16.mxu0 0
          %917 = vmatpush1.bf16.msra.mxu0 %v896
          %918 = vmatprep.subr.bf16.mxu0 0
          %919 = vmatpush1.bf16.msra.mxu0 %v897
          %920 = vmatprep.subr.bf16.mxu0 0
          %921 = vmatpush1.bf16.msra.mxu0 %v898
          %922 = vmatprep.subr.bf16.mxu0 0
          %923 = vmatpush1.bf16.msra.mxu0 %v899
          %924 = vmatprep.subr.bf16.mxu0 0
          %925 = vmatpush1.bf16.msra.mxu0 0
          %926 = vmatprep.subr.bf16.mxu0 0
          %927 = vmatpush1.bf16.msra.mxu0 0
          %928 = vmatprep.subr.bf16.mxu0 0
          %929 = vmatpush1.bf16.msra.mxu0 0
          %930 = vmatprep.subr.bf16.mxu0 0
          %931 = vmatpush1.bf16.msra.mxu0 0
          %932 = vmatprep.subr.bf16.mxu0 0
          %933 = vmatpush1.bf16.msra.mxu0 0
          %934 = vmatprep.subr.bf16.mxu0 0
          %935 = vmatpush1.bf16.msra.mxu0 0
          %936 = vmatprep.subr.bf16.mxu0 0
          %937 = vmatpush1.bf16.msra.mxu0 0
          %938 = vmatprep.subr.bf16.mxu0 0
          %939 = vmatpush1.bf16.msra.mxu0 0
          %940 = vmatprep.mubr.bf16.mxu0 0
          %941 = vmatmul.mubr.bf16.gmra.mrb[0].mxu0 %v746
          %v942 = vpop.f32.mrb[0].mxu0
          %v943 = vadd.f32 %v858, %v942
          %v944 = vpop.f32.mrb[0].mxu0
          %v945 = vpop.f32.mrb[0].mxu0
          %v946 = vpop.f32.mrb[0].mxu0
          %947 = vdwg.mxu0
          %948 = vst [vmem:[#allocation3] sm:$0xf] %v943
          %v949 = vld [vmem:[#allocation16] sm:$0xf]
          %v950 = vld [vmem:[#allocation16 + $0x4] sm:$0xf]
          %v951 = vld [vmem:[#allocation16 + $0x8] sm:$0xf]
          %v952 = vld [vmem:[#allocation16 + $0xc] sm:$0xf]
          %v953 = vld [vmem:[#allocation16 + $0x10] sm:$0xf]
          %v954 = vld [vmem:[#allocation16 + $0x14] sm:$0xf]
          %v955 = vld [vmem:[#allocation16 + $0x18] sm:$0xf]
          %v956 = vld [vmem:[#allocation16 + $0x1c] sm:$0xf]
          %v957 = vld [vmem:[#allocation16 + $0x20] sm:$0xf]
          %v958 = vld [vmem:[#allocation16 + $0x24] sm:$0xf]
          %v959 = vld [vmem:[#allocation16 + $0x28] sm:$0xf]
          %v960 = vld [vmem:[#allocation16 + $0x2c] sm:$0xf]
          %v961 = vld [vmem:[#allocation16 + $0x30] sm:$0xf]
          %v962 = vld [vmem:[#allocation16 + $0x34] sm:$0xf]
          %v963 = vld [vmem:[#allocation16 + $0x38] sm:$0xf]
          %v964 = vld [vmem:[#allocation16 + $0x3c] sm:$0xf]
          %v965 = vld [vmem:[%s8] sm:$0x1]
          %v967 = vlaneseq
          %v968 = vshrl.u32 %v967, 7
          %v969 = vsub.s32 0, %v968
          %v970 = vrot.slane %v965, %v969
          %v980 = vunpack.c.l.b16 %v653
          %v981 = vunpack.c.l.b16 %v654
          %v982 = vunpack.c.l.b16 %v655
          %v983 = vunpack.c.l.b16 %v656
          %v984 = vunpack.c.l.b16 %v657
          %v985 = vunpack.c.l.b16 %v658
          %v986 = vunpack.c.l.b16 %v659
          %v987 = vunpack.c.l.b16 %v660
          %v988 = vpack.c.b16 %v981, %v980
          %v989 = vpack.c.b16 %v983, %v982
          %v990 = vpack.c.b16 %v985, %v984
          %v991 = vpack.c.b16 %v987, %v986
          %v1012 = vunpack.c.l.b16 %v949
          %v1013 = vunpack.c.l.b16 %v950
          %v1014 = vunpack.c.l.b16 %v951
          %v1015 = vunpack.c.l.b16 %v952
          %v1016 = vunpack.c.l.b16 %v953
          %v1017 = vunpack.c.l.b16 %v954
          %v1018 = vunpack.c.l.b16 %v955
          %v1019 = vunpack.c.l.b16 %v956
          %v1020 = vunpack.c.l.b16 %v957
          %v1021 = vunpack.c.l.b16 %v958
          %v1022 = vunpack.c.l.b16 %v959
          %v1023 = vunpack.c.l.b16 %v960
          %v1024 = vunpack.c.l.b16 %v961
          %v1025 = vunpack.c.l.b16 %v962
          %v1026 = vunpack.c.l.b16 %v963
          %v1027 = vunpack.c.l.b16 %v964
          %v1028 = vpack.c.b16 %v1013, %v1012
          %v1029 = vpack.c.b16 %v1015, %v1014
          %v1030 = vpack.c.b16 %v1017, %v1016
          %v1031 = vpack.c.b16 %v1019, %v1018
          %v1032 = vpack.c.b16 %v1021, %v1020
          %v1033 = vpack.c.b16 %v1023, %v1022
          %v1034 = vpack.c.b16 %v1025, %v1024
          %v1035 = vpack.c.b16 %v1027, %v1026
          %1044 = vmatprep.subr.bf16.mxu0 0
          %1045 = vmatpush1.bf16.msra.mxu0 %v1028
          %1046 = vmatprep.subr.bf16.mxu0 0
          %1047 = vmatpush1.bf16.msra.mxu0 %v1029
          %1048 = vmatprep.subr.bf16.mxu0 0
          %1049 = vmatpush1.bf16.msra.mxu0 %v1030
          %1050 = vmatprep.subr.bf16.mxu0 0
          %1051 = vmatpush1.bf16.msra.mxu0 %v1031
          %1052 = vmatprep.subr.bf16.mxu0 0
          %1053 = vmatpush1.bf16.msra.mxu0 %v1032
          %1054 = vmatprep.subr.bf16.mxu0 0
          %1055 = vmatpush1.bf16.msra.mxu0 %v1033
          %1056 = vmatprep.subr.bf16.mxu0 0
          %1057 = vmatpush1.bf16.msra.mxu0 %v1034
          %1058 = vmatprep.subr.bf16.mxu0 0
          %1059 = vmatpush1.bf16.msra.mxu0 %v1035
          %1060 = vmatprep.subr.bf16.mxu0 0
          %1061 = vmatpush1.bf16.msra.mxu0 0
          %1062 = vmatprep.subr.bf16.mxu0 0
          %1063 = vmatpush1.bf16.msra.mxu0 0
          %1064 = vmatprep.subr.bf16.mxu0 0
          %1065 = vmatpush1.bf16.msra.mxu0 0
          %1066 = vmatprep.subr.bf16.mxu0 0
          %1067 = vmatpush1.bf16.msra.mxu0 0
          %1068 = vmatprep.subr.bf16.mxu0 0
          %1069 = vmatpush1.bf16.msra.mxu0 0
          %1070 = vmatprep.subr.bf16.mxu0 0
          %1071 = vmatpush1.bf16.msra.mxu0 0
          %1072 = vmatprep.subr.bf16.mxu0 0
          %1073 = vmatpush1.bf16.msra.mxu0 0
          %1074 = vmatprep.subr.bf16.mxu0 0
          %1075 = vmatpush1.bf16.msra.mxu0 0
          %1076 = vmatprep.mubr.bf16.mxu0 0
          %1077 = vmatmul.mubr.bf16.gmra.mrb[0].mxu0 %v988
          %v1078 = vpop.f32.mrb[0].mxu0
          %v1079 = vadd.f32 %v970, %v1078
          %v1080 = vpop.f32.mrb[0].mxu0
          %v1081 = vpop.f32.mrb[0].mxu0
          %v1082 = vadd.f32 %v970, %v1081
          %v1083 = vpop.f32.mrb[0].mxu0
          %1084 = vmatprep.mubr.bf16.mxu0 0
          %1085 = vmatmul.mubr.bf16.gmra.mrb[0].mxu0 %v989
          %v1086 = vpop.f32.mrb[0].mxu0
          %v1087 = vadd.f32 %v970, %v1086
          %v1088 = vpop.f32.mrb[0].mxu0
          %v1089 = vpop.f32.mrb[0].mxu0
          %v1090 = vadd.f32 %v970, %v1089
          %v1091 = vpop.f32.mrb[0].mxu0
          %1092 = vmatprep.mubr.bf16.mxu0 0
          %1093 = vmatmul.mubr.bf16.gmra.mrb[0].mxu0 %v990
          %v1094 = vpop.f32.mrb[0].mxu0
          %v1095 = vadd.f32 %v970, %v1094
          %v1096 = vpop.f32.mrb[0].mxu0
          %v1097 = vpop.f32.mrb[0].mxu0
          %v1098 = vadd.f32 %v970, %v1097
          %v1099 = vpop.f32.mrb[0].mxu0
          %1100 = vmatprep.mubr.bf16.mxu0 0
          %1101 = vmatmul.mubr.bf16.gmra.mrb[0].mxu0 %v991
          %v1102 = vpop.f32.mrb[0].mxu0
          %v1103 = vadd.f32 %v970, %v1102
          %v1104 = vpop.f32.mrb[0].mxu0
          %v1105 = vpop.f32.mrb[0].mxu0
          %v1106 = vadd.f32 %v970, %v1105
          %v1107 = vpop.f32.mrb[0].mxu0
          %1108 = vdwg.mxu0
          %1109 = vst [vmem:[#allocation4] sm:$0xff] %v1079
          %1110 = vst [vmem:[#allocation4 + $0x8] sm:$0xff] %v1082
          %1111 = vst [vmem:[#allocation4 + $0x10] sm:$0xff] %v1087
          %1112 = vst [vmem:[#allocation4 + $0x18] sm:$0xff] %v1090
          %1113 = vst [vmem:[#allocation4 + $0x20] sm:$0xff] %v1095
          %1114 = vst [vmem:[#allocation4 + $0x28] sm:$0xff] %v1098
          %1115 = vst [vmem:[#allocation4 + $0x30] sm:$0xff] %v1103
          %1116 = vst [vmem:[#allocation4 + $0x38] sm:$0xff] %v1106
        $region116: #{tpu_custom_call.1} parent=79 // pred_fallthru
          _
        %v1117 = vunpack.c.l.bf16 %v653
        %v1118 = vunpack.c.l.bf16 %v654
        %v1119 = vunpack.c.l.bf16 %v655
        %v1120 = vunpack.c.l.bf16 %v656
        %v1121 = vunpack.c.l.bf16 %v657
        %v1122 = vunpack.c.l.bf16 %v658
        %v1123 = vunpack.c.l.bf16 %v659
        %v1124 = vunpack.c.l.bf16 %v660
        %v1125 = vld [vmem:[#allocation4] sm:$0xff]
        %v1126 = vld [vmem:[#allocation4 + $0x8] sm:$0xff]
        %v1127 = vld [vmem:[#allocation4 + $0x10] sm:$0xff]
        %v1128 = vld [vmem:[#allocation4 + $0x18] sm:$0xff]
        %v1129 = vld [vmem:[#allocation4 + $0x20] sm:$0xff]
        %v1130 = vld [vmem:[#allocation4 + $0x28] sm:$0xff]
        %v1131 = vld [vmem:[#allocation4 + $0x30] sm:$0xff]
        %v1132 = vld [vmem:[#allocation4 + $0x38] sm:$0xff]
        %v1133 = vld [vmem:[%s11] sm:$0x1]
        %s1134 = sld [smem:[#allocation7]]
        %v1135 = vlaneseq
        %v1136 = vshrl.u32 %v1135, 7
        %s1137 = smul.u32 %s47, 4
        %v1138 = vld [vmem:[#allocation2] sm:$0xf]
        %v1139 = vld [vmem:[#allocation3] sm:$0xf]
        %v1140 = vpack.c.bf16 %v1138, %v1138
        %v1141 = vld [vmem:[#allocation17] sm:$0xff]
        %v1142 = vld [vmem:[#allocation17 + $0x8] sm:$0xff]
        %v1143 = vld [vmem:[#allocation17 + $0x10] sm:$0xff]
        %v1144 = vld [vmem:[#allocation17 + $0x18] sm:$0xff]
        %v1145 = vld [vmem:[#allocation17 + $0x20] sm:$0xff]
        %v1146 = vld [vmem:[#allocation17 + $0x28] sm:$0xff]
        %v1147 = vld [vmem:[#allocation17 + $0x30] sm:$0xff]
        %v1148 = vld [vmem:[#allocation17 + $0x38] sm:$0xff]
        %v1149 = vld [vmem:[#allocation17 + $0x40] sm:$0xff]
        %v1150 = vld [vmem:[#allocation17 + $0x48] sm:$0xff]
        %v1151 = vld [vmem:[#allocation17 + $0x50] sm:$0xff]
        %v1152 = vld [vmem:[#allocation17 + $0x58] sm:$0xff]
        %v1153 = vld [vmem:[#allocation17 + $0x60] sm:$0xff]
        %v1154 = vld [vmem:[#allocation17 + $0x68] sm:$0xff]
        %v1155 = vld [vmem:[#allocation17 + $0x70] sm:$0xff]
        %v1156 = vld [vmem:[#allocation17 + $0x78] sm:$0xff]
        %v1157 = vld [vmem:[#allocation17 + $0x80] sm:$0xff]
        %v1158 = vld [vmem:[#allocation17 + $0x88] sm:$0xff]
        %v1159 = vld [vmem:[#allocation17 + $0x90] sm:$0xff]
        %v1160 = vld [vmem:[#allocation17 + $0x98] sm:$0xff]
        %v1161 = vld [vmem:[#allocation17 + $0xa0] sm:$0xff]
        %v1162 = vld [vmem:[#allocation17 + $0xa8] sm:$0xff]
        %v1163 = vld [vmem:[#allocation17 + $0xb0] sm:$0xff]
        %v1164 = vld [vmem:[#allocation17 + $0xb8] sm:$0xff]
        %v1165 = vld [vmem:[#allocation17 + $0xc0] sm:$0xff]
        %v1166 = vld [vmem:[#allocation17 + $0xc8] sm:$0xff]
        %v1167 = vld [vmem:[#allocation17 + $0xd0] sm:$0xff]
        %v1168 = vld [vmem:[#allocation17 + $0xd8] sm:$0xff]
        %v1169 = vld [vmem:[#allocation17 + $0xe0] sm:$0xff]
        %v1170 = vld [vmem:[#allocation17 + $0xe8] sm:$0xff]
        %v1171 = vld [vmem:[#allocation17 + $0xf0] sm:$0xff]
        %v1172 = vld [vmem:[#allocation17 + $0xf8] sm:$0xff]
        %v1173 = vld [vmem:[#allocation17 + $0x100] sm:$0xff]
        %v1174 = vld [vmem:[#allocation17 + $0x108] sm:$0xff]
        %v1175 = vld [vmem:[#allocation17 + $0x110] sm:$0xff]
        %v1176 = vld [vmem:[#allocation17 + $0x118] sm:$0xff]
        %v1177 = vld [vmem:[#allocation17 + $0x120] sm:$0xff]
        %v1178 = vld [vmem:[#allocation17 + $0x128] sm:$0xff]
        %v1179 = vld [vmem:[#allocation17 + $0x130] sm:$0xff]
        %v1180 = vld [vmem:[#allocation17 + $0x138] sm:$0xff]
        %v1181 = vld [vmem:[#allocation17 + $0x140] sm:$0xff]
        %v1182 = vld [vmem:[#allocation17 + $0x148] sm:$0xff]
        %v1183 = vld [vmem:[#allocation17 + $0x150] sm:$0xff]
        %v1184 = vld [vmem:[#allocation17 + $0x158] sm:$0xff]
        %v1185 = vld [vmem:[#allocation17 + $0x160] sm:$0xff]
        %v1186 = vld [vmem:[#allocation17 + $0x168] sm:$0xff]
        %v1187 = vld [vmem:[#allocation17 + $0x170] sm:$0xff]
        %v1188 = vld [vmem:[#allocation17 + $0x178] sm:$0xff]
        %v1189 = vld [vmem:[%s10] sm:$0x3f]
        %v1191 = vlaneseq
        %v1192 = vshrl.u32 %v1191, 7
        %v1193 = vsub.s32 0, %v1192
        %v1194 = vrot.slane %v1189, %v1193
        %v1195 = vlaneseq
        %v1196 = vshrl.u32 %v1195, 7
        %v1197 = vsub.s32 1, %v1196
        %v1198 = vrot.slane %v1189, %v1197
        %v1199 = vlaneseq
        %v1200 = vshrl.u32 %v1199, 7
        %v1201 = vsub.s32 2, %v1200
        %v1202 = vrot.slane %v1189, %v1201
        %v1203 = vlaneseq
        %v1204 = vshrl.u32 %v1203, 7
        %v1205 = vsub.s32 3, %v1204
        %v1206 = vrot.slane %v1189, %v1205
        %v1207 = vlaneseq
        %v1208 = vshrl.u32 %v1207, 7
        %v1209 = vsub.s32 4, %v1208
        %v1210 = vrot.slane %v1189, %v1209
        %v1211 = vlaneseq
        %v1212 = vshrl.u32 %v1211, 7
        %v1213 = vsub.s32 5, %v1212
        %v1214 = vrot.slane %v1189, %v1213
        %v1269 = vunpack.c.l.b16 %v1141
        %v1270 = vunpack.c.h.b16 %v1141
        %v1271 = vunpack.c.l.b16 %v1142
        %v1272 = vunpack.c.h.b16 %v1142
        %v1273 = vunpack.c.l.b16 %v1143
        %v1274 = vunpack.c.h.b16 %v1143
        %v1275 = vunpack.c.l.b16 %v1144
        %v1276 = vunpack.c.h.b16 %v1144
        %v1277 = vunpack.c.l.b16 %v1145
        %v1278 = vunpack.c.h.b16 %v1145
        %v1279 = vunpack.c.l.b16 %v1146
        %v1280 = vunpack.c.h.b16 %v1146
        %v1281 = vunpack.c.l.b16 %v1147
        %v1282 = vunpack.c.h.b16 %v1147
        %v1283 = vunpack.c.l.b16 %v1148
        %v1284 = vunpack.c.h.b16 %v1148
        %v1285 = vunpack.c.l.b16 %v1149
        %v1286 = vunpack.c.h.b16 %v1149
        %v1287 = vunpack.c.l.b16 %v1150
        %v1288 = vunpack.c.h.b16 %v1150
        %v1289 = vunpack.c.l.b16 %v1151
        %v1290 = vunpack.c.h.b16 %v1151
        %v1291 = vunpack.c.l.b16 %v1152
        %v1292 = vunpack.c.h.b16 %v1152
        %v1293 = vunpack.c.l.b16 %v1153
        %v1294 = vunpack.c.h.b16 %v1153
        %v1295 = vunpack.c.l.b16 %v1154
        %v1296 = vunpack.c.h.b16 %v1154
        %v1297 = vunpack.c.l.b16 %v1155
        %v1298 = vunpack.c.h.b16 %v1155
        %v1299 = vunpack.c.l.b16 %v1156
        %v1300 = vunpack.c.h.b16 %v1156
        %v1301 = vunpack.c.l.b16 %v1157
        %v1302 = vunpack.c.h.b16 %v1157
        %v1303 = vunpack.c.l.b16 %v1158
        %v1304 = vunpack.c.h.b16 %v1158
        %v1305 = vunpack.c.l.b16 %v1159
        %v1306 = vunpack.c.h.b16 %v1159
        %v1307 = vunpack.c.l.b16 %v1160
        %v1308 = vunpack.c.h.b16 %v1160
        %v1309 = vunpack.c.l.b16 %v1161
        %v1310 = vunpack.c.h.b16 %v1161
        %v1311 = vunpack.c.l.b16 %v1162
        %v1312 = vunpack.c.h.b16 %v1162
        %v1313 = vunpack.c.l.b16 %v1163
        %v1314 = vunpack.c.h.b16 %v1163
        %v1315 = vunpack.c.l.b16 %v1164
        %v1316 = vunpack.c.h.b16 %v1164
        %v1317 = vunpack.c.l.b16 %v1165
        %v1318 = vunpack.c.h.b16 %v1165
        %v1319 = vunpack.c.l.b16 %v1166
        %v1320 = vunpack.c.h.b16 %v1166
        %v1321 = vunpack.c.l.b16 %v1167
        %v1322 = vunpack.c.h.b16 %v1167
        %v1323 = vunpack.c.l.b16 %v1168
        %v1324 = vunpack.c.h.b16 %v1168
        %v1325 = vunpack.c.l.b16 %v1169
        %v1326 = vunpack.c.h.b16 %v1169
        %v1327 = vunpack.c.l.b16 %v1170
        %v1328 = vunpack.c.h.b16 %v1170
        %v1329 = vunpack.c.l.b16 %v1171
        %v1330 = vunpack.c.h.b16 %v1171
        %v1331 = vunpack.c.l.b16 %v1172
        %v1332 = vunpack.c.h.b16 %v1172
        %v1333 = vunpack.c.l.b16 %v1173
        %v1334 = vunpack.c.h.b16 %v1173
        %v1335 = vunpack.c.l.b16 %v1174
        %v1336 = vunpack.c.h.b16 %v1174
        %v1337 = vunpack.c.l.b16 %v1175
        %v1338 = vunpack.c.h.b16 %v1175
        %v1339 = vunpack.c.l.b16 %v1176
        %v1340 = vunpack.c.h.b16 %v1176
        %v1341 = vunpack.c.l.b16 %v1177
        %v1342 = vunpack.c.h.b16 %v1177
        %v1343 = vunpack.c.l.b16 %v1178
        %v1344 = vunpack.c.h.b16 %v1178
        %v1345 = vunpack.c.l.b16 %v1179
        %v1346 = vunpack.c.h.b16 %v1179
        %v1347 = vunpack.c.l.b16 %v1180
        %v1348 = vunpack.c.h.b16 %v1180
        %v1349 = vunpack.c.l.b16 %v1181
        %v1350 = vunpack.c.h.b16 %v1181
        %v1351 = vunpack.c.l.b16 %v1182
        %v1352 = vunpack.c.h.b16 %v1182
        %v1353 = vunpack.c.l.b16 %v1183
        %v1354 = vunpack.c.h.b16 %v1183
        %v1355 = vunpack.c.l.b16 %v1184
        %v1356 = vunpack.c.h.b16 %v1184
        %v1357 = vunpack.c.l.b16 %v1185
        %v1358 = vunpack.c.h.b16 %v1185
        %v1359 = vunpack.c.l.b16 %v1186
        %v1360 = vunpack.c.h.b16 %v1186
        %v1361 = vunpack.c.l.b16 %v1187
        %v1362 = vunpack.c.h.b16 %v1187
        %v1363 = vunpack.c.l.b16 %v1188
        %v1364 = vunpack.c.h.b16 %v1188
        %v1365 = vpack.c.b16 %v1275, %v1269
        %v1366 = vpack.c.b16 %v1276, %v1270
        %v1367 = vpack.c.b16 %v1277, %v1271
        %v1368 = vpack.c.b16 %v1278, %v1272
        %v1369 = vpack.c.b16 %v1279, %v1273
        %v1370 = vpack.c.b16 %v1280, %v1274
        %v1371 = vpack.c.b16 %v1287, %v1281
        %v1372 = vpack.c.b16 %v1288, %v1282
        %v1373 = vpack.c.b16 %v1289, %v1283
        %v1374 = vpack.c.b16 %v1290, %v1284
        %v1375 = vpack.c.b16 %v1291, %v1285
        %v1376 = vpack.c.b16 %v1292, %v1286
        %v1377 = vpack.c.b16 %v1299, %v1293
        %v1378 = vpack.c.b16 %v1300, %v1294
        %v1379 = vpack.c.b16 %v1301, %v1295
        %v1380 = vpack.c.b16 %v1302, %v1296
        %v1381 = vpack.c.b16 %v1303, %v1297
        %v1382 = vpack.c.b16 %v1304, %v1298
        %v1383 = vpack.c.b16 %v1311, %v1305
        %v1384 = vpack.c.b16 %v1312, %v1306
        %v1385 = vpack.c.b16 %v1313, %v1307
        %v1386 = vpack.c.b16 %v1314, %v1308
        %v1387 = vpack.c.b16 %v1315, %v1309
        %v1388 = vpack.c.b16 %v1316, %v1310
        %v1389 = vpack.c.b16 %v1323, %v1317
        %v1390 = vpack.c.b16 %v1324, %v1318
        %v1391 = vpack.c.b16 %v1325, %v1319
        %v1392 = vpack.c.b16 %v1326, %v1320
        %v1393 = vpack.c.b16 %v1327, %v1321
        %v1394 = vpack.c.b16 %v1328, %v1322
        %v1395 = vpack.c.b16 %v1335, %v1329
        %v1396 = vpack.c.b16 %v1336, %v1330
        %v1397 = vpack.c.b16 %v1337, %v1331
        %v1398 = vpack.c.b16 %v1338, %v1332
        %v1399 = vpack.c.b16 %v1339, %v1333
        %v1400 = vpack.c.b16 %v1340, %v1334
        %v1401 = vpack.c.b16 %v1347, %v1341
        %v1402 = vpack.c.b16 %v1348, %v1342
        %v1403 = vpack.c.b16 %v1349, %v1343
        %v1404 = vpack.c.b16 %v1350, %v1344
        %v1405 = vpack.c.b16 %v1351, %v1345
        %v1406 = vpack.c.b16 %v1352, %v1346
        %v1407 = vpack.c.b16 %v1359, %v1353
        %v1408 = vpack.c.b16 %v1360, %v1354
        %v1409 = vpack.c.b16 %v1361, %v1355
        %v1410 = vpack.c.b16 %v1362, %v1356
        %v1411 = vpack.c.b16 %v1363, %v1357
        %v1412 = vpack.c.b16 %v1364, %v1358
        %1461 = vmatprep.subr.bf16.mxu0 %v1366
        %1462 = vmatpush1.bf16.msra.mxu0 %v1365
        %1463 = vmatprep.subr.bf16.mxu0 %v1372
        %1464 = vmatpush1.bf16.msra.mxu0 %v1371
        %1465 = vmatprep.subr.bf16.mxu0 %v1378
        %1466 = vmatpush1.bf16.msra.mxu0 %v1377
        %1467 = vmatprep.subr.bf16.mxu0 %v1384
        %1468 = vmatpush1.bf16.msra.mxu0 %v1383
        %1469 = vmatprep.subr.bf16.mxu0 %v1390
        %1470 = vmatpush1.bf16.msra.mxu0 %v1389
        %1471 = vmatprep.subr.bf16.mxu0 %v1396
        %1472 = vmatpush1.bf16.msra.mxu0 %v1395
        %1473 = vmatprep.subr.bf16.mxu0 %v1402
        %1474 = vmatpush1.bf16.msra.mxu0 %v1401
        %1475 = vmatprep.subr.bf16.mxu0 %v1408
        %1476 = vmatpush1.bf16.msra.mxu0 %v1407
        %1477 = vmatprep.subr.bf16.mxu0 0
        %1478 = vmatpush1.bf16.msra.mxu0 0
        %1479 = vmatprep.subr.bf16.mxu0 0
        %1480 = vmatpush1.bf16.msra.mxu0 0
        %1481 = vmatprep.subr.bf16.mxu0 0
        %1482 = vmatpush1.bf16.msra.mxu0 0
        %1483 = vmatprep.subr.bf16.mxu0 0
        %1484 = vmatpush1.bf16.msra.mxu0 0
        %1485 = vmatprep.subr.bf16.mxu0 0
        %1486 = vmatpush1.bf16.msra.mxu0 0
        %1487 = vmatprep.subr.bf16.mxu0 0
        %1488 = vmatpush1.bf16.msra.mxu0 0
        %1489 = vmatprep.subr.bf16.mxu0 0
        %1490 = vmatpush1.bf16.msra.mxu0 0
        %1491 = vmatprep.subr.bf16.mxu0 0
        %1492 = vmatpush1.bf16.msra.mxu0 0
        %1493 = vmatprep.mubr.bf16.mxu0 0
        %1494 = vmatmul.mubr.bf16.gmra.mrb[0].mxu0 %v1140
        %v1495 = vpop.f32.mrb[0].mxu0
        %v1496 = vadd.f32 %v1194, %v1495
        %v1497 = vpop.f32.mrb[0].mxu0
        %v1498 = vadd.f32 %v1198, %v1497
        %v1499 = vpop.f32.mrb[0].mxu0
        %v1500 = vpop.f32.mrb[0].mxu0
        %1501 = vdwg.mxu0
        %1502 = vmatprep.subr.bf16.mxu0 %v1368
        %1503 = vmatpush1.bf16.msra.mxu0 %v1367
        %1504 = vmatprep.subr.bf16.mxu0 %v1374
        %1505 = vmatpush1.bf16.msra.mxu0 %v1373
        %1506 = vmatprep.subr.bf16.mxu0 %v1380
        %1507 = vmatpush1.bf16.msra.mxu0 %v1379
        %1508 = vmatprep.subr.bf16.mxu0 %v1386
        %1509 = vmatpush1.bf16.msra.mxu0 %v1385
        %1510 = vmatprep.subr.bf16.mxu0 %v1392
        %1511 = vmatpush1.bf16.msra.mxu0 %v1391
        %1512 = vmatprep.subr.bf16.mxu0 %v1398
        %1513 = vmatpush1.bf16.msra.mxu0 %v1397
        %1514 = vmatprep.subr.bf16.mxu0 %v1404
        %1515 = vmatpush1.bf16.msra.mxu0 %v1403
        %1516 = vmatprep.subr.bf16.mxu0 %v1410
        %1517 = vmatpush1.bf16.msra.mxu0 %v1409
        %1518 = vmatprep.subr.bf16.mxu0 0
        %1519 = vmatpush1.bf16.msra.mxu0 0
        %1520 = vmatprep.subr.bf16.mxu0 0
        %1521 = vmatpush1.bf16.msra.mxu0 0
        %1522 = vmatprep.subr.bf16.mxu0 0
        %1523 = vmatpush1.bf16.msra.mxu0 0
        %1524 = vmatprep.subr.bf16.mxu0 0
        %1525 = vmatpush1.bf16.msra.mxu0 0
        %1526 = vmatprep.subr.bf16.mxu0 0
        %1527 = vmatpush1.bf16.msra.mxu0 0
        %1528 = vmatprep.subr.bf16.mxu0 0
        %1529 = vmatpush1.bf16.msra.mxu0 0
        %1530 = vmatprep.subr.bf16.mxu0 0
        %1531 = vmatpush1.bf16.msra.mxu0 0
        %1532 = vmatprep.subr.bf16.mxu0 0
        %1533 = vmatpush1.bf16.msra.mxu0 0
        %1534 = vmatprep.mubr.bf16.mxu0 0
        %1535 = vmatmul.mubr.bf16.gmra.mrb[0].mxu0 %v1140
        %v1536 = vpop.f32.mrb[0].mxu0
        %v1537 = vadd.f32 %v1202, %v1536
        %v1538 = vpop.f32.mrb[0].mxu0
        %v1539 = vadd.f32 %v1206, %v1538
        %v1540 = vpop.f32.mrb[0].mxu0
        %v1541 = vpop.f32.mrb[0].mxu0
        %1542 = vdwg.mxu0
        %1543 = vmatprep.subr.bf16.mxu0 %v1370
        %1544 = vmatpush1.bf16.msra.mxu0 %v1369
        %1545 = vmatprep.subr.bf16.mxu0 %v1376
        %1546 = vmatpush1.bf16.msra.mxu0 %v1375
        %1547 = vmatprep.subr.bf16.mxu0 %v1382
        %1548 = vmatpush1.bf16.msra.mxu0 %v1381
        %1549 = vmatprep.subr.bf16.mxu0 %v1388
        %1550 = vmatpush1.bf16.msra.mxu0 %v1387
        %1551 = vmatprep.subr.bf16.mxu0 %v1394
        %1552 = vmatpush1.bf16.msra.mxu0 %v1393
        %1553 = vmatprep.subr.bf16.mxu0 %v1400
        %1554 = vmatpush1.bf16.msra.mxu0 %v1399
        %1555 = vmatprep.subr.bf16.mxu0 %v1406
        %1556 = vmatpush1.bf16.msra.mxu0 %v1405
        %1557 = vmatprep.subr.bf16.mxu0 %v1412
        %1558 = vmatpush1.bf16.msra.mxu0 %v1411
        %1559 = vmatprep.subr.bf16.mxu0 0
        %1560 = vmatpush1.bf16.msra.mxu0 0
        %1561 = vmatprep.subr.bf16.mxu0 0
        %1562 = vmatpush1.bf16.msra.mxu0 0
        %1563 = vmatprep.subr.bf16.mxu0 0
        %1564 = vmatpush1.bf16.msra.mxu0 0
        %1565 = vmatprep.subr.bf16.mxu0 0
        %1566 = vmatpush1.bf16.msra.mxu0 0
        %1567 = vmatprep.subr.bf16.mxu0 0
        %1568 = vmatpush1.bf16.msra.mxu0 0
        %1569 = vmatprep.subr.bf16.mxu0 0
        %1570 = vmatpush1.bf16.msra.mxu0 0
        %1571 = vmatprep.subr.bf16.mxu0 0
        %1572 = vmatpush1.bf16.msra.mxu0 0
        %1573 = vmatprep.subr.bf16.mxu0 0
        %1574 = vmatpush1.bf16.msra.mxu0 0
        %1575 = vmatprep.mubr.bf16.mxu0 0
        %1576 = vmatmul.mubr.bf16.gmra.mrb[0].mxu0 %v1140
        %v1577 = vpop.f32.mrb[0].mxu0
        %v1578 = vadd.f32 %v1210, %v1577
        %v1579 = vpop.f32.mrb[0].mxu0
        %v1580 = vadd.f32 %v1214, %v1579
        %v1581 = vpop.f32.mrb[0].mxu0
        %v1582 = vpop.f32.mrb[0].mxu0
        %1583 = vdwg.mxu0
        %v1586 = vunpack.c.l.s4 1966171168
        %v1587 = vunpack.c.0.s8 %v1586
        %v1588 = vlaneseq
        %v1589 = vshrl.u32 %v1588, 7
        %v1590 = vsub.s32 %v1587, %v1589
        %v1591 = vrot.slane %v1496, %v1590
        %v1592 = vcombine.high %v1591, %v1591
        %v1594 = vunpack.c.l.s4 1966171168
        %v1595 = vunpack.c.0.s8 %v1594
        %v1596 = vlaneseq
        %v1597 = vshrl.u32 %v1596, 7
        %v1598 = vsub.s32 %v1595, %v1597
        %v1599 = vrot.slane %v1591, %v1598
        %v1601 = vunpack.c.l.s4 1966171168
        %v1602 = vunpack.c.0.s8 %v1601
        %v1603 = vlaneseq
        %v1604 = vshrl.u32 %v1603, 7
        %v1605 = vsub.s32 %v1602, %v1604
        %v1606 = vrot.slane %v1592, %v1605
        %v1607 = vcombine.high %v1599, %v1599
        %v1608 = vcombine.high %v1606, %v1606
        %v1609 = vlaneseq
        %v1610 = vshrl.u32 %v1609, 7
        %v1611 = vsub.s32 0, %v1610
        %v1612 = vrot.slane %v1599, %v1611
        %v1613 = vlaneseq
        %v1614 = vshrl.u32 %v1613, 7
        %v1615 = vsub.s32 0, %v1614
        %v1616 = vrot.slane %v1606, %v1615
        %v1617 = vlaneseq
        %v1618 = vshrl.u32 %v1617, 7
        %v1619 = vsub.s32 0, %v1618
        %v1620 = vrot.slane %v1607, %v1619
        %v1621 = vlaneseq
        %v1622 = vshrl.u32 %v1621, 7
        %v1623 = vsub.s32 0, %v1622
        %v1624 = vrot.slane %v1608, %v1623
        %v1629 = vadd.f32 %v1125, %v1612
        %v1630 = vadd.f32 %v1126, %v1612
        %v1631 = vadd.f32 %v1127, %v1616
        %v1632 = vadd.f32 %v1128, %v1616
        %v1633 = vadd.f32 %v1129, %v1620
        %v1634 = vadd.f32 %v1130, %v1620
        %v1635 = vadd.f32 %v1131, %v1624
        %v1636 = vadd.f32 %v1132, %v1624
        %v1637 = vmax.f32 %v1629, 0.0
        %v1638 = vmax.f32 %v1630, 0.0
        %v1639 = vmax.f32 %v1631, 0.0
        %v1640 = vmax.f32 %v1632, 0.0
        %v1641 = vmax.f32 %v1633, 0.0
        %v1642 = vmax.f32 %v1634, 0.0
        %v1643 = vmax.f32 %v1635, 0.0
        %v1644 = vmax.f32 %v1636, 0.0
        %v1646 = vlaneseq
        %v1647 = vshrl.u32 %v1646, 7
        %v1648 = vsub.s32 0, %v1647
        %v1649 = vrot.slane %v1133, %v1648
        %v1651 = vmul.f32 %v1637, %v1649
        %v1652 = vmul.f32 %v1638, %v1649
        %v1653 = vmul.f32 %v1639, %v1649
        %v1654 = vmul.f32 %v1640, %v1649
        %v1655 = vmul.f32 %v1641, %v1649
        %v1656 = vmul.f32 %v1642, %v1649
        %v1657 = vmul.f32 %v1643, %v1649
        %v1658 = vmul.f32 %v1644, %v1649
        %1659 = vadd.xlane.f32.xlu0 %v1651
        %v1660 = vpop.xlane.xlu0 %1659
        %1661 = vadd.xlane.f32.xlu0 %v1652
        %v1662 = vpop.xlane.xlu0 %1661
        %1663 = vadd.xlane.f32.xlu0 %v1653
        %v1664 = vpop.xlane.xlu0 %1663
        %1665 = vadd.xlane.f32.xlu0 %v1654
        %v1666 = vpop.xlane.xlu0 %1665
        %1667 = vadd.xlane.f32.xlu0 %v1655
        %v1668 = vpop.xlane.xlu0 %1667
        %1669 = vadd.xlane.f32.xlu0 %v1656
        %v1670 = vpop.xlane.xlu0 %1669
        %1671 = vadd.xlane.f32.xlu0 %v1657
        %v1672 = vpop.xlane.xlu0 %1671
        %1673 = vadd.xlane.f32.xlu0 %v1658
        %v1674 = vpop.xlane.xlu0 %1673
        %v1675 = vstv %s1134
        %v1676 = vadd.f32 %v1660, %v1675
        %v1677 = vadd.f32 %v1662, %v1675
        %v1678 = vadd.f32 %v1664, %v1675
        %v1679 = vadd.f32 %v1666, %v1675
        %v1680 = vadd.f32 %v1668, %v1675
        %v1681 = vadd.f32 %v1670, %v1675
        %v1682 = vadd.f32 %v1672, %v1675
        %v1683 = vadd.f32 %v1674, %v1675
        %v1692 = vlaneseq
        %v1693 = vand.u32 %v1692, 127
        %v1694 = vlaneseq
        %v1695 = vshrl.u32 %v1694, 7
        %v1696 = vsub.s32 %v1693, %v1695
        %v1697 = vrot.slane %v1676, %v1696
        %v1698 = vadd.s32 %v1693, 4294967288
        %v1699 = vlaneseq
        %v1700 = vshrl.u32 %v1699, 7
        %v1701 = vsub.s32 %v1698, %v1700
        %v1702 = vrot.slane %v1677, %v1701
        %vm1703 = vcmask 130112
        %v1704 = vsel %vm1703, %v1702, %v1697
        %v1705 = vlaneseq
        %v1706 = vshrl.u32 %v1705, 7
        %v1707 = vsub.s32 %v1693, %v1706
        %v1708 = vrot.slane %v1678, %v1707
        %v1709 = vlaneseq
        %v1710 = vshrl.u32 %v1709, 7
        %v1711 = vsub.s32 %v1698, %v1710
        %v1712 = vrot.slane %v1679, %v1711
        %v1713 = vsel %vm1703, %v1712, %v1708
        %v1714 = vlaneseq
        %v1715 = vshrl.u32 %v1714, 7
        %v1716 = vsub.s32 %v1693, %v1715
        %v1717 = vrot.slane %v1680, %v1716
        %v1718 = vlaneseq
        %v1719 = vshrl.u32 %v1718, 7
        %v1720 = vsub.s32 %v1698, %v1719
        %v1721 = vrot.slane %v1681, %v1720
        %v1722 = vsel %vm1703, %v1721, %v1717
        %v1723 = vlaneseq
        %v1724 = vshrl.u32 %v1723, 7
        %v1725 = vsub.s32 %v1693, %v1724
        %v1726 = vrot.slane %v1682, %v1725
        %v1727 = vlaneseq
        %v1728 = vshrl.u32 %v1727, 7
        %v1729 = vsub.s32 %v1698, %v1728
        %v1730 = vrot.slane %v1683, %v1729
        %v1731 = vsel %vm1703, %v1730, %v1726
        %vm1732 = vcmask 1041409
        %v1733 = vsel %vm1732, %v1713, %v1704
        %vm1734 = vcmask 1042434
        %v1735 = vsel %vm1734, %v1722, %v1733
        %vm1736 = vcmask 1043459
        %v1737 = vsel %vm1736, %v1731, %v1735
        %vm1739 = vcmask 125952
        %v1740 = vsel %vm1739, %v1737, -inf
        %1741 = vmax.xlane.f32.xlu0 %v1740
        %v1742 = vpop.xlane.xlu0 %1741
        %v1744 = vlaneseq
        %v1745 = vshrl.u32 %v1744, 7
        %v1746 = vsub.s32 0, %v1745
        %v1747 = vrot.slane %v1742, %v1746
        %v1748 = vlaneseq
        %v1749 = vshrl.u32 %v1748, 7
        %v1750 = vsub.s32 1, %v1749
        %v1751 = vrot.slane %v1742, %v1750
        %v1752 = vlaneseq
        %v1753 = vshrl.u32 %v1752, 7
        %v1754 = vsub.s32 2, %v1753
        %v1755 = vrot.slane %v1742, %v1754
        %v1756 = vlaneseq
        %v1757 = vshrl.u32 %v1756, 7
        %v1758 = vsub.s32 3, %v1757
        %v1759 = vrot.slane %v1742, %v1758
        %v1764 = vsub.f32 %v1676, %v1747
        %v1765 = vsub.f32 %v1677, %v1747
        %v1766 = vsub.f32 %v1678, %v1751
        %v1767 = vsub.f32 %v1679, %v1751
        %v1768 = vsub.f32 %v1680, %v1755
        %v1769 = vsub.f32 %v1681, %v1755
        %v1770 = vsub.f32 %v1682, %v1759
        %v1771 = vsub.f32 %v1683, %v1759
        %v1772 = vmul.f32 %v1764, 1.442695
        %v1773 = vpow.pop %v1772
        %v1774 = vmul.f32 %v1765, 1.442695
        %v1775 = vpow.pop %v1774
        %v1776 = vmul.f32 %v1766, 1.442695
        %v1777 = vpow.pop %v1776
        %v1778 = vmul.f32 %v1767, 1.442695
        %v1779 = vpow.pop %v1778
        %v1780 = vmul.f32 %v1768, 1.442695
        %v1781 = vpow.pop %v1780
        %v1782 = vmul.f32 %v1769, 1.442695
        %v1783 = vpow.pop %v1782
        %v1784 = vmul.f32 %v1770, 1.442695
        %v1785 = vpow.pop %v1784
        %v1786 = vmul.f32 %v1771, 1.442695
        %v1787 = vpow.pop %v1786
        %1796 = vset.pattern.permute.xlu0 0
        %1797 = vperm.xlu0 %1796, %v1773
        %v1798 = vpop.permute.xlu0 %1797
        %1799 = vset.pattern.permute.xlu0 0
        %1800 = vperm.xlu0 %1799, %v1775
        %v1801 = vpop.permute.xlu0 %1800
        %1802 = vset.pattern.permute.xlu0 0
        %1803 = vperm.xlu0 %1802, %v1777
        %v1804 = vpop.permute.xlu0 %1803
        %1805 = vset.pattern.permute.xlu0 0
        %1806 = vperm.xlu0 %1805, %v1779
        %v1807 = vpop.permute.xlu0 %1806
        %1808 = vset.pattern.permute.xlu0 0
        %1809 = vperm.xlu0 %1808, %v1781
        %v1810 = vpop.permute.xlu0 %1809
        %1811 = vset.pattern.permute.xlu0 0
        %1812 = vperm.xlu0 %1811, %v1783
        %v1813 = vpop.permute.xlu0 %1812
        %1814 = vset.pattern.permute.xlu0 0
        %1815 = vperm.xlu0 %1814, %v1785
        %v1816 = vpop.permute.xlu0 %1815
        %1817 = vset.pattern.permute.xlu0 0
        %1818 = vperm.xlu0 %1817, %v1787
        %v1819 = vpop.permute.xlu0 %1818
        %v1820 = vlaneseq
        %v1821 = vshrl.u32 %v1820, 7
        %v1822 = vsub.s32 %v1693, %v1821
        %v1823 = vrot.slane %v1798, %v1822
        %v1824 = vlaneseq
        %v1825 = vshrl.u32 %v1824, 7
        %v1826 = vsub.s32 %v1698, %v1825
        %v1827 = vrot.slane %v1801, %v1826
        %v1828 = vsel %vm1703, %v1827, %v1823
        %v1829 = vlaneseq
        %v1830 = vshrl.u32 %v1829, 7
        %v1831 = vsub.s32 %v1693, %v1830
        %v1832 = vrot.slane %v1804, %v1831
        %v1833 = vlaneseq
        %v1834 = vshrl.u32 %v1833, 7
        %v1835 = vsub.s32 %v1698, %v1834
        %v1836 = vrot.slane %v1807, %v1835
        %v1837 = vsel %vm1703, %v1836, %v1832
        %v1838 = vlaneseq
        %v1839 = vshrl.u32 %v1838, 7
        %v1840 = vsub.s32 %v1693, %v1839
        %v1841 = vrot.slane %v1810, %v1840
        %v1842 = vlaneseq
        %v1843 = vshrl.u32 %v1842, 7
        %v1844 = vsub.s32 %v1698, %v1843
        %v1845 = vrot.slane %v1813, %v1844
        %v1846 = vsel %vm1703, %v1845, %v1841
        %v1847 = vlaneseq
        %v1848 = vshrl.u32 %v1847, 7
        %v1849 = vsub.s32 %v1693, %v1848
        %v1850 = vrot.slane %v1816, %v1849
        %v1851 = vlaneseq
        %v1852 = vshrl.u32 %v1851, 7
        %v1853 = vsub.s32 %v1698, %v1852
        %v1854 = vrot.slane %v1819, %v1853
        %v1855 = vsel %vm1703, %v1854, %v1850
        %v1856 = vsel %vm1732, %v1837, %v1828
        %v1857 = vsel %vm1734, %v1846, %v1856
        %v1858 = vsel %vm1736, %v1855, %v1857
        %v1860 = vsel %vm1739, %v1858, 0.0
        %1861 = vadd.xlane.f32.xlu0 %v1860
        %v1862 = vpop.xlane.xlu0 %1861
        %v1864 = vlaneseq
        %v1865 = vshrl.u32 %v1864, 7
        %v1866 = vsub.s32 0, %v1865
        %v1867 = vrot.slane %v1862, %v1866
        %v1868 = vlaneseq
        %v1869 = vshrl.u32 %v1868, 7
        %v1870 = vsub.s32 1, %v1869
        %v1871 = vrot.slane %v1862, %v1870
        %v1872 = vlaneseq
        %v1873 = vshrl.u32 %v1872, 7
        %v1874 = vsub.s32 2, %v1873
        %v1875 = vrot.slane %v1862, %v1874
        %v1876 = vlaneseq
        %v1877 = vshrl.u32 %v1876, 7
        %v1878 = vsub.s32 3, %v1877
        %v1879 = vrot.slane %v1862, %v1878
        %v1884 = vrcp.pop %v1867
        %v1885 = vmul.f32 %v1773, %v1884
        %v1886 = vmul.f32 %v1775, %v1884
        %v1887 = vrcp.pop %v1871
        %v1888 = vmul.f32 %v1777, %v1887
        %v1889 = vmul.f32 %v1779, %v1887
        %v1890 = vrcp.pop %v1875
        %v1891 = vmul.f32 %v1781, %v1890
        %v1892 = vmul.f32 %v1783, %v1890
        %v1893 = vrcp.pop %v1879
        %v1894 = vmul.f32 %v1785, %v1893
        %v1895 = vmul.f32 %v1787, %v1893
        %1897 = vset.pattern.permute.xlu0 0
        %1898 = vperm.xlu0 %1897, %v1885
        %v1899 = vpop.permute.xlu0 %1898
        %1902 = vset.pattern.permute.xlu0 0
        %1903 = vperm.xlu0 %1902, %v1886
        %v1904 = vpop.permute.xlu0 %1903
        %1907 = vset.pattern.permute.xlu0 0
        %1908 = vperm.xlu0 %1907, %v1888
        %v1909 = vpop.permute.xlu0 %1908
        %1912 = vset.pattern.permute.xlu0 0
        %1913 = vperm.xlu0 %1912, %v1889
        %v1914 = vpop.permute.xlu0 %1913
        %1917 = vset.pattern.permute.xlu0 0
        %1918 = vperm.xlu0 %1917, %v1891
        %v1919 = vpop.permute.xlu0 %1918
        %1922 = vset.pattern.permute.xlu0 0
        %1923 = vperm.xlu0 %1922, %v1892
        %v1924 = vpop.permute.xlu0 %1923
        %1927 = vset.pattern.permute.xlu0 0
        %1928 = vperm.xlu0 %1927, %v1894
        %v1929 = vpop.permute.xlu0 %1928
        %1932 = vset.pattern.permute.xlu0 0
        %1933 = vperm.xlu0 %1932, %v1895
        %v1934 = vpop.permute.xlu0 %1933
        %v1936 = vmul.f32 %v1117, %v1899
        %v1937 = vmul.f32 %v1118, %v1904
        %v1938 = vmul.f32 %v1119, %v1909
        %v1939 = vmul.f32 %v1120, %v1914
        %v1940 = vmul.f32 %v1121, %v1919
        %v1941 = vmul.f32 %v1122, %v1924
        %v1942 = vmul.f32 %v1123, %v1929
        %v1943 = vmul.f32 %v1124, %v1934
        %v1944 = vadd.f32 %v1936, %v1937
        %v1945 = vrot.slane %v1944, 4
        %v1946 = vadd.f32 %v1944, %v1945
        %v1947 = vrot.slane %v1946, 2
        %v1948 = vadd.f32 %v1946, %v1947
        %v1949 = vrot.slane %v1948, 1
        %v1950 = vadd.f32 %v1948, %v1949
        %v1951 = vadd.f32 %v1938, %v1939
        %v1952 = vrot.slane %v1951, 4
        %v1953 = vadd.f32 %v1951, %v1952
        %v1954 = vrot.slane %v1953, 2
        %v1955 = vadd.f32 %v1953, %v1954
        %v1956 = vrot.slane %v1955, 1
        %v1957 = vadd.f32 %v1955, %v1956
        %v1958 = vadd.f32 %v1940, %v1941
        %v1959 = vrot.slane %v1958, 4
        %v1960 = vadd.f32 %v1958, %v1959
        %v1961 = vrot.slane %v1960, 2
        %v1962 = vadd.f32 %v1960, %v1961
        %v1963 = vrot.slane %v1962, 1
        %v1964 = vadd.f32 %v1962, %v1963
        %v1965 = vadd.f32 %v1942, %v1943
        %v1966 = vrot.slane %v1965, 4
        %v1967 = vadd.f32 %v1965, %v1966
        %v1968 = vrot.slane %v1967, 2
        %v1969 = vadd.f32 %v1967, %v1968
        %v1970 = vrot.slane %v1969, 1
        %v1971 = vadd.f32 %v1969, %v1970
        %v1972 = vxor.u32 %v1498, 2147483648
        %v1973 = vmul.f32 %v1972, 1.442695
        %v1974 = vpow.pop %v1973
        %v1975 = vadd.f32 %v1974, 1.0
        %v1976 = vrcp.pop %v1975
        %v1977 = vmul.f32 1.0, %v1976
        %v1982 = vsel %vm1732, %v1957, %v1950
        %v1983 = vsel %vm1734, %v1964, %v1982
        %v1984 = vsel %vm1736, %v1971, %v1983
        %v1986 = vmul.f32 %v1977, %v1984
        %v1987 = vld [vmem:[%s577] sm:$0xff]
        %v1988 = vld [vmem:[%s577 + $0x8] sm:$0xff]
        %v1989 = vpack.c.bf16 %v1986, %v1986
        %v1990 = vld [vmem:[#allocation19] sm:$0xff]
        %v1991 = vld [vmem:[#allocation19 + $0x8] sm:$0xff]
        %v1992 = vld [vmem:[#allocation19 + $0x10] sm:$0xff]
        %v1993 = vld [vmem:[#allocation19 + $0x18] sm:$0xff]
        %v1994 = vld [vmem:[#allocation19 + $0x20] sm:$0xff]
        %v1995 = vld [vmem:[#allocation19 + $0x28] sm:$0xff]
        %v1996 = vld [vmem:[#allocation19 + $0x30] sm:$0xff]
        %v1997 = vld [vmem:[#allocation19 + $0x38] sm:$0xff]
        %v1998 = vld [vmem:[#allocation19 + $0x40] sm:$0xff]
        %v1999 = vld [vmem:[#allocation19 + $0x48] sm:$0xff]
        %v2000 = vld [vmem:[#allocation19 + $0x50] sm:$0xff]
        %v2001 = vld [vmem:[#allocation19 + $0x58] sm:$0xff]
        %v2002 = vld [vmem:[#allocation19 + $0x60] sm:$0xff]
        %v2003 = vld [vmem:[#allocation19 + $0x68] sm:$0xff]
        %v2004 = vld [vmem:[#allocation19 + $0x70] sm:$0xff]
        %v2005 = vld [vmem:[#allocation19 + $0x78] sm:$0xff]
        %v2006 = vld [vmem:[#allocation19 + $0x80] sm:$0xff]
        %v2007 = vld [vmem:[#allocation19 + $0x88] sm:$0xff]
        %v2008 = vld [vmem:[#allocation19 + $0x90] sm:$0xff]
        %v2009 = vld [vmem:[#allocation19 + $0x98] sm:$0xff]
        %v2010 = vld [vmem:[#allocation19 + $0xa0] sm:$0xff]
        %v2011 = vld [vmem:[#allocation19 + $0xa8] sm:$0xff]
        %v2012 = vld [vmem:[#allocation19 + $0xb0] sm:$0xff]
        %v2013 = vld [vmem:[#allocation19 + $0xb8] sm:$0xff]
        %v2014 = vld [vmem:[#allocation19 + $0xc0] sm:$0xff]
        %v2015 = vld [vmem:[#allocation19 + $0xc8] sm:$0xff]
        %v2016 = vld [vmem:[#allocation19 + $0xd0] sm:$0xff]
        %v2017 = vld [vmem:[#allocation19 + $0xd8] sm:$0xff]
        %v2018 = vld [vmem:[#allocation19 + $0xe0] sm:$0xff]
        %v2019 = vld [vmem:[#allocation19 + $0xe8] sm:$0xff]
        %v2020 = vld [vmem:[#allocation19 + $0xf0] sm:$0xff]
        %v2021 = vld [vmem:[#allocation19 + $0xf8] sm:$0xff]
        %v2054 = vunpack.c.l.b16 %v1990
        %v2055 = vunpack.c.h.b16 %v1990
        %v2056 = vunpack.c.l.b16 %v1991
        %v2057 = vunpack.c.h.b16 %v1991
        %v2058 = vunpack.c.l.b16 %v1992
        %v2059 = vunpack.c.h.b16 %v1992
        %v2060 = vunpack.c.l.b16 %v1993
        %v2061 = vunpack.c.h.b16 %v1993
        %v2062 = vunpack.c.l.b16 %v1994
        %v2063 = vunpack.c.h.b16 %v1994
        %v2064 = vunpack.c.l.b16 %v1995
        %v2065 = vunpack.c.h.b16 %v1995
        %v2066 = vunpack.c.l.b16 %v1996
        %v2067 = vunpack.c.h.b16 %v1996
        %v2068 = vunpack.c.l.b16 %v1997
        %v2069 = vunpack.c.h.b16 %v1997
        %v2070 = vunpack.c.l.b16 %v1998
        %v2071 = vunpack.c.h.b16 %v1998
        %v2072 = vunpack.c.l.b16 %v1999
        %v2073 = vunpack.c.h.b16 %v1999
        %v2074 = vunpack.c.l.b16 %v2000
        %v2075 = vunpack.c.h.b16 %v2000
        %v2076 = vunpack.c.l.b16 %v2001
        %v2077 = vunpack.c.h.b16 %v2001
        %v2078 = vunpack.c.l.b16 %v2002
        %v2079 = vunpack.c.h.b16 %v2002
        %v2080 = vunpack.c.l.b16 %v2003
        %v2081 = vunpack.c.h.b16 %v2003
        %v2082 = vunpack.c.l.b16 %v2004
        %v2083 = vunpack.c.h.b16 %v2004
        %v2084 = vunpack.c.l.b16 %v2005
        %v2085 = vunpack.c.h.b16 %v2005
        %v2086 = vunpack.c.l.b16 %v2006
        %v2087 = vunpack.c.h.b16 %v2006
        %v2088 = vunpack.c.l.b16 %v2007
        %v2089 = vunpack.c.h.b16 %v2007
        %v2090 = vunpack.c.l.b16 %v2008
        %v2091 = vunpack.c.h.b16 %v2008
        %v2092 = vunpack.c.l.b16 %v2009
        %v2093 = vunpack.c.h.b16 %v2009
        %v2094 = vunpack.c.l.b16 %v2010
        %v2095 = vunpack.c.h.b16 %v2010
        %v2096 = vunpack.c.l.b16 %v2011
        %v2097 = vunpack.c.h.b16 %v2011
        %v2098 = vunpack.c.l.b16 %v2012
        %v2099 = vunpack.c.h.b16 %v2012
        %v2100 = vunpack.c.l.b16 %v2013
        %v2101 = vunpack.c.h.b16 %v2013
        %v2102 = vunpack.c.l.b16 %v2014
        %v2103 = vunpack.c.h.b16 %v2014
        %v2104 = vunpack.c.l.b16 %v2015
        %v2105 = vunpack.c.h.b16 %v2015
        %v2106 = vunpack.c.l.b16 %v2016
        %v2107 = vunpack.c.h.b16 %v2016
        %v2108 = vunpack.c.l.b16 %v2017
        %v2109 = vunpack.c.h.b16 %v2017
        %v2110 = vunpack.c.l.b16 %v2018
        %v2111 = vunpack.c.h.b16 %v2018
        %v2112 = vunpack.c.l.b16 %v2019
        %v2113 = vunpack.c.h.b16 %v2019
        %v2114 = vunpack.c.l.b16 %v2020
        %v2115 = vunpack.c.h.b16 %v2020
        %v2116 = vunpack.c.l.b16 %v2021
        %v2117 = vunpack.c.h.b16 %v2021
        %v2118 = vpack.c.b16 %v2058, %v2054
        %v2119 = vpack.c.b16 %v2059, %v2055
        %v2120 = vpack.c.b16 %v2060, %v2056
        %v2121 = vpack.c.b16 %v2061, %v2057
        %v2122 = vpack.c.b16 %v2066, %v2062
        %v2123 = vpack.c.b16 %v2067, %v2063
        %v2124 = vpack.c.b16 %v2068, %v2064
        %v2125 = vpack.c.b16 %v2069, %v2065
        %v2126 = vpack.c.b16 %v2074, %v2070
        %v2127 = vpack.c.b16 %v2075, %v2071
        %v2128 = vpack.c.b16 %v2076, %v2072
        %v2129 = vpack.c.b16 %v2077, %v2073
        %v2130 = vpack.c.b16 %v2082, %v2078
        %v2131 = vpack.c.b16 %v2083, %v2079
        %v2132 = vpack.c.b16 %v2084, %v2080
        %v2133 = vpack.c.b16 %v2085, %v2081
        %v2134 = vpack.c.b16 %v2090, %v2086
        %v2135 = vpack.c.b16 %v2091, %v2087
        %v2136 = vpack.c.b16 %v2092, %v2088
        %v2137 = vpack.c.b16 %v2093, %v2089
        %v2138 = vpack.c.b16 %v2098, %v2094
        %v2139 = vpack.c.b16 %v2099, %v2095
        %v2140 = vpack.c.b16 %v2100, %v2096
        %v2141 = vpack.c.b16 %v2101, %v2097
        %v2142 = vpack.c.b16 %v2106, %v2102
        %v2143 = vpack.c.b16 %v2107, %v2103
        %v2144 = vpack.c.b16 %v2108, %v2104
        %v2145 = vpack.c.b16 %v2109, %v2105
        %v2146 = vpack.c.b16 %v2114, %v2110
        %v2147 = vpack.c.b16 %v2115, %v2111
        %v2148 = vpack.c.b16 %v2116, %v2112
        %v2149 = vpack.c.b16 %v2117, %v2113
        %2182 = vmatprep.subr.bf16.mxu0 %v2119
        %2183 = vmatpush1.bf16.msra.mxu0 %v2118
        %2184 = vmatprep.subr.bf16.mxu0 %v2123
        %2185 = vmatpush1.bf16.msra.mxu0 %v2122
        %2186 = vmatprep.subr.bf16.mxu0 %v2127
        %2187 = vmatpush1.bf16.msra.mxu0 %v2126
        %2188 = vmatprep.subr.bf16.mxu0 %v2131
        %2189 = vmatpush1.bf16.msra.mxu0 %v2130
        %2190 = vmatprep.subr.bf16.mxu0 %v2135
        %2191 = vmatpush1.bf16.msra.mxu0 %v2134
        %2192 = vmatprep.subr.bf16.mxu0 %v2139
        %2193 = vmatpush1.bf16.msra.mxu0 %v2138
        %2194 = vmatprep.subr.bf16.mxu0 %v2143
        %2195 = vmatpush1.bf16.msra.mxu0 %v2142
        %2196 = vmatprep.subr.bf16.mxu0 %v2147
        %2197 = vmatpush1.bf16.msra.mxu0 %v2146
        %2198 = vmatprep.subr.bf16.mxu0 0
        %2199 = vmatpush1.bf16.msra.mxu0 0
        %2200 = vmatprep.subr.bf16.mxu0 0
        %2201 = vmatpush1.bf16.msra.mxu0 0
        %2202 = vmatprep.subr.bf16.mxu0 0
        %2203 = vmatpush1.bf16.msra.mxu0 0
        %2204 = vmatprep.subr.bf16.mxu0 0
        %2205 = vmatpush1.bf16.msra.mxu0 0
        %2206 = vmatprep.subr.bf16.mxu0 0
        %2207 = vmatpush1.bf16.msra.mxu0 0
        %2208 = vmatprep.subr.bf16.mxu0 0
        %2209 = vmatpush1.bf16.msra.mxu0 0
        %2210 = vmatprep.subr.bf16.mxu0 0
        %2211 = vmatpush1.bf16.msra.mxu0 0
        %2212 = vmatprep.subr.bf16.mxu0 0
        %2213 = vmatpush1.bf16.msra.mxu0 0
        %2214 = vmatprep.mubr.bf16.mxu0 0
        %2215 = vmatmul.mubr.bf16.gmra.mrb[0].mxu0 %v1989
        %v2216 = vpop.f32.mrb[0].mxu0
        %v2217 = vadd.f32 0.0, %v2216
        %v2218 = vpop.f32.mrb[0].mxu0
        %v2219 = vadd.f32 0.0, %v2218
        %v2220 = vpop.f32.mrb[0].mxu0
        %v2221 = vpop.f32.mrb[0].mxu0
        %2222 = vdwg.mxu0
        %2223 = vmatprep.subr.bf16.mxu0 %v2121
        %2224 = vmatpush1.bf16.msra.mxu0 %v2120
        %2225 = vmatprep.subr.bf16.mxu0 %v2125
        %2226 = vmatpush1.bf16.msra.mxu0 %v2124
        %2227 = vmatprep.subr.bf16.mxu0 %v2129
        %2228 = vmatpush1.bf16.msra.mxu0 %v2128
        %2229 = vmatprep.subr.bf16.mxu0 %v2133
        %2230 = vmatpush1.bf16.msra.mxu0 %v2132
        %2231 = vmatprep.subr.bf16.mxu0 %v2137
        %2232 = vmatpush1.bf16.msra.mxu0 %v2136
        %2233 = vmatprep.subr.bf16.mxu0 %v2141
        %2234 = vmatpush1.bf16.msra.mxu0 %v2140
        %2235 = vmatprep.subr.bf16.mxu0 %v2145
        %2236 = vmatpush1.bf16.msra.mxu0 %v2144
        %2237 = vmatprep.subr.bf16.mxu0 %v2149
        %2238 = vmatpush1.bf16.msra.mxu0 %v2148
        %2239 = vmatprep.subr.bf16.mxu0 0
        %2240 = vmatpush1.bf16.msra.mxu0 0
        %2241 = vmatprep.subr.bf16.mxu0 0
        %2242 = vmatpush1.bf16.msra.mxu0 0
        %2243 = vmatprep.subr.bf16.mxu0 0
        %2244 = vmatpush1.bf16.msra.mxu0 0
        %2245 = vmatprep.subr.bf16.mxu0 0
        %2246 = vmatpush1.bf16.msra.mxu0 0
        %2247 = vmatprep.subr.bf16.mxu0 0
        %2248 = vmatpush1.bf16.msra.mxu0 0
        %2249 = vmatprep.subr.bf16.mxu0 0
        %2250 = vmatpush1.bf16.msra.mxu0 0
        %2251 = vmatprep.subr.bf16.mxu0 0
        %2252 = vmatpush1.bf16.msra.mxu0 0
        %2253 = vmatprep.subr.bf16.mxu0 0
        %2254 = vmatpush1.bf16.msra.mxu0 0
        %2255 = vmatprep.mubr.bf16.mxu0 0
        %2256 = vmatmul.mubr.bf16.gmra.mrb[0].mxu0 %v1989
        %v2257 = vpop.f32.mrb[0].mxu0
        %v2258 = vadd.f32 0.0, %v2257
        %v2259 = vpop.f32.mrb[0].mxu0
        %v2260 = vadd.f32 0.0, %v2259
        %v2261 = vpop.f32.mrb[0].mxu0
        %v2262 = vpop.f32.mrb[0].mxu0
        %2263 = vdwg.mxu0
        %v2268 = vcombine.low %v2217, %v2219
        %v2269 = vcombine.low %v2258, %v2260
        %v2272 = vadd.f32 %v1987, %v2268
        %v2273 = vadd.f32 %v1988, %v2269
        %v2278 = vcombine.low %v1537, %v1539
        %v2279 = vcombine.low %v1578, %v1580
        %v2282 = vadd.f32 %v2272, %v2278
        %v2283 = vadd.f32 %v2273, %v2279
        %v2284 = vxor.u32 %v2282, 2147483648
        %v2285 = vmul.f32 %v2284, 1.442695
        %v2286 = vpow.pop %v2285
        %v2287 = vadd.f32 %v2286, 1.0
        %v2288 = vrcp.pop %v2287
        %v2289 = vmul.f32 1.0, %v2288
        %v2291 = vrot.slane %v2282, 4
        %v2293 = vxor.u32 %v2291, 2147483648
        %v2294 = vmul.f32 %v2293, 1.442695
        %v2295 = vpow.pop %v2294
        %v2296 = vadd.f32 %v2295, 1.0
        %v2297 = vrcp.pop %v2296
        %v2298 = vmul.f32 1.0, %v2297
        %v2299 = vtanh.pop %v2283
        %v2301 = vrot.slane %v2283, 4
        %v2303 = vxor.u32 %v2301, 2147483648
        %v2304 = vmul.f32 %v2303, 1.442695
        %v2305 = vpow.pop %v2304
        %v2306 = vadd.f32 %v2305, 1.0
        %v2307 = vrcp.pop %v2306
        %v2308 = vmul.f32 1.0, %v2307
        %v2309 = vmul.f32 %v2298, %v1139
        %v2310 = vmul.f32 %v2289, %v2299
        %v2311 = vadd.f32 %v2309, %v2310
        %v2312 = vtanh.pop %v2311
        %v2313 = vmul.f32 %v2308, %v2312
        %v2314 = vpack.c.bf16 %v2313, %v2313
        %v2315 = vld [vmem:[#allocation20] sm:$0xff]
        %v2316 = vld [vmem:[#allocation20 + $0x8] sm:$0xff]
        %v2317 = vld [vmem:[#allocation20 + $0x10] sm:$0xff]
        %v2318 = vld [vmem:[#allocation20 + $0x18] sm:$0xff]
        %v2319 = vld [vmem:[#allocation20 + $0x20] sm:$0xff]
        %v2320 = vld [vmem:[#allocation20 + $0x28] sm:$0xff]
        %v2321 = vld [vmem:[#allocation20 + $0x30] sm:$0xff]
        %v2322 = vld [vmem:[#allocation20 + $0x38] sm:$0xff]
        %v2323 = vld [vmem:[#allocation20 + $0x40] sm:$0xff]
        %v2324 = vld [vmem:[#allocation20 + $0x48] sm:$0xff]
        %v2325 = vld [vmem:[#allocation20 + $0x50] sm:$0xff]
        %v2326 = vld [vmem:[#allocation20 + $0x58] sm:$0xff]
        %v2327 = vld [vmem:[#allocation20 + $0x60] sm:$0xff]
        %v2328 = vld [vmem:[#allocation20 + $0x68] sm:$0xff]
        %v2329 = vld [vmem:[#allocation20 + $0x70] sm:$0xff]
        %v2330 = vld [vmem:[#allocation20 + $0x78] sm:$0xff]
        %v2331 = vld [vmem:[%s15] sm:$0x3]
        %v2333 = vlaneseq
        %v2334 = vshrl.u32 %v2333, 7
        %v2335 = vsub.s32 0, %v2334
        %v2336 = vrot.slane %v2331, %v2335
        %v2337 = vlaneseq
        %v2338 = vshrl.u32 %v2337, 7
        %v2339 = vsub.s32 1, %v2338
        %v2340 = vrot.slane %v2331, %v2339
        %v2359 = vunpack.c.l.b16 %v2315
        %v2360 = vunpack.c.h.b16 %v2315
        %v2361 = vunpack.c.l.b16 %v2316
        %v2362 = vunpack.c.h.b16 %v2316
        %v2363 = vunpack.c.l.b16 %v2317
        %v2364 = vunpack.c.h.b16 %v2317
        %v2365 = vunpack.c.l.b16 %v2318
        %v2366 = vunpack.c.h.b16 %v2318
        %v2367 = vunpack.c.l.b16 %v2319
        %v2368 = vunpack.c.h.b16 %v2319
        %v2369 = vunpack.c.l.b16 %v2320
        %v2370 = vunpack.c.h.b16 %v2320
        %v2371 = vunpack.c.l.b16 %v2321
        %v2372 = vunpack.c.h.b16 %v2321
        %v2373 = vunpack.c.l.b16 %v2322
        %v2374 = vunpack.c.h.b16 %v2322
        %v2375 = vunpack.c.l.b16 %v2323
        %v2376 = vunpack.c.h.b16 %v2323
        %v2377 = vunpack.c.l.b16 %v2324
        %v2378 = vunpack.c.h.b16 %v2324
        %v2379 = vunpack.c.l.b16 %v2325
        %v2380 = vunpack.c.h.b16 %v2325
        %v2381 = vunpack.c.l.b16 %v2326
        %v2382 = vunpack.c.h.b16 %v2326
        %v2383 = vunpack.c.l.b16 %v2327
        %v2384 = vunpack.c.h.b16 %v2327
        %v2385 = vunpack.c.l.b16 %v2328
        %v2386 = vunpack.c.h.b16 %v2328
        %v2387 = vunpack.c.l.b16 %v2329
        %v2388 = vunpack.c.h.b16 %v2329
        %v2389 = vunpack.c.l.b16 %v2330
        %v2390 = vunpack.c.h.b16 %v2330
        %v2391 = vpack.c.b16 %v2361, %v2359
        %v2392 = vpack.c.b16 %v2362, %v2360
        %v2393 = vpack.c.b16 %v2365, %v2363
        %v2394 = vpack.c.b16 %v2366, %v2364
        %v2395 = vpack.c.b16 %v2369, %v2367
        %v2396 = vpack.c.b16 %v2370, %v2368
        %v2397 = vpack.c.b16 %v2373, %v2371
        %v2398 = vpack.c.b16 %v2374, %v2372
        %v2399 = vpack.c.b16 %v2377, %v2375
        %v2400 = vpack.c.b16 %v2378, %v2376
        %v2401 = vpack.c.b16 %v2381, %v2379
        %v2402 = vpack.c.b16 %v2382, %v2380
        %v2403 = vpack.c.b16 %v2385, %v2383
        %v2404 = vpack.c.b16 %v2386, %v2384
        %v2405 = vpack.c.b16 %v2389, %v2387
        %v2406 = vpack.c.b16 %v2390, %v2388
        %2423 = vmatprep.subr.bf16.mxu0 %v2392
        %2424 = vmatpush1.bf16.msra.mxu0 %v2391
        %2425 = vmatprep.subr.bf16.mxu0 %v2394
        %2426 = vmatpush1.bf16.msra.mxu0 %v2393
        %2427 = vmatprep.subr.bf16.mxu0 %v2396
        %2428 = vmatpush1.bf16.msra.mxu0 %v2395
        %2429 = vmatprep.subr.bf16.mxu0 %v2398
        %2430 = vmatpush1.bf16.msra.mxu0 %v2397
        %2431 = vmatprep.subr.bf16.mxu0 %v2400
        %2432 = vmatpush1.bf16.msra.mxu0 %v2399
        %2433 = vmatprep.subr.bf16.mxu0 %v2402
        %2434 = vmatpush1.bf16.msra.mxu0 %v2401
        %2435 = vmatprep.subr.bf16.mxu0 %v2404
        %2436 = vmatpush1.bf16.msra.mxu0 %v2403
        %2437 = vmatprep.subr.bf16.mxu0 %v2406
        %2438 = vmatpush1.bf16.msra.mxu0 %v2405
        %2439 = vmatprep.subr.bf16.mxu0 0
        %2440 = vmatpush1.bf16.msra.mxu0 0
        %2441 = vmatprep.subr.bf16.mxu0 0
        %2442 = vmatpush1.bf16.msra.mxu0 0
        %2443 = vmatprep.subr.bf16.mxu0 0
        %2444 = vmatpush1.bf16.msra.mxu0 0
        %2445 = vmatprep.subr.bf16.mxu0 0
        %2446 = vmatpush1.bf16.msra.mxu0 0
        %2447 = vmatprep.subr.bf16.mxu0 0
        %2448 = vmatpush1.bf16.msra.mxu0 0
        %2449 = vmatprep.subr.bf16.mxu0 0
        %2450 = vmatpush1.bf16.msra.mxu0 0
        %2451 = vmatprep.subr.bf16.mxu0 0
        %2452 = vmatpush1.bf16.msra.mxu0 0
        %2453 = vmatprep.subr.bf16.mxu0 0
        %2454 = vmatpush1.bf16.msra.mxu0 0
        %2455 = vmatprep.mubr.bf16.mxu0 0
        %2456 = vmatmul.mubr.bf16.gmra.mrb[0].mxu0 %v2314
        %v2457 = vpop.f32.mrb[0].mxu0
        %v2458 = vadd.f32 %v2336, %v2457
        %v2459 = vpop.f32.mrb[0].mxu0
        %v2460 = vadd.f32 %v2340, %v2459
        %v2461 = vpop.f32.mrb[0].mxu0
        %v2462 = vpop.f32.mrb[0].mxu0
        %2463 = vdwg.mxu0
        %s2464 = sld [smem:[#allocation6 + %s1137]]
        %v2465 = vstv %s2464
        %vm2466 = vcmp.lt.s32.totalorder %v1136, %v2465
        %v2467 = vsel %vm2466, 1, 0
        %vm2468 = vcmp.eq.s32.totalorder %v2467, 1
        %v2469 = vsel %vm2468, %v2313, %v1138
        %2470 = vst [vmem:[#allocation2] sm:$0xf] %v2469
        %v2471 = vsel %vm2468, %v2311, %v1139
        %2472 = vst [vmem:[#allocation3] sm:$0xf] %v2471
        %v2473 = vsel %vm2468, %v2458, 0.0
        %v2474 = vsel %vm2468, %v2460, 0.0
        %v2477 = vcombine.low %v2473, %v2474
        %2479 = vst [vmem:[%s647] sm:$0xff] %v2477
        %v2480 = vlaneseq
        %v2481 = vshrl.u32 %v2480, 7
        %v2482 = vsub.s32 %v1693, %v2481
        %v2483 = vrot.slane %v1899, %v2482
        %v2484 = vlaneseq
        %v2485 = vshrl.u32 %v2484, 7
        %v2486 = vsub.s32 %v1698, %v2485
        %v2487 = vrot.slane %v1904, %v2486
        %v2488 = vsel %vm1703, %v2487, %v2483
        %v2489 = vlaneseq
        %v2490 = vshrl.u32 %v2489, 7
        %v2491 = vsub.s32 %v1693, %v2490
        %v2492 = vrot.slane %v1909, %v2491
        %v2493 = vlaneseq
        %v2494 = vshrl.u32 %v2493, 7
        %v2495 = vsub.s32 %v1698, %v2494
        %v2496 = vrot.slane %v1914, %v2495
        %v2497 = vsel %vm1703, %v2496, %v2492
        %v2498 = vlaneseq
        %v2499 = vshrl.u32 %v2498, 7
        %v2500 = vsub.s32 %v1693, %v2499
        %v2501 = vrot.slane %v1919, %v2500
        %v2502 = vlaneseq
        %v2503 = vshrl.u32 %v2502, 7
        %v2504 = vsub.s32 %v1698, %v2503
        %v2505 = vrot.slane %v1924, %v2504
        %v2506 = vsel %vm1703, %v2505, %v2501
        %v2507 = vlaneseq
        %v2508 = vshrl.u32 %v2507, 7
        %v2509 = vsub.s32 %v1693, %v2508
        %v2510 = vrot.slane %v1929, %v2509
        %v2511 = vlaneseq
        %v2512 = vshrl.u32 %v2511, 7
        %v2513 = vsub.s32 %v1698, %v2512
        %v2514 = vrot.slane %v1934, %v2513
        %v2515 = vsel %vm1703, %v2514, %v2510
        %v2516 = vsel %vm1732, %v2497, %v2488
        %v2517 = vsel %vm1734, %v2506, %v2516
        %v2518 = vsel %vm1736, %v2515, %v2517
        %v2520 = vsel %vm2468, %v2518, 0.0
        %s2521 = smul.u32 %s1137, 4
        %s2522 = scalar_lea.vmem [#allocation23], %s2521
        %2523 = vst.msk [vmem:[%s2522] sm:$0xf] %vm1739, %v2520
        %s2524 = sadd.s32 %s1137, 1
        %v2525 = vld [vmem:[#allocation2] sm:$0xf]
        %v2526 = vld [vmem:[#allocation3] sm:$0xf]
        %v2527 = vpack.c.bf16 %v2525, %v2525
        %v2528 = vld [vmem:[#allocation17] sm:$0xff]
        %v2529 = vld [vmem:[#allocation17 + $0x8] sm:$0xff]
        %v2530 = vld [vmem:[#allocation17 + $0x10] sm:$0xff]
        %v2531 = vld [vmem:[#allocation17 + $0x18] sm:$0xff]
        %v2532 = vld [vmem:[#allocation17 + $0x20] sm:$0xff]
        %v2533 = vld [vmem:[#allocation17 + $0x28] sm:$0xff]
        %v2534 = vld [vmem:[#allocation17 + $0x30] sm:$0xff]
        %v2535 = vld [vmem:[#allocation17 + $0x38] sm:$0xff]
        %v2536 = vld [vmem:[#allocation17 + $0x40] sm:$0xff]
        %v2537 = vld [vmem:[#allocation17 + $0x48] sm:$0xff]
        %v2538 = vld [vmem:[#allocation17 + $0x50] sm:$0xff]
        %v2539 = vld [vmem:[#allocation17 + $0x58] sm:$0xff]
        %v2540 = vld [vmem:[#allocation17 + $0x60] sm:$0xff]
        %v2541 = vld [vmem:[#allocation17 + $0x68] sm:$0xff]
        %v2542 = vld [vmem:[#allocation17 + $0x70] sm:$0xff]
        %v2543 = vld [vmem:[#allocation17 + $0x78] sm:$0xff]
        %v2544 = vld [vmem:[#allocation17 + $0x80] sm:$0xff]
        %v2545 = vld [vmem:[#allocation17 + $0x88] sm:$0xff]
        %v2546 = vld [vmem:[#allocation17 + $0x90] sm:$0xff]
        %v2547 = vld [vmem:[#allocation17 + $0x98] sm:$0xff]
        %v2548 = vld [vmem:[#allocation17 + $0xa0] sm:$0xff]
        %v2549 = vld [vmem:[#allocation17 + $0xa8] sm:$0xff]
        %v2550 = vld [vmem:[#allocation17 + $0xb0] sm:$0xff]
        %v2551 = vld [vmem:[#allocation17 + $0xb8] sm:$0xff]
        %v2552 = vld [vmem:[#allocation17 + $0xc0] sm:$0xff]
        %v2553 = vld [vmem:[#allocation17 + $0xc8] sm:$0xff]
        %v2554 = vld [vmem:[#allocation17 + $0xd0] sm:$0xff]
        %v2555 = vld [vmem:[#allocation17 + $0xd8] sm:$0xff]
        %v2556 = vld [vmem:[#allocation17 + $0xe0] sm:$0xff]
        %v2557 = vld [vmem:[#allocation17 + $0xe8] sm:$0xff]
        %v2558 = vld [vmem:[#allocation17 + $0xf0] sm:$0xff]
        %v2559 = vld [vmem:[#allocation17 + $0xf8] sm:$0xff]
        %v2560 = vld [vmem:[#allocation17 + $0x100] sm:$0xff]
        %v2561 = vld [vmem:[#allocation17 + $0x108] sm:$0xff]
        %v2562 = vld [vmem:[#allocation17 + $0x110] sm:$0xff]
        %v2563 = vld [vmem:[#allocation17 + $0x118] sm:$0xff]
        %v2564 = vld [vmem:[#allocation17 + $0x120] sm:$0xff]
        %v2565 = vld [vmem:[#allocation17 + $0x128] sm:$0xff]
        %v2566 = vld [vmem:[#allocation17 + $0x130] sm:$0xff]
        %v2567 = vld [vmem:[#allocation17 + $0x138] sm:$0xff]
        %v2568 = vld [vmem:[#allocation17 + $0x140] sm:$0xff]
        %v2569 = vld [vmem:[#allocation17 + $0x148] sm:$0xff]
        %v2570 = vld [vmem:[#allocation17 + $0x150] sm:$0xff]
        %v2571 = vld [vmem:[#allocation17 + $0x158] sm:$0xff]
        %v2572 = vld [vmem:[#allocation17 + $0x160] sm:$0xff]
        %v2573 = vld [vmem:[#allocation17 + $0x168] sm:$0xff]
        %v2574 = vld [vmem:[#allocation17 + $0x170] sm:$0xff]
        %v2575 = vld [vmem:[#allocation17 + $0x178] sm:$0xff]
        %v2576 = vld [vmem:[%s10] sm:$0x3f]
        %v2578 = vlaneseq
        %v2579 = vshrl.u32 %v2578, 7
        %v2580 = vsub.s32 0, %v2579
        %v2581 = vrot.slane %v2576, %v2580
        %v2582 = vlaneseq
        %v2583 = vshrl.u32 %v2582, 7
        %v2584 = vsub.s32 1, %v2583
        %v2585 = vrot.slane %v2576, %v2584
        %v2586 = vlaneseq
        %v2587 = vshrl.u32 %v2586, 7
        %v2588 = vsub.s32 2, %v2587
        %v2589 = vrot.slane %v2576, %v2588
        %v2590 = vlaneseq
        %v2591 = vshrl.u32 %v2590, 7
        %v2592 = vsub.s32 3, %v2591
        %v2593 = vrot.slane %v2576, %v2592
        %v2594 = vlaneseq
        %v2595 = vshrl.u32 %v2594, 7
        %v2596 = vsub.s32 4, %v2595
        %v2597 = vrot.slane %v2576, %v2596
        %v2598 = vlaneseq
        %v2599 = vshrl.u32 %v2598, 7
        %v2600 = vsub.s32 5, %v2599
        %v2601 = vrot.slane %v2576, %v2600
        %v2656 = vunpack.c.l.b16 %v2528
        %v2657 = vunpack.c.h.b16 %v2528
        %v2658 = vunpack.c.l.b16 %v2529
        %v2659 = vunpack.c.h.b16 %v2529
        %v2660 = vunpack.c.l.b16 %v2530
        %v2661 = vunpack.c.h.b16 %v2530
        %v2662 = vunpack.c.l.b16 %v2531
        %v2663 = vunpack.c.h.b16 %v2531
        %v2664 = vunpack.c.l.b16 %v2532
        %v2665 = vunpack.c.h.b16 %v2532
        %v2666 = vunpack.c.l.b16 %v2533
        %v2667 = vunpack.c.h.b16 %v2533
        %v2668 = vunpack.c.l.b16 %v2534
        %v2669 = vunpack.c.h.b16 %v2534
        %v2670 = vunpack.c.l.b16 %v2535
        %v2671 = vunpack.c.h.b16 %v2535
        %v2672 = vunpack.c.l.b16 %v2536
        %v2673 = vunpack.c.h.b16 %v2536
        %v2674 = vunpack.c.l.b16 %v2537
        %v2675 = vunpack.c.h.b16 %v2537
        %v2676 = vunpack.c.l.b16 %v2538
        %v2677 = vunpack.c.h.b16 %v2538
        %v2678 = vunpack.c.l.b16 %v2539
        %v2679 = vunpack.c.h.b16 %v2539
        %v2680 = vunpack.c.l.b16 %v2540
        %v2681 = vunpack.c.h.b16 %v2540
        %v2682 = vunpack.c.l.b16 %v2541
        %v2683 = vunpack.c.h.b16 %v2541
        %v2684 = vunpack.c.l.b16 %v2542
        %v2685 = vunpack.c.h.b16 %v2542
        %v2686 = vunpack.c.l.b16 %v2543
        %v2687 = vunpack.c.h.b16 %v2543
        %v2688 = vunpack.c.l.b16 %v2544
        %v2689 = vunpack.c.h.b16 %v2544
        %v2690 = vunpack.c.l.b16 %v2545
        %v2691 = vunpack.c.h.b16 %v2545
        %v2692 = vunpack.c.l.b16 %v2546
        %v2693 = vunpack.c.h.b16 %v2546
        %v2694 = vunpack.c.l.b16 %v2547
        %v2695 = vunpack.c.h.b16 %v2547
        %v2696 = vunpack.c.l.b16 %v2548
        %v2697 = vunpack.c.h.b16 %v2548
        %v2698 = vunpack.c.l.b16 %v2549
        %v2699 = vunpack.c.h.b16 %v2549
        %v2700 = vunpack.c.l.b16 %v2550
        %v2701 = vunpack.c.h.b16 %v2550
        %v2702 = vunpack.c.l.b16 %v2551
        %v2703 = vunpack.c.h.b16 %v2551
        %v2704 = vunpack.c.l.b16 %v2552
        %v2705 = vunpack.c.h.b16 %v2552
        %v2706 = vunpack.c.l.b16 %v2553
        %v2707 = vunpack.c.h.b16 %v2553
        %v2708 = vunpack.c.l.b16 %v2554
        %v2709 = vunpack.c.h.b16 %v2554
        %v2710 = vunpack.c.l.b16 %v2555
        %v2711 = vunpack.c.h.b16 %v2555
        %v2712 = vunpack.c.l.b16 %v2556
        %v2713 = vunpack.c.h.b16 %v2556
        %v2714 = vunpack.c.l.b16 %v2557
        %v2715 = vunpack.c.h.b16 %v2557
        %v2716 = vunpack.c.l.b16 %v2558
        %v2717 = vunpack.c.h.b16 %v2558
        %v2718 = vunpack.c.l.b16 %v2559
        %v2719 = vunpack.c.h.b16 %v2559
        %v2720 = vunpack.c.l.b16 %v2560
        %v2721 = vunpack.c.h.b16 %v2560
        %v2722 = vunpack.c.l.b16 %v2561
        %v2723 = vunpack.c.h.b16 %v2561
        %v2724 = vunpack.c.l.b16 %v2562
        %v2725 = vunpack.c.h.b16 %v2562
        %v2726 = vunpack.c.l.b16 %v2563
        %v2727 = vunpack.c.h.b16 %v2563
        %v2728 = vunpack.c.l.b16 %v2564
        %v2729 = vunpack.c.h.b16 %v2564
        %v2730 = vunpack.c.l.b16 %v2565
        %v2731 = vunpack.c.h.b16 %v2565
        %v2732 = vunpack.c.l.b16 %v2566
        %v2733 = vunpack.c.h.b16 %v2566
        %v2734 = vunpack.c.l.b16 %v2567
        %v2735 = vunpack.c.h.b16 %v2567
        %v2736 = vunpack.c.l.b16 %v2568
        %v2737 = vunpack.c.h.b16 %v2568
        %v2738 = vunpack.c.l.b16 %v2569
        %v2739 = vunpack.c.h.b16 %v2569
        %v2740 = vunpack.c.l.b16 %v2570
        %v2741 = vunpack.c.h.b16 %v2570
        %v2742 = vunpack.c.l.b16 %v2571
        %v2743 = vunpack.c.h.b16 %v2571
        %v2744 = vunpack.c.l.b16 %v2572
        %v2745 = vunpack.c.h.b16 %v2572
        %v2746 = vunpack.c.l.b16 %v2573
        %v2747 = vunpack.c.h.b16 %v2573
        %v2748 = vunpack.c.l.b16 %v2574
        %v2749 = vunpack.c.h.b16 %v2574
        %v2750 = vunpack.c.l.b16 %v2575
        %v2751 = vunpack.c.h.b16 %v2575
        %v2752 = vpack.c.b16 %v2662, %v2656
        %v2753 = vpack.c.b16 %v2663, %v2657
        %v2754 = vpack.c.b16 %v2664, %v2658
        %v2755 = vpack.c.b16 %v2665, %v2659
        %v2756 = vpack.c.b16 %v2666, %v2660
        %v2757 = vpack.c.b16 %v2667, %v2661
        %v2758 = vpack.c.b16 %v2674, %v2668
        %v2759 = vpack.c.b16 %v2675, %v2669
        %v2760 = vpack.c.b16 %v2676, %v2670
        %v2761 = vpack.c.b16 %v2677, %v2671
        %v2762 = vpack.c.b16 %v2678, %v2672
        %v2763 = vpack.c.b16 %v2679, %v2673
        %v2764 = vpack.c.b16 %v2686, %v2680
        %v2765 = vpack.c.b16 %v2687, %v2681
        %v2766 = vpack.c.b16 %v2688, %v2682
        %v2767 = vpack.c.b16 %v2689, %v2683
        %v2768 = vpack.c.b16 %v2690, %v2684
        %v2769 = vpack.c.b16 %v2691, %v2685
        %v2770 = vpack.c.b16 %v2698, %v2692
        %v2771 = vpack.c.b16 %v2699, %v2693
        %v2772 = vpack.c.b16 %v2700, %v2694
        %v2773 = vpack.c.b16 %v2701, %v2695
        %v2774 = vpack.c.b16 %v2702, %v2696
        %v2775 = vpack.c.b16 %v2703, %v2697
        %v2776 = vpack.c.b16 %v2710, %v2704
        %v2777 = vpack.c.b16 %v2711, %v2705
        %v2778 = vpack.c.b16 %v2712, %v2706
        %v2779 = vpack.c.b16 %v2713, %v2707
        %v2780 = vpack.c.b16 %v2714, %v2708
        %v2781 = vpack.c.b16 %v2715, %v2709
        %v2782 = vpack.c.b16 %v2722, %v2716
        %v2783 = vpack.c.b16 %v2723, %v2717
        %v2784 = vpack.c.b16 %v2724, %v2718
        %v2785 = vpack.c.b16 %v2725, %v2719
        %v2786 = vpack.c.b16 %v2726, %v2720
        %v2787 = vpack.c.b16 %v2727, %v2721
        %v2788 = vpack.c.b16 %v2734, %v2728
        %v2789 = vpack.c.b16 %v2735, %v2729
        %v2790 = vpack.c.b16 %v2736, %v2730
        %v2791 = vpack.c.b16 %v2737, %v2731
        %v2792 = vpack.c.b16 %v2738, %v2732
        %v2793 = vpack.c.b16 %v2739, %v2733
        %v2794 = vpack.c.b16 %v2746, %v2740
        %v2795 = vpack.c.b16 %v2747, %v2741
        %v2796 = vpack.c.b16 %v2748, %v2742
        %v2797 = vpack.c.b16 %v2749, %v2743
        %v2798 = vpack.c.b16 %v2750, %v2744
        %v2799 = vpack.c.b16 %v2751, %v2745
        %2848 = vmatprep.subr.bf16.mxu0 %v2753
        %2849 = vmatpush1.bf16.msra.mxu0 %v2752
        %2850 = vmatprep.subr.bf16.mxu0 %v2759
        %2851 = vmatpush1.bf16.msra.mxu0 %v2758
        %2852 = vmatprep.subr.bf16.mxu0 %v2765
        %2853 = vmatpush1.bf16.msra.mxu0 %v2764
        %2854 = vmatprep.subr.bf16.mxu0 %v2771
        %2855 = vmatpush1.bf16.msra.mxu0 %v2770
        %2856 = vmatprep.subr.bf16.mxu0 %v2777
        %2857 = vmatpush1.bf16.msra.mxu0 %v2776
        %2858 = vmatprep.subr.bf16.mxu0 %v2783
        %2859 = vmatpush1.bf16.msra.mxu0 %v2782
        %2860 = vmatprep.subr.bf16.mxu0 %v2789
        %2861 = vmatpush1.bf16.msra.mxu0 %v2788
        %2862 = vmatprep.subr.bf16.mxu0 %v2795
        %2863 = vmatpush1.bf16.msra.mxu0 %v2794
        %2864 = vmatprep.subr.bf16.mxu0 0
        %2865 = vmatpush1.bf16.msra.mxu0 0
        %2866 = vmatprep.subr.bf16.mxu0 0
        %2867 = vmatpush1.bf16.msra.mxu0 0
        %2868 = vmatprep.subr.bf16.mxu0 0
        %2869 = vmatpush1.bf16.msra.mxu0 0
        %2870 = vmatprep.subr.bf16.mxu0 0
        %2871 = vmatpush1.bf16.msra.mxu0 0
        %2872 = vmatprep.subr.bf16.mxu0 0
        %2873 = vmatpush1.bf16.msra.mxu0 0
        %2874 = vmatprep.subr.bf16.mxu0 0
        %2875 = vmatpush1.bf16.msra.mxu0 0
        %2876 = vmatprep.subr.bf16.mxu0 0
        %2877 = vmatpush1.bf16.msra.mxu0 0
        %2878 = vmatprep.subr.bf16.mxu0 0
        %2879 = vmatpush1.bf16.msra.mxu0 0
        %2880 = vmatprep.mubr.bf16.mxu0 0
        %2881 = vmatmul.mubr.bf16.gmra.mrb[0].mxu0 %v2527
        %v2882 = vpop.f32.mrb[0].mxu0
        %v2883 = vadd.f32 %v2581, %v2882
        %v2884 = vpop.f32.mrb[0].mxu0
        %v2885 = vadd.f32 %v2585, %v2884
        %v2886 = vpop.f32.mrb[0].mxu0
        %v2887 = vpop.f32.mrb[0].mxu0
        %2888 = vdwg.mxu0
        %2889 = vmatprep.subr.bf16.mxu0 %v2755
        %2890 = vmatpush1.bf16.msra.mxu0 %v2754
        %2891 = vmatprep.subr.bf16.mxu0 %v2761
        %2892 = vmatpush1.bf16.msra.mxu0 %v2760
        %2893 = vmatprep.subr.bf16.mxu0 %v2767
        %2894 = vmatpush1.bf16.msra.mxu0 %v2766
        %2895 = vmatprep.subr.bf16.mxu0 %v2773
        %2896 = vmatpush1.bf16.msra.mxu0 %v2772
        %2897 = vmatprep.subr.bf16.mxu0 %v2779
        %2898 = vmatpush1.bf16.msra.mxu0 %v2778
        %2899 = vmatprep.subr.bf16.mxu0 %v2785
        %2900 = vmatpush1.bf16.msra.mxu0 %v2784
        %2901 = vmatprep.subr.bf16.mxu0 %v2791
        %2902 = vmatpush1.bf16.msra.mxu0 %v2790
        %2903 = vmatprep.subr.bf16.mxu0 %v2797
        %2904 = vmatpush1.bf16.msra.mxu0 %v2796
        %2905 = vmatprep.subr.bf16.mxu0 0
        %2906 = vmatpush1.bf16.msra.mxu0 0
        %2907 = vmatprep.subr.bf16.mxu0 0
        %2908 = vmatpush1.bf16.msra.mxu0 0
        %2909 = vmatprep.subr.bf16.mxu0 0
        %2910 = vmatpush1.bf16.msra.mxu0 0
        %2911 = vmatprep.subr.bf16.mxu0 0
        %2912 = vmatpush1.bf16.msra.mxu0 0
        %2913 = vmatprep.subr.bf16.mxu0 0
        %2914 = vmatpush1.bf16.msra.mxu0 0
        %2915 = vmatprep.subr.bf16.mxu0 0
        %2916 = vmatpush1.bf16.msra.mxu0 0
        %2917 = vmatprep.subr.bf16.mxu0 0
        %2918 = vmatpush1.bf16.msra.mxu0 0
        %2919 = vmatprep.subr.bf16.mxu0 0
        %2920 = vmatpush1.bf16.msra.mxu0 0
        %2921 = vmatprep.mubr.bf16.mxu0 0
        %2922 = vmatmul.mubr.bf16.gmra.mrb[0].mxu0 %v2527
        %v2923 = vpop.f32.mrb[0].mxu0
        %v2924 = vadd.f32 %v2589, %v2923
        %v2925 = vpop.f32.mrb[0].mxu0
        %v2926 = vadd.f32 %v2593, %v2925
        %v2927 = vpop.f32.mrb[0].mxu0
        %v2928 = vpop.f32.mrb[0].mxu0
        %2929 = vdwg.mxu0
        %2930 = vmatprep.subr.bf16.mxu0 %v2757
        %2931 = vmatpush1.bf16.msra.mxu0 %v2756
        %2932 = vmatprep.subr.bf16.mxu0 %v2763
        %2933 = vmatpush1.bf16.msra.mxu0 %v2762
        %2934 = vmatprep.subr.bf16.mxu0 %v2769
        %2935 = vmatpush1.bf16.msra.mxu0 %v2768
        %2936 = vmatprep.subr.bf16.mxu0 %v2775
        %2937 = vmatpush1.bf16.msra.mxu0 %v2774
        %2938 = vmatprep.subr.bf16.mxu0 %v2781
        %2939 = vmatpush1.bf16.msra.mxu0 %v2780
        %2940 = vmatprep.subr.bf16.mxu0 %v2787
        %2941 = vmatpush1.bf16.msra.mxu0 %v2786
        %2942 = vmatprep.subr.bf16.mxu0 %v2793
        %2943 = vmatpush1.bf16.msra.mxu0 %v2792
        %2944 = vmatprep.subr.bf16.mxu0 %v2799
        %2945 = vmatpush1.bf16.msra.mxu0 %v2798
        %2946 = vmatprep.subr.bf16.mxu0 0
        %2947 = vmatpush1.bf16.msra.mxu0 0
        %2948 = vmatprep.subr.bf16.mxu0 0
        %2949 = vmatpush1.bf16.msra.mxu0 0
        %2950 = vmatprep.subr.bf16.mxu0 0
        %2951 = vmatpush1.bf16.msra.mxu0 0
        %2952 = vmatprep.subr.bf16.mxu0 0
        %2953 = vmatpush1.bf16.msra.mxu0 0
        %2954 = vmatprep.subr.bf16.mxu0 0
        %2955 = vmatpush1.bf16.msra.mxu0 0
        %2956 = vmatprep.subr.bf16.mxu0 0
        %2957 = vmatpush1.bf16.msra.mxu0 0
        %2958 = vmatprep.subr.bf16.mxu0 0
        %2959 = vmatpush1.bf16.msra.mxu0 0
        %2960 = vmatprep.subr.bf16.mxu0 0
        %2961 = vmatpush1.bf16.msra.mxu0 0
        %2962 = vmatprep.mubr.bf16.mxu0 0
        %2963 = vmatmul.mubr.bf16.gmra.mrb[0].mxu0 %v2527
        %v2964 = vpop.f32.mrb[0].mxu0
        %v2965 = vadd.f32 %v2597, %v2964
        %v2966 = vpop.f32.mrb[0].mxu0
        %v2967 = vadd.f32 %v2601, %v2966
        %v2968 = vpop.f32.mrb[0].mxu0
        %v2969 = vpop.f32.mrb[0].mxu0
        %2970 = vdwg.mxu0
        %v2973 = vunpack.c.l.s4 1966171168
        %v2974 = vunpack.c.0.s8 %v2973
        %v2975 = vlaneseq
        %v2976 = vshrl.u32 %v2975, 7
        %v2977 = vsub.s32 %v2974, %v2976
        %v2978 = vrot.slane %v2883, %v2977
        %v2979 = vcombine.high %v2978, %v2978
        %v2981 = vunpack.c.l.s4 1966171168
        %v2982 = vunpack.c.0.s8 %v2981
        %v2983 = vlaneseq
        %v2984 = vshrl.u32 %v2983, 7
        %v2985 = vsub.s32 %v2982, %v2984
        %v2986 = vrot.slane %v2978, %v2985
        %v2988 = vunpack.c.l.s4 1966171168
        %v2989 = vunpack.c.0.s8 %v2988
        %v2990 = vlaneseq
        %v2991 = vshrl.u32 %v2990, 7
        %v2992 = vsub.s32 %v2989, %v2991
        %v2993 = vrot.slane %v2979, %v2992
        %v2994 = vcombine.high %v2986, %v2986
        %v2995 = vcombine.high %v2993, %v2993
        %v2996 = vlaneseq
        %v2997 = vshrl.u32 %v2996, 7
        %v2998 = vsub.s32 0, %v2997
        %v2999 = vrot.slane %v2986, %v2998
        %v3000 = vlaneseq
        %v3001 = vshrl.u32 %v3000, 7
        %v3002 = vsub.s32 0, %v3001
        %v3003 = vrot.slane %v2993, %v3002
        %v3004 = vlaneseq
        %v3005 = vshrl.u32 %v3004, 7
        %v3006 = vsub.s32 0, %v3005
        %v3007 = vrot.slane %v2994, %v3006
        %v3008 = vlaneseq
        %v3009 = vshrl.u32 %v3008, 7
        %v3010 = vsub.s32 0, %v3009
        %v3011 = vrot.slane %v2995, %v3010
        %v3016 = vadd.f32 %v1125, %v2999
        %v3017 = vadd.f32 %v1126, %v2999
        %v3018 = vadd.f32 %v1127, %v3003
        %v3019 = vadd.f32 %v1128, %v3003
        %v3020 = vadd.f32 %v1129, %v3007
        %v3021 = vadd.f32 %v1130, %v3007
        %v3022 = vadd.f32 %v1131, %v3011
        %v3023 = vadd.f32 %v1132, %v3011
        %v3024 = vmax.f32 %v3016, 0.0
        %v3025 = vmax.f32 %v3017, 0.0
        %v3026 = vmax.f32 %v3018, 0.0
        %v3027 = vmax.f32 %v3019, 0.0
        %v3028 = vmax.f32 %v3020, 0.0
        %v3029 = vmax.f32 %v3021, 0.0
        %v3030 = vmax.f32 %v3022, 0.0
        %v3031 = vmax.f32 %v3023, 0.0
        %v3032 = vmul.f32 %v3024, %v1649
        %v3033 = vmul.f32 %v3025, %v1649
        %v3034 = vmul.f32 %v3026, %v1649
        %v3035 = vmul.f32 %v3027, %v1649
        %v3036 = vmul.f32 %v3028, %v1649
        %v3037 = vmul.f32 %v3029, %v1649
        %v3038 = vmul.f32 %v3030, %v1649
        %v3039 = vmul.f32 %v3031, %v1649
        %3040 = vadd.xlane.f32.xlu0 %v3032
        %v3041 = vpop.xlane.xlu0 %3040
        %3042 = vadd.xlane.f32.xlu0 %v3033
        %v3043 = vpop.xlane.xlu0 %3042
        %3044 = vadd.xlane.f32.xlu0 %v3034
        %v3045 = vpop.xlane.xlu0 %3044
        %3046 = vadd.xlane.f32.xlu0 %v3035
        %v3047 = vpop.xlane.xlu0 %3046
        %3048 = vadd.xlane.f32.xlu0 %v3036
        %v3049 = vpop.xlane.xlu0 %3048
        %3050 = vadd.xlane.f32.xlu0 %v3037
        %v3051 = vpop.xlane.xlu0 %3050
        %3052 = vadd.xlane.f32.xlu0 %v3038
        %v3053 = vpop.xlane.xlu0 %3052
        %3054 = vadd.xlane.f32.xlu0 %v3039
        %v3055 = vpop.xlane.xlu0 %3054
        %v3056 = vadd.f32 %v3041, %v1675
        %v3057 = vadd.f32 %v3043, %v1675
        %v3058 = vadd.f32 %v3045, %v1675
        %v3059 = vadd.f32 %v3047, %v1675
        %v3060 = vadd.f32 %v3049, %v1675
        %v3061 = vadd.f32 %v3051, %v1675
        %v3062 = vadd.f32 %v3053, %v1675
        %v3063 = vadd.f32 %v3055, %v1675
        %v3072 = vlaneseq
        %v3073 = vshrl.u32 %v3072, 7
        %v3074 = vsub.s32 %v1693, %v3073
        %v3075 = vrot.slane %v3056, %v3074
        %v3076 = vlaneseq
        %v3077 = vshrl.u32 %v3076, 7
        %v3078 = vsub.s32 %v1698, %v3077
        %v3079 = vrot.slane %v3057, %v3078
        %v3080 = vsel %vm1703, %v3079, %v3075
        %v3081 = vlaneseq
        %v3082 = vshrl.u32 %v3081, 7
        %v3083 = vsub.s32 %v1693, %v3082
        %v3084 = vrot.slane %v3058, %v3083
        %v3085 = vlaneseq
        %v3086 = vshrl.u32 %v3085, 7
        %v3087 = vsub.s32 %v1698, %v3086
        %v3088 = vrot.slane %v3059, %v3087
        %v3089 = vsel %vm1703, %v3088, %v3084
        %v3090 = vlaneseq
        %v3091 = vshrl.u32 %v3090, 7
        %v3092 = vsub.s32 %v1693, %v3091
        %v3093 = vrot.slane %v3060, %v3092
        %v3094 = vlaneseq
        %v3095 = vshrl.u32 %v3094, 7
        %v3096 = vsub.s32 %v1698, %v3095
        %v3097 = vrot.slane %v3061, %v3096
        %v3098 = vsel %vm1703, %v3097, %v3093
        %v3099 = vlaneseq
        %v3100 = vshrl.u32 %v3099, 7
        %v3101 = vsub.s32 %v1693, %v3100
        %v3102 = vrot.slane %v3062, %v3101
        %v3103 = vlaneseq
        %v3104 = vshrl.u32 %v3103, 7
        %v3105 = vsub.s32 %v1698, %v3104
        %v3106 = vrot.slane %v3063, %v3105
        %v3107 = vsel %vm1703, %v3106, %v3102
        %v3108 = vsel %vm1732, %v3089, %v3080
        %v3109 = vsel %vm1734, %v3098, %v3108
        %v3110 = vsel %vm1736, %v3107, %v3109
        %v3112 = vsel %vm1739, %v3110, -inf
        %3113 = vmax.xlane.f32.xlu0 %v3112
        %v3114 = vpop.xlane.xlu0 %3113
        %v3116 = vlaneseq
        %v3117 = vshrl.u32 %v3116, 7
        %v3118 = vsub.s32 0, %v3117
        %v3119 = vrot.slane %v3114, %v3118
        %v3120 = vlaneseq
        %v3121 = vshrl.u32 %v3120, 7
        %v3122 = vsub.s32 1, %v3121
        %v3123 = vrot.slane %v3114, %v3122
        %v3124 = vlaneseq
        %v3125 = vshrl.u32 %v3124, 7
        %v3126 = vsub.s32 2, %v3125
        %v3127 = vrot.slane %v3114, %v3126
        %v3128 = vlaneseq
        %v3129 = vshrl.u32 %v3128, 7
        %v3130 = vsub.s32 3, %v3129
        %v3131 = vrot.slane %v3114, %v3130
        %v3136 = vsub.f32 %v3056, %v3119
        %v3137 = vsub.f32 %v3057, %v3119
        %v3138 = vsub.f32 %v3058, %v3123
        %v3139 = vsub.f32 %v3059, %v3123
        %v3140 = vsub.f32 %v3060, %v3127
        %v3141 = vsub.f32 %v3061, %v3127
        %v3142 = vsub.f32 %v3062, %v3131
        %v3143 = vsub.f32 %v3063, %v3131
        %v3144 = vmul.f32 %v3136, 1.442695
        %v3145 = vpow.pop %v3144
        %v3146 = vmul.f32 %v3137, 1.442695
        %v3147 = vpow.pop %v3146
        %v3148 = vmul.f32 %v3138, 1.442695
        %v3149 = vpow.pop %v3148
        %v3150 = vmul.f32 %v3139, 1.442695
        %v3151 = vpow.pop %v3150
        %v3152 = vmul.f32 %v3140, 1.442695
        %v3153 = vpow.pop %v3152
        %v3154 = vmul.f32 %v3141, 1.442695
        %v3155 = vpow.pop %v3154
        %v3156 = vmul.f32 %v3142, 1.442695
        %v3157 = vpow.pop %v3156
        %v3158 = vmul.f32 %v3143, 1.442695
        %v3159 = vpow.pop %v3158
        %3168 = vset.pattern.permute.xlu0 0
        %3169 = vperm.xlu0 %3168, %v3145
        %v3170 = vpop.permute.xlu0 %3169
        %3171 = vset.pattern.permute.xlu0 0
        %3172 = vperm.xlu0 %3171, %v3147
        %v3173 = vpop.permute.xlu0 %3172
        %3174 = vset.pattern.permute.xlu0 0
        %3175 = vperm.xlu0 %3174, %v3149
        %v3176 = vpop.permute.xlu0 %3175
        %3177 = vset.pattern.permute.xlu0 0
        %3178 = vperm.xlu0 %3177, %v3151
        %v3179 = vpop.permute.xlu0 %3178
        %3180 = vset.pattern.permute.xlu0 0
        %3181 = vperm.xlu0 %3180, %v3153
        %v3182 = vpop.permute.xlu0 %3181
        %3183 = vset.pattern.permute.xlu0 0
        %3184 = vperm.xlu0 %3183, %v3155
        %v3185 = vpop.permute.xlu0 %3184
        %3186 = vset.pattern.permute.xlu0 0
        %3187 = vperm.xlu0 %3186, %v3157
        %v3188 = vpop.permute.xlu0 %3187
        %3189 = vset.pattern.permute.xlu0 0
        %3190 = vperm.xlu0 %3189, %v3159
        %v3191 = vpop.permute.xlu0 %3190
        %v3192 = vlaneseq
        %v3193 = vshrl.u32 %v3192, 7
        %v3194 = vsub.s32 %v1693, %v3193
        %v3195 = vrot.slane %v3170, %v3194
        %v3196 = vlaneseq
        %v3197 = vshrl.u32 %v3196, 7
        %v3198 = vsub.s32 %v1698, %v3197
        %v3199 = vrot.slane %v3173, %v3198
        %v3200 = vsel %vm1703, %v3199, %v3195
        %v3201 = vlaneseq
        %v3202 = vshrl.u32 %v3201, 7
        %v3203 = vsub.s32 %v1693, %v3202
        %v3204 = vrot.slane %v3176, %v3203
        %v3205 = vlaneseq
        %v3206 = vshrl.u32 %v3205, 7
        %v3207 = vsub.s32 %v1698, %v3206
        %v3208 = vrot.slane %v3179, %v3207
        %v3209 = vsel %vm1703, %v3208, %v3204
        %v3210 = vlaneseq
        %v3211 = vshrl.u32 %v3210, 7
        %v3212 = vsub.s32 %v1693, %v3211
        %v3213 = vrot.slane %v3182, %v3212
        %v3214 = vlaneseq
        %v3215 = vshrl.u32 %v3214, 7
        %v3216 = vsub.s32 %v1698, %v3215
        %v3217 = vrot.slane %v3185, %v3216
        %v3218 = vsel %vm1703, %v3217, %v3213
        %v3219 = vlaneseq
        %v3220 = vshrl.u32 %v3219, 7
        %v3221 = vsub.s32 %v1693, %v3220
        %v3222 = vrot.slane %v3188, %v3221
        %v3223 = vlaneseq
        %v3224 = vshrl.u32 %v3223, 7
        %v3225 = vsub.s32 %v1698, %v3224
        %v3226 = vrot.slane %v3191, %v3225
        %v3227 = vsel %vm1703, %v3226, %v3222
        %v3228 = vsel %vm1732, %v3209, %v3200
        %v3229 = vsel %vm1734, %v3218, %v3228
        %v3230 = vsel %vm1736, %v3227, %v3229
        %v3232 = vsel %vm1739, %v3230, 0.0
        %3233 = vadd.xlane.f32.xlu0 %v3232
        %v3234 = vpop.xlane.xlu0 %3233
        %v3236 = vlaneseq
        %v3237 = vshrl.u32 %v3236, 7
        %v3238 = vsub.s32 0, %v3237
        %v3239 = vrot.slane %v3234, %v3238
        %v3240 = vlaneseq
        %v3241 = vshrl.u32 %v3240, 7
        %v3242 = vsub.s32 1, %v3241
        %v3243 = vrot.slane %v3234, %v3242
        %v3244 = vlaneseq
        %v3245 = vshrl.u32 %v3244, 7
        %v3246 = vsub.s32 2, %v3245
        %v3247 = vrot.slane %v3234, %v3246
        %v3248 = vlaneseq
        %v3249 = vshrl.u32 %v3248, 7
        %v3250 = vsub.s32 3, %v3249
        %v3251 = vrot.slane %v3234, %v3250
        %v3256 = vrcp.pop %v3239
        %v3257 = vmul.f32 %v3145, %v3256
        %v3258 = vmul.f32 %v3147, %v3256
        %v3259 = vrcp.pop %v3243
        %v3260 = vmul.f32 %v3149, %v3259
        %v3261 = vmul.f32 %v3151, %v3259
        %v3262 = vrcp.pop %v3247
        %v3263 = vmul.f32 %v3153, %v3262
        %v3264 = vmul.f32 %v3155, %v3262
        %v3265 = vrcp.pop %v3251
        %v3266 = vmul.f32 %v3157, %v3265
        %v3267 = vmul.f32 %v3159, %v3265
        %3269 = vset.pattern.permute.xlu0 0
        %3270 = vperm.xlu0 %3269, %v3257
        %v3271 = vpop.permute.xlu0 %3270
        %3274 = vset.pattern.permute.xlu0 0
        %3275 = vperm.xlu0 %3274, %v3258
        %v3276 = vpop.permute.xlu0 %3275
        %3279 = vset.pattern.permute.xlu0 0
        %3280 = vperm.xlu0 %3279, %v3260
        %v3281 = vpop.permute.xlu0 %3280
        %3284 = vset.pattern.permute.xlu0 0
        %3285 = vperm.xlu0 %3284, %v3261
        %v3286 = vpop.permute.xlu0 %3285
        %3289 = vset.pattern.permute.xlu0 0
        %3290 = vperm.xlu0 %3289, %v3263
        %v3291 = vpop.permute.xlu0 %3290
        %3294 = vset.pattern.permute.xlu0 0
        %3295 = vperm.xlu0 %3294, %v3264
        %v3296 = vpop.permute.xlu0 %3295
        %3299 = vset.pattern.permute.xlu0 0
        %3300 = vperm.xlu0 %3299, %v3266
        %v3301 = vpop.permute.xlu0 %3300
        %3304 = vset.pattern.permute.xlu0 0
        %3305 = vperm.xlu0 %3304, %v3267
        %v3306 = vpop.permute.xlu0 %3305
        %v3308 = vmul.f32 %v1117, %v3271
        %v3309 = vmul.f32 %v1118, %v3276
        %v3310 = vmul.f32 %v1119, %v3281
        %v3311 = vmul.f32 %v1120, %v3286
        %v3312 = vmul.f32 %v1121, %v3291
        %v3313 = vmul.f32 %v1122, %v3296
        %v3314 = vmul.f32 %v1123, %v3301
        %v3315 = vmul.f32 %v1124, %v3306
        %v3316 = vadd.f32 %v3308, %v3309
        %v3317 = vrot.slane %v3316, 4
        %v3318 = vadd.f32 %v3316, %v3317
        %v3319 = vrot.slane %v3318, 2
        %v3320 = vadd.f32 %v3318, %v3319
        %v3321 = vrot.slane %v3320, 1
        %v3322 = vadd.f32 %v3320, %v3321
        %v3323 = vadd.f32 %v3310, %v3311
        %v3324 = vrot.slane %v3323, 4
        %v3325 = vadd.f32 %v3323, %v3324
        %v3326 = vrot.slane %v3325, 2
        %v3327 = vadd.f32 %v3325, %v3326
        %v3328 = vrot.slane %v3327, 1
        %v3329 = vadd.f32 %v3327, %v3328
        %v3330 = vadd.f32 %v3312, %v3313
        %v3331 = vrot.slane %v3330, 4
        %v3332 = vadd.f32 %v3330, %v3331
        %v3333 = vrot.slane %v3332, 2
        %v3334 = vadd.f32 %v3332, %v3333
        %v3335 = vrot.slane %v3334, 1
        %v3336 = vadd.f32 %v3334, %v3335
        %v3337 = vadd.f32 %v3314, %v3315
        %v3338 = vrot.slane %v3337, 4
        %v3339 = vadd.f32 %v3337, %v3338
        %v3340 = vrot.slane %v3339, 2
        %v3341 = vadd.f32 %v3339, %v3340
        %v3342 = vrot.slane %v3341, 1
        %v3343 = vadd.f32 %v3341, %v3342
        %v3344 = vxor.u32 %v2885, 2147483648
        %v3345 = vmul.f32 %v3344, 1.442695
        %v3346 = vpow.pop %v3345
        %v3347 = vadd.f32 %v3346, 1.0
        %v3348 = vrcp.pop %v3347
        %v3349 = vmul.f32 1.0, %v3348
        %v3354 = vsel %vm1732, %v3329, %v3322
        %v3355 = vsel %vm1734, %v3336, %v3354
        %v3356 = vsel %vm1736, %v3343, %v3355
        %v3358 = vmul.f32 %v3349, %v3356
        %s3359 = scalar_lea.vmem %s577, 16 [#allocation11]
        %v3360 = vld [vmem:[%s3359] sm:$0xff]
        %v3361 = vld [vmem:[%s3359 + $0x8] sm:$0xff]
        %v3362 = vpack.c.bf16 %v3358, %v3358
        %v3363 = vld [vmem:[#allocation19] sm:$0xff]
        %v3364 = vld [vmem:[#allocation19 + $0x8] sm:$0xff]
        %v3365 = vld [vmem:[#allocation19 + $0x10] sm:$0xff]
        %v3366 = vld [vmem:[#allocation19 + $0x18] sm:$0xff]
        %v3367 = vld [vmem:[#allocation19 + $0x20] sm:$0xff]
        %v3368 = vld [vmem:[#allocation19 + $0x28] sm:$0xff]
        %v3369 = vld [vmem:[#allocation19 + $0x30] sm:$0xff]
        %v3370 = vld [vmem:[#allocation19 + $0x38] sm:$0xff]
        %v3371 = vld [vmem:[#allocation19 + $0x40] sm:$0xff]
        %v3372 = vld [vmem:[#allocation19 + $0x48] sm:$0xff]
        %v3373 = vld [vmem:[#allocation19 + $0x50] sm:$0xff]
        %v3374 = vld [vmem:[#allocation19 + $0x58] sm:$0xff]
        %v3375 = vld [vmem:[#allocation19 + $0x60] sm:$0xff]
        %v3376 = vld [vmem:[#allocation19 + $0x68] sm:$0xff]
        %v3377 = vld [vmem:[#allocation19 + $0x70] sm:$0xff]
        %v3378 = vld [vmem:[#allocation19 + $0x78] sm:$0xff]
        %v3379 = vld [vmem:[#allocation19 + $0x80] sm:$0xff]
        %v3380 = vld [vmem:[#allocation19 + $0x88] sm:$0xff]
        %v3381 = vld [vmem:[#allocation19 + $0x90] sm:$0xff]
        %v3382 = vld [vmem:[#allocation19 + $0x98] sm:$0xff]
        %v3383 = vld [vmem:[#allocation19 + $0xa0] sm:$0xff]
        %v3384 = vld [vmem:[#allocation19 + $0xa8] sm:$0xff]
        %v3385 = vld [vmem:[#allocation19 + $0xb0] sm:$0xff]
        %v3386 = vld [vmem:[#allocation19 + $0xb8] sm:$0xff]
        %v3387 = vld [vmem:[#allocation19 + $0xc0] sm:$0xff]
        %v3388 = vld [vmem:[#allocation19 + $0xc8] sm:$0xff]
        %v3389 = vld [vmem:[#allocation19 + $0xd0] sm:$0xff]
        %v3390 = vld [vmem:[#allocation19 + $0xd8] sm:$0xff]
        %v3391 = vld [vmem:[#allocation19 + $0xe0] sm:$0xff]
        %v3392 = vld [vmem:[#allocation19 + $0xe8] sm:$0xff]
        %v3393 = vld [vmem:[#allocation19 + $0xf0] sm:$0xff]
        %v3394 = vld [vmem:[#allocation19 + $0xf8] sm:$0xff]
        %v3427 = vunpack.c.l.b16 %v3363
        %v3428 = vunpack.c.h.b16 %v3363
        %v3429 = vunpack.c.l.b16 %v3364
        %v3430 = vunpack.c.h.b16 %v3364
        %v3431 = vunpack.c.l.b16 %v3365
        %v3432 = vunpack.c.h.b16 %v3365
        %v3433 = vunpack.c.l.b16 %v3366
        %v3434 = vunpack.c.h.b16 %v3366
        %v3435 = vunpack.c.l.b16 %v3367
        %v3436 = vunpack.c.h.b16 %v3367
        %v3437 = vunpack.c.l.b16 %v3368
        %v3438 = vunpack.c.h.b16 %v3368
        %v3439 = vunpack.c.l.b16 %v3369
        %v3440 = vunpack.c.h.b16 %v3369
        %v3441 = vunpack.c.l.b16 %v3370
        %v3442 = vunpack.c.h.b16 %v3370
        %v3443 = vunpack.c.l.b16 %v3371
        %v3444 = vunpack.c.h.b16 %v3371
        %v3445 = vunpack.c.l.b16 %v3372
        %v3446 = vunpack.c.h.b16 %v3372
        %v3447 = vunpack.c.l.b16 %v3373
        %v3448 = vunpack.c.h.b16 %v3373
        %v3449 = vunpack.c.l.b16 %v3374
        %v3450 = vunpack.c.h.b16 %v3374
        %v3451 = vunpack.c.l.b16 %v3375
        %v3452 = vunpack.c.h.b16 %v3375
        %v3453 = vunpack.c.l.b16 %v3376
        %v3454 = vunpack.c.h.b16 %v3376
        %v3455 = vunpack.c.l.b16 %v3377
        %v3456 = vunpack.c.h.b16 %v3377
        %v3457 = vunpack.c.l.b16 %v3378
        %v3458 = vunpack.c.h.b16 %v3378
        %v3459 = vunpack.c.l.b16 %v3379
        %v3460 = vunpack.c.h.b16 %v3379
        %v3461 = vunpack.c.l.b16 %v3380
        %v3462 = vunpack.c.h.b16 %v3380
        %v3463 = vunpack.c.l.b16 %v3381
        %v3464 = vunpack.c.h.b16 %v3381
        %v3465 = vunpack.c.l.b16 %v3382
        %v3466 = vunpack.c.h.b16 %v3382
        %v3467 = vunpack.c.l.b16 %v3383
        %v3468 = vunpack.c.h.b16 %v3383
        %v3469 = vunpack.c.l.b16 %v3384
        %v3470 = vunpack.c.h.b16 %v3384
        %v3471 = vunpack.c.l.b16 %v3385
        %v3472 = vunpack.c.h.b16 %v3385
        %v3473 = vunpack.c.l.b16 %v3386
        %v3474 = vunpack.c.h.b16 %v3386
        %v3475 = vunpack.c.l.b16 %v3387
        %v3476 = vunpack.c.h.b16 %v3387
        %v3477 = vunpack.c.l.b16 %v3388
        %v3478 = vunpack.c.h.b16 %v3388
        %v3479 = vunpack.c.l.b16 %v3389
        %v3480 = vunpack.c.h.b16 %v3389
        %v3481 = vunpack.c.l.b16 %v3390
        %v3482 = vunpack.c.h.b16 %v3390
        %v3483 = vunpack.c.l.b16 %v3391
        %v3484 = vunpack.c.h.b16 %v3391
        %v3485 = vunpack.c.l.b16 %v3392
        %v3486 = vunpack.c.h.b16 %v3392
        %v3487 = vunpack.c.l.b16 %v3393
        %v3488 = vunpack.c.h.b16 %v3393
        %v3489 = vunpack.c.l.b16 %v3394
        %v3490 = vunpack.c.h.b16 %v3394
        %v3491 = vpack.c.b16 %v3431, %v3427
        %v3492 = vpack.c.b16 %v3432, %v3428
        %v3493 = vpack.c.b16 %v3433, %v3429
        %v3494 = vpack.c.b16 %v3434, %v3430
        %v3495 = vpack.c.b16 %v3439, %v3435
        %v3496 = vpack.c.b16 %v3440, %v3436
        %v3497 = vpack.c.b16 %v3441, %v3437
        %v3498 = vpack.c.b16 %v3442, %v3438
        %v3499 = vpack.c.b16 %v3447, %v3443
        %v3500 = vpack.c.b16 %v3448, %v3444
        %v3501 = vpack.c.b16 %v3449, %v3445
        %v3502 = vpack.c.b16 %v3450, %v3446
        %v3503 = vpack.c.b16 %v3455, %v3451
        %v3504 = vpack.c.b16 %v3456, %v3452
        %v3505 = vpack.c.b16 %v3457, %v3453
        %v3506 = vpack.c.b16 %v3458, %v3454
        %v3507 = vpack.c.b16 %v3463, %v3459
        %v3508 = vpack.c.b16 %v3464, %v3460
        %v3509 = vpack.c.b16 %v3465, %v3461
        %v3510 = vpack.c.b16 %v3466, %v3462
        %v3511 = vpack.c.b16 %v3471, %v3467
        %v3512 = vpack.c.b16 %v3472, %v3468
        %v3513 = vpack.c.b16 %v3473, %v3469
        %v3514 = vpack.c.b16 %v3474, %v3470
        %v3515 = vpack.c.b16 %v3479, %v3475
        %v3516 = vpack.c.b16 %v3480, %v3476
        %v3517 = vpack.c.b16 %v3481, %v3477
        %v3518 = vpack.c.b16 %v3482, %v3478
        %v3519 = vpack.c.b16 %v3487, %v3483
        %v3520 = vpack.c.b16 %v3488, %v3484
        %v3521 = vpack.c.b16 %v3489, %v3485
        %v3522 = vpack.c.b16 %v3490, %v3486
        %3555 = vmatprep.subr.bf16.mxu0 %v3492
        %3556 = vmatpush1.bf16.msra.mxu0 %v3491
        %3557 = vmatprep.subr.bf16.mxu0 %v3496
        %3558 = vmatpush1.bf16.msra.mxu0 %v3495
        %3559 = vmatprep.subr.bf16.mxu0 %v3500
        %3560 = vmatpush1.bf16.msra.mxu0 %v3499
        %3561 = vmatprep.subr.bf16.mxu0 %v3504
        %3562 = vmatpush1.bf16.msra.mxu0 %v3503
        %3563 = vmatprep.subr.bf16.mxu0 %v3508
        %3564 = vmatpush1.bf16.msra.mxu0 %v3507
        %3565 = vmatprep.subr.bf16.mxu0 %v3512
        %3566 = vmatpush1.bf16.msra.mxu0 %v3511
        %3567 = vmatprep.subr.bf16.mxu0 %v3516
        %3568 = vmatpush1.bf16.msra.mxu0 %v3515
        %3569 = vmatprep.subr.bf16.mxu0 %v3520
        %3570 = vmatpush1.bf16.msra.mxu0 %v3519
        %3571 = vmatprep.subr.bf16.mxu0 0
        %3572 = vmatpush1.bf16.msra.mxu0 0
        %3573 = vmatprep.subr.bf16.mxu0 0
        %3574 = vmatpush1.bf16.msra.mxu0 0
        %3575 = vmatprep.subr.bf16.mxu0 0
        %3576 = vmatpush1.bf16.msra.mxu0 0
        %3577 = vmatprep.subr.bf16.mxu0 0
        %3578 = vmatpush1.bf16.msra.mxu0 0
        %3579 = vmatprep.subr.bf16.mxu0 0
        %3580 = vmatpush1.bf16.msra.mxu0 0
        %3581 = vmatprep.subr.bf16.mxu0 0
        %3582 = vmatpush1.bf16.msra.mxu0 0
        %3583 = vmatprep.subr.bf16.mxu0 0
        %3584 = vmatpush1.bf16.msra.mxu0 0
        %3585 = vmatprep.subr.bf16.mxu0 0
        %3586 = vmatpush1.bf16.msra.mxu0 0
        %3587 = vmatprep.mubr.bf16.mxu0 0
        %3588 = vmatmul.mubr.bf16.gmra.mrb[0].mxu0 %v3362
        %v3589 = vpop.f32.mrb[0].mxu0
        %v3590 = vadd.f32 0.0, %v3589
        %v3591 = vpop.f32.mrb[0].mxu0
        %v3592 = vadd.f32 0.0, %v3591
        %v3593 = vpop.f32.mrb[0].mxu0
        %v3594 = vpop.f32.mrb[0].mxu0
        %3595 = vdwg.mxu0
        %3596 = vmatprep.subr.bf16.mxu0 %v3494
        %3597 = vmatpush1.bf16.msra.mxu0 %v3493
        %3598 = vmatprep.subr.bf16.mxu0 %v3498
        %3599 = vmatpush1.bf16.msra.mxu0 %v3497
        %3600 = vmatprep.subr.bf16.mxu0 %v3502
        %3601 = vmatpush1.bf16.msra.mxu0 %v3501
        %3602 = vmatprep.subr.bf16.mxu0 %v3506
        %3603 = vmatpush1.bf16.msra.mxu0 %v3505
        %3604 = vmatprep.subr.bf16.mxu0 %v3510
        %3605 = vmatpush1.bf16.msra.mxu0 %v3509
        %3606 = vmatprep.subr.bf16.mxu0 %v3514
        %3607 = vmatpush1.bf16.msra.mxu0 %v3513
        %3608 = vmatprep.subr.bf16.mxu0 %v3518
        %3609 = vmatpush1.bf16.msra.mxu0 %v3517
        %3610 = vmatprep.subr.bf16.mxu0 %v3522
        %3611 = vmatpush1.bf16.msra.mxu0 %v3521
        %3612 = vmatprep.subr.bf16.mxu0 0
        %3613 = vmatpush1.bf16.msra.mxu0 0
        %3614 = vmatprep.subr.bf16.mxu0 0
        %3615 = vmatpush1.bf16.msra.mxu0 0
        %3616 = vmatprep.subr.bf16.mxu0 0
        %3617 = vmatpush1.bf16.msra.mxu0 0
        %3618 = vmatprep.subr.bf16.mxu0 0
        %3619 = vmatpush1.bf16.msra.mxu0 0
        %3620 = vmatprep.subr.bf16.mxu0 0
        %3621 = vmatpush1.bf16.msra.mxu0 0
        %3622 = vmatprep.subr.bf16.mxu0 0
        %3623 = vmatpush1.bf16.msra.mxu0 0
        %3624 = vmatprep.subr.bf16.mxu0 0
        %3625 = vmatpush1.bf16.msra.mxu0 0
        %3626 = vmatprep.subr.bf16.mxu0 0
        %3627 = vmatpush1.bf16.msra.mxu0 0
        %3628 = vmatprep.mubr.bf16.mxu0 0
        %3629 = vmatmul.mubr.bf16.gmra.mrb[0].mxu0 %v3362
        %v3630 = vpop.f32.mrb[0].mxu0
        %v3631 = vadd.f32 0.0, %v3630
        %v3632 = vpop.f32.mrb[0].mxu0
        %v3633 = vadd.f32 0.0, %v3632
        %v3634 = vpop.f32.mrb[0].mxu0
        %v3635 = vpop.f32.mrb[0].mxu0
        %3636 = vdwg.mxu0
        %v3641 = vcombine.low %v3590, %v3592
        %v3642 = vcombine.low %v3631, %v3633
        %v3645 = vadd.f32 %v3360, %v3641
        %v3646 = vadd.f32 %v3361, %v3642
        %v3651 = vcombine.low %v2924, %v2926
        %v3652 = vcombine.low %v2965, %v2967
        %v3655 = vadd.f32 %v3645, %v3651
        %v3656 = vadd.f32 %v3646, %v3652
        %v3657 = vxor.u32 %v3655, 2147483648
        %v3658 = vmul.f32 %v3657, 1.442695
        %v3659 = vpow.pop %v3658
        %v3660 = vadd.f32 %v3659, 1.0
        %v3661 = vrcp.pop %v3660
        %v3662 = vmul.f32 1.0, %v3661
        %v3664 = vrot.slane %v3655, 4
        %v3666 = vxor.u32 %v3664, 2147483648
        %v3667 = vmul.f32 %v3666, 1.442695
        %v3668 = vpow.pop %v3667
        %v3669 = vadd.f32 %v3668, 1.0
        %v3670 = vrcp.pop %v3669
        %v3671 = vmul.f32 1.0, %v3670
        %v3672 = vtanh.pop %v3656
        %v3674 = vrot.slane %v3656, 4
        %v3676 = vxor.u32 %v3674, 2147483648
        %v3677 = vmul.f32 %v3676, 1.442695
        %v3678 = vpow.pop %v3677
        %v3679 = vadd.f32 %v3678, 1.0
        %v3680 = vrcp.pop %v3679
        %v3681 = vmul.f32 1.0, %v3680
        %v3682 = vmul.f32 %v3671, %v2526
        %v3683 = vmul.f32 %v3662, %v3672
        %v3684 = vadd.f32 %v3682, %v3683
        %v3685 = vtanh.pop %v3684
        %v3686 = vmul.f32 %v3681, %v3685
        %v3687 = vpack.c.bf16 %v3686, %v3686
        %v3688 = vld [vmem:[#allocation20] sm:$0xff]
        %v3689 = vld [vmem:[#allocation20 + $0x8] sm:$0xff]
        %v3690 = vld [vmem:[#allocation20 + $0x10] sm:$0xff]
        %v3691 = vld [vmem:[#allocation20 + $0x18] sm:$0xff]
        %v3692 = vld [vmem:[#allocation20 + $0x20] sm:$0xff]
        %v3693 = vld [vmem:[#allocation20 + $0x28] sm:$0xff]
        %v3694 = vld [vmem:[#allocation20 + $0x30] sm:$0xff]
        %v3695 = vld [vmem:[#allocation20 + $0x38] sm:$0xff]
        %v3696 = vld [vmem:[#allocation20 + $0x40] sm:$0xff]
        %v3697 = vld [vmem:[#allocation20 + $0x48] sm:$0xff]
        %v3698 = vld [vmem:[#allocation20 + $0x50] sm:$0xff]
        %v3699 = vld [vmem:[#allocation20 + $0x58] sm:$0xff]
        %v3700 = vld [vmem:[#allocation20 + $0x60] sm:$0xff]
        %v3701 = vld [vmem:[#allocation20 + $0x68] sm:$0xff]
        %v3702 = vld [vmem:[#allocation20 + $0x70] sm:$0xff]
        %v3703 = vld [vmem:[#allocation20 + $0x78] sm:$0xff]
        %v3704 = vld [vmem:[%s15] sm:$0x3]
        %v3706 = vlaneseq
        %v3707 = vshrl.u32 %v3706, 7
        %v3708 = vsub.s32 0, %v3707
        %v3709 = vrot.slane %v3704, %v3708
        %v3710 = vlaneseq
        %v3711 = vshrl.u32 %v3710, 7
        %v3712 = vsub.s32 1, %v3711
        %v3713 = vrot.slane %v3704, %v3712
        %v3732 = vunpack.c.l.b16 %v3688
        %v3733 = vunpack.c.h.b16 %v3688
        %v3734 = vunpack.c.l.b16 %v3689
        %v3735 = vunpack.c.h.b16 %v3689
        %v3736 = vunpack.c.l.b16 %v3690
        %v3737 = vunpack.c.h.b16 %v3690
        %v3738 = vunpack.c.l.b16 %v3691
        %v3739 = vunpack.c.h.b16 %v3691
        %v3740 = vunpack.c.l.b16 %v3692
        %v3741 = vunpack.c.h.b16 %v3692
        %v3742 = vunpack.c.l.b16 %v3693
        %v3743 = vunpack.c.h.b16 %v3693
        %v3744 = vunpack.c.l.b16 %v3694
        %v3745 = vunpack.c.h.b16 %v3694
        %v3746 = vunpack.c.l.b16 %v3695
        %v3747 = vunpack.c.h.b16 %v3695
        %v3748 = vunpack.c.l.b16 %v3696
        %v3749 = vunpack.c.h.b16 %v3696
        %v3750 = vunpack.c.l.b16 %v3697
        %v3751 = vunpack.c.h.b16 %v3697
        %v3752 = vunpack.c.l.b16 %v3698
        %v3753 = vunpack.c.h.b16 %v3698
        %v3754 = vunpack.c.l.b16 %v3699
        %v3755 = vunpack.c.h.b16 %v3699
        %v3756 = vunpack.c.l.b16 %v3700
        %v3757 = vunpack.c.h.b16 %v3700
        %v3758 = vunpack.c.l.b16 %v3701
        %v3759 = vunpack.c.h.b16 %v3701
        %v3760 = vunpack.c.l.b16 %v3702
        %v3761 = vunpack.c.h.b16 %v3702
        %v3762 = vunpack.c.l.b16 %v3703
        %v3763 = vunpack.c.h.b16 %v3703
        %v3764 = vpack.c.b16 %v3734, %v3732
        %v3765 = vpack.c.b16 %v3735, %v3733
        %v3766 = vpack.c.b16 %v3738, %v3736
        %v3767 = vpack.c.b16 %v3739, %v3737
        %v3768 = vpack.c.b16 %v3742, %v3740
        %v3769 = vpack.c.b16 %v3743, %v3741
        %v3770 = vpack.c.b16 %v3746, %v3744
        %v3771 = vpack.c.b16 %v3747, %v3745
        %v3772 = vpack.c.b16 %v3750, %v3748
        %v3773 = vpack.c.b16 %v3751, %v3749
        %v3774 = vpack.c.b16 %v3754, %v3752
        %v3775 = vpack.c.b16 %v3755, %v3753
        %v3776 = vpack.c.b16 %v3758, %v3756
        %v3777 = vpack.c.b16 %v3759, %v3757
        %v3778 = vpack.c.b16 %v3762, %v3760
        %v3779 = vpack.c.b16 %v3763, %v3761
        %3796 = vmatprep.subr.bf16.mxu0 %v3765
        %3797 = vmatpush1.bf16.msra.mxu0 %v3764
        %3798 = vmatprep.subr.bf16.mxu0 %v3767
        %3799 = vmatpush1.bf16.msra.mxu0 %v3766
        %3800 = vmatprep.subr.bf16.mxu0 %v3769
        %3801 = vmatpush1.bf16.msra.mxu0 %v3768
        %3802 = vmatprep.subr.bf16.mxu0 %v3771
        %3803 = vmatpush1.bf16.msra.mxu0 %v3770
        %3804 = vmatprep.subr.bf16.mxu0 %v3773
        %3805 = vmatpush1.bf16.msra.mxu0 %v3772
        %3806 = vmatprep.subr.bf16.mxu0 %v3775
        %3807 = vmatpush1.bf16.msra.mxu0 %v3774
        %3808 = vmatprep.subr.bf16.mxu0 %v3777
        %3809 = vmatpush1.bf16.msra.mxu0 %v3776
        %3810 = vmatprep.subr.bf16.mxu0 %v3779
        %3811 = vmatpush1.bf16.msra.mxu0 %v3778
        %3812 = vmatprep.subr.bf16.mxu0 0
        %3813 = vmatpush1.bf16.msra.mxu0 0
        %3814 = vmatprep.subr.bf16.mxu0 0
        %3815 = vmatpush1.bf16.msra.mxu0 0
        %3816 = vmatprep.subr.bf16.mxu0 0
        %3817 = vmatpush1.bf16.msra.mxu0 0
        %3818 = vmatprep.subr.bf16.mxu0 0
        %3819 = vmatpush1.bf16.msra.mxu0 0
        %3820 = vmatprep.subr.bf16.mxu0 0
        %3821 = vmatpush1.bf16.msra.mxu0 0
        %3822 = vmatprep.subr.bf16.mxu0 0
        %3823 = vmatpush1.bf16.msra.mxu0 0
        %3824 = vmatprep.subr.bf16.mxu0 0
        %3825 = vmatpush1.bf16.msra.mxu0 0
        %3826 = vmatprep.subr.bf16.mxu0 0
        %3827 = vmatpush1.bf16.msra.mxu0 0
        %3828 = vmatprep.mubr.bf16.mxu0 0
        %3829 = vmatmul.mubr.bf16.gmra.mrb[0].mxu0 %v3687
        %v3830 = vpop.f32.mrb[0].mxu0
        %v3831 = vadd.f32 %v3709, %v3830
        %v3832 = vpop.f32.mrb[0].mxu0
        %v3833 = vadd.f32 %v3713, %v3832
        %v3834 = vpop.f32.mrb[0].mxu0
        %v3835 = vpop.f32.mrb[0].mxu0
        %3836 = vdwg.mxu0
        %s3837 = sld [smem:[#allocation6 + %s2524]]
        %v3838 = vstv %s3837
        %vm3839 = vcmp.lt.s32.totalorder %v1136, %v3838
        %v3840 = vsel %vm3839, 1, 0
        %vm3841 = vcmp.eq.s32.totalorder %v3840, 1
        %v3842 = vsel %vm3841, %v3686, %v2525
        %3843 = vst [vmem:[#allocation2] sm:$0xf] %v3842
        %v3844 = vsel %vm3841, %v3684, %v2526
        %3845 = vst [vmem:[#allocation3] sm:$0xf] %v3844
        %v3846 = vsel %vm3841, %v3831, 0.0
        %v3847 = vsel %vm3841, %v3833, 0.0
        %v3850 = vcombine.low %v3846, %v3847
        %s3852 = scalar_lea.vmem %s647, 8 [#allocation22]
        %3853 = vst [vmem:[%s3852] sm:$0xff] %v3850
        %v3854 = vlaneseq
        %v3855 = vshrl.u32 %v3854, 7
        %v3856 = vsub.s32 %v1693, %v3855
        %v3857 = vrot.slane %v3271, %v3856
        %v3858 = vlaneseq
        %v3859 = vshrl.u32 %v3858, 7
        %v3860 = vsub.s32 %v1698, %v3859
        %v3861 = vrot.slane %v3276, %v3860
        %v3862 = vsel %vm1703, %v3861, %v3857
        %v3863 = vlaneseq
        %v3864 = vshrl.u32 %v3863, 7
        %v3865 = vsub.s32 %v1693, %v3864
        %v3866 = vrot.slane %v3281, %v3865
        %v3867 = vlaneseq
        %v3868 = vshrl.u32 %v3867, 7
        %v3869 = vsub.s32 %v1698, %v3868
        %v3870 = vrot.slane %v3286, %v3869
        %v3871 = vsel %vm1703, %v3870, %v3866
        %v3872 = vlaneseq
        %v3873 = vshrl.u32 %v3872, 7
        %v3874 = vsub.s32 %v1693, %v3873
        %v3875 = vrot.slane %v3291, %v3874
        %v3876 = vlaneseq
        %v3877 = vshrl.u32 %v3876, 7
        %v3878 = vsub.s32 %v1698, %v3877
        %v3879 = vrot.slane %v3296, %v3878
        %v3880 = vsel %vm1703, %v3879, %v3875
        %v3881 = vlaneseq
        %v3882 = vshrl.u32 %v3881, 7
        %v3883 = vsub.s32 %v1693, %v3882
        %v3884 = vrot.slane %v3301, %v3883
        %v3885 = vlaneseq
        %v3886 = vshrl.u32 %v3885, 7
        %v3887 = vsub.s32 %v1698, %v3886
        %v3888 = vrot.slane %v3306, %v3887
        %v3889 = vsel %vm1703, %v3888, %v3884
        %v3890 = vsel %vm1732, %v3871, %v3862
        %v3891 = vsel %vm1734, %v3880, %v3890
        %v3892 = vsel %vm1736, %v3889, %v3891
        %v3894 = vsel %vm3841, %v3892, 0.0
        %s3895 = smul.u32 %s2524, 4
        %s3896 = scalar_lea.vmem [#allocation23], %s3895
        %3897 = vst.msk [vmem:[%s3896] sm:$0xf] %vm1739, %v3894
        %s3898 = sadd.s32 %s1137, 2
        %v3899 = vld [vmem:[#allocation2] sm:$0xf]
        %v3900 = vld [vmem:[#allocation3] sm:$0xf]
        %v3901 = vpack.c.bf16 %v3899, %v3899
        %v3902 = vld [vmem:[#allocation17] sm:$0xff]
        %v3903 = vld [vmem:[#allocation17 + $0x8] sm:$0xff]
        %v3904 = vld [vmem:[#allocation17 + $0x10] sm:$0xff]
        %v3905 = vld [vmem:[#allocation17 + $0x18] sm:$0xff]
        %v3906 = vld [vmem:[#allocation17 + $0x20] sm:$0xff]
        %v3907 = vld [vmem:[#allocation17 + $0x28] sm:$0xff]
        %v3908 = vld [vmem:[#allocation17 + $0x30] sm:$0xff]
        %v3909 = vld [vmem:[#allocation17 + $0x38] sm:$0xff]
        %v3910 = vld [vmem:[#allocation17 + $0x40] sm:$0xff]
        %v3911 = vld [vmem:[#allocation17 + $0x48] sm:$0xff]
        %v3912 = vld [vmem:[#allocation17 + $0x50] sm:$0xff]
        %v3913 = vld [vmem:[#allocation17 + $0x58] sm:$0xff]
        %v3914 = vld [vmem:[#allocation17 + $0x60] sm:$0xff]
        %v3915 = vld [vmem:[#allocation17 + $0x68] sm:$0xff]
        %v3916 = vld [vmem:[#allocation17 + $0x70] sm:$0xff]
        %v3917 = vld [vmem:[#allocation17 + $0x78] sm:$0xff]
        %v3918 = vld [vmem:[#allocation17 + $0x80] sm:$0xff]
        %v3919 = vld [vmem:[#allocation17 + $0x88] sm:$0xff]
        %v3920 = vld [vmem:[#allocation17 + $0x90] sm:$0xff]
        %v3921 = vld [vmem:[#allocation17 + $0x98] sm:$0xff]
        %v3922 = vld [vmem:[#allocation17 + $0xa0] sm:$0xff]
        %v3923 = vld [vmem:[#allocation17 + $0xa8] sm:$0xff]
        %v3924 = vld [vmem:[#allocation17 + $0xb0] sm:$0xff]
        %v3925 = vld [vmem:[#allocation17 + $0xb8] sm:$0xff]
        %v3926 = vld [vmem:[#allocation17 + $0xc0] sm:$0xff]
        %v3927 = vld [vmem:[#allocation17 + $0xc8] sm:$0xff]
        %v3928 = vld [vmem:[#allocation17 + $0xd0] sm:$0xff]
        %v3929 = vld [vmem:[#allocation17 + $0xd8] sm:$0xff]
        %v3930 = vld [vmem:[#allocation17 + $0xe0] sm:$0xff]
        %v3931 = vld [vmem:[#allocation17 + $0xe8] sm:$0xff]
        %v3932 = vld [vmem:[#allocation17 + $0xf0] sm:$0xff]
        %v3933 = vld [vmem:[#allocation17 + $0xf8] sm:$0xff]
        %v3934 = vld [vmem:[#allocation17 + $0x100] sm:$0xff]
        %v3935 = vld [vmem:[#allocation17 + $0x108] sm:$0xff]
        %v3936 = vld [vmem:[#allocation17 + $0x110] sm:$0xff]
        %v3937 = vld [vmem:[#allocation17 + $0x118] sm:$0xff]
        %v3938 = vld [vmem:[#allocation17 + $0x120] sm:$0xff]
        %v3939 = vld [vmem:[#allocation17 + $0x128] sm:$0xff]
        %v3940 = vld [vmem:[#allocation17 + $0x130] sm:$0xff]
        %v3941 = vld [vmem:[#allocation17 + $0x138] sm:$0xff]
        %v3942 = vld [vmem:[#allocation17 + $0x140] sm:$0xff]
        %v3943 = vld [vmem:[#allocation17 + $0x148] sm:$0xff]
        %v3944 = vld [vmem:[#allocation17 + $0x150] sm:$0xff]
        %v3945 = vld [vmem:[#allocation17 + $0x158] sm:$0xff]
        %v3946 = vld [vmem:[#allocation17 + $0x160] sm:$0xff]
        %v3947 = vld [vmem:[#allocation17 + $0x168] sm:$0xff]
        %v3948 = vld [vmem:[#allocation17 + $0x170] sm:$0xff]
        %v3949 = vld [vmem:[#allocation17 + $0x178] sm:$0xff]
        %v3950 = vld [vmem:[%s10] sm:$0x3f]
        %v3952 = vlaneseq
        %v3953 = vshrl.u32 %v3952, 7
        %v3954 = vsub.s32 0, %v3953
        %v3955 = vrot.slane %v3950, %v3954
        %v3956 = vlaneseq
        %v3957 = vshrl.u32 %v3956, 7
        %v3958 = vsub.s32 1, %v3957
        %v3959 = vrot.slane %v3950, %v3958
        %v3960 = vlaneseq
        %v3961 = vshrl.u32 %v3960, 7
        %v3962 = vsub.s32 2, %v3961
        %v3963 = vrot.slane %v3950, %v3962
        %v3964 = vlaneseq
        %v3965 = vshrl.u32 %v3964, 7
        %v3966 = vsub.s32 3, %v3965
        %v3967 = vrot.slane %v3950, %v3966
        %v3968 = vlaneseq
        %v3969 = vshrl.u32 %v3968, 7
        %v3970 = vsub.s32 4, %v3969
        %v3971 = vrot.slane %v3950, %v3970
        %v3972 = vlaneseq
        %v3973 = vshrl.u32 %v3972, 7
        %v3974 = vsub.s32 5, %v3973
        %v3975 = vrot.slane %v3950, %v3974
        %v4030 = vunpack.c.l.b16 %v3902
        %v4031 = vunpack.c.h.b16 %v3902
        %v4032 = vunpack.c.l.b16 %v3903
        %v4033 = vunpack.c.h.b16 %v3903
        %v4034 = vunpack.c.l.b16 %v3904
        %v4035 = vunpack.c.h.b16 %v3904
        %v4036 = vunpack.c.l.b16 %v3905
        %v4037 = vunpack.c.h.b16 %v3905
        %v4038 = vunpack.c.l.b16 %v3906
        %v4039 = vunpack.c.h.b16 %v3906
        %v4040 = vunpack.c.l.b16 %v3907
        %v4041 = vunpack.c.h.b16 %v3907
        %v4042 = vunpack.c.l.b16 %v3908
        %v4043 = vunpack.c.h.b16 %v3908
        %v4044 = vunpack.c.l.b16 %v3909
        %v4045 = vunpack.c.h.b16 %v3909
        %v4046 = vunpack.c.l.b16 %v3910
        %v4047 = vunpack.c.h.b16 %v3910
        %v4048 = vunpack.c.l.b16 %v3911
        %v4049 = vunpack.c.h.b16 %v3911
        %v4050 = vunpack.c.l.b16 %v3912
        %v4051 = vunpack.c.h.b16 %v3912
        %v4052 = vunpack.c.l.b16 %v3913
        %v4053 = vunpack.c.h.b16 %v3913
        %v4054 = vunpack.c.l.b16 %v3914
        %v4055 = vunpack.c.h.b16 %v3914
        %v4056 = vunpack.c.l.b16 %v3915
        %v4057 = vunpack.c.h.b16 %v3915
        %v4058 = vunpack.c.l.b16 %v3916
        %v4059 = vunpack.c.h.b16 %v3916
        %v4060 = vunpack.c.l.b16 %v3917
        %v4061 = vunpack.c.h.b16 %v3917
        %v4062 = vunpack.c.l.b16 %v3918
        %v4063 = vunpack.c.h.b16 %v3918
        %v4064 = vunpack.c.l.b16 %v3919
        %v4065 = vunpack.c.h.b16 %v3919
        %v4066 = vunpack.c.l.b16 %v3920
        %v4067 = vunpack.c.h.b16 %v3920
        %v4068 = vunpack.c.l.b16 %v3921
        %v4069 = vunpack.c.h.b16 %v3921
        %v4070 = vunpack.c.l.b16 %v3922
        %v4071 = vunpack.c.h.b16 %v3922
        %v4072 = vunpack.c.l.b16 %v3923
        %v4073 = vunpack.c.h.b16 %v3923
        %v4074 = vunpack.c.l.b16 %v3924
        %v4075 = vunpack.c.h.b16 %v3924
        %v4076 = vunpack.c.l.b16 %v3925
        %v4077 = vunpack.c.h.b16 %v3925
        %v4078 = vunpack.c.l.b16 %v3926
        %v4079 = vunpack.c.h.b16 %v3926
        %v4080 = vunpack.c.l.b16 %v3927
        %v4081 = vunpack.c.h.b16 %v3927
        %v4082 = vunpack.c.l.b16 %v3928
        %v4083 = vunpack.c.h.b16 %v3928
        %v4084 = vunpack.c.l.b16 %v3929
        %v4085 = vunpack.c.h.b16 %v3929
        %v4086 = vunpack.c.l.b16 %v3930
        %v4087 = vunpack.c.h.b16 %v3930
        %v4088 = vunpack.c.l.b16 %v3931
        %v4089 = vunpack.c.h.b16 %v3931
        %v4090 = vunpack.c.l.b16 %v3932
        %v4091 = vunpack.c.h.b16 %v3932
        %v4092 = vunpack.c.l.b16 %v3933
        %v4093 = vunpack.c.h.b16 %v3933
        %v4094 = vunpack.c.l.b16 %v3934
        %v4095 = vunpack.c.h.b16 %v3934
        %v4096 = vunpack.c.l.b16 %v3935
        %v4097 = vunpack.c.h.b16 %v3935
        %v4098 = vunpack.c.l.b16 %v3936
        %v4099 = vunpack.c.h.b16 %v3936
        %v4100 = vunpack.c.l.b16 %v3937
        %v4101 = vunpack.c.h.b16 %v3937
        %v4102 = vunpack.c.l.b16 %v3938
        %v4103 = vunpack.c.h.b16 %v3938
        %v4104 = vunpack.c.l.b16 %v3939
        %v4105 = vunpack.c.h.b16 %v3939
        %v4106 = vunpack.c.l.b16 %v3940
        %v4107 = vunpack.c.h.b16 %v3940
        %v4108 = vunpack.c.l.b16 %v3941
        %v4109 = vunpack.c.h.b16 %v3941
        %v4110 = vunpack.c.l.b16 %v3942
        %v4111 = vunpack.c.h.b16 %v3942
        %v4112 = vunpack.c.l.b16 %v3943
        %v4113 = vunpack.c.h.b16 %v3943
        %v4114 = vunpack.c.l.b16 %v3944
        %v4115 = vunpack.c.h.b16 %v3944
        %v4116 = vunpack.c.l.b16 %v3945
        %v4117 = vunpack.c.h.b16 %v3945
        %v4118 = vunpack.c.l.b16 %v3946
        %v4119 = vunpack.c.h.b16 %v3946
        %v4120 = vunpack.c.l.b16 %v3947
        %v4121 = vunpack.c.h.b16 %v3947
        %v4122 = vunpack.c.l.b16 %v3948
        %v4123 = vunpack.c.h.b16 %v3948
        %v4124 = vunpack.c.l.b16 %v3949
        %v4125 = vunpack.c.h.b16 %v3949
        %v4126 = vpack.c.b16 %v4036, %v4030
        %v4127 = vpack.c.b16 %v4037, %v4031
        %v4128 = vpack.c.b16 %v4038, %v4032
        %v4129 = vpack.c.b16 %v4039, %v4033
        %v4130 = vpack.c.b16 %v4040, %v4034
        %v4131 = vpack.c.b16 %v4041, %v4035
        %v4132 = vpack.c.b16 %v4048, %v4042
        %v4133 = vpack.c.b16 %v4049, %v4043
        %v4134 = vpack.c.b16 %v4050, %v4044
        %v4135 = vpack.c.b16 %v4051, %v4045
        %v4136 = vpack.c.b16 %v4052, %v4046
        %v4137 = vpack.c.b16 %v4053, %v4047
        %v4138 = vpack.c.b16 %v4060, %v4054
        %v4139 = vpack.c.b16 %v4061, %v4055
        %v4140 = vpack.c.b16 %v4062, %v4056
        %v4141 = vpack.c.b16 %v4063, %v4057
        %v4142 = vpack.c.b16 %v4064, %v4058
        %v4143 = vpack.c.b16 %v4065, %v4059
        %v4144 = vpack.c.b16 %v4072, %v4066
        %v4145 = vpack.c.b16 %v4073, %v4067
        %v4146 = vpack.c.b16 %v4074, %v4068
        %v4147 = vpack.c.b16 %v4075, %v4069
        %v4148 = vpack.c.b16 %v4076, %v4070
        %v4149 = vpack.c.b16 %v4077, %v4071
        %v4150 = vpack.c.b16 %v4084, %v4078
        %v4151 = vpack.c.b16 %v4085, %v4079
        %v4152 = vpack.c.b16 %v4086, %v4080
        %v4153 = vpack.c.b16 %v4087, %v4081
        %v4154 = vpack.c.b16 %v4088, %v4082
        %v4155 = vpack.c.b16 %v4089, %v4083
        %v4156 = vpack.c.b16 %v4096, %v4090
        %v4157 = vpack.c.b16 %v4097, %v4091
        %v4158 = vpack.c.b16 %v4098, %v4092
        %v4159 = vpack.c.b16 %v4099, %v4093
        %v4160 = vpack.c.b16 %v4100, %v4094
        %v4161 = vpack.c.b16 %v4101, %v4095
        %v4162 = vpack.c.b16 %v4108, %v4102
        %v4163 = vpack.c.b16 %v4109, %v4103
        %v4164 = vpack.c.b16 %v4110, %v4104
        %v4165 = vpack.c.b16 %v4111, %v4105
        %v4166 = vpack.c.b16 %v4112, %v4106
        %v4167 = vpack.c.b16 %v4113, %v4107
        %v4168 = vpack.c.b16 %v4120, %v4114
        %v4169 = vpack.c.b16 %v4121, %v4115
        %v4170 = vpack.c.b16 %v4122, %v4116
        %v4171 = vpack.c.b16 %v4123, %v4117
        %v4172 = vpack.c.b16 %v4124, %v4118
        %v4173 = vpack.c.b16 %v4125, %v4119
        %4222 = vmatprep.subr.bf16.mxu0 %v4127
        %4223 = vmatpush1.bf16.msra.mxu0 %v4126
        %4224 = vmatprep.subr.bf16.mxu0 %v4133
        %4225 = vmatpush1.bf16.msra.mxu0 %v4132
        %4226 = vmatprep.subr.bf16.mxu0 %v4139
        %4227 = vmatpush1.bf16.msra.mxu0 %v4138
        %4228 = vmatprep.subr.bf16.mxu0 %v4145
        %4229 = vmatpush1.bf16.msra.mxu0 %v4144
        %4230 = vmatprep.subr.bf16.mxu0 %v4151
        %4231 = vmatpush1.bf16.msra.mxu0 %v4150
        %4232 = vmatprep.subr.bf16.mxu0 %v4157
        %4233 = vmatpush1.bf16.msra.mxu0 %v4156
        %4234 = vmatprep.subr.bf16.mxu0 %v4163
        %4235 = vmatpush1.bf16.msra.mxu0 %v4162
        %4236 = vmatprep.subr.bf16.mxu0 %v4169
        %4237 = vmatpush1.bf16.msra.mxu0 %v4168
        %4238 = vmatprep.subr.bf16.mxu0 0
        %4239 = vmatpush1.bf16.msra.mxu0 0
        %4240 = vmatprep.subr.bf16.mxu0 0
        %4241 = vmatpush1.bf16.msra.mxu0 0
        %4242 = vmatprep.subr.bf16.mxu0 0
        %4243 = vmatpush1.bf16.msra.mxu0 0
        %4244 = vmatprep.subr.bf16.mxu0 0
        %4245 = vmatpush1.bf16.msra.mxu0 0
        %4246 = vmatprep.subr.bf16.mxu0 0
        %4247 = vmatpush1.bf16.msra.mxu0 0
        %4248 = vmatprep.subr.bf16.mxu0 0
        %4249 = vmatpush1.bf16.msra.mxu0 0
        %4250 = vmatprep.subr.bf16.mxu0 0
        %4251 = vmatpush1.bf16.msra.mxu0 0
        %4252 = vmatprep.subr.bf16.mxu0 0
        %4253 = vmatpush1.bf16.msra.mxu0 0
        %4254 = vmatprep.mubr.bf16.mxu0 0
        %4255 = vmatmul.mubr.bf16.gmra.mrb[0].mxu0 %v3901
        %v4256 = vpop.f32.mrb[0].mxu0
        %v4257 = vadd.f32 %v3955, %v4256
        %v4258 = vpop.f32.mrb[0].mxu0
        %v4259 = vadd.f32 %v3959, %v4258
        %v4260 = vpop.f32.mrb[0].mxu0
        %v4261 = vpop.f32.mrb[0].mxu0
        %4262 = vdwg.mxu0
        %4263 = vmatprep.subr.bf16.mxu0 %v4129
        %4264 = vmatpush1.bf16.msra.mxu0 %v4128
        %4265 = vmatprep.subr.bf16.mxu0 %v4135
        %4266 = vmatpush1.bf16.msra.mxu0 %v4134
        %4267 = vmatprep.subr.bf16.mxu0 %v4141
        %4268 = vmatpush1.bf16.msra.mxu0 %v4140
        %4269 = vmatprep.subr.bf16.mxu0 %v4147
        %4270 = vmatpush1.bf16.msra.mxu0 %v4146
        %4271 = vmatprep.subr.bf16.mxu0 %v4153
        %4272 = vmatpush1.bf16.msra.mxu0 %v4152
        %4273 = vmatprep.subr.bf16.mxu0 %v4159
        %4274 = vmatpush1.bf16.msra.mxu0 %v4158
        %4275 = vmatprep.subr.bf16.mxu0 %v4165
        %4276 = vmatpush1.bf16.msra.mxu0 %v4164
        %4277 = vmatprep.subr.bf16.mxu0 %v4171
        %4278 = vmatpush1.bf16.msra.mxu0 %v4170
        %4279 = vmatprep.subr.bf16.mxu0 0
        %4280 = vmatpush1.bf16.msra.mxu0 0
        %4281 = vmatprep.subr.bf16.mxu0 0
        %4282 = vmatpush1.bf16.msra.mxu0 0
        %4283 = vmatprep.subr.bf16.mxu0 0
        %4284 = vmatpush1.bf16.msra.mxu0 0
        %4285 = vmatprep.subr.bf16.mxu0 0
        %4286 = vmatpush1.bf16.msra.mxu0 0
        %4287 = vmatprep.subr.bf16.mxu0 0
        %4288 = vmatpush1.bf16.msra.mxu0 0
        %4289 = vmatprep.subr.bf16.mxu0 0
        %4290 = vmatpush1.bf16.msra.mxu0 0
        %4291 = vmatprep.subr.bf16.mxu0 0
        %4292 = vmatpush1.bf16.msra.mxu0 0
        %4293 = vmatprep.subr.bf16.mxu0 0
        %4294 = vmatpush1.bf16.msra.mxu0 0
        %4295 = vmatprep.mubr.bf16.mxu0 0
        %4296 = vmatmul.mubr.bf16.gmra.mrb[0].mxu0 %v3901
        %v4297 = vpop.f32.mrb[0].mxu0
        %v4298 = vadd.f32 %v3963, %v4297
        %v4299 = vpop.f32.mrb[0].mxu0
        %v4300 = vadd.f32 %v3967, %v4299
        %v4301 = vpop.f32.mrb[0].mxu0
        %v4302 = vpop.f32.mrb[0].mxu0
        %4303 = vdwg.mxu0
        %4304 = vmatprep.subr.bf16.mxu0 %v4131
        %4305 = vmatpush1.bf16.msra.mxu0 %v4130
        %4306 = vmatprep.subr.bf16.mxu0 %v4137
        %4307 = vmatpush1.bf16.msra.mxu0 %v4136
        %4308 = vmatprep.subr.bf16.mxu0 %v4143
        %4309 = vmatpush1.bf16.msra.mxu0 %v4142
        %4310 = vmatprep.subr.bf16.mxu0 %v4149
        %4311 = vmatpush1.bf16.msra.mxu0 %v4148
        %4312 = vmatprep.subr.bf16.mxu0 %v4155
        %4313 = vmatpush1.bf16.msra.mxu0 %v4154
        %4314 = vmatprep.subr.bf16.mxu0 %v4161
        %4315 = vmatpush1.bf16.msra.mxu0 %v4160
        %4316 = vmatprep.subr.bf16.mxu0 %v4167
        %4317 = vmatpush1.bf16.msra.mxu0 %v4166
        %4318 = vmatprep.subr.bf16.mxu0 %v4173
        %4319 = vmatpush1.bf16.msra.mxu0 %v4172
        %4320 = vmatprep.subr.bf16.mxu0 0
        %4321 = vmatpush1.bf16.msra.mxu0 0
        %4322 = vmatprep.subr.bf16.mxu0 0
        %4323 = vmatpush1.bf16.msra.mxu0 0
        %4324 = vmatprep.subr.bf16.mxu0 0
        %4325 = vmatpush1.bf16.msra.mxu0 0
        %4326 = vmatprep.subr.bf16.mxu0 0
        %4327 = vmatpush1.bf16.msra.mxu0 0
        %4328 = vmatprep.subr.bf16.mxu0 0
        %4329 = vmatpush1.bf16.msra.mxu0 0
        %4330 = vmatprep.subr.bf16.mxu0 0
        %4331 = vmatpush1.bf16.msra.mxu0 0
        %4332 = vmatprep.subr.bf16.mxu0 0
        %4333 = vmatpush1.bf16.msra.mxu0 0
        %4334 = vmatprep.subr.bf16.mxu0 0
        %4335 = vmatpush1.bf16.msra.mxu0 0
        %4336 = vmatprep.mubr.bf16.mxu0 0
        %4337 = vmatmul.mubr.bf16.gmra.mrb[0].mxu0 %v3901
        %v4338 = vpop.f32.mrb[0].mxu0
        %v4339 = vadd.f32 %v3971, %v4338
        %v4340 = vpop.f32.mrb[0].mxu0
        %v4341 = vadd.f32 %v3975, %v4340
        %v4342 = vpop.f32.mrb[0].mxu0
        %v4343 = vpop.f32.mrb[0].mxu0
        %4344 = vdwg.mxu0
        %v4347 = vunpack.c.l.s4 1966171168
        %v4348 = vunpack.c.0.s8 %v4347
        %v4349 = vlaneseq
        %v4350 = vshrl.u32 %v4349, 7
        %v4351 = vsub.s32 %v4348, %v4350
        %v4352 = vrot.slane %v4257, %v4351
        %v4353 = vcombine.high %v4352, %v4352
        %v4355 = vunpack.c.l.s4 1966171168
        %v4356 = vunpack.c.0.s8 %v4355
        %v4357 = vlaneseq
        %v4358 = vshrl.u32 %v4357, 7
        %v4359 = vsub.s32 %v4356, %v4358
        %v4360 = vrot.slane %v4352, %v4359
        %v4362 = vunpack.c.l.s4 1966171168
        %v4363 = vunpack.c.0.s8 %v4362
        %v4364 = vlaneseq
        %v4365 = vshrl.u32 %v4364, 7
        %v4366 = vsub.s32 %v4363, %v4365
        %v4367 = vrot.slane %v4353, %v4366
        %v4368 = vcombine.high %v4360, %v4360
        %v4369 = vcombine.high %v4367, %v4367
        %v4370 = vlaneseq
        %v4371 = vshrl.u32 %v4370, 7
        %v4372 = vsub.s32 0, %v4371
        %v4373 = vrot.slane %v4360, %v4372
        %v4374 = vlaneseq
        %v4375 = vshrl.u32 %v4374, 7
        %v4376 = vsub.s32 0, %v4375
        %v4377 = vrot.slane %v4367, %v4376
        %v4378 = vlaneseq
        %v4379 = vshrl.u32 %v4378, 7
        %v4380 = vsub.s32 0, %v4379
        %v4381 = vrot.slane %v4368, %v4380
        %v4382 = vlaneseq
        %v4383 = vshrl.u32 %v4382, 7
        %v4384 = vsub.s32 0, %v4383
        %v4385 = vrot.slane %v4369, %v4384
        %v4390 = vadd.f32 %v1125, %v4373
        %v4391 = vadd.f32 %v1126, %v4373
        %v4392 = vadd.f32 %v1127, %v4377
        %v4393 = vadd.f32 %v1128, %v4377
        %v4394 = vadd.f32 %v1129, %v4381
        %v4395 = vadd.f32 %v1130, %v4381
        %v4396 = vadd.f32 %v1131, %v4385
        %v4397 = vadd.f32 %v1132, %v4385
        %v4398 = vmax.f32 %v4390, 0.0
        %v4399 = vmax.f32 %v4391, 0.0
        %v4400 = vmax.f32 %v4392, 0.0
        %v4401 = vmax.f32 %v4393, 0.0
        %v4402 = vmax.f32 %v4394, 0.0
        %v4403 = vmax.f32 %v4395, 0.0
        %v4404 = vmax.f32 %v4396, 0.0
        %v4405 = vmax.f32 %v4397, 0.0
        %v4406 = vmul.f32 %v4398, %v1649
        %v4407 = vmul.f32 %v4399, %v1649
        %v4408 = vmul.f32 %v4400, %v1649
        %v4409 = vmul.f32 %v4401, %v1649
        %v4410 = vmul.f32 %v4402, %v1649
        %v4411 = vmul.f32 %v4403, %v1649
        %v4412 = vmul.f32 %v4404, %v1649
        %v4413 = vmul.f32 %v4405, %v1649
        %4414 = vadd.xlane.f32.xlu0 %v4406
        %v4415 = vpop.xlane.xlu0 %4414
        %4416 = vadd.xlane.f32.xlu0 %v4407
        %v4417 = vpop.xlane.xlu0 %4416
        %4418 = vadd.xlane.f32.xlu0 %v4408
        %v4419 = vpop.xlane.xlu0 %4418
        %4420 = vadd.xlane.f32.xlu0 %v4409
        %v4421 = vpop.xlane.xlu0 %4420
        %4422 = vadd.xlane.f32.xlu0 %v4410
        %v4423 = vpop.xlane.xlu0 %4422
        %4424 = vadd.xlane.f32.xlu0 %v4411
        %v4425 = vpop.xlane.xlu0 %4424
        %4426 = vadd.xlane.f32.xlu0 %v4412
        %v4427 = vpop.xlane.xlu0 %4426
        %4428 = vadd.xlane.f32.xlu0 %v4413
        %v4429 = vpop.xlane.xlu0 %4428
        %v4430 = vadd.f32 %v4415, %v1675
        %v4431 = vadd.f32 %v4417, %v1675
        %v4432 = vadd.f32 %v4419, %v1675
        %v4433 = vadd.f32 %v4421, %v1675
        %v4434 = vadd.f32 %v4423, %v1675
        %v4435 = vadd.f32 %v4425, %v1675
        %v4436 = vadd.f32 %v4427, %v1675
        %v4437 = vadd.f32 %v4429, %v1675
        %v4446 = vlaneseq
        %v4447 = vshrl.u32 %v4446, 7
        %v4448 = vsub.s32 %v1693, %v4447
        %v4449 = vrot.slane %v4430, %v4448
        %v4450 = vlaneseq
        %v4451 = vshrl.u32 %v4450, 7
        %v4452 = vsub.s32 %v1698, %v4451
        %v4453 = vrot.slane %v4431, %v4452
        %v4454 = vsel %vm1703, %v4453, %v4449
        %v4455 = vlaneseq
        %v4456 = vshrl.u32 %v4455, 7
        %v4457 = vsub.s32 %v1693, %v4456
        %v4458 = vrot.slane %v4432, %v4457
        %v4459 = vlaneseq
        %v4460 = vshrl.u32 %v4459, 7
        %v4461 = vsub.s32 %v1698, %v4460
        %v4462 = vrot.slane %v4433, %v4461
        %v4463 = vsel %vm1703, %v4462, %v4458
        %v4464 = vlaneseq
        %v4465 = vshrl.u32 %v4464, 7
        %v4466 = vsub.s32 %v1693, %v4465
        %v4467 = vrot.slane %v4434, %v4466
        %v4468 = vlaneseq
        %v4469 = vshrl.u32 %v4468, 7
        %v4470 = vsub.s32 %v1698, %v4469
        %v4471 = vrot.slane %v4435, %v4470
        %v4472 = vsel %vm1703, %v4471, %v4467
        %v4473 = vlaneseq
        %v4474 = vshrl.u32 %v4473, 7
        %v4475 = vsub.s32 %v1693, %v4474
        %v4476 = vrot.slane %v4436, %v4475
        %v4477 = vlaneseq
        %v4478 = vshrl.u32 %v4477, 7
        %v4479 = vsub.s32 %v1698, %v4478
        %v4480 = vrot.slane %v4437, %v4479
        %v4481 = vsel %vm1703, %v4480, %v4476
        %v4482 = vsel %vm1732, %v4463, %v4454
        %v4483 = vsel %vm1734, %v4472, %v4482
        %v4484 = vsel %vm1736, %v4481, %v4483
        %v4486 = vsel %vm1739, %v4484, -inf
        %4487 = vmax.xlane.f32.xlu0 %v4486
        %v4488 = vpop.xlane.xlu0 %4487
        %v4490 = vlaneseq
        %v4491 = vshrl.u32 %v4490, 7
        %v4492 = vsub.s32 0, %v4491
        %v4493 = vrot.slane %v4488, %v4492
        %v4494 = vlaneseq
        %v4495 = vshrl.u32 %v4494, 7
        %v4496 = vsub.s32 1, %v4495
        %v4497 = vrot.slane %v4488, %v4496
        %v4498 = vlaneseq
        %v4499 = vshrl.u32 %v4498, 7
        %v4500 = vsub.s32 2, %v4499
        %v4501 = vrot.slane %v4488, %v4500
        %v4502 = vlaneseq
        %v4503 = vshrl.u32 %v4502, 7
        %v4504 = vsub.s32 3, %v4503
        %v4505 = vrot.slane %v4488, %v4504
        %v4510 = vsub.f32 %v4430, %v4493
        %v4511 = vsub.f32 %v4431, %v4493
        %v4512 = vsub.f32 %v4432, %v4497
        %v4513 = vsub.f32 %v4433, %v4497
        %v4514 = vsub.f32 %v4434, %v4501
        %v4515 = vsub.f32 %v4435, %v4501
        %v4516 = vsub.f32 %v4436, %v4505
        %v4517 = vsub.f32 %v4437, %v4505
        %v4518 = vmul.f32 %v4510, 1.442695
        %v4519 = vpow.pop %v4518
        %v4520 = vmul.f32 %v4511, 1.442695
        %v4521 = vpow.pop %v4520
        %v4522 = vmul.f32 %v4512, 1.442695
        %v4523 = vpow.pop %v4522
        %v4524 = vmul.f32 %v4513, 1.442695
        %v4525 = vpow.pop %v4524
        %v4526 = vmul.f32 %v4514, 1.442695
        %v4527 = vpow.pop %v4526
        %v4528 = vmul.f32 %v4515, 1.442695
        %v4529 = vpow.pop %v4528
        %v4530 = vmul.f32 %v4516, 1.442695
        %v4531 = vpow.pop %v4530
        %v4532 = vmul.f32 %v4517, 1.442695
        %v4533 = vpow.pop %v4532
        %4542 = vset.pattern.permute.xlu0 0
        %4543 = vperm.xlu0 %4542, %v4519
        %v4544 = vpop.permute.xlu0 %4543
        %4545 = vset.pattern.permute.xlu0 0
        %4546 = vperm.xlu0 %4545, %v4521
        %v4547 = vpop.permute.xlu0 %4546
        %4548 = vset.pattern.permute.xlu0 0
        %4549 = vperm.xlu0 %4548, %v4523
        %v4550 = vpop.permute.xlu0 %4549
        %4551 = vset.pattern.permute.xlu0 0
        %4552 = vperm.xlu0 %4551, %v4525
        %v4553 = vpop.permute.xlu0 %4552
        %4554 = vset.pattern.permute.xlu0 0
        %4555 = vperm.xlu0 %4554, %v4527
        %v4556 = vpop.permute.xlu0 %4555
        %4557 = vset.pattern.permute.xlu0 0
        %4558 = vperm.xlu0 %4557, %v4529
        %v4559 = vpop.permute.xlu0 %4558
        %4560 = vset.pattern.permute.xlu0 0
        %4561 = vperm.xlu0 %4560, %v4531
        %v4562 = vpop.permute.xlu0 %4561
        %4563 = vset.pattern.permute.xlu0 0
        %4564 = vperm.xlu0 %4563, %v4533
        %v4565 = vpop.permute.xlu0 %4564
        %v4566 = vlaneseq
        %v4567 = vshrl.u32 %v4566, 7
        %v4568 = vsub.s32 %v1693, %v4567
        %v4569 = vrot.slane %v4544, %v4568
        %v4570 = vlaneseq
        %v4571 = vshrl.u32 %v4570, 7
        %v4572 = vsub.s32 %v1698, %v4571
        %v4573 = vrot.slane %v4547, %v4572
        %v4574 = vsel %vm1703, %v4573, %v4569
        %v4575 = vlaneseq
        %v4576 = vshrl.u32 %v4575, 7
        %v4577 = vsub.s32 %v1693, %v4576
        %v4578 = vrot.slane %v4550, %v4577
        %v4579 = vlaneseq
        %v4580 = vshrl.u32 %v4579, 7
        %v4581 = vsub.s32 %v1698, %v4580
        %v4582 = vrot.slane %v4553, %v4581
        %v4583 = vsel %vm1703, %v4582, %v4578
        %v4584 = vlaneseq
        %v4585 = vshrl.u32 %v4584, 7
        %v4586 = vsub.s32 %v1693, %v4585
        %v4587 = vrot.slane %v4556, %v4586
        %v4588 = vlaneseq
        %v4589 = vshrl.u32 %v4588, 7
        %v4590 = vsub.s32 %v1698, %v4589
        %v4591 = vrot.slane %v4559, %v4590
        %v4592 = vsel %vm1703, %v4591, %v4587
        %v4593 = vlaneseq
        %v4594 = vshrl.u32 %v4593, 7
        %v4595 = vsub.s32 %v1693, %v4594
        %v4596 = vrot.slane %v4562, %v4595
        %v4597 = vlaneseq
        %v4598 = vshrl.u32 %v4597, 7
        %v4599 = vsub.s32 %v1698, %v4598
        %v4600 = vrot.slane %v4565, %v4599
        %v4601 = vsel %vm1703, %v4600, %v4596
        %v4602 = vsel %vm1732, %v4583, %v4574
        %v4603 = vsel %vm1734, %v4592, %v4602
        %v4604 = vsel %vm1736, %v4601, %v4603
        %v4606 = vsel %vm1739, %v4604, 0.0
        %4607 = vadd.xlane.f32.xlu0 %v4606
        %v4608 = vpop.xlane.xlu0 %4607
        %v4610 = vlaneseq
        %v4611 = vshrl.u32 %v4610, 7
        %v4612 = vsub.s32 0, %v4611
        %v4613 = vrot.slane %v4608, %v4612
        %v4614 = vlaneseq
        %v4615 = vshrl.u32 %v4614, 7
        %v4616 = vsub.s32 1, %v4615
        %v4617 = vrot.slane %v4608, %v4616
        %v4618 = vlaneseq
        %v4619 = vshrl.u32 %v4618, 7
        %v4620 = vsub.s32 2, %v4619
        %v4621 = vrot.slane %v4608, %v4620
        %v4622 = vlaneseq
        %v4623 = vshrl.u32 %v4622, 7
        %v4624 = vsub.s32 3, %v4623
        %v4625 = vrot.slane %v4608, %v4624
        %v4630 = vrcp.pop %v4613
        %v4631 = vmul.f32 %v4519, %v4630
        %v4632 = vmul.f32 %v4521, %v4630
        %v4633 = vrcp.pop %v4617
        %v4634 = vmul.f32 %v4523, %v4633
        %v4635 = vmul.f32 %v4525, %v4633
        %v4636 = vrcp.pop %v4621
        %v4637 = vmul.f32 %v4527, %v4636
        %v4638 = vmul.f32 %v4529, %v4636
        %v4639 = vrcp.pop %v4625
        %v4640 = vmul.f32 %v4531, %v4639
        %v4641 = vmul.f32 %v4533, %v4639
        %4643 = vset.pattern.permute.xlu0 0
        %4644 = vperm.xlu0 %4643, %v4631
        %v4645 = vpop.permute.xlu0 %4644
        %4648 = vset.pattern.permute.xlu0 0
        %4649 = vperm.xlu0 %4648, %v4632
        %v4650 = vpop.permute.xlu0 %4649
        %4653 = vset.pattern.permute.xlu0 0
        %4654 = vperm.xlu0 %4653, %v4634
        %v4655 = vpop.permute.xlu0 %4654
        %4658 = vset.pattern.permute.xlu0 0
        %4659 = vperm.xlu0 %4658, %v4635
        %v4660 = vpop.permute.xlu0 %4659
        %4663 = vset.pattern.permute.xlu0 0
        %4664 = vperm.xlu0 %4663, %v4637
        %v4665 = vpop.permute.xlu0 %4664
        %4668 = vset.pattern.permute.xlu0 0
        %4669 = vperm.xlu0 %4668, %v4638
        %v4670 = vpop.permute.xlu0 %4669
        %4673 = vset.pattern.permute.xlu0 0
        %4674 = vperm.xlu0 %4673, %v4640
        %v4675 = vpop.permute.xlu0 %4674
        %4678 = vset.pattern.permute.xlu0 0
        %4679 = vperm.xlu0 %4678, %v4641
        %v4680 = vpop.permute.xlu0 %4679
        %v4682 = vmul.f32 %v1117, %v4645
        %v4683 = vmul.f32 %v1118, %v4650
        %v4684 = vmul.f32 %v1119, %v4655
        %v4685 = vmul.f32 %v1120, %v4660
        %v4686 = vmul.f32 %v1121, %v4665
        %v4687 = vmul.f32 %v1122, %v4670
        %v4688 = vmul.f32 %v1123, %v4675
        %v4689 = vmul.f32 %v1124, %v4680
        %v4690 = vadd.f32 %v4682, %v4683
        %v4691 = vrot.slane %v4690, 4
        %v4692 = vadd.f32 %v4690, %v4691
        %v4693 = vrot.slane %v4692, 2
        %v4694 = vadd.f32 %v4692, %v4693
        %v4695 = vrot.slane %v4694, 1
        %v4696 = vadd.f32 %v4694, %v4695
        %v4697 = vadd.f32 %v4684, %v4685
        %v4698 = vrot.slane %v4697, 4
        %v4699 = vadd.f32 %v4697, %v4698
        %v4700 = vrot.slane %v4699, 2
        %v4701 = vadd.f32 %v4699, %v4700
        %v4702 = vrot.slane %v4701, 1
        %v4703 = vadd.f32 %v4701, %v4702
        %v4704 = vadd.f32 %v4686, %v4687
        %v4705 = vrot.slane %v4704, 4
        %v4706 = vadd.f32 %v4704, %v4705
        %v4707 = vrot.slane %v4706, 2
        %v4708 = vadd.f32 %v4706, %v4707
        %v4709 = vrot.slane %v4708, 1
        %v4710 = vadd.f32 %v4708, %v4709
        %v4711 = vadd.f32 %v4688, %v4689
        %v4712 = vrot.slane %v4711, 4
        %v4713 = vadd.f32 %v4711, %v4712
        %v4714 = vrot.slane %v4713, 2
        %v4715 = vadd.f32 %v4713, %v4714
        %v4716 = vrot.slane %v4715, 1
        %v4717 = vadd.f32 %v4715, %v4716
        %v4718 = vxor.u32 %v4259, 2147483648
        %v4719 = vmul.f32 %v4718, 1.442695
        %v4720 = vpow.pop %v4719
        %v4721 = vadd.f32 %v4720, 1.0
        %v4722 = vrcp.pop %v4721
        %v4723 = vmul.f32 1.0, %v4722
        %v4728 = vsel %vm1732, %v4703, %v4696
        %v4729 = vsel %vm1734, %v4710, %v4728
        %v4730 = vsel %vm1736, %v4717, %v4729
        %v4732 = vmul.f32 %v4723, %v4730
        %s4733 = scalar_lea.vmem %s577, 32 [#allocation11]
        %v4734 = vld [vmem:[%s4733] sm:$0xff]
        %v4735 = vld [vmem:[%s4733 + $0x8] sm:$0xff]
        %v4736 = vpack.c.bf16 %v4732, %v4732
        %v4737 = vld [vmem:[#allocation19] sm:$0xff]
        %v4738 = vld [vmem:[#allocation19 + $0x8] sm:$0xff]
        %v4739 = vld [vmem:[#allocation19 + $0x10] sm:$0xff]
        %v4740 = vld [vmem:[#allocation19 + $0x18] sm:$0xff]
        %v4741 = vld [vmem:[#allocation19 + $0x20] sm:$0xff]
        %v4742 = vld [vmem:[#allocation19 + $0x28] sm:$0xff]
        %v4743 = vld [vmem:[#allocation19 + $0x30] sm:$0xff]
        %v4744 = vld [vmem:[#allocation19 + $0x38] sm:$0xff]
        %v4745 = vld [vmem:[#allocation19 + $0x40] sm:$0xff]
        %v4746 = vld [vmem:[#allocation19 + $0x48] sm:$0xff]
        %v4747 = vld [vmem:[#allocation19 + $0x50] sm:$0xff]
        %v4748 = vld [vmem:[#allocation19 + $0x58] sm:$0xff]
        %v4749 = vld [vmem:[#allocation19 + $0x60] sm:$0xff]
        %v4750 = vld [vmem:[#allocation19 + $0x68] sm:$0xff]
        %v4751 = vld [vmem:[#allocation19 + $0x70] sm:$0xff]
        %v4752 = vld [vmem:[#allocation19 + $0x78] sm:$0xff]
        %v4753 = vld [vmem:[#allocation19 + $0x80] sm:$0xff]
        %v4754 = vld [vmem:[#allocation19 + $0x88] sm:$0xff]
        %v4755 = vld [vmem:[#allocation19 + $0x90] sm:$0xff]
        %v4756 = vld [vmem:[#allocation19 + $0x98] sm:$0xff]
        %v4757 = vld [vmem:[#allocation19 + $0xa0] sm:$0xff]
        %v4758 = vld [vmem:[#allocation19 + $0xa8] sm:$0xff]
        %v4759 = vld [vmem:[#allocation19 + $0xb0] sm:$0xff]
        %v4760 = vld [vmem:[#allocation19 + $0xb8] sm:$0xff]
        %v4761 = vld [vmem:[#allocation19 + $0xc0] sm:$0xff]
        %v4762 = vld [vmem:[#allocation19 + $0xc8] sm:$0xff]
        %v4763 = vld [vmem:[#allocation19 + $0xd0] sm:$0xff]
        %v4764 = vld [vmem:[#allocation19 + $0xd8] sm:$0xff]
        %v4765 = vld [vmem:[#allocation19 + $0xe0] sm:$0xff]
        %v4766 = vld [vmem:[#allocation19 + $0xe8] sm:$0xff]
        %v4767 = vld [vmem:[#allocation19 + $0xf0] sm:$0xff]
        %v4768 = vld [vmem:[#allocation19 + $0xf8] sm:$0xff]
        %v4801 = vunpack.c.l.b16 %v4737
        %v4802 = vunpack.c.h.b16 %v4737
        %v4803 = vunpack.c.l.b16 %v4738
        %v4804 = vunpack.c.h.b16 %v4738
        %v4805 = vunpack.c.l.b16 %v4739
        %v4806 = vunpack.c.h.b16 %v4739
        %v4807 = vunpack.c.l.b16 %v4740
        %v4808 = vunpack.c.h.b16 %v4740
        %v4809 = vunpack.c.l.b16 %v4741
        %v4810 = vunpack.c.h.b16 %v4741
        %v4811 = vunpack.c.l.b16 %v4742
        %v4812 = vunpack.c.h.b16 %v4742
        %v4813 = vunpack.c.l.b16 %v4743
        %v4814 = vunpack.c.h.b16 %v4743
        %v4815 = vunpack.c.l.b16 %v4744
        %v4816 = vunpack.c.h.b16 %v4744
        %v4817 = vunpack.c.l.b16 %v4745
        %v4818 = vunpack.c.h.b16 %v4745
        %v4819 = vunpack.c.l.b16 %v4746
        %v4820 = vunpack.c.h.b16 %v4746
        %v4821 = vunpack.c.l.b16 %v4747
        %v4822 = vunpack.c.h.b16 %v4747
        %v4823 = vunpack.c.l.b16 %v4748
        %v4824 = vunpack.c.h.b16 %v4748
        %v4825 = vunpack.c.l.b16 %v4749
        %v4826 = vunpack.c.h.b16 %v4749
        %v4827 = vunpack.c.l.b16 %v4750
        %v4828 = vunpack.c.h.b16 %v4750
        %v4829 = vunpack.c.l.b16 %v4751
        %v4830 = vunpack.c.h.b16 %v4751
        %v4831 = vunpack.c.l.b16 %v4752
        %v4832 = vunpack.c.h.b16 %v4752
        %v4833 = vunpack.c.l.b16 %v4753
        %v4834 = vunpack.c.h.b16 %v4753
        %v4835 = vunpack.c.l.b16 %v4754
        %v4836 = vunpack.c.h.b16 %v4754
        %v4837 = vunpack.c.l.b16 %v4755
        %v4838 = vunpack.c.h.b16 %v4755
        %v4839 = vunpack.c.l.b16 %v4756
        %v4840 = vunpack.c.h.b16 %v4756
        %v4841 = vunpack.c.l.b16 %v4757
        %v4842 = vunpack.c.h.b16 %v4757
        %v4843 = vunpack.c.l.b16 %v4758
        %v4844 = vunpack.c.h.b16 %v4758
        %v4845 = vunpack.c.l.b16 %v4759
        %v4846 = vunpack.c.h.b16 %v4759
        %v4847 = vunpack.c.l.b16 %v4760
        %v4848 = vunpack.c.h.b16 %v4760
        %v4849 = vunpack.c.l.b16 %v4761
        %v4850 = vunpack.c.h.b16 %v4761
        %v4851 = vunpack.c.l.b16 %v4762
        %v4852 = vunpack.c.h.b16 %v4762
        %v4853 = vunpack.c.l.b16 %v4763
        %v4854 = vunpack.c.h.b16 %v4763
        %v4855 = vunpack.c.l.b16 %v4764
        %v4856 = vunpack.c.h.b16 %v4764
        %v4857 = vunpack.c.l.b16 %v4765
        %v4858 = vunpack.c.h.b16 %v4765
        %v4859 = vunpack.c.l.b16 %v4766
        %v4860 = vunpack.c.h.b16 %v4766
        %v4861 = vunpack.c.l.b16 %v4767
        %v4862 = vunpack.c.h.b16 %v4767
        %v4863 = vunpack.c.l.b16 %v4768
        %v4864 = vunpack.c.h.b16 %v4768
        %v4865 = vpack.c.b16 %v4805, %v4801
        %v4866 = vpack.c.b16 %v4806, %v4802
        %v4867 = vpack.c.b16 %v4807, %v4803
        %v4868 = vpack.c.b16 %v4808, %v4804
        %v4869 = vpack.c.b16 %v4813, %v4809
        %v4870 = vpack.c.b16 %v4814, %v4810
        %v4871 = vpack.c.b16 %v4815, %v4811
        %v4872 = vpack.c.b16 %v4816, %v4812
        %v4873 = vpack.c.b16 %v4821, %v4817
        %v4874 = vpack.c.b16 %v4822, %v4818
        %v4875 = vpack.c.b16 %v4823, %v4819
        %v4876 = vpack.c.b16 %v4824, %v4820
        %v4877 = vpack.c.b16 %v4829, %v4825
        %v4878 = vpack.c.b16 %v4830, %v4826
        %v4879 = vpack.c.b16 %v4831, %v4827
        %v4880 = vpack.c.b16 %v4832, %v4828
        %v4881 = vpack.c.b16 %v4837, %v4833
        %v4882 = vpack.c.b16 %v4838, %v4834
        %v4883 = vpack.c.b16 %v4839, %v4835
        %v4884 = vpack.c.b16 %v4840, %v4836
        %v4885 = vpack.c.b16 %v4845, %v4841
        %v4886 = vpack.c.b16 %v4846, %v4842
        %v4887 = vpack.c.b16 %v4847, %v4843
        %v4888 = vpack.c.b16 %v4848, %v4844
        %v4889 = vpack.c.b16 %v4853, %v4849
        %v4890 = vpack.c.b16 %v4854, %v4850
        %v4891 = vpack.c.b16 %v4855, %v4851
        %v4892 = vpack.c.b16 %v4856, %v4852
        %v4893 = vpack.c.b16 %v4861, %v4857
        %v4894 = vpack.c.b16 %v4862, %v4858
        %v4895 = vpack.c.b16 %v4863, %v4859
        %v4896 = vpack.c.b16 %v4864, %v4860
        %4929 = vmatprep.subr.bf16.mxu0 %v4866
        %4930 = vmatpush1.bf16.msra.mxu0 %v4865
        %4931 = vmatprep.subr.bf16.mxu0 %v4870
        %4932 = vmatpush1.bf16.msra.mxu0 %v4869
        %4933 = vmatprep.subr.bf16.mxu0 %v4874
        %4934 = vmatpush1.bf16.msra.mxu0 %v4873
        %4935 = vmatprep.subr.bf16.mxu0 %v4878
        %4936 = vmatpush1.bf16.msra.mxu0 %v4877
        %4937 = vmatprep.subr.bf16.mxu0 %v4882
        %4938 = vmatpush1.bf16.msra.mxu0 %v4881
        %4939 = vmatprep.subr.bf16.mxu0 %v4886
        %4940 = vmatpush1.bf16.msra.mxu0 %v4885
        %4941 = vmatprep.subr.bf16.mxu0 %v4890
        %4942 = vmatpush1.bf16.msra.mxu0 %v4889
        %4943 = vmatprep.subr.bf16.mxu0 %v4894
        %4944 = vmatpush1.bf16.msra.mxu0 %v4893
        %4945 = vmatprep.subr.bf16.mxu0 0
        %4946 = vmatpush1.bf16.msra.mxu0 0
        %4947 = vmatprep.subr.bf16.mxu0 0
        %4948 = vmatpush1.bf16.msra.mxu0 0
        %4949 = vmatprep.subr.bf16.mxu0 0
        %4950 = vmatpush1.bf16.msra.mxu0 0
        %4951 = vmatprep.subr.bf16.mxu0 0
        %4952 = vmatpush1.bf16.msra.mxu0 0
        %4953 = vmatprep.subr.bf16.mxu0 0
        %4954 = vmatpush1.bf16.msra.mxu0 0
        %4955 = vmatprep.subr.bf16.mxu0 0
        %4956 = vmatpush1.bf16.msra.mxu0 0
        %4957 = vmatprep.subr.bf16.mxu0 0
        %4958 = vmatpush1.bf16.msra.mxu0 0
        %4959 = vmatprep.subr.bf16.mxu0 0
        %4960 = vmatpush1.bf16.msra.mxu0 0
        %4961 = vmatprep.mubr.bf16.mxu0 0
        %4962 = vmatmul.mubr.bf16.gmra.mrb[0].mxu0 %v4736
        %v4963 = vpop.f32.mrb[0].mxu0
        %v4964 = vadd.f32 0.0, %v4963
        %v4965 = vpop.f32.mrb[0].mxu0
        %v4966 = vadd.f32 0.0, %v4965
        %v4967 = vpop.f32.mrb[0].mxu0
        %v4968 = vpop.f32.mrb[0].mxu0
        %4969 = vdwg.mxu0
        %4970 = vmatprep.subr.bf16.mxu0 %v4868
        %4971 = vmatpush1.bf16.msra.mxu0 %v4867
        %4972 = vmatprep.subr.bf16.mxu0 %v4872
        %4973 = vmatpush1.bf16.msra.mxu0 %v4871
        %4974 = vmatprep.subr.bf16.mxu0 %v4876
        %4975 = vmatpush1.bf16.msra.mxu0 %v4875
        %4976 = vmatprep.subr.bf16.mxu0 %v4880
        %4977 = vmatpush1.bf16.msra.mxu0 %v4879
        %4978 = vmatprep.subr.bf16.mxu0 %v4884
        %4979 = vmatpush1.bf16.msra.mxu0 %v4883
        %4980 = vmatprep.subr.bf16.mxu0 %v4888
        %4981 = vmatpush1.bf16.msra.mxu0 %v4887
        %4982 = vmatprep.subr.bf16.mxu0 %v4892
        %4983 = vmatpush1.bf16.msra.mxu0 %v4891
        %4984 = vmatprep.subr.bf16.mxu0 %v4896
        %4985 = vmatpush1.bf16.msra.mxu0 %v4895
        %4986 = vmatprep.subr.bf16.mxu0 0
        %4987 = vmatpush1.bf16.msra.mxu0 0
        %4988 = vmatprep.subr.bf16.mxu0 0
        %4989 = vmatpush1.bf16.msra.mxu0 0
        %4990 = vmatprep.subr.bf16.mxu0 0
        %4991 = vmatpush1.bf16.msra.mxu0 0
        %4992 = vmatprep.subr.bf16.mxu0 0
        %4993 = vmatpush1.bf16.msra.mxu0 0
        %4994 = vmatprep.subr.bf16.mxu0 0
        %4995 = vmatpush1.bf16.msra.mxu0 0
        %4996 = vmatprep.subr.bf16.mxu0 0
        %4997 = vmatpush1.bf16.msra.mxu0 0
        %4998 = vmatprep.subr.bf16.mxu0 0
        %4999 = vmatpush1.bf16.msra.mxu0 0
        %5000 = vmatprep.subr.bf16.mxu0 0
        %5001 = vmatpush1.bf16.msra.mxu0 0
        %5002 = vmatprep.mubr.bf16.mxu0 0
        %5003 = vmatmul.mubr.bf16.gmra.mrb[0].mxu0 %v4736
        %v5004 = vpop.f32.mrb[0].mxu0
        %v5005 = vadd.f32 0.0, %v5004
        %v5006 = vpop.f32.mrb[0].mxu0
        %v5007 = vadd.f32 0.0, %v5006
        %v5008 = vpop.f32.mrb[0].mxu0
        %v5009 = vpop.f32.mrb[0].mxu0
        %5010 = vdwg.mxu0
        %v5015 = vcombine.low %v4964, %v4966
        %v5016 = vcombine.low %v5005, %v5007
        %v5019 = vadd.f32 %v4734, %v5015
        %v5020 = vadd.f32 %v4735, %v5016
        %v5025 = vcombine.low %v4298, %v4300
        %v5026 = vcombine.low %v4339, %v4341
        %v5029 = vadd.f32 %v5019, %v5025
        %v5030 = vadd.f32 %v5020, %v5026
        %v5031 = vxor.u32 %v5029, 2147483648
        %v5032 = vmul.f32 %v5031, 1.442695
        %v5033 = vpow.pop %v5032
        %v5034 = vadd.f32 %v5033, 1.0
        %v5035 = vrcp.pop %v5034
        %v5036 = vmul.f32 1.0, %v5035
        %v5038 = vrot.slane %v5029, 4
        %v5040 = vxor.u32 %v5038, 2147483648
        %v5041 = vmul.f32 %v5040, 1.442695
        %v5042 = vpow.pop %v5041
        %v5043 = vadd.f32 %v5042, 1.0
        %v5044 = vrcp.pop %v5043
        %v5045 = vmul.f32 1.0, %v5044
        %v5046 = vtanh.pop %v5030
        %v5048 = vrot.slane %v5030, 4
        %v5050 = vxor.u32 %v5048, 2147483648
        %v5051 = vmul.f32 %v5050, 1.442695
        %v5052 = vpow.pop %v5051
        %v5053 = vadd.f32 %v5052, 1.0
        %v5054 = vrcp.pop %v5053
        %v5055 = vmul.f32 1.0, %v5054
        %v5056 = vmul.f32 %v5045, %v3900
        %v5057 = vmul.f32 %v5036, %v5046
        %v5058 = vadd.f32 %v5056, %v5057
        %v5059 = vtanh.pop %v5058
        %v5060 = vmul.f32 %v5055, %v5059
        %v5061 = vpack.c.bf16 %v5060, %v5060
        %v5062 = vld [vmem:[#allocation20] sm:$0xff]
        %v5063 = vld [vmem:[#allocation20 + $0x8] sm:$0xff]
        %v5064 = vld [vmem:[#allocation20 + $0x10] sm:$0xff]
        %v5065 = vld [vmem:[#allocation20 + $0x18] sm:$0xff]
        %v5066 = vld [vmem:[#allocation20 + $0x20] sm:$0xff]
        %v5067 = vld [vmem:[#allocation20 + $0x28] sm:$0xff]
        %v5068 = vld [vmem:[#allocation20 + $0x30] sm:$0xff]
        %v5069 = vld [vmem:[#allocation20 + $0x38] sm:$0xff]
        %v5070 = vld [vmem:[#allocation20 + $0x40] sm:$0xff]
        %v5071 = vld [vmem:[#allocation20 + $0x48] sm:$0xff]
        %v5072 = vld [vmem:[#allocation20 + $0x50] sm:$0xff]
        %v5073 = vld [vmem:[#allocation20 + $0x58] sm:$0xff]
        %v5074 = vld [vmem:[#allocation20 + $0x60] sm:$0xff]
        %v5075 = vld [vmem:[#allocation20 + $0x68] sm:$0xff]
        %v5076 = vld [vmem:[#allocation20 + $0x70] sm:$0xff]
        %v5077 = vld [vmem:[#allocation20 + $0x78] sm:$0xff]
        %v5078 = vld [vmem:[%s15] sm:$0x3]
        %v5080 = vlaneseq
        %v5081 = vshrl.u32 %v5080, 7
        %v5082 = vsub.s32 0, %v5081
        %v5083 = vrot.slane %v5078, %v5082
        %v5084 = vlaneseq
        %v5085 = vshrl.u32 %v5084, 7
        %v5086 = vsub.s32 1, %v5085
        %v5087 = vrot.slane %v5078, %v5086
        %v5106 = vunpack.c.l.b16 %v5062
        %v5107 = vunpack.c.h.b16 %v5062
        %v5108 = vunpack.c.l.b16 %v5063
        %v5109 = vunpack.c.h.b16 %v5063
        %v5110 = vunpack.c.l.b16 %v5064
        %v5111 = vunpack.c.h.b16 %v5064
        %v5112 = vunpack.c.l.b16 %v5065
        %v5113 = vunpack.c.h.b16 %v5065
        %v5114 = vunpack.c.l.b16 %v5066
        %v5115 = vunpack.c.h.b16 %v5066
        %v5116 = vunpack.c.l.b16 %v5067
        %v5117 = vunpack.c.h.b16 %v5067
        %v5118 = vunpack.c.l.b16 %v5068
        %v5119 = vunpack.c.h.b16 %v5068
        %v5120 = vunpack.c.l.b16 %v5069
        %v5121 = vunpack.c.h.b16 %v5069
        %v5122 = vunpack.c.l.b16 %v5070
        %v5123 = vunpack.c.h.b16 %v5070
        %v5124 = vunpack.c.l.b16 %v5071
        %v5125 = vunpack.c.h.b16 %v5071
        %v5126 = vunpack.c.l.b16 %v5072
        %v5127 = vunpack.c.h.b16 %v5072
        %v5128 = vunpack.c.l.b16 %v5073
        %v5129 = vunpack.c.h.b16 %v5073
        %v5130 = vunpack.c.l.b16 %v5074
        %v5131 = vunpack.c.h.b16 %v5074
        %v5132 = vunpack.c.l.b16 %v5075
        %v5133 = vunpack.c.h.b16 %v5075
        %v5134 = vunpack.c.l.b16 %v5076
        %v5135 = vunpack.c.h.b16 %v5076
        %v5136 = vunpack.c.l.b16 %v5077
        %v5137 = vunpack.c.h.b16 %v5077
        %v5138 = vpack.c.b16 %v5108, %v5106
        %v5139 = vpack.c.b16 %v5109, %v5107
        %v5140 = vpack.c.b16 %v5112, %v5110
        %v5141 = vpack.c.b16 %v5113, %v5111
        %v5142 = vpack.c.b16 %v5116, %v5114
        %v5143 = vpack.c.b16 %v5117, %v5115
        %v5144 = vpack.c.b16 %v5120, %v5118
        %v5145 = vpack.c.b16 %v5121, %v5119
        %v5146 = vpack.c.b16 %v5124, %v5122
        %v5147 = vpack.c.b16 %v5125, %v5123
        %v5148 = vpack.c.b16 %v5128, %v5126
        %v5149 = vpack.c.b16 %v5129, %v5127
        %v5150 = vpack.c.b16 %v5132, %v5130
        %v5151 = vpack.c.b16 %v5133, %v5131
        %v5152 = vpack.c.b16 %v5136, %v5134
        %v5153 = vpack.c.b16 %v5137, %v5135
        %5170 = vmatprep.subr.bf16.mxu0 %v5139
        %5171 = vmatpush1.bf16.msra.mxu0 %v5138
        %5172 = vmatprep.subr.bf16.mxu0 %v5141
        %5173 = vmatpush1.bf16.msra.mxu0 %v5140
        %5174 = vmatprep.subr.bf16.mxu0 %v5143
        %5175 = vmatpush1.bf16.msra.mxu0 %v5142
        %5176 = vmatprep.subr.bf16.mxu0 %v5145
        %5177 = vmatpush1.bf16.msra.mxu0 %v5144
        %5178 = vmatprep.subr.bf16.mxu0 %v5147
        %5179 = vmatpush1.bf16.msra.mxu0 %v5146
        %5180 = vmatprep.subr.bf16.mxu0 %v5149
        %5181 = vmatpush1.bf16.msra.mxu0 %v5148
        %5182 = vmatprep.subr.bf16.mxu0 %v5151
        %5183 = vmatpush1.bf16.msra.mxu0 %v5150
        %5184 = vmatprep.subr.bf16.mxu0 %v5153
        %5185 = vmatpush1.bf16.msra.mxu0 %v5152
        %5186 = vmatprep.subr.bf16.mxu0 0
        %5187 = vmatpush1.bf16.msra.mxu0 0
        %5188 = vmatprep.subr.bf16.mxu0 0
        %5189 = vmatpush1.bf16.msra.mxu0 0
        %5190 = vmatprep.subr.bf16.mxu0 0
        %5191 = vmatpush1.bf16.msra.mxu0 0
        %5192 = vmatprep.subr.bf16.mxu0 0
        %5193 = vmatpush1.bf16.msra.mxu0 0
        %5194 = vmatprep.subr.bf16.mxu0 0
        %5195 = vmatpush1.bf16.msra.mxu0 0
        %5196 = vmatprep.subr.bf16.mxu0 0
        %5197 = vmatpush1.bf16.msra.mxu0 0
        %5198 = vmatprep.subr.bf16.mxu0 0
        %5199 = vmatpush1.bf16.msra.mxu0 0
        %5200 = vmatprep.subr.bf16.mxu0 0
        %5201 = vmatpush1.bf16.msra.mxu0 0
        %5202 = vmatprep.mubr.bf16.mxu0 0
        %5203 = vmatmul.mubr.bf16.gmra.mrb[0].mxu0 %v5061
        %v5204 = vpop.f32.mrb[0].mxu0
        %v5205 = vadd.f32 %v5083, %v5204
        %v5206 = vpop.f32.mrb[0].mxu0
        %v5207 = vadd.f32 %v5087, %v5206
        %v5208 = vpop.f32.mrb[0].mxu0
        %v5209 = vpop.f32.mrb[0].mxu0
        %5210 = vdwg.mxu0
        %s5211 = sld [smem:[#allocation6 + %s3898]]
        %v5212 = vstv %s5211
        %vm5213 = vcmp.lt.s32.totalorder %v1136, %v5212
        %v5214 = vsel %vm5213, 1, 0
        %vm5215 = vcmp.eq.s32.totalorder %v5214, 1
        %v5216 = vsel %vm5215, %v5060, %v3899
        %5217 = vst [vmem:[#allocation2] sm:$0xf] %v5216
        %v5218 = vsel %vm5215, %v5058, %v3900
        %5219 = vst [vmem:[#allocation3] sm:$0xf] %v5218
        %v5220 = vsel %vm5215, %v5205, 0.0
        %v5221 = vsel %vm5215, %v5207, 0.0
        %v5224 = vcombine.low %v5220, %v5221
        %s5226 = scalar_lea.vmem %s647, 16 [#allocation22]
        %5227 = vst [vmem:[%s5226] sm:$0xff] %v5224
        %v5228 = vlaneseq
        %v5229 = vshrl.u32 %v5228, 7
        %v5230 = vsub.s32 %v1693, %v5229
        %v5231 = vrot.slane %v4645, %v5230
        %v5232 = vlaneseq
        %v5233 = vshrl.u32 %v5232, 7
        %v5234 = vsub.s32 %v1698, %v5233
        %v5235 = vrot.slane %v4650, %v5234
        %v5236 = vsel %vm1703, %v5235, %v5231
        %v5237 = vlaneseq
        %v5238 = vshrl.u32 %v5237, 7
        %v5239 = vsub.s32 %v1693, %v5238
        %v5240 = vrot.slane %v4655, %v5239
        %v5241 = vlaneseq
        %v5242 = vshrl.u32 %v5241, 7
        %v5243 = vsub.s32 %v1698, %v5242
        %v5244 = vrot.slane %v4660, %v5243
        %v5245 = vsel %vm1703, %v5244, %v5240
        %v5246 = vlaneseq
        %v5247 = vshrl.u32 %v5246, 7
        %v5248 = vsub.s32 %v1693, %v5247
        %v5249 = vrot.slane %v4665, %v5248
        %v5250 = vlaneseq
        %v5251 = vshrl.u32 %v5250, 7
        %v5252 = vsub.s32 %v1698, %v5251
        %v5253 = vrot.slane %v4670, %v5252
        %v5254 = vsel %vm1703, %v5253, %v5249
        %v5255 = vlaneseq
        %v5256 = vshrl.u32 %v5255, 7
        %v5257 = vsub.s32 %v1693, %v5256
        %v5258 = vrot.slane %v4675, %v5257
        %v5259 = vlaneseq
        %v5260 = vshrl.u32 %v5259, 7
        %v5261 = vsub.s32 %v1698, %v5260
        %v5262 = vrot.slane %v4680, %v5261
        %v5263 = vsel %vm1703, %v5262, %v5258
        %v5264 = vsel %vm1732, %v5245, %v5236
        %v5265 = vsel %vm1734, %v5254, %v5264
        %v5266 = vsel %vm1736, %v5263, %v5265
        %v5268 = vsel %vm5215, %v5266, 0.0
        %s5269 = smul.u32 %s3898, 4
        %s5270 = scalar_lea.vmem [#allocation23], %s5269
        %5271 = vst.msk [vmem:[%s5270] sm:$0xf] %vm1739, %v5268
        %s5272 = sadd.s32 %s1137, 3
        %v5273 = vld [vmem:[#allocation2] sm:$0xf]
        %v5274 = vld [vmem:[#allocation3] sm:$0xf]
        %v5275 = vpack.c.bf16 %v5273, %v5273
        %v5276 = vld [vmem:[#allocation17] sm:$0xff]
        %v5277 = vld [vmem:[#allocation17 + $0x8] sm:$0xff]
        %v5278 = vld [vmem:[#allocation17 + $0x10] sm:$0xff]
        %v5279 = vld [vmem:[#allocation17 + $0x18] sm:$0xff]
        %v5280 = vld [vmem:[#allocation17 + $0x20] sm:$0xff]
        %v5281 = vld [vmem:[#allocation17 + $0x28] sm:$0xff]
        %v5282 = vld [vmem:[#allocation17 + $0x30] sm:$0xff]
        %v5283 = vld [vmem:[#allocation17 + $0x38] sm:$0xff]
        %v5284 = vld [vmem:[#allocation17 + $0x40] sm:$0xff]
        %v5285 = vld [vmem:[#allocation17 + $0x48] sm:$0xff]
        %v5286 = vld [vmem:[#allocation17 + $0x50] sm:$0xff]
        %v5287 = vld [vmem:[#allocation17 + $0x58] sm:$0xff]
        %v5288 = vld [vmem:[#allocation17 + $0x60] sm:$0xff]
        %v5289 = vld [vmem:[#allocation17 + $0x68] sm:$0xff]
        %v5290 = vld [vmem:[#allocation17 + $0x70] sm:$0xff]
        %v5291 = vld [vmem:[#allocation17 + $0x78] sm:$0xff]
        %v5292 = vld [vmem:[#allocation17 + $0x80] sm:$0xff]
        %v5293 = vld [vmem:[#allocation17 + $0x88] sm:$0xff]
        %v5294 = vld [vmem:[#allocation17 + $0x90] sm:$0xff]
        %v5295 = vld [vmem:[#allocation17 + $0x98] sm:$0xff]
        %v5296 = vld [vmem:[#allocation17 + $0xa0] sm:$0xff]
        %v5297 = vld [vmem:[#allocation17 + $0xa8] sm:$0xff]
        %v5298 = vld [vmem:[#allocation17 + $0xb0] sm:$0xff]
        %v5299 = vld [vmem:[#allocation17 + $0xb8] sm:$0xff]
        %v5300 = vld [vmem:[#allocation17 + $0xc0] sm:$0xff]
        %v5301 = vld [vmem:[#allocation17 + $0xc8] sm:$0xff]
        %v5302 = vld [vmem:[#allocation17 + $0xd0] sm:$0xff]
        %v5303 = vld [vmem:[#allocation17 + $0xd8] sm:$0xff]
        %v5304 = vld [vmem:[#allocation17 + $0xe0] sm:$0xff]
        %v5305 = vld [vmem:[#allocation17 + $0xe8] sm:$0xff]
        %v5306 = vld [vmem:[#allocation17 + $0xf0] sm:$0xff]
        %v5307 = vld [vmem:[#allocation17 + $0xf8] sm:$0xff]
        %v5308 = vld [vmem:[#allocation17 + $0x100] sm:$0xff]
        %v5309 = vld [vmem:[#allocation17 + $0x108] sm:$0xff]
        %v5310 = vld [vmem:[#allocation17 + $0x110] sm:$0xff]
        %v5311 = vld [vmem:[#allocation17 + $0x118] sm:$0xff]
        %v5312 = vld [vmem:[#allocation17 + $0x120] sm:$0xff]
        %v5313 = vld [vmem:[#allocation17 + $0x128] sm:$0xff]
        %v5314 = vld [vmem:[#allocation17 + $0x130] sm:$0xff]
        %v5315 = vld [vmem:[#allocation17 + $0x138] sm:$0xff]
        %v5316 = vld [vmem:[#allocation17 + $0x140] sm:$0xff]
        %v5317 = vld [vmem:[#allocation17 + $0x148] sm:$0xff]
        %v5318 = vld [vmem:[#allocation17 + $0x150] sm:$0xff]
        %v5319 = vld [vmem:[#allocation17 + $0x158] sm:$0xff]
        %v5320 = vld [vmem:[#allocation17 + $0x160] sm:$0xff]
        %v5321 = vld [vmem:[#allocation17 + $0x168] sm:$0xff]
        %v5322 = vld [vmem:[#allocation17 + $0x170] sm:$0xff]
        %v5323 = vld [vmem:[#allocation17 + $0x178] sm:$0xff]
        %v5324 = vld [vmem:[%s10] sm:$0x3f]
        %v5326 = vlaneseq
        %v5327 = vshrl.u32 %v5326, 7
        %v5328 = vsub.s32 0, %v5327
        %v5329 = vrot.slane %v5324, %v5328
        %v5330 = vlaneseq
        %v5331 = vshrl.u32 %v5330, 7
        %v5332 = vsub.s32 1, %v5331
        %v5333 = vrot.slane %v5324, %v5332
        %v5334 = vlaneseq
        %v5335 = vshrl.u32 %v5334, 7
        %v5336 = vsub.s32 2, %v5335
        %v5337 = vrot.slane %v5324, %v5336
        %v5338 = vlaneseq
        %v5339 = vshrl.u32 %v5338, 7
        %v5340 = vsub.s32 3, %v5339
        %v5341 = vrot.slane %v5324, %v5340
        %v5342 = vlaneseq
        %v5343 = vshrl.u32 %v5342, 7
        %v5344 = vsub.s32 4, %v5343
        %v5345 = vrot.slane %v5324, %v5344
        %v5346 = vlaneseq
        %v5347 = vshrl.u32 %v5346, 7
        %v5348 = vsub.s32 5, %v5347
        %v5349 = vrot.slane %v5324, %v5348
        %v5404 = vunpack.c.l.b16 %v5276
        %v5405 = vunpack.c.h.b16 %v5276
        %v5406 = vunpack.c.l.b16 %v5277
        %v5407 = vunpack.c.h.b16 %v5277
        %v5408 = vunpack.c.l.b16 %v5278
        %v5409 = vunpack.c.h.b16 %v5278
        %v5410 = vunpack.c.l.b16 %v5279
        %v5411 = vunpack.c.h.b16 %v5279
        %v5412 = vunpack.c.l.b16 %v5280
        %v5413 = vunpack.c.h.b16 %v5280
        %v5414 = vunpack.c.l.b16 %v5281
        %v5415 = vunpack.c.h.b16 %v5281
        %v5416 = vunpack.c.l.b16 %v5282
        %v5417 = vunpack.c.h.b16 %v5282
        %v5418 = vunpack.c.l.b16 %v5283
        %v5419 = vunpack.c.h.b16 %v5283
        %v5420 = vunpack.c.l.b16 %v5284
        %v5421 = vunpack.c.h.b16 %v5284
        %v5422 = vunpack.c.l.b16 %v5285
        %v5423 = vunpack.c.h.b16 %v5285
        %v5424 = vunpack.c.l.b16 %v5286
        %v5425 = vunpack.c.h.b16 %v5286
        %v5426 = vunpack.c.l.b16 %v5287
        %v5427 = vunpack.c.h.b16 %v5287
        %v5428 = vunpack.c.l.b16 %v5288
        %v5429 = vunpack.c.h.b16 %v5288
        %v5430 = vunpack.c.l.b16 %v5289
        %v5431 = vunpack.c.h.b16 %v5289
        %v5432 = vunpack.c.l.b16 %v5290
        %v5433 = vunpack.c.h.b16 %v5290
        %v5434 = vunpack.c.l.b16 %v5291
        %v5435 = vunpack.c.h.b16 %v5291
        %v5436 = vunpack.c.l.b16 %v5292
        %v5437 = vunpack.c.h.b16 %v5292
        %v5438 = vunpack.c.l.b16 %v5293
        %v5439 = vunpack.c.h.b16 %v5293
        %v5440 = vunpack.c.l.b16 %v5294
        %v5441 = vunpack.c.h.b16 %v5294
        %v5442 = vunpack.c.l.b16 %v5295
        %v5443 = vunpack.c.h.b16 %v5295
        %v5444 = vunpack.c.l.b16 %v5296
        %v5445 = vunpack.c.h.b16 %v5296
        %v5446 = vunpack.c.l.b16 %v5297
        %v5447 = vunpack.c.h.b16 %v5297
        %v5448 = vunpack.c.l.b16 %v5298
        %v5449 = vunpack.c.h.b16 %v5298
        %v5450 = vunpack.c.l.b16 %v5299
        %v5451 = vunpack.c.h.b16 %v5299
        %v5452 = vunpack.c.l.b16 %v5300
        %v5453 = vunpack.c.h.b16 %v5300
        %v5454 = vunpack.c.l.b16 %v5301
        %v5455 = vunpack.c.h.b16 %v5301
        %v5456 = vunpack.c.l.b16 %v5302
        %v5457 = vunpack.c.h.b16 %v5302
        %v5458 = vunpack.c.l.b16 %v5303
        %v5459 = vunpack.c.h.b16 %v5303
        %v5460 = vunpack.c.l.b16 %v5304
        %v5461 = vunpack.c.h.b16 %v5304
        %v5462 = vunpack.c.l.b16 %v5305
        %v5463 = vunpack.c.h.b16 %v5305
        %v5464 = vunpack.c.l.b16 %v5306
        %v5465 = vunpack.c.h.b16 %v5306
        %v5466 = vunpack.c.l.b16 %v5307
        %v5467 = vunpack.c.h.b16 %v5307
        %v5468 = vunpack.c.l.b16 %v5308
        %v5469 = vunpack.c.h.b16 %v5308
        %v5470 = vunpack.c.l.b16 %v5309
        %v5471 = vunpack.c.h.b16 %v5309
        %v5472 = vunpack.c.l.b16 %v5310
        %v5473 = vunpack.c.h.b16 %v5310
        %v5474 = vunpack.c.l.b16 %v5311
        %v5475 = vunpack.c.h.b16 %v5311
        %v5476 = vunpack.c.l.b16 %v5312
        %v5477 = vunpack.c.h.b16 %v5312
        %v5478 = vunpack.c.l.b16 %v5313
        %v5479 = vunpack.c.h.b16 %v5313
        %v5480 = vunpack.c.l.b16 %v5314
        %v5481 = vunpack.c.h.b16 %v5314
        %v5482 = vunpack.c.l.b16 %v5315
        %v5483 = vunpack.c.h.b16 %v5315
        %v5484 = vunpack.c.l.b16 %v5316
        %v5485 = vunpack.c.h.b16 %v5316
        %v5486 = vunpack.c.l.b16 %v5317
        %v5487 = vunpack.c.h.b16 %v5317
        %v5488 = vunpack.c.l.b16 %v5318
        %v5489 = vunpack.c.h.b16 %v5318
        %v5490 = vunpack.c.l.b16 %v5319
        %v5491 = vunpack.c.h.b16 %v5319
        %v5492 = vunpack.c.l.b16 %v5320
        %v5493 = vunpack.c.h.b16 %v5320
        %v5494 = vunpack.c.l.b16 %v5321
        %v5495 = vunpack.c.h.b16 %v5321
        %v5496 = vunpack.c.l.b16 %v5322
        %v5497 = vunpack.c.h.b16 %v5322
        %v5498 = vunpack.c.l.b16 %v5323
        %v5499 = vunpack.c.h.b16 %v5323
        %v5500 = vpack.c.b16 %v5410, %v5404
        %v5501 = vpack.c.b16 %v5411, %v5405
        %v5502 = vpack.c.b16 %v5412, %v5406
        %v5503 = vpack.c.b16 %v5413, %v5407
        %v5504 = vpack.c.b16 %v5414, %v5408
        %v5505 = vpack.c.b16 %v5415, %v5409
        %v5506 = vpack.c.b16 %v5422, %v5416
        %v5507 = vpack.c.b16 %v5423, %v5417
        %v5508 = vpack.c.b16 %v5424, %v5418
        %v5509 = vpack.c.b16 %v5425, %v5419
        %v5510 = vpack.c.b16 %v5426, %v5420
        %v5511 = vpack.c.b16 %v5427, %v5421
        %v5512 = vpack.c.b16 %v5434, %v5428
        %v5513 = vpack.c.b16 %v5435, %v5429
        %v5514 = vpack.c.b16 %v5436, %v5430
        %v5515 = vpack.c.b16 %v5437, %v5431
        %v5516 = vpack.c.b16 %v5438, %v5432
        %v5517 = vpack.c.b16 %v5439, %v5433
        %v5518 = vpack.c.b16 %v5446, %v5440
        %v5519 = vpack.c.b16 %v5447, %v5441
        %v5520 = vpack.c.b16 %v5448, %v5442
        %v5521 = vpack.c.b16 %v5449, %v5443
        %v5522 = vpack.c.b16 %v5450, %v5444
        %v5523 = vpack.c.b16 %v5451, %v5445
        %v5524 = vpack.c.b16 %v5458, %v5452
        %v5525 = vpack.c.b16 %v5459, %v5453
        %v5526 = vpack.c.b16 %v5460, %v5454
        %v5527 = vpack.c.b16 %v5461, %v5455
        %v5528 = vpack.c.b16 %v5462, %v5456
        %v5529 = vpack.c.b16 %v5463, %v5457
        %v5530 = vpack.c.b16 %v5470, %v5464
        %v5531 = vpack.c.b16 %v5471, %v5465
        %v5532 = vpack.c.b16 %v5472, %v5466
        %v5533 = vpack.c.b16 %v5473, %v5467
        %v5534 = vpack.c.b16 %v5474, %v5468
        %v5535 = vpack.c.b16 %v5475, %v5469
        %v5536 = vpack.c.b16 %v5482, %v5476
        %v5537 = vpack.c.b16 %v5483, %v5477
        %v5538 = vpack.c.b16 %v5484, %v5478
        %v5539 = vpack.c.b16 %v5485, %v5479
        %v5540 = vpack.c.b16 %v5486, %v5480
        %v5541 = vpack.c.b16 %v5487, %v5481
        %v5542 = vpack.c.b16 %v5494, %v5488
        %v5543 = vpack.c.b16 %v5495, %v5489
        %v5544 = vpack.c.b16 %v5496, %v5490
        %v5545 = vpack.c.b16 %v5497, %v5491
        %v5546 = vpack.c.b16 %v5498, %v5492
        %v5547 = vpack.c.b16 %v5499, %v5493
        %5596 = vmatprep.subr.bf16.mxu0 %v5501
        %5597 = vmatpush1.bf16.msra.mxu0 %v5500
        %5598 = vmatprep.subr.bf16.mxu0 %v5507
        %5599 = vmatpush1.bf16.msra.mxu0 %v5506
        %5600 = vmatprep.subr.bf16.mxu0 %v5513
        %5601 = vmatpush1.bf16.msra.mxu0 %v5512
        %5602 = vmatprep.subr.bf16.mxu0 %v5519
        %5603 = vmatpush1.bf16.msra.mxu0 %v5518
        %5604 = vmatprep.subr.bf16.mxu0 %v5525
        %5605 = vmatpush1.bf16.msra.mxu0 %v5524
        %5606 = vmatprep.subr.bf16.mxu0 %v5531
        %5607 = vmatpush1.bf16.msra.mxu0 %v5530
        %5608 = vmatprep.subr.bf16.mxu0 %v5537
        %5609 = vmatpush1.bf16.msra.mxu0 %v5536
        %5610 = vmatprep.subr.bf16.mxu0 %v5543
        %5611 = vmatpush1.bf16.msra.mxu0 %v5542
        %5612 = vmatprep.subr.bf16.mxu0 0
        %5613 = vmatpush1.bf16.msra.mxu0 0
        %5614 = vmatprep.subr.bf16.mxu0 0
        %5615 = vmatpush1.bf16.msra.mxu0 0
        %5616 = vmatprep.subr.bf16.mxu0 0
        %5617 = vmatpush1.bf16.msra.mxu0 0
        %5618 = vmatprep.subr.bf16.mxu0 0
        %5619 = vmatpush1.bf16.msra.mxu0 0
        %5620 = vmatprep.subr.bf16.mxu0 0
        %5621 = vmatpush1.bf16.msra.mxu0 0
        %5622 = vmatprep.subr.bf16.mxu0 0
        %5623 = vmatpush1.bf16.msra.mxu0 0
        %5624 = vmatprep.subr.bf16.mxu0 0
        %5625 = vmatpush1.bf16.msra.mxu0 0
        %5626 = vmatprep.subr.bf16.mxu0 0
        %5627 = vmatpush1.bf16.msra.mxu0 0
        %5628 = vmatprep.mubr.bf16.mxu0 0
        %5629 = vmatmul.mubr.bf16.gmra.mrb[0].mxu0 %v5275
        %v5630 = vpop.f32.mrb[0].mxu0
        %v5631 = vadd.f32 %v5329, %v5630
        %v5632 = vpop.f32.mrb[0].mxu0
        %v5633 = vadd.f32 %v5333, %v5632
        %v5634 = vpop.f32.mrb[0].mxu0
        %v5635 = vpop.f32.mrb[0].mxu0
        %5636 = vdwg.mxu0
        %5637 = vmatprep.subr.bf16.mxu0 %v5503
        %5638 = vmatpush1.bf16.msra.mxu0 %v5502
        %5639 = vmatprep.subr.bf16.mxu0 %v5509
        %5640 = vmatpush1.bf16.msra.mxu0 %v5508
        %5641 = vmatprep.subr.bf16.mxu0 %v5515
        %5642 = vmatpush1.bf16.msra.mxu0 %v5514
        %5643 = vmatprep.subr.bf16.mxu0 %v5521
        %5644 = vmatpush1.bf16.msra.mxu0 %v5520
        %5645 = vmatprep.subr.bf16.mxu0 %v5527
        %5646 = vmatpush1.bf16.msra.mxu0 %v5526
        %5647 = vmatprep.subr.bf16.mxu0 %v5533
        %5648 = vmatpush1.bf16.msra.mxu0 %v5532
        %5649 = vmatprep.subr.bf16.mxu0 %v5539
        %5650 = vmatpush1.bf16.msra.mxu0 %v5538
        %5651 = vmatprep.subr.bf16.mxu0 %v5545
        %5652 = vmatpush1.bf16.msra.mxu0 %v5544
        %5653 = vmatprep.subr.bf16.mxu0 0
        %5654 = vmatpush1.bf16.msra.mxu0 0
        %5655 = vmatprep.subr.bf16.mxu0 0
        %5656 = vmatpush1.bf16.msra.mxu0 0
        %5657 = vmatprep.subr.bf16.mxu0 0
        %5658 = vmatpush1.bf16.msra.mxu0 0
        %5659 = vmatprep.subr.bf16.mxu0 0
        %5660 = vmatpush1.bf16.msra.mxu0 0
        %5661 = vmatprep.subr.bf16.mxu0 0
        %5662 = vmatpush1.bf16.msra.mxu0 0
        %5663 = vmatprep.subr.bf16.mxu0 0
        %5664 = vmatpush1.bf16.msra.mxu0 0
        %5665 = vmatprep.subr.bf16.mxu0 0
        %5666 = vmatpush1.bf16.msra.mxu0 0
        %5667 = vmatprep.subr.bf16.mxu0 0
        %5668 = vmatpush1.bf16.msra.mxu0 0
        %5669 = vmatprep.mubr.bf16.mxu0 0
        %5670 = vmatmul.mubr.bf16.gmra.mrb[0].mxu0 %v5275
        %v5671 = vpop.f32.mrb[0].mxu0
        %v5672 = vadd.f32 %v5337, %v5671
        %v5673 = vpop.f32.mrb[0].mxu0
        %v5674 = vadd.f32 %v5341, %v5673
        %v5675 = vpop.f32.mrb[0].mxu0
        %v5676 = vpop.f32.mrb[0].mxu0
        %5677 = vdwg.mxu0
        %5678 = vmatprep.subr.bf16.mxu0 %v5505
        %5679 = vmatpush1.bf16.msra.mxu0 %v5504
        %5680 = vmatprep.subr.bf16.mxu0 %v5511
        %5681 = vmatpush1.bf16.msra.mxu0 %v5510
        %5682 = vmatprep.subr.bf16.mxu0 %v5517
        %5683 = vmatpush1.bf16.msra.mxu0 %v5516
        %5684 = vmatprep.subr.bf16.mxu0 %v5523
        %5685 = vmatpush1.bf16.msra.mxu0 %v5522
        %5686 = vmatprep.subr.bf16.mxu0 %v5529
        %5687 = vmatpush1.bf16.msra.mxu0 %v5528
        %5688 = vmatprep.subr.bf16.mxu0 %v5535
        %5689 = vmatpush1.bf16.msra.mxu0 %v5534
        %5690 = vmatprep.subr.bf16.mxu0 %v5541
        %5691 = vmatpush1.bf16.msra.mxu0 %v5540
        %5692 = vmatprep.subr.bf16.mxu0 %v5547
        %5693 = vmatpush1.bf16.msra.mxu0 %v5546
        %5694 = vmatprep.subr.bf16.mxu0 0
        %5695 = vmatpush1.bf16.msra.mxu0 0
        %5696 = vmatprep.subr.bf16.mxu0 0
        %5697 = vmatpush1.bf16.msra.mxu0 0
        %5698 = vmatprep.subr.bf16.mxu0 0
        %5699 = vmatpush1.bf16.msra.mxu0 0
        %5700 = vmatprep.subr.bf16.mxu0 0
        %5701 = vmatpush1.bf16.msra.mxu0 0
        %5702 = vmatprep.subr.bf16.mxu0 0
        %5703 = vmatpush1.bf16.msra.mxu0 0
        %5704 = vmatprep.subr.bf16.mxu0 0
        %5705 = vmatpush1.bf16.msra.mxu0 0
        %5706 = vmatprep.subr.bf16.mxu0 0
        %5707 = vmatpush1.bf16.msra.mxu0 0
        %5708 = vmatprep.subr.bf16.mxu0 0
        %5709 = vmatpush1.bf16.msra.mxu0 0
        %5710 = vmatprep.mubr.bf16.mxu0 0
        %5711 = vmatmul.mubr.bf16.gmra.mrb[0].mxu0 %v5275
        %v5712 = vpop.f32.mrb[0].mxu0
        %v5713 = vadd.f32 %v5345, %v5712
        %v5714 = vpop.f32.mrb[0].mxu0
        %v5715 = vadd.f32 %v5349, %v5714
        %v5716 = vpop.f32.mrb[0].mxu0
        %v5717 = vpop.f32.mrb[0].mxu0
        %5718 = vdwg.mxu0
        %v5721 = vunpack.c.l.s4 1966171168
        %v5722 = vunpack.c.0.s8 %v5721
        %v5723 = vlaneseq
        %v5724 = vshrl.u32 %v5723, 7
        %v5725 = vsub.s32 %v5722, %v5724
        %v5726 = vrot.slane %v5631, %v5725
        %v5727 = vcombine.high %v5726, %v5726
        %v5729 = vunpack.c.l.s4 1966171168
        %v5730 = vunpack.c.0.s8 %v5729
        %v5731 = vlaneseq
        %v5732 = vshrl.u32 %v5731, 7
        %v5733 = vsub.s32 %v5730, %v5732
        %v5734 = vrot.slane %v5726, %v5733
        %v5736 = vunpack.c.l.s4 1966171168
        %v5737 = vunpack.c.0.s8 %v5736
        %v5738 = vlaneseq
        %v5739 = vshrl.u32 %v5738, 7
        %v5740 = vsub.s32 %v5737, %v5739
        %v5741 = vrot.slane %v5727, %v5740
        %v5742 = vcombine.high %v5734, %v5734
        %v5743 = vcombine.high %v5741, %v5741
        %v5744 = vlaneseq
        %v5745 = vshrl.u32 %v5744, 7
        %v5746 = vsub.s32 0, %v5745
        %v5747 = vrot.slane %v5734, %v5746
        %v5748 = vlaneseq
        %v5749 = vshrl.u32 %v5748, 7
        %v5750 = vsub.s32 0, %v5749
        %v5751 = vrot.slane %v5741, %v5750
        %v5752 = vlaneseq
        %v5753 = vshrl.u32 %v5752, 7
        %v5754 = vsub.s32 0, %v5753
        %v5755 = vrot.slane %v5742, %v5754
        %v5756 = vlaneseq
        %v5757 = vshrl.u32 %v5756, 7
        %v5758 = vsub.s32 0, %v5757
        %v5759 = vrot.slane %v5743, %v5758
        %v5764 = vadd.f32 %v1125, %v5747
        %v5765 = vadd.f32 %v1126, %v5747
        %v5766 = vadd.f32 %v1127, %v5751
        %v5767 = vadd.f32 %v1128, %v5751
        %v5768 = vadd.f32 %v1129, %v5755
        %v5769 = vadd.f32 %v1130, %v5755
        %v5770 = vadd.f32 %v1131, %v5759
        %v5771 = vadd.f32 %v1132, %v5759
        %v5772 = vmax.f32 %v5764, 0.0
        %v5773 = vmax.f32 %v5765, 0.0
        %v5774 = vmax.f32 %v5766, 0.0
        %v5775 = vmax.f32 %v5767, 0.0
        %v5776 = vmax.f32 %v5768, 0.0
        %v5777 = vmax.f32 %v5769, 0.0
        %v5778 = vmax.f32 %v5770, 0.0
        %v5779 = vmax.f32 %v5771, 0.0
        %v5780 = vmul.f32 %v5772, %v1649
        %v5781 = vmul.f32 %v5773, %v1649
        %v5782 = vmul.f32 %v5774, %v1649
        %v5783 = vmul.f32 %v5775, %v1649
        %v5784 = vmul.f32 %v5776, %v1649
        %v5785 = vmul.f32 %v5777, %v1649
        %v5786 = vmul.f32 %v5778, %v1649
        %v5787 = vmul.f32 %v5779, %v1649
        %5788 = vadd.xlane.f32.xlu0 %v5780
        %v5789 = vpop.xlane.xlu0 %5788
        %5790 = vadd.xlane.f32.xlu0 %v5781
        %v5791 = vpop.xlane.xlu0 %5790
        %5792 = vadd.xlane.f32.xlu0 %v5782
        %v5793 = vpop.xlane.xlu0 %5792
        %5794 = vadd.xlane.f32.xlu0 %v5783
        %v5795 = vpop.xlane.xlu0 %5794
        %5796 = vadd.xlane.f32.xlu0 %v5784
        %v5797 = vpop.xlane.xlu0 %5796
        %5798 = vadd.xlane.f32.xlu0 %v5785
        %v5799 = vpop.xlane.xlu0 %5798
        %5800 = vadd.xlane.f32.xlu0 %v5786
        %v5801 = vpop.xlane.xlu0 %5800
        %5802 = vadd.xlane.f32.xlu0 %v5787
        %v5803 = vpop.xlane.xlu0 %5802
        %v5804 = vadd.f32 %v5789, %v1675
        %v5805 = vadd.f32 %v5791, %v1675
        %v5806 = vadd.f32 %v5793, %v1675
        %v5807 = vadd.f32 %v5795, %v1675
        %v5808 = vadd.f32 %v5797, %v1675
        %v5809 = vadd.f32 %v5799, %v1675
        %v5810 = vadd.f32 %v5801, %v1675
        %v5811 = vadd.f32 %v5803, %v1675
        %v5820 = vlaneseq
        %v5821 = vshrl.u32 %v5820, 7
        %v5822 = vsub.s32 %v1693, %v5821
        %v5823 = vrot.slane %v5804, %v5822
        %v5824 = vlaneseq
        %v5825 = vshrl.u32 %v5824, 7
        %v5826 = vsub.s32 %v1698, %v5825
        %v5827 = vrot.slane %v5805, %v5826
        %v5828 = vsel %vm1703, %v5827, %v5823
        %v5829 = vlaneseq
        %v5830 = vshrl.u32 %v5829, 7
        %v5831 = vsub.s32 %v1693, %v5830
        %v5832 = vrot.slane %v5806, %v5831
        %v5833 = vlaneseq
        %v5834 = vshrl.u32 %v5833, 7
        %v5835 = vsub.s32 %v1698, %v5834
        %v5836 = vrot.slane %v5807, %v5835
        %v5837 = vsel %vm1703, %v5836, %v5832
        %v5838 = vlaneseq
        %v5839 = vshrl.u32 %v5838, 7
        %v5840 = vsub.s32 %v1693, %v5839
        %v5841 = vrot.slane %v5808, %v5840
        %v5842 = vlaneseq
        %v5843 = vshrl.u32 %v5842, 7
        %v5844 = vsub.s32 %v1698, %v5843
        %v5845 = vrot.slane %v5809, %v5844
        %v5846 = vsel %vm1703, %v5845, %v5841
        %v5847 = vlaneseq
        %v5848 = vshrl.u32 %v5847, 7
        %v5849 = vsub.s32 %v1693, %v5848
        %v5850 = vrot.slane %v5810, %v5849
        %v5851 = vlaneseq
        %v5852 = vshrl.u32 %v5851, 7
        %v5853 = vsub.s32 %v1698, %v5852
        %v5854 = vrot.slane %v5811, %v5853
        %v5855 = vsel %vm1703, %v5854, %v5850
        %v5856 = vsel %vm1732, %v5837, %v5828
        %v5857 = vsel %vm1734, %v5846, %v5856
        %v5858 = vsel %vm1736, %v5855, %v5857
        %v5860 = vsel %vm1739, %v5858, -inf
        %5861 = vmax.xlane.f32.xlu0 %v5860
        %v5862 = vpop.xlane.xlu0 %5861
        %v5864 = vlaneseq
        %v5865 = vshrl.u32 %v5864, 7
        %v5866 = vsub.s32 0, %v5865
        %v5867 = vrot.slane %v5862, %v5866
        %v5868 = vlaneseq
        %v5869 = vshrl.u32 %v5868, 7
        %v5870 = vsub.s32 1, %v5869
        %v5871 = vrot.slane %v5862, %v5870
        %v5872 = vlaneseq
        %v5873 = vshrl.u32 %v5872, 7
        %v5874 = vsub.s32 2, %v5873
        %v5875 = vrot.slane %v5862, %v5874
        %v5876 = vlaneseq
        %v5877 = vshrl.u32 %v5876, 7
        %v5878 = vsub.s32 3, %v5877
        %v5879 = vrot.slane %v5862, %v5878
        %v5884 = vsub.f32 %v5804, %v5867
        %v5885 = vsub.f32 %v5805, %v5867
        %v5886 = vsub.f32 %v5806, %v5871
        %v5887 = vsub.f32 %v5807, %v5871
        %v5888 = vsub.f32 %v5808, %v5875
        %v5889 = vsub.f32 %v5809, %v5875
        %v5890 = vsub.f32 %v5810, %v5879
        %v5891 = vsub.f32 %v5811, %v5879
        %v5892 = vmul.f32 %v5884, 1.442695
        %v5893 = vpow.pop %v5892
        %v5894 = vmul.f32 %v5885, 1.442695
        %v5895 = vpow.pop %v5894
        %v5896 = vmul.f32 %v5886, 1.442695
        %v5897 = vpow.pop %v5896
        %v5898 = vmul.f32 %v5887, 1.442695
        %v5899 = vpow.pop %v5898
        %v5900 = vmul.f32 %v5888, 1.442695
        %v5901 = vpow.pop %v5900
        %v5902 = vmul.f32 %v5889, 1.442695
        %v5903 = vpow.pop %v5902
        %v5904 = vmul.f32 %v5890, 1.442695
        %v5905 = vpow.pop %v5904
        %v5906 = vmul.f32 %v5891, 1.442695
        %v5907 = vpow.pop %v5906
        %5916 = vset.pattern.permute.xlu0 0
        %5917 = vperm.xlu0 %5916, %v5893
        %v5918 = vpop.permute.xlu0 %5917
        %5919 = vset.pattern.permute.xlu0 0
        %5920 = vperm.xlu0 %5919, %v5895
        %v5921 = vpop.permute.xlu0 %5920
        %5922 = vset.pattern.permute.xlu0 0
        %5923 = vperm.xlu0 %5922, %v5897
        %v5924 = vpop.permute.xlu0 %5923
        %5925 = vset.pattern.permute.xlu0 0
        %5926 = vperm.xlu0 %5925, %v5899
        %v5927 = vpop.permute.xlu0 %5926
        %5928 = vset.pattern.permute.xlu0 0
        %5929 = vperm.xlu0 %5928, %v5901
        %v5930 = vpop.permute.xlu0 %5929
        %5931 = vset.pattern.permute.xlu0 0
        %5932 = vperm.xlu0 %5931, %v5903
        %v5933 = vpop.permute.xlu0 %5932
        %5934 = vset.pattern.permute.xlu0 0
        %5935 = vperm.xlu0 %5934, %v5905
        %v5936 = vpop.permute.xlu0 %5935
        %5937 = vset.pattern.permute.xlu0 0
        %5938 = vperm.xlu0 %5937, %v5907
        %v5939 = vpop.permute.xlu0 %5938
        %v5940 = vlaneseq
        %v5941 = vshrl.u32 %v5940, 7
        %v5942 = vsub.s32 %v1693, %v5941
        %v5943 = vrot.slane %v5918, %v5942
        %v5944 = vlaneseq
        %v5945 = vshrl.u32 %v5944, 7
        %v5946 = vsub.s32 %v1698, %v5945
        %v5947 = vrot.slane %v5921, %v5946
        %v5948 = vsel %vm1703, %v5947, %v5943
        %v5949 = vlaneseq
        %v5950 = vshrl.u32 %v5949, 7
        %v5951 = vsub.s32 %v1693, %v5950
        %v5952 = vrot.slane %v5924, %v5951
        %v5953 = vlaneseq
        %v5954 = vshrl.u32 %v5953, 7
        %v5955 = vsub.s32 %v1698, %v5954
        %v5956 = vrot.slane %v5927, %v5955
        %v5957 = vsel %vm1703, %v5956, %v5952
        %v5958 = vlaneseq
        %v5959 = vshrl.u32 %v5958, 7
        %v5960 = vsub.s32 %v1693, %v5959
        %v5961 = vrot.slane %v5930, %v5960
        %v5962 = vlaneseq
        %v5963 = vshrl.u32 %v5962, 7
        %v5964 = vsub.s32 %v1698, %v5963
        %v5965 = vrot.slane %v5933, %v5964
        %v5966 = vsel %vm1703, %v5965, %v5961
        %v5967 = vlaneseq
        %v5968 = vshrl.u32 %v5967, 7
        %v5969 = vsub.s32 %v1693, %v5968
        %v5970 = vrot.slane %v5936, %v5969
        %v5971 = vlaneseq
        %v5972 = vshrl.u32 %v5971, 7
        %v5973 = vsub.s32 %v1698, %v5972
        %v5974 = vrot.slane %v5939, %v5973
        %v5975 = vsel %vm1703, %v5974, %v5970
        %v5976 = vsel %vm1732, %v5957, %v5948
        %v5977 = vsel %vm1734, %v5966, %v5976
        %v5978 = vsel %vm1736, %v5975, %v5977
        %v5980 = vsel %vm1739, %v5978, 0.0
        %5981 = vadd.xlane.f32.xlu0 %v5980
        %v5982 = vpop.xlane.xlu0 %5981
        %v5984 = vlaneseq
        %v5985 = vshrl.u32 %v5984, 7
        %v5986 = vsub.s32 0, %v5985
        %v5987 = vrot.slane %v5982, %v5986
        %v5988 = vlaneseq
        %v5989 = vshrl.u32 %v5988, 7
        %v5990 = vsub.s32 1, %v5989
        %v5991 = vrot.slane %v5982, %v5990
        %v5992 = vlaneseq
        %v5993 = vshrl.u32 %v5992, 7
        %v5994 = vsub.s32 2, %v5993
        %v5995 = vrot.slane %v5982, %v5994
        %v5996 = vlaneseq
        %v5997 = vshrl.u32 %v5996, 7
        %v5998 = vsub.s32 3, %v5997
        %v5999 = vrot.slane %v5982, %v5998
        %v6004 = vrcp.pop %v5987
        %v6005 = vmul.f32 %v5893, %v6004
        %v6006 = vmul.f32 %v5895, %v6004
        %v6007 = vrcp.pop %v5991
        %v6008 = vmul.f32 %v5897, %v6007
        %v6009 = vmul.f32 %v5899, %v6007
        %v6010 = vrcp.pop %v5995
        %v6011 = vmul.f32 %v5901, %v6010
        %v6012 = vmul.f32 %v5903, %v6010
        %v6013 = vrcp.pop %v5999
        %v6014 = vmul.f32 %v5905, %v6013
        %v6015 = vmul.f32 %v5907, %v6013
        %6017 = vset.pattern.permute.xlu0 0
        %6018 = vperm.xlu0 %6017, %v6005
        %v6019 = vpop.permute.xlu0 %6018
        %6022 = vset.pattern.permute.xlu0 0
        %6023 = vperm.xlu0 %6022, %v6006
        %v6024 = vpop.permute.xlu0 %6023
        %6027 = vset.pattern.permute.xlu0 0
        %6028 = vperm.xlu0 %6027, %v6008
        %v6029 = vpop.permute.xlu0 %6028
        %6032 = vset.pattern.permute.xlu0 0
        %6033 = vperm.xlu0 %6032, %v6009
        %v6034 = vpop.permute.xlu0 %6033
        %6037 = vset.pattern.permute.xlu0 0
        %6038 = vperm.xlu0 %6037, %v6011
        %v6039 = vpop.permute.xlu0 %6038
        %6042 = vset.pattern.permute.xlu0 0
        %6043 = vperm.xlu0 %6042, %v6012
        %v6044 = vpop.permute.xlu0 %6043
        %6047 = vset.pattern.permute.xlu0 0
        %6048 = vperm.xlu0 %6047, %v6014
        %v6049 = vpop.permute.xlu0 %6048
        %6052 = vset.pattern.permute.xlu0 0
        %6053 = vperm.xlu0 %6052, %v6015
        %v6054 = vpop.permute.xlu0 %6053
        %v6056 = vmul.f32 %v1117, %v6019
        %v6057 = vmul.f32 %v1118, %v6024
        %v6058 = vmul.f32 %v1119, %v6029
        %v6059 = vmul.f32 %v1120, %v6034
        %v6060 = vmul.f32 %v1121, %v6039
        %v6061 = vmul.f32 %v1122, %v6044
        %v6062 = vmul.f32 %v1123, %v6049
        %v6063 = vmul.f32 %v1124, %v6054
        %v6064 = vadd.f32 %v6056, %v6057
        %v6065 = vrot.slane %v6064, 4
        %v6066 = vadd.f32 %v6064, %v6065
        %v6067 = vrot.slane %v6066, 2
        %v6068 = vadd.f32 %v6066, %v6067
        %v6069 = vrot.slane %v6068, 1
        %v6070 = vadd.f32 %v6068, %v6069
        %v6071 = vadd.f32 %v6058, %v6059
        %v6072 = vrot.slane %v6071, 4
        %v6073 = vadd.f32 %v6071, %v6072
        %v6074 = vrot.slane %v6073, 2
        %v6075 = vadd.f32 %v6073, %v6074
        %v6076 = vrot.slane %v6075, 1
        %v6077 = vadd.f32 %v6075, %v6076
        %v6078 = vadd.f32 %v6060, %v6061
        %v6079 = vrot.slane %v6078, 4
        %v6080 = vadd.f32 %v6078, %v6079
        %v6081 = vrot.slane %v6080, 2
        %v6082 = vadd.f32 %v6080, %v6081
        %v6083 = vrot.slane %v6082, 1
        %v6084 = vadd.f32 %v6082, %v6083
        %v6085 = vadd.f32 %v6062, %v6063
        %v6086 = vrot.slane %v6085, 4
        %v6087 = vadd.f32 %v6085, %v6086
        %v6088 = vrot.slane %v6087, 2
        %v6089 = vadd.f32 %v6087, %v6088
        %v6090 = vrot.slane %v6089, 1
        %v6091 = vadd.f32 %v6089, %v6090
        %v6092 = vxor.u32 %v5633, 2147483648
        %v6093 = vmul.f32 %v6092, 1.442695
        %v6094 = vpow.pop %v6093
        %v6095 = vadd.f32 %v6094, 1.0
        %v6096 = vrcp.pop %v6095
        %v6097 = vmul.f32 1.0, %v6096
        %v6102 = vsel %vm1732, %v6077, %v6070
        %v6103 = vsel %vm1734, %v6084, %v6102
        %v6104 = vsel %vm1736, %v6091, %v6103
        %v6106 = vmul.f32 %v6097, %v6104
        %s6107 = scalar_lea.vmem %s577, 48 [#allocation11]
        %v6108 = vld [vmem:[%s6107] sm:$0xff]
        %v6109 = vld [vmem:[%s6107 + $0x8] sm:$0xff]
        %v6110 = vpack.c.bf16 %v6106, %v6106
        %v6111 = vld [vmem:[#allocation19] sm:$0xff]
        %v6112 = vld [vmem:[#allocation19 + $0x8] sm:$0xff]
        %v6113 = vld [vmem:[#allocation19 + $0x10] sm:$0xff]
        %v6114 = vld [vmem:[#allocation19 + $0x18] sm:$0xff]
        %v6115 = vld [vmem:[#allocation19 + $0x20] sm:$0xff]
        %v6116 = vld [vmem:[#allocation19 + $0x28] sm:$0xff]
        %v6117 = vld [vmem:[#allocation19 + $0x30] sm:$0xff]
        %v6118 = vld [vmem:[#allocation19 + $0x38] sm:$0xff]
        %v6119 = vld [vmem:[#allocation19 + $0x40] sm:$0xff]
        %v6120 = vld [vmem:[#allocation19 + $0x48] sm:$0xff]
        %v6121 = vld [vmem:[#allocation19 + $0x50] sm:$0xff]
        %v6122 = vld [vmem:[#allocation19 + $0x58] sm:$0xff]
        %v6123 = vld [vmem:[#allocation19 + $0x60] sm:$0xff]
        %v6124 = vld [vmem:[#allocation19 + $0x68] sm:$0xff]
        %v6125 = vld [vmem:[#allocation19 + $0x70] sm:$0xff]
        %v6126 = vld [vmem:[#allocation19 + $0x78] sm:$0xff]
        %v6127 = vld [vmem:[#allocation19 + $0x80] sm:$0xff]
        %v6128 = vld [vmem:[#allocation19 + $0x88] sm:$0xff]
        %v6129 = vld [vmem:[#allocation19 + $0x90] sm:$0xff]
        %v6130 = vld [vmem:[#allocation19 + $0x98] sm:$0xff]
        %v6131 = vld [vmem:[#allocation19 + $0xa0] sm:$0xff]
        %v6132 = vld [vmem:[#allocation19 + $0xa8] sm:$0xff]
        %v6133 = vld [vmem:[#allocation19 + $0xb0] sm:$0xff]
        %v6134 = vld [vmem:[#allocation19 + $0xb8] sm:$0xff]
        %v6135 = vld [vmem:[#allocation19 + $0xc0] sm:$0xff]
        %v6136 = vld [vmem:[#allocation19 + $0xc8] sm:$0xff]
        %v6137 = vld [vmem:[#allocation19 + $0xd0] sm:$0xff]
        %v6138 = vld [vmem:[#allocation19 + $0xd8] sm:$0xff]
        %v6139 = vld [vmem:[#allocation19 + $0xe0] sm:$0xff]
        %v6140 = vld [vmem:[#allocation19 + $0xe8] sm:$0xff]
        %v6141 = vld [vmem:[#allocation19 + $0xf0] sm:$0xff]
        %v6142 = vld [vmem:[#allocation19 + $0xf8] sm:$0xff]
        %v6175 = vunpack.c.l.b16 %v6111
        %v6176 = vunpack.c.h.b16 %v6111
        %v6177 = vunpack.c.l.b16 %v6112
        %v6178 = vunpack.c.h.b16 %v6112
        %v6179 = vunpack.c.l.b16 %v6113
        %v6180 = vunpack.c.h.b16 %v6113
        %v6181 = vunpack.c.l.b16 %v6114
        %v6182 = vunpack.c.h.b16 %v6114
        %v6183 = vunpack.c.l.b16 %v6115
        %v6184 = vunpack.c.h.b16 %v6115
        %v6185 = vunpack.c.l.b16 %v6116
        %v6186 = vunpack.c.h.b16 %v6116
        %v6187 = vunpack.c.l.b16 %v6117
        %v6188 = vunpack.c.h.b16 %v6117
        %v6189 = vunpack.c.l.b16 %v6118
        %v6190 = vunpack.c.h.b16 %v6118
        %v6191 = vunpack.c.l.b16 %v6119
        %v6192 = vunpack.c.h.b16 %v6119
        %v6193 = vunpack.c.l.b16 %v6120
        %v6194 = vunpack.c.h.b16 %v6120
        %v6195 = vunpack.c.l.b16 %v6121
        %v6196 = vunpack.c.h.b16 %v6121
        %v6197 = vunpack.c.l.b16 %v6122
        %v6198 = vunpack.c.h.b16 %v6122
        %v6199 = vunpack.c.l.b16 %v6123
        %v6200 = vunpack.c.h.b16 %v6123
        %v6201 = vunpack.c.l.b16 %v6124
        %v6202 = vunpack.c.h.b16 %v6124
        %v6203 = vunpack.c.l.b16 %v6125
        %v6204 = vunpack.c.h.b16 %v6125
        %v6205 = vunpack.c.l.b16 %v6126
        %v6206 = vunpack.c.h.b16 %v6126
        %v6207 = vunpack.c.l.b16 %v6127
        %v6208 = vunpack.c.h.b16 %v6127
        %v6209 = vunpack.c.l.b16 %v6128
        %v6210 = vunpack.c.h.b16 %v6128
        %v6211 = vunpack.c.l.b16 %v6129
        %v6212 = vunpack.c.h.b16 %v6129
        %v6213 = vunpack.c.l.b16 %v6130
        %v6214 = vunpack.c.h.b16 %v6130
        %v6215 = vunpack.c.l.b16 %v6131
        %v6216 = vunpack.c.h.b16 %v6131
        %v6217 = vunpack.c.l.b16 %v6132
        %v6218 = vunpack.c.h.b16 %v6132
        %v6219 = vunpack.c.l.b16 %v6133
        %v6220 = vunpack.c.h.b16 %v6133
        %v6221 = vunpack.c.l.b16 %v6134
        %v6222 = vunpack.c.h.b16 %v6134
        %v6223 = vunpack.c.l.b16 %v6135
        %v6224 = vunpack.c.h.b16 %v6135
        %v6225 = vunpack.c.l.b16 %v6136
        %v6226 = vunpack.c.h.b16 %v6136
        %v6227 = vunpack.c.l.b16 %v6137
        %v6228 = vunpack.c.h.b16 %v6137
        %v6229 = vunpack.c.l.b16 %v6138
        %v6230 = vunpack.c.h.b16 %v6138
        %v6231 = vunpack.c.l.b16 %v6139
        %v6232 = vunpack.c.h.b16 %v6139
        %v6233 = vunpack.c.l.b16 %v6140
        %v6234 = vunpack.c.h.b16 %v6140
        %v6235 = vunpack.c.l.b16 %v6141
        %v6236 = vunpack.c.h.b16 %v6141
        %v6237 = vunpack.c.l.b16 %v6142
        %v6238 = vunpack.c.h.b16 %v6142
        %v6239 = vpack.c.b16 %v6179, %v6175
        %v6240 = vpack.c.b16 %v6180, %v6176
        %v6241 = vpack.c.b16 %v6181, %v6177
        %v6242 = vpack.c.b16 %v6182, %v6178
        %v6243 = vpack.c.b16 %v6187, %v6183
        %v6244 = vpack.c.b16 %v6188, %v6184
        %v6245 = vpack.c.b16 %v6189, %v6185
        %v6246 = vpack.c.b16 %v6190, %v6186
        %v6247 = vpack.c.b16 %v6195, %v6191
        %v6248 = vpack.c.b16 %v6196, %v6192
        %v6249 = vpack.c.b16 %v6197, %v6193
        %v6250 = vpack.c.b16 %v6198, %v6194
        %v6251 = vpack.c.b16 %v6203, %v6199
        %v6252 = vpack.c.b16 %v6204, %v6200
        %v6253 = vpack.c.b16 %v6205, %v6201
        %v6254 = vpack.c.b16 %v6206, %v6202
        %v6255 = vpack.c.b16 %v6211, %v6207
        %v6256 = vpack.c.b16 %v6212, %v6208
        %v6257 = vpack.c.b16 %v6213, %v6209
        %v6258 = vpack.c.b16 %v6214, %v6210
        %v6259 = vpack.c.b16 %v6219, %v6215
        %v6260 = vpack.c.b16 %v6220, %v6216
        %v6261 = vpack.c.b16 %v6221, %v6217
        %v6262 = vpack.c.b16 %v6222, %v6218
        %v6263 = vpack.c.b16 %v6227, %v6223
        %v6264 = vpack.c.b16 %v6228, %v6224
        %v6265 = vpack.c.b16 %v6229, %v6225
        %v6266 = vpack.c.b16 %v6230, %v6226
        %v6267 = vpack.c.b16 %v6235, %v6231
        %v6268 = vpack.c.b16 %v6236, %v6232
        %v6269 = vpack.c.b16 %v6237, %v6233
        %v6270 = vpack.c.b16 %v6238, %v6234
        %6303 = vmatprep.subr.bf16.mxu0 %v6240
        %6304 = vmatpush1.bf16.msra.mxu0 %v6239
        %6305 = vmatprep.subr.bf16.mxu0 %v6244
        %6306 = vmatpush1.bf16.msra.mxu0 %v6243
        %6307 = vmatprep.subr.bf16.mxu0 %v6248
        %6308 = vmatpush1.bf16.msra.mxu0 %v6247
        %6309 = vmatprep.subr.bf16.mxu0 %v6252
        %6310 = vmatpush1.bf16.msra.mxu0 %v6251
        %6311 = vmatprep.subr.bf16.mxu0 %v6256
        %6312 = vmatpush1.bf16.msra.mxu0 %v6255
        %6313 = vmatprep.subr.bf16.mxu0 %v6260
        %6314 = vmatpush1.bf16.msra.mxu0 %v6259
        %6315 = vmatprep.subr.bf16.mxu0 %v6264
        %6316 = vmatpush1.bf16.msra.mxu0 %v6263
        %6317 = vmatprep.subr.bf16.mxu0 %v6268
        %6318 = vmatpush1.bf16.msra.mxu0 %v6267
        %6319 = vmatprep.subr.bf16.mxu0 0
        %6320 = vmatpush1.bf16.msra.mxu0 0
        %6321 = vmatprep.subr.bf16.mxu0 0
        %6322 = vmatpush1.bf16.msra.mxu0 0
        %6323 = vmatprep.subr.bf16.mxu0 0
        %6324 = vmatpush1.bf16.msra.mxu0 0
        %6325 = vmatprep.subr.bf16.mxu0 0
        %6326 = vmatpush1.bf16.msra.mxu0 0
        %6327 = vmatprep.subr.bf16.mxu0 0
        %6328 = vmatpush1.bf16.msra.mxu0 0
        %6329 = vmatprep.subr.bf16.mxu0 0
        %6330 = vmatpush1.bf16.msra.mxu0 0
        %6331 = vmatprep.subr.bf16.mxu0 0
        %6332 = vmatpush1.bf16.msra.mxu0 0
        %6333 = vmatprep.subr.bf16.mxu0 0
        %6334 = vmatpush1.bf16.msra.mxu0 0
        %6335 = vmatprep.mubr.bf16.mxu0 0
        %6336 = vmatmul.mubr.bf16.gmra.mrb[0].mxu0 %v6110
        %v6337 = vpop.f32.mrb[0].mxu0
        %v6338 = vadd.f32 0.0, %v6337
        %v6339 = vpop.f32.mrb[0].mxu0
        %v6340 = vadd.f32 0.0, %v6339
        %v6341 = vpop.f32.mrb[0].mxu0
        %v6342 = vpop.f32.mrb[0].mxu0
        %6343 = vdwg.mxu0
        %6344 = vmatprep.subr.bf16.mxu0 %v6242
        %6345 = vmatpush1.bf16.msra.mxu0 %v6241
        %6346 = vmatprep.subr.bf16.mxu0 %v6246
        %6347 = vmatpush1.bf16.msra.mxu0 %v6245
        %6348 = vmatprep.subr.bf16.mxu0 %v6250
        %6349 = vmatpush1.bf16.msra.mxu0 %v6249
        %6350 = vmatprep.subr.bf16.mxu0 %v6254
        %6351 = vmatpush1.bf16.msra.mxu0 %v6253
        %6352 = vmatprep.subr.bf16.mxu0 %v6258
        %6353 = vmatpush1.bf16.msra.mxu0 %v6257
        %6354 = vmatprep.subr.bf16.mxu0 %v6262
        %6355 = vmatpush1.bf16.msra.mxu0 %v6261
        %6356 = vmatprep.subr.bf16.mxu0 %v6266
        %6357 = vmatpush1.bf16.msra.mxu0 %v6265
        %6358 = vmatprep.subr.bf16.mxu0 %v6270
        %6359 = vmatpush1.bf16.msra.mxu0 %v6269
        %6360 = vmatprep.subr.bf16.mxu0 0
        %6361 = vmatpush1.bf16.msra.mxu0 0
        %6362 = vmatprep.subr.bf16.mxu0 0
        %6363 = vmatpush1.bf16.msra.mxu0 0
        %6364 = vmatprep.subr.bf16.mxu0 0
        %6365 = vmatpush1.bf16.msra.mxu0 0
        %6366 = vmatprep.subr.bf16.mxu0 0
        %6367 = vmatpush1.bf16.msra.mxu0 0
        %6368 = vmatprep.subr.bf16.mxu0 0
        %6369 = vmatpush1.bf16.msra.mxu0 0
        %6370 = vmatprep.subr.bf16.mxu0 0
        %6371 = vmatpush1.bf16.msra.mxu0 0
        %6372 = vmatprep.subr.bf16.mxu0 0
        %6373 = vmatpush1.bf16.msra.mxu0 0
        %6374 = vmatprep.subr.bf16.mxu0 0
        %6375 = vmatpush1.bf16.msra.mxu0 0
        %6376 = vmatprep.mubr.bf16.mxu0 0
        %6377 = vmatmul.mubr.bf16.gmra.mrb[0].mxu0 %v6110
        %v6378 = vpop.f32.mrb[0].mxu0
        %v6379 = vadd.f32 0.0, %v6378
        %v6380 = vpop.f32.mrb[0].mxu0
        %v6381 = vadd.f32 0.0, %v6380
        %v6382 = vpop.f32.mrb[0].mxu0
        %v6383 = vpop.f32.mrb[0].mxu0
        %6384 = vdwg.mxu0
        %v6389 = vcombine.low %v6338, %v6340
        %v6390 = vcombine.low %v6379, %v6381
        %v6393 = vadd.f32 %v6108, %v6389
        %v6394 = vadd.f32 %v6109, %v6390
        %v6399 = vcombine.low %v5672, %v5674
        %v6400 = vcombine.low %v5713, %v5715
        %v6403 = vadd.f32 %v6393, %v6399
        %v6404 = vadd.f32 %v6394, %v6400
        %v6405 = vxor.u32 %v6403, 2147483648
        %v6406 = vmul.f32 %v6405, 1.442695
        %v6407 = vpow.pop %v6406
        %v6408 = vadd.f32 %v6407, 1.0
        %v6409 = vrcp.pop %v6408
        %v6410 = vmul.f32 1.0, %v6409
        %v6412 = vrot.slane %v6403, 4
        %v6414 = vxor.u32 %v6412, 2147483648
        %v6415 = vmul.f32 %v6414, 1.442695
        %v6416 = vpow.pop %v6415
        %v6417 = vadd.f32 %v6416, 1.0
        %v6418 = vrcp.pop %v6417
        %v6419 = vmul.f32 1.0, %v6418
        %v6420 = vtanh.pop %v6404
        %v6422 = vrot.slane %v6404, 4
        %v6424 = vxor.u32 %v6422, 2147483648
        %v6425 = vmul.f32 %v6424, 1.442695
        %v6426 = vpow.pop %v6425
        %v6427 = vadd.f32 %v6426, 1.0
        %v6428 = vrcp.pop %v6427
        %v6429 = vmul.f32 1.0, %v6428
        %v6430 = vmul.f32 %v6419, %v5274
        %v6431 = vmul.f32 %v6410, %v6420
        %v6432 = vadd.f32 %v6430, %v6431
        %v6433 = vtanh.pop %v6432
        %v6434 = vmul.f32 %v6429, %v6433
        %v6435 = vpack.c.bf16 %v6434, %v6434
        %v6436 = vld [vmem:[#allocation20] sm:$0xff]
        %v6437 = vld [vmem:[#allocation20 + $0x8] sm:$0xff]
        %v6438 = vld [vmem:[#allocation20 + $0x10] sm:$0xff]
        %v6439 = vld [vmem:[#allocation20 + $0x18] sm:$0xff]
        %v6440 = vld [vmem:[#allocation20 + $0x20] sm:$0xff]
        %v6441 = vld [vmem:[#allocation20 + $0x28] sm:$0xff]
        %v6442 = vld [vmem:[#allocation20 + $0x30] sm:$0xff]
        %v6443 = vld [vmem:[#allocation20 + $0x38] sm:$0xff]
        %v6444 = vld [vmem:[#allocation20 + $0x40] sm:$0xff]
        %v6445 = vld [vmem:[#allocation20 + $0x48] sm:$0xff]
        %v6446 = vld [vmem:[#allocation20 + $0x50] sm:$0xff]
        %v6447 = vld [vmem:[#allocation20 + $0x58] sm:$0xff]
        %v6448 = vld [vmem:[#allocation20 + $0x60] sm:$0xff]
        %v6449 = vld [vmem:[#allocation20 + $0x68] sm:$0xff]
        %v6450 = vld [vmem:[#allocation20 + $0x70] sm:$0xff]
        %v6451 = vld [vmem:[#allocation20 + $0x78] sm:$0xff]
        %v6452 = vld [vmem:[%s15] sm:$0x3]
        %v6454 = vlaneseq
        %v6455 = vshrl.u32 %v6454, 7
        %v6456 = vsub.s32 0, %v6455
        %v6457 = vrot.slane %v6452, %v6456
        %v6458 = vlaneseq
        %v6459 = vshrl.u32 %v6458, 7
        %v6460 = vsub.s32 1, %v6459
        %v6461 = vrot.slane %v6452, %v6460
        %v6480 = vunpack.c.l.b16 %v6436
        %v6481 = vunpack.c.h.b16 %v6436
        %v6482 = vunpack.c.l.b16 %v6437
        %v6483 = vunpack.c.h.b16 %v6437
        %v6484 = vunpack.c.l.b16 %v6438
        %v6485 = vunpack.c.h.b16 %v6438
        %v6486 = vunpack.c.l.b16 %v6439
        %v6487 = vunpack.c.h.b16 %v6439
        %v6488 = vunpack.c.l.b16 %v6440
        %v6489 = vunpack.c.h.b16 %v6440
        %v6490 = vunpack.c.l.b16 %v6441
        %v6491 = vunpack.c.h.b16 %v6441
        %v6492 = vunpack.c.l.b16 %v6442
        %v6493 = vunpack.c.h.b16 %v6442
        %v6494 = vunpack.c.l.b16 %v6443
        %v6495 = vunpack.c.h.b16 %v6443
        %v6496 = vunpack.c.l.b16 %v6444
        %v6497 = vunpack.c.h.b16 %v6444
        %v6498 = vunpack.c.l.b16 %v6445
        %v6499 = vunpack.c.h.b16 %v6445
        %v6500 = vunpack.c.l.b16 %v6446
        %v6501 = vunpack.c.h.b16 %v6446
        %v6502 = vunpack.c.l.b16 %v6447
        %v6503 = vunpack.c.h.b16 %v6447
        %v6504 = vunpack.c.l.b16 %v6448
        %v6505 = vunpack.c.h.b16 %v6448
        %v6506 = vunpack.c.l.b16 %v6449
        %v6507 = vunpack.c.h.b16 %v6449
        %v6508 = vunpack.c.l.b16 %v6450
        %v6509 = vunpack.c.h.b16 %v6450
        %v6510 = vunpack.c.l.b16 %v6451
        %v6511 = vunpack.c.h.b16 %v6451
        %v6512 = vpack.c.b16 %v6482, %v6480
        %v6513 = vpack.c.b16 %v6483, %v6481
        %v6514 = vpack.c.b16 %v6486, %v6484
        %v6515 = vpack.c.b16 %v6487, %v6485
        %v6516 = vpack.c.b16 %v6490, %v6488
        %v6517 = vpack.c.b16 %v6491, %v6489
        %v6518 = vpack.c.b16 %v6494, %v6492
        %v6519 = vpack.c.b16 %v6495, %v6493
        %v6520 = vpack.c.b16 %v6498, %v6496
        %v6521 = vpack.c.b16 %v6499, %v6497
        %v6522 = vpack.c.b16 %v6502, %v6500
        %v6523 = vpack.c.b16 %v6503, %v6501
        %v6524 = vpack.c.b16 %v6506, %v6504
        %v6525 = vpack.c.b16 %v6507, %v6505
        %v6526 = vpack.c.b16 %v6510, %v6508
        %v6527 = vpack.c.b16 %v6511, %v6509
        %6544 = vmatprep.subr.bf16.mxu0 %v6513
        %6545 = vmatpush1.bf16.msra.mxu0 %v6512
        %6546 = vmatprep.subr.bf16.mxu0 %v6515
        %6547 = vmatpush1.bf16.msra.mxu0 %v6514
        %6548 = vmatprep.subr.bf16.mxu0 %v6517
        %6549 = vmatpush1.bf16.msra.mxu0 %v6516
        %6550 = vmatprep.subr.bf16.mxu0 %v6519
        %6551 = vmatpush1.bf16.msra.mxu0 %v6518
        %6552 = vmatprep.subr.bf16.mxu0 %v6521
        %6553 = vmatpush1.bf16.msra.mxu0 %v6520
        %6554 = vmatprep.subr.bf16.mxu0 %v6523
        %6555 = vmatpush1.bf16.msra.mxu0 %v6522
        %6556 = vmatprep.subr.bf16.mxu0 %v6525
        %6557 = vmatpush1.bf16.msra.mxu0 %v6524
        %6558 = vmatprep.subr.bf16.mxu0 %v6527
        %6559 = vmatpush1.bf16.msra.mxu0 %v6526
        %6560 = vmatprep.subr.bf16.mxu0 0
        %6561 = vmatpush1.bf16.msra.mxu0 0
        %6562 = vmatprep.subr.bf16.mxu0 0
        %6563 = vmatpush1.bf16.msra.mxu0 0
        %6564 = vmatprep.subr.bf16.mxu0 0
        %6565 = vmatpush1.bf16.msra.mxu0 0
        %6566 = vmatprep.subr.bf16.mxu0 0
        %6567 = vmatpush1.bf16.msra.mxu0 0
        %6568 = vmatprep.subr.bf16.mxu0 0
        %6569 = vmatpush1.bf16.msra.mxu0 0
        %6570 = vmatprep.subr.bf16.mxu0 0
        %6571 = vmatpush1.bf16.msra.mxu0 0
        %6572 = vmatprep.subr.bf16.mxu0 0
        %6573 = vmatpush1.bf16.msra.mxu0 0
        %6574 = vmatprep.subr.bf16.mxu0 0
        %6575 = vmatpush1.bf16.msra.mxu0 0
        %6576 = vmatprep.mubr.bf16.mxu0 0
        %6577 = vmatmul.mubr.bf16.gmra.mrb[0].mxu0 %v6435
        %v6578 = vpop.f32.mrb[0].mxu0
        %v6579 = vadd.f32 %v6457, %v6578
        %v6580 = vpop.f32.mrb[0].mxu0
        %v6581 = vadd.f32 %v6461, %v6580
        %v6582 = vpop.f32.mrb[0].mxu0
        %v6583 = vpop.f32.mrb[0].mxu0
        %6584 = vdwg.mxu0
        %s6585 = sld [smem:[#allocation6 + %s5272]]
        %v6586 = vstv %s6585
        %vm6587 = vcmp.lt.s32.totalorder %v1136, %v6586
        %v6588 = vsel %vm6587, 1, 0
        %vm6589 = vcmp.eq.s32.totalorder %v6588, 1
        %v6590 = vsel %vm6589, %v6434, %v5273
        %6591 = vst [vmem:[#allocation2] sm:$0xf] %v6590
        %v6592 = vsel %vm6589, %v6432, %v5274
        %6593 = vst [vmem:[#allocation3] sm:$0xf] %v6592
        %v6594 = vsel %vm6589, %v6579, 0.0
        %v6595 = vsel %vm6589, %v6581, 0.0
        %v6598 = vcombine.low %v6594, %v6595
        %s6600 = scalar_lea.vmem %s647, 24 [#allocation22]
        %6601 = vst [vmem:[%s6600] sm:$0xff] %v6598
        %v6602 = vlaneseq
        %v6603 = vshrl.u32 %v6602, 7
        %v6604 = vsub.s32 %v1693, %v6603
        %v6605 = vrot.slane %v6019, %v6604
        %v6606 = vlaneseq
        %v6607 = vshrl.u32 %v6606, 7
        %v6608 = vsub.s32 %v1698, %v6607
        %v6609 = vrot.slane %v6024, %v6608
        %v6610 = vsel %vm1703, %v6609, %v6605
        %v6611 = vlaneseq
        %v6612 = vshrl.u32 %v6611, 7
        %v6613 = vsub.s32 %v1693, %v6612
        %v6614 = vrot.slane %v6029, %v6613
        %v6615 = vlaneseq
        %v6616 = vshrl.u32 %v6615, 7
        %v6617 = vsub.s32 %v1698, %v6616
        %v6618 = vrot.slane %v6034, %v6617
        %v6619 = vsel %vm1703, %v6618, %v6614
        %v6620 = vlaneseq
        %v6621 = vshrl.u32 %v6620, 7
        %v6622 = vsub.s32 %v1693, %v6621
        %v6623 = vrot.slane %v6039, %v6622
        %v6624 = vlaneseq
        %v6625 = vshrl.u32 %v6624, 7
        %v6626 = vsub.s32 %v1698, %v6625
        %v6627 = vrot.slane %v6044, %v6626
        %v6628 = vsel %vm1703, %v6627, %v6623
        %v6629 = vlaneseq
        %v6630 = vshrl.u32 %v6629, 7
        %v6631 = vsub.s32 %v1693, %v6630
        %v6632 = vrot.slane %v6049, %v6631
        %v6633 = vlaneseq
        %v6634 = vshrl.u32 %v6633, 7
        %v6635 = vsub.s32 %v1698, %v6634
        %v6636 = vrot.slane %v6054, %v6635
        %v6637 = vsel %vm1703, %v6636, %v6632
        %v6638 = vsel %vm1732, %v6619, %v6610
        %v6639 = vsel %vm1734, %v6628, %v6638
        %v6640 = vsel %vm1736, %v6637, %v6639
        %v6642 = vsel %vm6589, %v6640, 0.0
        %s6643 = smul.u32 %s5272, 4
        %s6644 = scalar_lea.vmem [#allocation23], %s6643
        %6645 = vst.msk [vmem:[%s6644] sm:$0xf] %vm1739, %v6642
        %s6646 = sand.u32 %s375, 1
        %s6647 = scalar_lea.sflag [#allocation10], %s6646
        %s6648 = sand.u32 %s375, 1
        %s6649 = smul.addr %s6648, 32
        %s6650 = scalar_lea.vmem [#allocation22], %s6649
        // Predicated region
        $region117: #{tpu_custom_call.1} parent=79 // pred_check
          %p6651 = pneg %p385
        $region118: #{tpu_custom_call.1} parent=79 // pred_check_branch
          %6653 = sbr.rel (%p6651) target = $region120
        $region119: #{tpu_custom_call.1} parent=79 // pred_region
          %s6654 = smul.u32 4, %s47
          %s6656 = ssub.s32 512, 512
          %6657 = vsyncadd %s6647, %s6656
          %s6658 = smul.addr %s6654, 2
          %s6659 = smul.addr %s6658, 64
          %s6660 = scalar_lea.hbm %s16, %s6659
          %s6661 = sshll.u32 %s6650, 4
          %s6662 = int_to_ptr.vmem [resolvable:$true] %s6661
          %6667 = dma.vmem_to_hbm [thread:$0]  %s6662, 512, %s6660, %s6647, 128, 128, 8
        $region120: #{tpu_custom_call.1} parent=79 // pred_fallthru
          _
        // Predicated region
        $region121: #{tpu_custom_call.1} parent=79 // pred_check
          %p6668 = pneg %p406
        $region122: #{tpu_custom_call.1} parent=79 // pred_check_branch
          %6670 = sbr.rel (%p6668) target = $region124
        $region123: #{tpu_custom_call.1} parent=79 // pred_region
          %s6672 = ssub.s32 512, 512
          %6673 = vsyncadd [#allocation24], %s6672
          %s6674 = sshll.u32 [#allocation23], 4
          %s6675 = int_to_ptr.vmem [resolvable:$true] %s6674
          %6680 = dma.vmem_to_hbm [thread:$0]  %s6675, 512, %s17, [#allocation24], 64, 64, 4
        $region124: #{tpu_custom_call.1} parent=79 // pred_fallthru
          _
        // Predicated region
        $region125: #{tpu_custom_call.1} parent=79 // pred_check
          %p6681 = pneg %p406
        $region126: #{tpu_custom_call.1} parent=79 // pred_check_branch
          %6683 = sbr.rel (%p6681) target = $region128
        $region127: #{tpu_custom_call.1} parent=79 // pred_region
          %6684 = dma.done [#allocation24], 512
        $region128: #{tpu_custom_call.1} parent=79 // pred_fallthru
          _
      $region80: #{tpu_custom_call.1} parent=5 // pred_fallthru
        _
      %p6685 = scmp.le.s32.totalorder 2, %s42
      // Predicated region
      $region129: #{tpu_custom_call.1} parent=5 // pred_check
        %p6686 = pneg %p6685
      $region130: #{tpu_custom_call.1} parent=5 // pred_check_branch
        %6688 = sbr.rel (%p6686) target = $region132
      $region131: #{tpu_custom_call.1} parent=5 // pred_region
        %s6689 = ssub.s32 %s42, 2
        // Predicated region
        $region133: #{tpu_custom_call.1} parent=131 // pred_check
          %p6690 = pneg %p391
        $region134: #{tpu_custom_call.1} parent=131 // pred_check_branch
          %6692 = sbr.rel (%p6690) target = $region136
        $region135: #{tpu_custom_call.1} parent=131 // pred_region
          %s6693 = sand.u32 %s376, 1
          %s6694 = scalar_lea.sflag [#allocation10], %s6693
          %s6695 = sand.u32 %s376, 1
          %s6696 = smul.addr %s6695, 32
          %s6697 = scalar_lea.vmem [#allocation22], %s6696
          %6698 = dma.done %s6694, 512
        $region136: #{tpu_custom_call.1} parent=131 // pred_fallthru
          _
      $region132: #{tpu_custom_call.1} parent=5 // pred_fallthru
        _
    $region6: #{tpu_custom_call.1} parent=1 // loop_footer
      %s46 = sadd.s32 1, %s42
    $region7: #{tpu_custom_call.1} parent=1 // loop_footer_branch
      %41 = sbr.rel target = $region3
    $region8: #{tpu_custom_call.1} parent=1 // loop_exit
      _
    %6699 = vsyncpa [#allocation9], 1
    %s6700 = scalar_lea.sflag [#allocation9], 1
    %6701 = vsyncpa %s6700, 1
    %6702 = vsyncpa [#allocation12], 1
    %s6703 = scalar_lea.sflag [#allocation12], 1
    %6704 = vsyncpa %s6703, 1
    %6705 = vsyncpa [#allocation15], 1
    %6706 = vsyncpa [#allocation18], 1
    %6707 = vsyncpa [#allocation21], 1
    %6708 = vsyncpa [#allocation10], 1
    %s6709 = scalar_lea.sflag [#allocation10], 1
    %6710 = vsyncpa %s6709, 1
    %6711 = vsyncpa [#allocation24], 1

</llo_original>
